<compile_context>
chip_gen: v5e
topology: v5e:2x2
jax: 0.10.0
libtpu: 0.0.40
codegen_flags: <defaults>
</compile_context>

<pallas_src>
import math
import jax
import jax.numpy as jnp
from jax.experimental import pallas as pl
from jax.experimental.pallas import tpu as pltpu

# --------------------------- configuration ----------------------------------
B = 2
C_IN = 3
IMG = 16
PATCH = 8
GRID = IMG // PATCH                  # 2
N_PATCH = GRID * GRID                # 4
PP = PATCH * PATCH                   # 64
D = 32                               # embed dim (768 in ViT/B-16)
HEADS = 4                            # (12 in ViT/B-16)
HD = D // HEADS                      # 8
MLP_H = 4 * D
DEPTH = 2
NUM_CLASSES = 10
HEAD_PAD = 128                       # lane-dense classifier output slab

POOL_SIZE_CLS, LEN_PROMPTS_CLS = 1, 2
POOL_SIZE_IMG, LEN_PROMPTS_IMG = 1, 2
P_LEN = POOL_SIZE_CLS * LEN_PROMPTS_CLS + POOL_SIZE_IMG * LEN_PROMPTS_IMG   # 4
N_TOTAL = 1 + P_LEN + N_PATCH        # 9 tokens per image while prompts are in

SCALE = HD ** -0.5
LN_EPS = 1e-6
SIMAM_EPS = 1e-4
HW = IMG * IMG

VMEM = pl.BlockSpec(memory_space=pltpu.MemorySpace.VMEM)


# ------------------------------ fused kernel ---------------------------------
def _fused_forward_kernel(
    xp_ref,                     # (B*N_PATCH, C_IN*PP) patch-extracted raw image
    patch_w_ref, patch_b_ref,   # (C_IN*PP, D), (1, D)
    cls_ref, pos_ref,           # (1, D), (1+N_PATCH, D)
    n1g_ref, n1b_ref,           # (DEPTH, 1, D)
    qkvw_ref, qkvb_ref,         # (DEPTH, D, 3D), (DEPTH, 1, 3D)
    projw_ref, projb_ref,       # (DEPTH, D, D), (DEPTH, 1, D)
    n2g_ref, n2b_ref,           # (DEPTH, 1, D)
    fc1w_ref, fc1b_ref,         # (DEPTH, D, MLP_H), (DEPTH, 1, MLP_H)
    fc2w_ref, fc2b_ref,         # (DEPTH, MLP_H, D), (DEPTH, 1, D)
    promptf_ref,                # (DEPTH, P_LEN, D) = real(fft(fft(prompt))), folded at init
    poolk_ref,                  # (DEPTH, P_LEN, D) synthetic Pool_TCPA keys
    advpw_ref, advpb_ref,       # (B*N_TOTAL, D) ADVP affine, identity outside prompt rows
    normg_ref, normb_ref,       # (1, D)
    headw_ref, headb_ref,       # (D, HEAD_PAD), (1, HEAD_PAD) zero-padded
    logits_ref,                 # out (B, HEAD_PAD)
    dist_ref,                   # out (1, 1)
    tok_ref,                    # VMEM scratch (B*N_TOTAL, D); per-image rows:
                                #   [cls, p0..p3, patch0..patch3]
):
    f32 = jnp.float32

    def mm(a, b):               # a @ b
        return jax.lax.dot_general(a, b, (((1,), (0,)), ((), ())),
                                   preferred_element_type=f32)

    def mm_t(a, b):             # a @ b.T
        return jax.lax.dot_general(a, b, (((1,), (1,)), ((), ())),
                                   preferred_element_type=f32)

    def layernorm(x, g, bias):
        mu = jnp.mean(x, axis=-1, keepdims=True)
        xc = x - mu
        var = jnp.mean(xc * xc, axis=-1, keepdims=True)
        return xc * jax.lax.rsqrt(var + LN_EPS) * g + bias

    def sigmoid(x):
        return 1.0 / (1.0 + jnp.exp(-x))

    # ---- SimAM + patch embed + cls/pos -> token buffer ----------------------
    tok_ref[...] = jnp.zeros((B * N_TOTAL, D), f32)
    cls_row = cls_ref[...] + pos_ref[0:1, :]
    pos_patch = pos_ref[1:1 + N_PATCH, :]
    patch_b = patch_b_ref[...]
    inv_n = 1.0 / float(HW - 1)
    for b in range(B):
        acc = jnp.zeros((N_PATCH, D), f32)
        for c in range(C_IN):
            # This (N_PATCH, PP) block holds exactly the HW pixels of channel c
            # of image b, so SimAM's per-channel statistics are computed here.
            sl = xp_ref[b * N_PATCH:(b + 1) * N_PATCH, c * PP:(c + 1) * PP]
            mu = jnp.sum(jnp.sum(sl, axis=1, keepdims=True),
                         axis=0, keepdims=True) * (1.0 / HW)
            d = (sl - mu) * (sl - mu)
            s = jnp.sum(jnp.sum(d, axis=1, keepdims=True), axis=0, keepdims=True)
            y = d / (4.0 * (s * inv_n + SIMAM_EPS)) + 0.5
            sl = sl * sigmoid(y)                         # SimAM (parameter-free)
            acc = acc + mm(sl, patch_w_ref[c * PP:(c + 1) * PP, :])
        r0 = b * N_TOTAL
        tok_ref[r0:r0 + 1, :] = cls_row
        tok_ref[r0 + 1 + P_LEN:r0 + N_TOTAL, :] = acc + patch_b + pos_patch

    advp_w = advpw_ref[...]
    advp_b = advpb_ref[...]
    dist = jnp.zeros((1, 1), f32)

    # ---- transformer blocks (depth unrolled, everything VMEM-resident) ------
    for l in range(DEPTH):
        # synthetic Pool_TCPA gate over prompt keys + prompt-distance term
        # TODO(synk): Pool_TCPA undefined upstream; key-similarity gate stand-in.
        poolk = poolk_ref[l]                                      # (P_LEN, D)
        key_n = poolk / (jnp.sqrt(jnp.sum(poolk * poolk, axis=-1,
                                          keepdims=True)) + 1e-6)
        masks = []
        for b in range(B):
            cls_b = tok_ref[b * N_TOTAL:b * N_TOTAL + 1, :]       # (1, D)
            cls_n = cls_b / (jnp.sqrt(jnp.sum(cls_b * cls_b, axis=-1,
                                              keepdims=True)) + 1e-6)
            sim_b = mm_t(cls_n, key_n)                            # (1, P_LEN)
            masks.append(jnp.concatenate(
                [jnp.ones((1, 1), f32), sigmoid(sim_b),
                 jnp.ones((1, N_PATCH), f32)], axis=1))           # (1, N_TOTAL)
            dist = dist + jnp.sum(1.0 - sim_b, axis=-1, keepdims=True)

        # insert this layer's (pre-FFT'd) prompts into the prompt slots
        pf = promptf_ref[l]                                       # (P_LEN, D)
        for b in range(B):
            r0 = b * N_TOTAL
            tok_ref[r0 + 1:r0 + 1 + P_LEN, :] = pf

        x = tok_ref[...]                                          # (B*NT, D)

        # ---- attention: LN1 -> qkv -> ADVP on V -> per-(batch, head) attn ---
        xl = layernorm(x, n1g_ref[l], n1b_ref[l])
        qkv = mm(xl, qkvw_ref[l]) + qkvb_ref[l]                   # (B*NT, 3D)
        q = qkv[:, 0:D]
        k = qkv[:, D:2 * D]
        v = qkv[:, 2 * D:3 * D] * advp_w + advp_b                 # ADVP affine
        proj_w = projw_ref[l]
        proj_b = projb_ref[l]
        for b in range(B):
            r0 = b * N_TOTAL
            q_b = q[r0:r0 + N_TOTAL, :]
            k_b = k[r0:r0 + N_TOTAL, :]
            v_b = v[r0:r0 + N_TOTAL, :]
            acc = jnp.zeros((N_TOTAL, D), f32)
            for h in range(HEADS):
                c0 = h * HD
                s = mm_t(q_b[:, c0:c0 + HD], k_b[:, c0:c0 + HD]) * SCALE
                s = s - jnp.max(s, axis=-1, keepdims=True)
                e = jnp.exp(s)
                p = e / jnp.sum(e, axis=-1, keepdims=True)        # softmax over keys
                # RDVP mask applied AFTER softmax, exactly as in the reference
                # (attn = attn.softmax(); attn = attn * mask).
                p = p * masks[b]
                o = mm(p, v_b[:, c0:c0 + HD])                     # (NT, HD)
                acc = acc + mm(o, proj_w[c0:c0 + HD, :])          # head-merge folded into proj
            attn_out = acc + proj_b
            # Residual.  The reference drops the prompt-query rows (RDVP); here
            # those rows simply become dead and are overwritten next layer.
            tok_ref[r0:r0 + N_TOTAL, :] = x[r0:r0 + N_TOTAL, :] + attn_out

        # ---- MLP (row-local -> both images processed in one matmul) ---------
        xr = tok_ref[...]
        hmid = layernorm(xr, n2g_ref[l], n2b_ref[l])
        hmid = mm(hmid, fc1w_ref[l]) + fc1b_ref[l]                # (B*NT, MLP_H)
        # TODO(synk): tanh-approx GELU (PyTorch nn.GELU default is exact erf).
        gc = 0.7978845608028654
        hmid = 0.5 * hmid * (1.0 + jnp.tanh(gc * (hmid + 0.044715 * hmid * hmid * hmid)))
        hmid = mm(hmid, fc2w_ref[l]) + fc2b_ref[l]                # (B*NT, D)
        tok_ref[...] = xr + hmid

    # ---- final norm + classifier head on cls tokens (lane-dense output) -----
    head_w = headw_ref[...]
    head_b = headb_ref[...]
    for b in range(B):
        cls_b = tok_ref[b * N_TOTAL:b * N_TOTAL + 1, :]
        cls_b = layernorm(cls_b, normg_ref[...], normb_ref[...])
        logits_ref[b:b + 1, :] = mm(cls_b, head_w) + head_b
    dist_ref[...] = dist * (1.0 / float(B * P_LEN))


# ------------------------------ parameters -----------------------------------
def init_params(key):
    ks = iter(jax.random.split(key, 64))
    nrm = lambda shp, std: (std * jax.random.normal(next(ks), shp)).astype(jnp.float32)

    params = {
        "patch_w": nrm((C_IN * PP, D), 0.02),
        "patch_b": jnp.zeros((1, D), jnp.float32),
        "cls_token": nrm((1, D), 0.02),
        "pos_embed": nrm((1 + N_PATCH, D), 0.02),
        "norm_g": jnp.ones((1, D), jnp.float32),
        "norm_b": jnp.zeros((1, D), jnp.float32),
    }

    head_w = nrm((D, NUM_CLASSES), 0.02)
    params["head_w_pad"] = (
        jnp.zeros((D, HEAD_PAD), jnp.float32).at[:, :NUM_CLASSES].set(head_w))
    params["head_b_pad"] = jnp.zeros((1, HEAD_PAD), jnp.float32)

    # ADVP: kaiming-style normal, then w = w*0.1 + 1, b = b*0.1.  Expanded once
    # at init into per-token affines that are identity outside the prompt rows,
    # tiled over the batch (row layout per image: [cls, p0..p3, patch0..patch3]).
    advp_w = nrm((P_LEN, D), math.sqrt(2.0 / D)) * 0.1 + 1.0
    advp_b = nrm((P_LEN, D), math.sqrt(2.0 / D)) * 0.1
    w_full = jnp.concatenate([jnp.ones((1, D)), advp_w, jnp.ones((N_PATCH, D))], axis=0)
    b_full = jnp.concatenate([jnp.zeros((1, D)), advp_b, jnp.zeros((N_PATCH, D))], axis=0)
    params["advp_w_full"] = jnp.tile(w_full, (B, 1)).astype(jnp.float32)
    params["advp_b_full"] = jnp.tile(b_full, (B, 1)).astype(jnp.float32)

    stk = {"n1_g": [], "n1_b": [], "qkv_w": [], "qkv_b": [], "proj_w": [],
           "proj_b": [], "n2_g": [], "n2_b": [], "fc1_w": [], "fc1_b": [],
           "fc2_w": [], "fc2_b": [], "prompt_fft": [], "pool_key": []}
    for _ in range(DEPTH):
        stk["n1_g"].append(jnp.ones((1, D), jnp.float32))
        stk["n1_b"].append(jnp.zeros((1, D), jnp.float32))
        stk["qkv_w"].append(nrm((D, 3 * D), 0.02))
        stk["qkv_b"].append(jnp.zeros((1, 3 * D), jnp.float32))
        stk["proj_w"].append(nrm((D, D), 0.02))
        stk["proj_b"].append(jnp.zeros((1, D), jnp.float32))
        stk["n2_g"].append(jnp.ones((1, D), jnp.float32))
        stk["n2_b"].append(jnp.zeros((1, D), jnp.float32))
        stk["fc1_w"].append(nrm((D, MLP_H), 0.02))
        stk["fc1_b"].append(jnp.zeros((1, MLP_H), jnp.float32))
        stk["fc2_w"].append(nrm((MLP_H, D), 0.02))
        stk["fc2_b"].append(jnp.zeros((1, D), jnp.float32))
        # prompt = fft(fft(prompt, dim=-1), dim=-2).real is parameter-only, so
        # it is folded once here instead of being recomputed every forward.
        prompt = nrm((P_LEN, D), 0.02)
        pfft = jnp.real(jnp.fft.fft(jnp.fft.fft(prompt, axis=-1), axis=-2))
        stk["prompt_fft"].append(pfft.astype(jnp.float32))
        stk["pool_key"].append(nrm((P_LEN, D), 0.02))
    for name, lst in stk.items():
        params[name] = jnp.stack(lst, axis=0)
    return params


# ------------------------------ model forward ---------------------------------
def forward(params, x_nchw):
    assert x_nchw.shape == (B, C_IN, IMG, IMG)
    # Patch extraction is a data-independent relayout; done once in the wrapper
    # so the kernel sees a lane-friendly (B*N_PATCH, C*P*P) slab.
    xp = x_nchw.reshape(B, C_IN, GRID, PATCH, GRID, PATCH)
    xp = xp.transpose(0, 2, 4, 1, 3, 5).reshape(B * N_PATCH, C_IN * PP)

    args = (
        xp,
        params["patch_w"], params["patch_b"],
        params["cls_token"], params["pos_embed"],
        params["n1_g"], params["n1_b"],
        params["qkv_w"], params["qkv_b"],
        params["proj_w"], params["proj_b"],
        params["n2_g"], params["n2_b"],
        params["fc1_w"], params["fc1_b"],
        params["fc2_w"], params["fc2_b"],
        params["prompt_fft"], params["pool_key"],
        params["advp_w_full"], params["advp_b_full"],
        params["norm_g"], params["norm_b"],
        params["head_w_pad"], params["head_b_pad"],
    )
    logits_pad, dist = pl.pallas_call(
        _fused_forward_kernel,
        out_shape=(jax.ShapeDtypeStruct((B, HEAD_PAD), jnp.float32),
                   jax.ShapeDtypeStruct((1, 1), jnp.float32)),
        in_specs=[VMEM] * len(args),
        out_specs=(VMEM, VMEM),
        scratch_shapes=[pltpu.VMEM((B * N_TOTAL, D), jnp.float32)],
    )(*args)
    return logits_pad[:, :NUM_CLASSES], dist[0, 0]


# ------------------------------------ main ------------------------------------
if __name__ == "__main__":
    root = jax.random.PRNGKey(0)
    k_in, k_par = jax.random.split(root)
    x = jax.random.normal(k_in, (B, C_IN, IMG, IMG), dtype=jnp.float32)
    params = init_params(k_par)

    fwd = jax.jit(forward)
    logits, dist = fwd(params, x)
    jax.block_until_ready((logits, dist))

    assert logits.shape == (B, NUM_CLASSES)
    assert logits.dtype == jnp.float32
    assert bool(jnp.all(jnp.isfinite(logits))) and bool(jnp.isfinite(dist))
    print("KERNEL_OK")
</pallas_src>

<mosaic_0001>
module attributes {stable_mosaic.version = 11 : i64} {
  func.func @_fused_forward_kernel(%arg0: memref<8x192xf32, #tpu.memory_space<vmem>>, %arg1: memref<192x32xf32, #tpu.memory_space<vmem>>, %arg2: memref<1x32xf32, #tpu.memory_space<vmem>>, %arg3: memref<1x32xf32, #tpu.memory_space<vmem>>, %arg4: memref<5x32xf32, #tpu.memory_space<vmem>>, %arg5: memref<2x1x32xf32, #tpu.memory_space<vmem>>, %arg6: memref<2x1x32xf32, #tpu.memory_space<vmem>>, %arg7: memref<2x32x96xf32, #tpu.memory_space<vmem>>, %arg8: memref<2x1x96xf32, #tpu.memory_space<vmem>>, %arg9: memref<2x32x32xf32, #tpu.memory_space<vmem>>, %arg10: memref<2x1x32xf32, #tpu.memory_space<vmem>>, %arg11: memref<2x1x32xf32, #tpu.memory_space<vmem>>, %arg12: memref<2x1x32xf32, #tpu.memory_space<vmem>>, %arg13: memref<2x32x128xf32, #tpu.memory_space<vmem>>, %arg14: memref<2x1x128xf32, #tpu.memory_space<vmem>>, %arg15: memref<2x128x32xf32, #tpu.memory_space<vmem>>, %arg16: memref<2x1x32xf32, #tpu.memory_space<vmem>>, %arg17: memref<2x4x32xf32, #tpu.memory_space<vmem>>, %arg18: memref<2x4x32xf32, #tpu.memory_space<vmem>>, %arg19: memref<18x32xf32, #tpu.memory_space<vmem>>, %arg20: memref<18x32xf32, #tpu.memory_space<vmem>>, %arg21: memref<1x32xf32, #tpu.memory_space<vmem>>, %arg22: memref<1x32xf32, #tpu.memory_space<vmem>>, %arg23: memref<32x128xf32, #tpu.memory_space<vmem>>, %arg24: memref<1x128xf32, #tpu.memory_space<vmem>>, %arg25: memref<2x128xf32, #tpu.memory_space<vmem>>, %arg26: memref<1x1xf32, #tpu.memory_space<vmem>>, %arg27: memref<18x32xf32, #tpu.memory_space<vmem>>) attributes {dimension_semantics = [], scalar_prefetch = 0 : i64, scratch_operands = 1 : i64, tpu.core_type = #tpu.core_type<tc>} {
    %cst = arith.constant 0.000000e+00 : f32
    %0 = vector.broadcast %cst : f32 to vector<18x32xf32>
    %c0 = arith.constant 0 : index
    %c0_0 = arith.constant 0 : index
    %1 = vector.load %arg27[%c0, %c0_0] : memref<18x32xf32, #tpu.memory_space<vmem>>, vector<18x32xf32>
    tpu.vector_store %arg27[%c0, %c0_0], %0 {strides = array<i32>} : memref<18x32xf32, #tpu.memory_space<vmem>>, vector<18x32xf32>,
    %c0_1 = arith.constant 0 : index
    %c0_2 = arith.constant 0 : index
    %2 = vector.load %arg3[%c0_1, %c0_2] : memref<1x32xf32, #tpu.memory_space<vmem>>, vector<1x32xf32>
    %c0_3 = arith.constant 0 : index
    %c0_4 = arith.constant 0 : index
    %3 = vector.load %arg4[%c0_3, %c0_4] : memref<5x32xf32, #tpu.memory_space<vmem>>, vector<1x32xf32>
    %4 = arith.addf %2, %3 : vector<1x32xf32>
    %c1 = arith.constant 1 : index
    %c0_5 = arith.constant 0 : index
    %5 = vector.load %arg4[%c1, %c0_5] : memref<5x32xf32, #tpu.memory_space<vmem>>, vector<4x32xf32>
    %c0_6 = arith.constant 0 : index
    %c0_7 = arith.constant 0 : index
    %6 = vector.load %arg2[%c0_6, %c0_7] : memref<1x32xf32, #tpu.memory_space<vmem>>, vector<1x32xf32>
    %cst_8 = arith.constant 0.000000e+00 : f32
    %7 = vector.broadcast %cst_8 : f32 to vector<4x32xf32>
    %c0_9 = arith.constant 0 : index
    %c0_10 = arith.constant 0 : index
    %8 = vector.load %arg0[%c0_9, %c0_10] : memref<8x192xf32, #tpu.memory_space<vmem>>, vector<4x64xf32>
    %cst_11 = arith.constant dense<0.000000e+00> : vector<4xf32>
    %9 = vector.multi_reduction <add>, %8, %cst_11 [1] : vector<4x64xf32> to vector<4xf32>
    %10 = vector.shape_cast %9 : vector<4xf32> to vector<4x1xf32>
    %cst_12 = arith.constant dense<0.000000e+00> : vector<1xf32>
    %11 = vector.multi_reduction <add>, %10, %cst_12 [0] : vector<4x1xf32> to vector<1xf32>
    %12 = vector.shape_cast %11 : vector<1xf32> to vector<1x1xf32>
    %cst_13 = arith.constant 3.906250e-03 : f32
    %13 = vector.broadcast %cst_13 : f32 to vector<1x1xf32>
    %14 = arith.mulf %12, %13 : vector<1x1xf32>
    %15 = vector.broadcast %14 : vector<1x1xf32> to vector<4x64xf32>
    %16 = arith.subf %8, %15 : vector<4x64xf32>
    %17 = vector.broadcast %14 : vector<1x1xf32> to vector<4x64xf32>
    %18 = arith.subf %8, %17 : vector<4x64xf32>
    %19 = arith.mulf %16, %18 : vector<4x64xf32>
    %cst_14 = arith.constant dense<0.000000e+00> : vector<4xf32>
    %20 = vector.multi_reduction <add>, %19, %cst_14 [1] : vector<4x64xf32> to vector<4xf32>
    %21 = vector.shape_cast %20 : vector<4xf32> to vector<4x1xf32>
    %cst_15 = arith.constant dense<0.000000e+00> : vector<1xf32>
    %22 = vector.multi_reduction <add>, %21, %cst_15 [0] : vector<4x1xf32> to vector<1xf32>
    %23 = vector.shape_cast %22 : vector<1xf32> to vector<1x1xf32>
    %cst_16 = arith.constant 0.00392156886 : f32
    %24 = vector.broadcast %cst_16 : f32 to vector<1x1xf32>
    %25 = arith.mulf %23, %24 : vector<1x1xf32>
    %cst_17 = arith.constant 9.99999974E-5 : f32
    %26 = vector.broadcast %cst_17 : f32 to vector<1x1xf32>
    %27 = arith.addf %25, %26 : vector<1x1xf32>
    %cst_18 = arith.constant 4.000000e+00 : f32
    %28 = vector.broadcast %cst_18 : f32 to vector<1x1xf32>
    %29 = arith.mulf %28, %27 : vector<1x1xf32>
    %30 = vector.broadcast %29 : vector<1x1xf32> to vector<4x64xf32>
    %31 = arith.divf %19, %30 : vector<4x64xf32>
    %cst_19 = arith.constant 5.000000e-01 : f32
    %32 = vector.broadcast %cst_19 : f32 to vector<4x64xf32>
    %33 = arith.addf %31, %32 : vector<4x64xf32>
    %cst_20 = arith.constant 0.000000e+00 : f32
    %34 = vector.broadcast %cst_20 : f32 to vector<4x64xf32>
    %35 = arith.subf %34, %33 : vector<4x64xf32>
    %36 = math.exp %35 : vector<4x64xf32>
    %cst_21 = arith.constant 1.000000e+00 : f32
    %37 = vector.broadcast %cst_21 : f32 to vector<4x64xf32>
    %38 = arith.addf %37, %36 : vector<4x64xf32>
    %cst_22 = arith.constant 1.000000e+00 : f32
    %39 = vector.broadcast %cst_22 : f32 to vector<4x64xf32>
    %40 = arith.divf %39, %38 : vector<4x64xf32>
    %41 = arith.mulf %8, %40 : vector<4x64xf32>
    %c0_23 = arith.constant 0 : index
    %c0_24 = arith.constant 0 : index
    %42 = vector.load %arg1[%c0_23, %c0_24] : memref<192x32xf32, #tpu.memory_space<vmem>>, vector<64x32xf32>
    %cst_25 = arith.constant dense<0.000000e+00> : vector<4x32xf32>
    %43 = tpu.matmul %41, %42, %cst_25 {dimension_numbers = #tpu.dot_dimension_numbers<[1], [0], [0], [1], [0, 0, 1, 1], [], []>} : vector<4x64xf32>, vector<64x32xf32>, vector<4x32xf32> -> vector<4x32xf32>
    %44 = arith.addf %7, %43 : vector<4x32xf32>
    %c0_26 = arith.constant 0 : index
    %c64 = arith.constant 64 : index
    %45 = vector.load %arg0[%c0_26, %c64] : memref<8x192xf32, #tpu.memory_space<vmem>>, vector<4x64xf32>
    %cst_27 = arith.constant dense<0.000000e+00> : vector<4xf32>
    %46 = vector.multi_reduction <add>, %45, %cst_27 [1] : vector<4x64xf32> to vector<4xf32>
    %47 = vector.shape_cast %46 : vector<4xf32> to vector<4x1xf32>
    %cst_28 = arith.constant dense<0.000000e+00> : vector<1xf32>
    %48 = vector.multi_reduction <add>, %47, %cst_28 [0] : vector<4x1xf32> to vector<1xf32>
    %49 = vector.shape_cast %48 : vector<1xf32> to vector<1x1xf32>
    %cst_29 = arith.constant 3.906250e-03 : f32
    %50 = vector.broadcast %cst_29 : f32 to vector<1x1xf32>
    %51 = arith.mulf %49, %50 : vector<1x1xf32>
    %52 = vector.broadcast %51 : vector<1x1xf32> to vector<4x64xf32>
    %53 = arith.subf %45, %52 : vector<4x64xf32>
    %54 = vector.broadcast %51 : vector<1x1xf32> to vector<4x64xf32>
    %55 = arith.subf %45, %54 : vector<4x64xf32>
    %56 = arith.mulf %53, %55 : vector<4x64xf32>
    %cst_30 = arith.constant dense<0.000000e+00> : vector<4xf32>
    %57 = vector.multi_reduction <add>, %56, %cst_30 [1] : vector<4x64xf32> to vector<4xf32>
    %58 = vector.shape_cast %57 : vector<4xf32> to vector<4x1xf32>
    %cst_31 = arith.constant dense<0.000000e+00> : vector<1xf32>
    %59 = vector.multi_reduction <add>, %58, %cst_31 [0] : vector<4x1xf32> to vector<1xf32>
    %60 = vector.shape_cast %59 : vector<1xf32> to vector<1x1xf32>
    %cst_32 = arith.constant 0.00392156886 : f32
    %61 = vector.broadcast %cst_32 : f32 to vector<1x1xf32>
    %62 = arith.mulf %60, %61 : vector<1x1xf32>
    %cst_33 = arith.constant 9.99999974E-5 : f32
    %63 = vector.broadcast %cst_33 : f32 to vector<1x1xf32>
    %64 = arith.addf %62, %63 : vector<1x1xf32>
    %cst_34 = arith.constant 4.000000e+00 : f32
    %65 = vector.broadcast %cst_34 : f32 to vector<1x1xf32>
    %66 = arith.mulf %65, %64 : vector<1x1xf32>
    %67 = vector.broadcast %66 : vector<1x1xf32> to vector<4x64xf32>
    %68 = arith.divf %56, %67 : vector<4x64xf32>
    %cst_35 = arith.constant 5.000000e-01 : f32
    %69 = vector.broadcast %cst_35 : f32 to vector<4x64xf32>
    %70 = arith.addf %68, %69 : vector<4x64xf32>
    %cst_36 = arith.constant 0.000000e+00 : f32
    %71 = vector.broadcast %cst_36 : f32 to vector<4x64xf32>
    %72 = arith.subf %71, %70 : vector<4x64xf32>
    %73 = math.exp %72 : vector<4x64xf32>
    %cst_37 = arith.constant 1.000000e+00 : f32
    %74 = vector.broadcast %cst_37 : f32 to vector<4x64xf32>
    %75 = arith.addf %74, %73 : vector<4x64xf32>
    %cst_38 = arith.constant 1.000000e+00 : f32
    %76 = vector.broadcast %cst_38 : f32 to vector<4x64xf32>
    %77 = arith.divf %76, %75 : vector<4x64xf32>
    %78 = arith.mulf %45, %77 : vector<4x64xf32>
    %c64_39 = arith.constant 64 : index
    %c0_40 = arith.constant 0 : index
    %79 = vector.load %arg1[%c64_39, %c0_40] : memref<192x32xf32, #tpu.memory_space<vmem>>, vector<64x32xf32>
    %cst_41 = arith.constant dense<0.000000e+00> : vector<4x32xf32>
    %80 = tpu.matmul %78, %79, %cst_41 {dimension_numbers = #tpu.dot_dimension_numbers<[1], [0], [0], [1], [0, 0, 1, 1], [], []>} : vector<4x64xf32>, vector<64x32xf32>, vector<4x32xf32> -> vector<4x32xf32>
    %81 = arith.addf %44, %80 : vector<4x32xf32>
    %c0_42 = arith.constant 0 : index
    %c128 = arith.constant 128 : index
    %82 = vector.load %arg0[%c0_42, %c128] : memref<8x192xf32, #tpu.memory_space<vmem>>, vector<4x64xf32>
    %cst_43 = arith.constant dense<0.000000e+00> : vector<4xf32>
    %83 = vector.multi_reduction <add>, %82, %cst_43 [1] : vector<4x64xf32> to vector<4xf32>
    %84 = vector.shape_cast %83 : vector<4xf32> to vector<4x1xf32>
    %cst_44 = arith.constant dense<0.000000e+00> : vector<1xf32>
    %85 = vector.multi_reduction <add>, %84, %cst_44 [0] : vector<4x1xf32> to vector<1xf32>
    %86 = vector.shape_cast %85 : vector<1xf32> to vector<1x1xf32>
    %cst_45 = arith.constant 3.906250e-03 : f32
    %87 = vector.broadcast %cst_45 : f32 to vector<1x1xf32>
    %88 = arith.mulf %86, %87 : vector<1x1xf32>
    %89 = vector.broadcast %88 : vector<1x1xf32> to vector<4x64xf32>
    %90 = arith.subf %82, %89 : vector<4x64xf32>
    %91 = vector.broadcast %88 : vector<1x1xf32> to vector<4x64xf32>
    %92 = arith.subf %82, %91 : vector<4x64xf32>
    %93 = arith.mulf %90, %92 : vector<4x64xf32>
    %cst_46 = arith.constant dense<0.000000e+00> : vector<4xf32>
    %94 = vector.multi_reduction <add>, %93, %cst_46 [1] : vector<4x64xf32> to vector<4xf32>
    %95 = vector.shape_cast %94 : vector<4xf32> to vector<4x1xf32>
    %cst_47 = arith.constant dense<0.000000e+00> : vector<1xf32>
    %96 = vector.multi_reduction <add>, %95, %cst_47 [0] : vector<4x1xf32> to vector<1xf32>
    %97 = vector.shape_cast %96 : vector<1xf32> to vector<1x1xf32>
    %cst_48 = arith.constant 0.00392156886 : f32
    %98 = vector.broadcast %cst_48 : f32 to vector<1x1xf32>
    %99 = arith.mulf %97, %98 : vector<1x1xf32>
    %cst_49 = arith.constant 9.99999974E-5 : f32
    %100 = vector.broadcast %cst_49 : f32 to vector<1x1xf32>
    %101 = arith.addf %99, %100 : vector<1x1xf32>
    %cst_50 = arith.constant 4.000000e+00 : f32
    %102 = vector.broadcast %cst_50 : f32 to vector<1x1xf32>
    %103 = arith.mulf %102, %101 : vector<1x1xf32>
    %104 = vector.broadcast %103 : vector<1x1xf32> to vector<4x64xf32>
    %105 = arith.divf %93, %104 : vector<4x64xf32>
    %cst_51 = arith.constant 5.000000e-01 : f32
    %106 = vector.broadcast %cst_51 : f32 to vector<4x64xf32>
    %107 = arith.addf %105, %106 : vector<4x64xf32>
    %cst_52 = arith.constant 0.000000e+00 : f32
    %108 = vector.broadcast %cst_52 : f32 to vector<4x64xf32>
    %109 = arith.subf %108, %107 : vector<4x64xf32>
    %110 = math.exp %109 : vector<4x64xf32>
    %cst_53 = arith.constant 1.000000e+00 : f32
    %111 = vector.broadcast %cst_53 : f32 to vector<4x64xf32>
    %112 = arith.addf %111, %110 : vector<4x64xf32>
    %cst_54 = arith.constant 1.000000e+00 : f32
    %113 = vector.broadcast %cst_54 : f32 to vector<4x64xf32>
    %114 = arith.divf %113, %112 : vector<4x64xf32>
    %115 = arith.mulf %82, %114 : vector<4x64xf32>
    %c128_55 = arith.constant 128 : index
    %c0_56 = arith.constant 0 : index
    %116 = vector.load %arg1[%c128_55, %c0_56] : memref<192x32xf32, #tpu.memory_space<vmem>>, vector<64x32xf32>
    %cst_57 = arith.constant dense<0.000000e+00> : vector<4x32xf32>
    %117 = tpu.matmul %115, %116, %cst_57 {dimension_numbers = #tpu.dot_dimension_numbers<[1], [0], [0], [1], [0, 0, 1, 1], [], []>} : vector<4x64xf32>, vector<64x32xf32>, vector<4x32xf32> -> vector<4x32xf32>
    %118 = arith.addf %81, %117 : vector<4x32xf32>
    %c0_58 = arith.constant 0 : index
    %c0_59 = arith.constant 0 : index
    %119 = vector.load %arg27[%c0_58, %c0_59] : memref<18x32xf32, #tpu.memory_space<vmem>>, vector<1x32xf32>
    tpu.vector_store %arg27[%c0_58, %c0_59], %4 {strides = array<i32>} : memref<18x32xf32, #tpu.memory_space<vmem>>, vector<1x32xf32>,
    %120 = vector.broadcast %6 : vector<1x32xf32> to vector<4x32xf32>
    %121 = arith.addf %118, %120 : vector<4x32xf32>
    %122 = arith.addf %121, %5 : vector<4x32xf32>
    %c5 = arith.constant 5 : index
    %c0_60 = arith.constant 0 : index
    %123 = vector.load %arg27[%c5, %c0_60] : memref<18x32xf32, #tpu.memory_space<vmem>>, vector<4x32xf32>
    tpu.vector_store %arg27[%c5, %c0_60], %122 {strides = array<i32>} : memref<18x32xf32, #tpu.memory_space<vmem>>, vector<4x32xf32>,
    %cst_61 = arith.constant 0.000000e+00 : f32
    %124 = vector.broadcast %cst_61 : f32 to vector<4x32xf32>
    %c4 = arith.constant 4 : index
    %c0_62 = arith.constant 0 : index
    %125 = vector.load %arg0[%c4, %c0_62] : memref<8x192xf32, #tpu.memory_space<vmem>>, vector<4x64xf32>
    %cst_63 = arith.constant dense<0.000000e+00> : vector<4xf32>
    %126 = vector.multi_reduction <add>, %125, %cst_63 [1] : vector<4x64xf32> to vector<4xf32>
    %127 = vector.shape_cast %126 : vector<4xf32> to vector<4x1xf32>
    %cst_64 = arith.constant dense<0.000000e+00> : vector<1xf32>
    %128 = vector.multi_reduction <add>, %127, %cst_64 [0] : vector<4x1xf32> to vector<1xf32>
    %129 = vector.shape_cast %128 : vector<1xf32> to vector<1x1xf32>
    %cst_65 = arith.constant 3.906250e-03 : f32
    %130 = vector.broadcast %cst_65 : f32 to vector<1x1xf32>
    %131 = arith.mulf %129, %130 : vector<1x1xf32>
    %132 = vector.broadcast %131 : vector<1x1xf32> to vector<4x64xf32>
    %133 = arith.subf %125, %132 : vector<4x64xf32>
    %134 = vector.broadcast %131 : vector<1x1xf32> to vector<4x64xf32>
    %135 = arith.subf %125, %134 : vector<4x64xf32>
    %136 = arith.mulf %133, %135 : vector<4x64xf32>
    %cst_66 = arith.constant dense<0.000000e+00> : vector<4xf32>
    %137 = vector.multi_reduction <add>, %136, %cst_66 [1] : vector<4x64xf32> to vector<4xf32>
    %138 = vector.shape_cast %137 : vector<4xf32> to vector<4x1xf32>
    %cst_67 = arith.constant dense<0.000000e+00> : vector<1xf32>
    %139 = vector.multi_reduction <add>, %138, %cst_67 [0] : vector<4x1xf32> to vector<1xf32>
    %140 = vector.shape_cast %139 : vector<1xf32> to vector<1x1xf32>
    %cst_68 = arith.constant 0.00392156886 : f32
    %141 = vector.broadcast %cst_68 : f32 to vector<1x1xf32>
    %142 = arith.mulf %140, %141 : vector<1x1xf32>
    %cst_69 = arith.constant 9.99999974E-5 : f32
    %143 = vector.broadcast %cst_69 : f32 to vector<1x1xf32>
    %144 = arith.addf %142, %143 : vector<1x1xf32>
    %cst_70 = arith.constant 4.000000e+00 : f32
    %145 = vector.broadcast %cst_70 : f32 to vector<1x1xf32>
    %146 = arith.mulf %145, %144 : vector<1x1xf32>
    %147 = vector.broadcast %146 : vector<1x1xf32> to vector<4x64xf32>
    %148 = arith.divf %136, %147 : vector<4x64xf32>
    %cst_71 = arith.constant 5.000000e-01 : f32
    %149 = vector.broadcast %cst_71 : f32 to vector<4x64xf32>
    %150 = arith.addf %148, %149 : vector<4x64xf32>
    %cst_72 = arith.constant 0.000000e+00 : f32
    %151 = vector.broadcast %cst_72 : f32 to vector<4x64xf32>
    %152 = arith.subf %151, %150 : vector<4x64xf32>
    %153 = math.exp %152 : vector<4x64xf32>
    %cst_73 = arith.constant 1.000000e+00 : f32
    %154 = vector.broadcast %cst_73 : f32 to vector<4x64xf32>
    %155 = arith.addf %154, %153 : vector<4x64xf32>
    %cst_74 = arith.constant 1.000000e+00 : f32
    %156 = vector.broadcast %cst_74 : f32 to vector<4x64xf32>
    %157 = arith.divf %156, %155 : vector<4x64xf32>
    %158 = arith.mulf %125, %157 : vector<4x64xf32>
    %c0_75 = arith.constant 0 : index
    %c0_76 = arith.constant 0 : index
    %159 = vector.load %arg1[%c0_75, %c0_76] : memref<192x32xf32, #tpu.memory_space<vmem>>, vector<64x32xf32>
    %cst_77 = arith.constant dense<0.000000e+00> : vector<4x32xf32>
    %160 = tpu.matmul %158, %159, %cst_77 {dimension_numbers = #tpu.dot_dimension_numbers<[1], [0], [0], [1], [0, 0, 1, 1], [], []>} : vector<4x64xf32>, vector<64x32xf32>, vector<4x32xf32> -> vector<4x32xf32>
    %161 = arith.addf %124, %160 : vector<4x32xf32>
    %c4_78 = arith.constant 4 : index
    %c64_79 = arith.constant 64 : index
    %162 = vector.load %arg0[%c4_78, %c64_79] : memref<8x192xf32, #tpu.memory_space<vmem>>, vector<4x64xf32>
    %cst_80 = arith.constant dense<0.000000e+00> : vector<4xf32>
    %163 = vector.multi_reduction <add>, %162, %cst_80 [1] : vector<4x64xf32> to vector<4xf32>
    %164 = vector.shape_cast %163 : vector<4xf32> to vector<4x1xf32>
    %cst_81 = arith.constant dense<0.000000e+00> : vector<1xf32>
    %165 = vector.multi_reduction <add>, %164, %cst_81 [0] : vector<4x1xf32> to vector<1xf32>
    %166 = vector.shape_cast %165 : vector<1xf32> to vector<1x1xf32>
    %cst_82 = arith.constant 3.906250e-03 : f32
    %167 = vector.broadcast %cst_82 : f32 to vector<1x1xf32>
    %168 = arith.mulf %166, %167 : vector<1x1xf32>
    %169 = vector.broadcast %168 : vector<1x1xf32> to vector<4x64xf32>
    %170 = arith.subf %162, %169 : vector<4x64xf32>
    %171 = vector.broadcast %168 : vector<1x1xf32> to vector<4x64xf32>
    %172 = arith.subf %162, %171 : vector<4x64xf32>
    %173 = arith.mulf %170, %172 : vector<4x64xf32>
    %cst_83 = arith.constant dense<0.000000e+00> : vector<4xf32>
    %174 = vector.multi_reduction <add>, %173, %cst_83 [1] : vector<4x64xf32> to vector<4xf32>
    %175 = vector.shape_cast %174 : vector<4xf32> to vector<4x1xf32>
    %cst_84 = arith.constant dense<0.000000e+00> : vector<1xf32>
    %176 = vector.multi_reduction <add>, %175, %cst_84 [0] : vector<4x1xf32> to vector<1xf32>
    %177 = vector.shape_cast %176 : vector<1xf32> to vector<1x1xf32>
    %cst_85 = arith.constant 0.00392156886 : f32
    %178 = vector.broadcast %cst_85 : f32 to vector<1x1xf32>
    %179 = arith.mulf %177, %178 : vector<1x1xf32>
    %cst_86 = arith.constant 9.99999974E-5 : f32
    %180 = vector.broadcast %cst_86 : f32 to vector<1x1xf32>
    %181 = arith.addf %179, %180 : vector<1x1xf32>
    %cst_87 = arith.constant 4.000000e+00 : f32
    %182 = vector.broadcast %cst_87 : f32 to vector<1x1xf32>
    %183 = arith.mulf %182, %181 : vector<1x1xf32>
    %184 = vector.broadcast %183 : vector<1x1xf32> to vector<4x64xf32>
    %185 = arith.divf %173, %184 : vector<4x64xf32>
    %cst_88 = arith.constant 5.000000e-01 : f32
    %186 = vector.broadcast %cst_88 : f32 to vector<4x64xf32>
    %187 = arith.addf %185, %186 : vector<4x64xf32>
    %cst_89 = arith.constant 0.000000e+00 : f32
    %188 = vector.broadcast %cst_89 : f32 to vector<4x64xf32>
    %189 = arith.subf %188, %187 : vector<4x64xf32>
    %190 = math.exp %189 : vector<4x64xf32>
    %cst_90 = arith.constant 1.000000e+00 : f32
    %191 = vector.broadcast %cst_90 : f32 to vector<4x64xf32>
    %192 = arith.addf %191, %190 : vector<4x64xf32>
    %cst_91 = arith.constant 1.000000e+00 : f32
    %193 = vector.broadcast %cst_91 : f32 to vector<4x64xf32>
    %194 = arith.divf %193, %192 : vector<4x64xf32>
    %195 = arith.mulf %162, %194 : vector<4x64xf32>
    %c64_92 = arith.constant 64 : index
    %c0_93 = arith.constant 0 : index
    %196 = vector.load %arg1[%c64_92, %c0_93] : memref<192x32xf32, #tpu.memory_space<vmem>>, vector<64x32xf32>
    %cst_94 = arith.constant dense<0.000000e+00> : vector<4x32xf32>
    %197 = tpu.matmul %195, %196, %cst_94 {dimension_numbers = #tpu.dot_dimension_numbers<[1], [0], [0], [1], [0, 0, 1, 1], [], []>} : vector<4x64xf32>, vector<64x32xf32>, vector<4x32xf32> -> vector<4x32xf32>
    %198 = arith.addf %161, %197 : vector<4x32xf32>
    %c4_95 = arith.constant 4 : index
    %c128_96 = arith.constant 128 : index
    %199 = vector.load %arg0[%c4_95, %c128_96] : memref<8x192xf32, #tpu.memory_space<vmem>>, vector<4x64xf32>
    %cst_97 = arith.constant dense<0.000000e+00> : vector<4xf32>
    %200 = vector.multi_reduction <add>, %199, %cst_97 [1] : vector<4x64xf32> to vector<4xf32>
    %201 = vector.shape_cast %200 : vector<4xf32> to vector<4x1xf32>
    %cst_98 = arith.constant dense<0.000000e+00> : vector<1xf32>
    %202 = vector.multi_reduction <add>, %201, %cst_98 [0] : vector<4x1xf32> to vector<1xf32>
    %203 = vector.shape_cast %202 : vector<1xf32> to vector<1x1xf32>
    %cst_99 = arith.constant 3.906250e-03 : f32
    %204 = vector.broadcast %cst_99 : f32 to vector<1x1xf32>
    %205 = arith.mulf %203, %204 : vector<1x1xf32>
    %206 = vector.broadcast %205 : vector<1x1xf32> to vector<4x64xf32>
    %207 = arith.subf %199, %206 : vector<4x64xf32>
    %208 = vector.broadcast %205 : vector<1x1xf32> to vector<4x64xf32>
    %209 = arith.subf %199, %208 : vector<4x64xf32>
    %210 = arith.mulf %207, %209 : vector<4x64xf32>
    %cst_100 = arith.constant dense<0.000000e+00> : vector<4xf32>
    %211 = vector.multi_reduction <add>, %210, %cst_100 [1] : vector<4x64xf32> to vector<4xf32>
    %212 = vector.shape_cast %211 : vector<4xf32> to vector<4x1xf32>
    %cst_101 = arith.constant dense<0.000000e+00> : vector<1xf32>
    %213 = vector.multi_reduction <add>, %212, %cst_101 [0] : vector<4x1xf32> to vector<1xf32>
    %214 = vector.shape_cast %213 : vector<1xf32> to vector<1x1xf32>
    %cst_102 = arith.constant 0.00392156886 : f32
    %215 = vector.broadcast %cst_102 : f32 to vector<1x1xf32>
    %216 = arith.mulf %214, %215 : vector<1x1xf32>
    %cst_103 = arith.constant 9.99999974E-5 : f32
    %217 = vector.broadcast %cst_103 : f32 to vector<1x1xf32>
    %218 = arith.addf %216, %217 : vector<1x1xf32>
    %cst_104 = arith.constant 4.000000e+00 : f32
    %219 = vector.broadcast %cst_104 : f32 to vector<1x1xf32>
    %220 = arith.mulf %219, %218 : vector<1x1xf32>
    %221 = vector.broadcast %220 : vector<1x1xf32> to vector<4x64xf32>
    %222 = arith.divf %210, %221 : vector<4x64xf32>
    %cst_105 = arith.constant 5.000000e-01 : f32
    %223 = vector.broadcast %cst_105 : f32 to vector<4x64xf32>
    %224 = arith.addf %222, %223 : vector<4x64xf32>
    %cst_106 = arith.constant 0.000000e+00 : f32
    %225 = vector.broadcast %cst_106 : f32 to vector<4x64xf32>
    %226 = arith.subf %225, %224 : vector<4x64xf32>
    %227 = math.exp %226 : vector<4x64xf32>
    %cst_107 = arith.constant 1.000000e+00 : f32
    %228 = vector.broadcast %cst_107 : f32 to vector<4x64xf32>
    %229 = arith.addf %228, %227 : vector<4x64xf32>
    %cst_108 = arith.constant 1.000000e+00 : f32
    %230 = vector.broadcast %cst_108 : f32 to vector<4x64xf32>
    %231 = arith.divf %230, %229 : vector<4x64xf32>
    %232 = arith.mulf %199, %231 : vector<4x64xf32>
    %c128_109 = arith.constant 128 : index
    %c0_110 = arith.constant 0 : index
    %233 = vector.load %arg1[%c128_109, %c0_110] : memref<192x32xf32, #tpu.memory_space<vmem>>, vector<64x32xf32>
    %cst_111 = arith.constant dense<0.000000e+00> : vector<4x32xf32>
    %234 = tpu.matmul %232, %233, %cst_111 {dimension_numbers = #tpu.dot_dimension_numbers<[1], [0], [0], [1], [0, 0, 1, 1], [], []>} : vector<4x64xf32>, vector<64x32xf32>, vector<4x32xf32> -> vector<4x32xf32>
    %235 = arith.addf %198, %234 : vector<4x32xf32>
    %c9 = arith.constant 9 : index
    %c0_112 = arith.constant 0 : index
    %236 = vector.load %arg27[%c9, %c0_112] : memref<18x32xf32, #tpu.memory_space<vmem>>, vector<1x32xf32>
    tpu.vector_store %arg27[%c9, %c0_112], %4 {strides = array<i32>} : memref<18x32xf32, #tpu.memory_space<vmem>>, vector<1x32xf32>,
    %237 = vector.broadcast %6 : vector<1x32xf32> to vector<4x32xf32>
    %238 = arith.addf %235, %237 : vector<4x32xf32>
    %239 = arith.addf %238, %5 : vector<4x32xf32>
    %c14 = arith.constant 14 : index
    %c0_113 = arith.constant 0 : index
    %240 = vector.load %arg27[%c14, %c0_113] : memref<18x32xf32, #tpu.memory_space<vmem>>, vector<4x32xf32>
    tpu.vector_store %arg27[%c14, %c0_113], %239 {strides = array<i32>} : memref<18x32xf32, #tpu.memory_space<vmem>>, vector<4x32xf32>,
    %c0_114 = arith.constant 0 : index
    %c0_115 = arith.constant 0 : index
    %241 = vector.load %arg19[%c0_114, %c0_115] : memref<18x32xf32, #tpu.memory_space<vmem>>, vector<18x32xf32>
    %c0_116 = arith.constant 0 : index
    %c0_117 = arith.constant 0 : index
    %242 = vector.load %arg20[%c0_116, %c0_117] : memref<18x32xf32, #tpu.memory_space<vmem>>, vector<18x32xf32>
    %cst_118 = arith.constant 0.000000e+00 : f32
    %243 = vector.broadcast %cst_118 : f32 to vector<1x1xf32>
    %c0_119 = arith.constant 0 : index
    %c0_120 = arith.constant 0 : index
    %c0_121 = arith.constant 0 : index
    %244 = vector.load %arg18[%c0_119, %c0_120, %c0_121] : memref<2x4x32xf32, #tpu.memory_space<vmem>>, vector<1x4x32xf32>
    %245 = vector.shape_cast %244 : vector<1x4x32xf32> to vector<4x32xf32>
    %246 = arith.mulf %245, %245 : vector<4x32xf32>
    %cst_122 = arith.constant dense<0.000000e+00> : vector<4xf32>
    %247 = vector.multi_reduction <add>, %246, %cst_122 [1] : vector<4x32xf32> to vector<4xf32>
    %248 = vector.shape_cast %247 : vector<4xf32> to vector<4x1xf32>
    %249 = math.sqrt %248 : vector<4x1xf32>
    %cst_123 = arith.constant 9.99999997E-7 : f32
    %250 = vector.broadcast %cst_123 : f32 to vector<4x1xf32>
    %251 = arith.addf %249, %250 : vector<4x1xf32>
    %252 = vector.broadcast %251 : vector<4x1xf32> to vector<4x32xf32>
    %253 = arith.divf %245, %252 : vector<4x32xf32>
    %c0_124 = arith.constant 0 : index
    %c0_125 = arith.constant 0 : index
    %254 = vector.load %arg27[%c0_124, %c0_125] : memref<18x32xf32, #tpu.memory_space<vmem>>, vector<1x32xf32>
    %255 = arith.mulf %254, %254 : vector<1x32xf32>
    %cst_126 = arith.constant dense<0.000000e+00> : vector<1xf32>
    %256 = vector.multi_reduction <add>, %255, %cst_126 [1] : vector<1x32xf32> to vector<1xf32>
    %257 = vector.shape_cast %256 : vector<1xf32> to vector<1x1xf32>
    %258 = math.sqrt %257 : vector<1x1xf32>
    %cst_127 = arith.constant 9.99999997E-7 : f32
    %259 = vector.broadcast %cst_127 : f32 to vector<1x1xf32>
    %260 = arith.addf %258, %259 : vector<1x1xf32>
    %261 = vector.broadcast %260 : vector<1x1xf32> to vector<1x32xf32>
    %262 = arith.divf %254, %261 : vector<1x32xf32>
    %cst_128 = arith.constant dense<0.000000e+00> : vector<1x4xf32>
    %263 = tpu.matmul %262, %253, %cst_128 {dimension_numbers = #tpu.dot_dimension_numbers<[1], [1], [0], [0], [0, 0, 1, 0], [], []>} : vector<1x32xf32>, vector<4x32xf32>, vector<1x4xf32> -> vector<1x4xf32>
    %cst_129 = arith.constant 1.000000e+00 : f32
    %264 = vector.broadcast %cst_129 : f32 to vector<1x1xf32>
    %cst_130 = arith.constant 0.000000e+00 : f32
    %265 = vector.broadcast %cst_130 : f32 to vector<1x4xf32>
    %266 = arith.subf %265, %263 : vector<1x4xf32>
    %267 = math.exp %266 : vector<1x4xf32>
    %cst_131 = arith.constant 1.000000e+00 : f32
    %268 = vector.broadcast %cst_131 : f32 to vector<1x4xf32>
    %269 = arith.addf %268, %267 : vector<1x4xf32>
    %cst_132 = arith.constant 1.000000e+00 : f32
    %270 = vector.broadcast %cst_132 : f32 to vector<1x4xf32>
    %271 = arith.divf %270, %269 : vector<1x4xf32>
    %cst_133 = arith.constant 1.000000e+00 : f32
    %272 = vector.broadcast %cst_133 : f32 to vector<1x4xf32>
    %273 = tpu.concatenate %264, %271, %272 in 1 : vector<1x1xf32>, vector<1x4xf32>, vector<1x4xf32> -> vector<1x9xf32>
    %cst_134 = arith.constant 1.000000e+00 : f32
    %274 = vector.broadcast %cst_134 : f32 to vector<1x4xf32>
    %275 = arith.subf %274, %263 : vector<1x4xf32>
    %cst_135 = arith.constant dense<0.000000e+00> : vector<1xf32>
    %276 = vector.multi_reduction <add>, %275, %cst_135 [1] : vector<1x4xf32> to vector<1xf32>
    %277 = vector.shape_cast %276 : vector<1xf32> to vector<1x1xf32>
    %278 = arith.addf %243, %277 : vector<1x1xf32>
    %c9_136 = arith.constant 9 : index
    %c0_137 = arith.constant 0 : index
    %279 = vector.load %arg27[%c9_136, %c0_137] : memref<18x32xf32, #tpu.memory_space<vmem>>, vector<1x32xf32>
    %280 = arith.mulf %279, %279 : vector<1x32xf32>
    %cst_138 = arith.constant dense<0.000000e+00> : vector<1xf32>
    %281 = vector.multi_reduction <add>, %280, %cst_138 [1] : vector<1x32xf32> to vector<1xf32>
    %282 = vector.shape_cast %281 : vector<1xf32> to vector<1x1xf32>
    %283 = math.sqrt %282 : vector<1x1xf32>
    %cst_139 = arith.constant 9.99999997E-7 : f32
    %284 = vector.broadcast %cst_139 : f32 to vector<1x1xf32>
    %285 = arith.addf %283, %284 : vector<1x1xf32>
    %286 = vector.broadcast %285 : vector<1x1xf32> to vector<1x32xf32>
    %287 = arith.divf %279, %286 : vector<1x32xf32>
    %cst_140 = arith.constant dense<0.000000e+00> : vector<1x4xf32>
    %288 = tpu.matmul %287, %253, %cst_140 {dimension_numbers = #tpu.dot_dimension_numbers<[1], [1], [0], [0], [0, 0, 1, 0], [], []>} : vector<1x32xf32>, vector<4x32xf32>, vector<1x4xf32> -> vector<1x4xf32>
    %cst_141 = arith.constant 1.000000e+00 : f32
    %289 = vector.broadcast %cst_141 : f32 to vector<1x1xf32>
    %cst_142 = arith.constant 0.000000e+00 : f32
    %290 = vector.broadcast %cst_142 : f32 to vector<1x4xf32>
    %291 = arith.subf %290, %288 : vector<1x4xf32>
    %292 = math.exp %291 : vector<1x4xf32>
    %cst_143 = arith.constant 1.000000e+00 : f32
    %293 = vector.broadcast %cst_143 : f32 to vector<1x4xf32>
    %294 = arith.addf %293, %292 : vector<1x4xf32>
    %cst_144 = arith.constant 1.000000e+00 : f32
    %295 = vector.broadcast %cst_144 : f32 to vector<1x4xf32>
    %296 = arith.divf %295, %294 : vector<1x4xf32>
    %cst_145 = arith.constant 1.000000e+00 : f32
    %297 = vector.broadcast %cst_145 : f32 to vector<1x4xf32>
    %298 = tpu.concatenate %289, %296, %297 in 1 : vector<1x1xf32>, vector<1x4xf32>, vector<1x4xf32> -> vector<1x9xf32>
    %cst_146 = arith.constant 1.000000e+00 : f32
    %299 = vector.broadcast %cst_146 : f32 to vector<1x4xf32>
    %300 = arith.subf %299, %288 : vector<1x4xf32>
    %cst_147 = arith.constant dense<0.000000e+00> : vector<1xf32>
    %301 = vector.multi_reduction <add>, %300, %cst_147 [1] : vector<1x4xf32> to vector<1xf32>
    %302 = vector.shape_cast %301 : vector<1xf32> to vector<1x1xf32>
    %303 = arith.addf %278, %302 : vector<1x1xf32>
    %c0_148 = arith.constant 0 : index
    %c0_149 = arith.constant 0 : index
    %c0_150 = arith.constant 0 : index
    %304 = vector.load %arg17[%c0_148, %c0_149, %c0_150] : memref<2x4x32xf32, #tpu.memory_space<vmem>>, vector<1x4x32xf32>
    %305 = vector.shape_cast %304 : vector<1x4x32xf32> to vector<4x32xf32>
    %c1_151 = arith.constant 1 : index
    %c0_152 = arith.constant 0 : index
    %306 = vector.load %arg27[%c1_151, %c0_152] : memref<18x32xf32, #tpu.memory_space<vmem>>, vector<4x32xf32>
    tpu.vector_store %arg27[%c1_151, %c0_152], %305 {strides = array<i32>} : memref<18x32xf32, #tpu.memory_space<vmem>>, vector<4x32xf32>,
    %c10 = arith.constant 10 : index
    %c0_153 = arith.constant 0 : index
    %307 = vector.load %arg27[%c10, %c0_153] : memref<18x32xf32, #tpu.memory_space<vmem>>, vector<4x32xf32>
    tpu.vector_store %arg27[%c10, %c0_153], %305 {strides = array<i32>} : memref<18x32xf32, #tpu.memory_space<vmem>>, vector<4x32xf32>,
    %c0_154 = arith.constant 0 : index
    %c0_155 = arith.constant 0 : index
    %308 = vector.load %arg27[%c0_154, %c0_155] : memref<18x32xf32, #tpu.memory_space<vmem>>, vector<18x32xf32>
    %c0_156 = arith.constant 0 : index
    %c0_157 = arith.constant 0 : index
    %c0_158 = arith.constant 0 : index
    %309 = vector.load %arg5[%c0_156, %c0_157, %c0_158] : memref<2x1x32xf32, #tpu.memory_space<vmem>>, vector<1x1x32xf32>
    %310 = vector.shape_cast %309 : vector<1x1x32xf32> to vector<1x32xf32>
    %c0_159 = arith.constant 0 : index
    %c0_160 = arith.constant 0 : index
    %c0_161 = arith.constant 0 : index
    %311 = vector.load %arg6[%c0_159, %c0_160, %c0_161] : memref<2x1x32xf32, #tpu.memory_space<vmem>>, vector<1x1x32xf32>
    %312 = vector.shape_cast %311 : vector<1x1x32xf32> to vector<1x32xf32>
    %cst_162 = arith.constant dense<0.000000e+00> : vector<18xf32>
    %313 = vector.multi_reduction <add>, %308, %cst_162 [1] : vector<18x32xf32> to vector<18xf32>
    %314 = vector.shape_cast %313 : vector<18xf32> to vector<18x1xf32>
    %cst_163 = arith.constant 3.200000e+01 : f32
    %315 = vector.broadcast %cst_163 : f32 to vector<18x1xf32>
    %316 = arith.divf %314, %315 : vector<18x1xf32>
    %317 = vector.broadcast %316 : vector<18x1xf32> to vector<18x32xf32>
    %318 = arith.subf %308, %317 : vector<18x32xf32>
    %319 = arith.mulf %318, %318 : vector<18x32xf32>
    %cst_164 = arith.constant dense<0.000000e+00> : vector<18xf32>
    %320 = vector.multi_reduction <add>, %319, %cst_164 [1] : vector<18x32xf32> to vector<18xf32>
    %321 = vector.shape_cast %320 : vector<18xf32> to vector<18x1xf32>
    %cst_165 = arith.constant 3.200000e+01 : f32
    %322 = vector.broadcast %cst_165 : f32 to vector<18x1xf32>
    %323 = arith.divf %321, %322 : vector<18x1xf32>
    %cst_166 = arith.constant 9.99999997E-7 : f32
    %324 = vector.broadcast %cst_166 : f32 to vector<18x1xf32>
    %325 = arith.addf %323, %324 : vector<18x1xf32>
    %326 = math.rsqrt %325 : vector<18x1xf32>
    %327 = vector.broadcast %326 : vector<18x1xf32> to vector<18x32xf32>
    %328 = arith.mulf %318, %327 : vector<18x32xf32>
    %329 = vector.broadcast %310 : vector<1x32xf32> to vector<18x32xf32>
    %330 = arith.mulf %328, %329 : vector<18x32xf32>
    %331 = vector.broadcast %312 : vector<1x32xf32> to vector<18x32xf32>
    %332 = arith.addf %330, %331 : vector<18x32xf32>
    %c0_167 = arith.constant 0 : index
    %c0_168 = arith.constant 0 : index
    %c0_169 = arith.constant 0 : index
    %333 = vector.load %arg7[%c0_167, %c0_168, %c0_169] : memref<2x32x96xf32, #tpu.memory_space<vmem>>, vector<1x32x96xf32>
    %334 = vector.shape_cast %333 : vector<1x32x96xf32> to vector<32x96xf32>
    %cst_170 = arith.constant dense<0.000000e+00> : vector<18x96xf32>
    %335 = tpu.matmul %332, %334, %cst_170 {dimension_numbers = #tpu.dot_dimension_numbers<[1], [0], [0], [1], [0, 0, 1, 1], [], []>} : vector<18x32xf32>, vector<32x96xf32>, vector<18x96xf32> -> vector<18x96xf32>
    %c0_171 = arith.constant 0 : index
    %c0_172 = arith.constant 0 : index
    %c0_173 = arith.constant 0 : index
    %336 = vector.load %arg8[%c0_171, %c0_172, %c0_173] : memref<2x1x96xf32, #tpu.memory_space<vmem>>, vector<1x1x96xf32>
    %337 = vector.shape_cast %336 : vector<1x1x96xf32> to vector<1x96xf32>
    %338 = vector.broadcast %337 : vector<1x96xf32> to vector<18x96xf32>
    %339 = arith.addf %335, %338 : vector<18x96xf32>
    %340 = vector.extract_strided_slice %339 {offsets = [0, 0], sizes = [18, 32], strides = [1, 1]} : vector<18x96xf32> to vector<18x32xf32>
    %341 = vector.extract_strided_slice %339 {offsets = [0, 32], sizes = [18, 32], strides = [1, 1]} : vector<18x96xf32> to vector<18x32xf32>
    %342 = vector.extract_strided_slice %339 {offsets = [0, 64], sizes = [18, 32], strides = [1, 1]} : vector<18x96xf32> to vector<18x32xf32>
    %343 = arith.mulf %342, %241 : vector<18x32xf32>
    %344 = arith.addf %343, %242 : vector<18x32xf32>
    %c0_174 = arith.constant 0 : index
    %c0_175 = arith.constant 0 : index
    %c0_176 = arith.constant 0 : index
    %345 = vector.load %arg9[%c0_174, %c0_175, %c0_176] : memref<2x32x32xf32, #tpu.memory_space<vmem>>, vector<1x32x32xf32>
    %346 = vector.shape_cast %345 : vector<1x32x32xf32> to vector<32x32xf32>
    %c0_177 = arith.constant 0 : index
    %c0_178 = arith.constant 0 : index
    %c0_179 = arith.constant 0 : index
    %347 = vector.load %arg10[%c0_177, %c0_178, %c0_179] : memref<2x1x32xf32, #tpu.memory_space<vmem>>, vector<1x1x32xf32>
    %348 = vector.shape_cast %347 : vector<1x1x32xf32> to vector<1x32xf32>
    %349 = vector.extract_strided_slice %340 {offsets = [0, 0], sizes = [9, 32], strides = [1, 1]} : vector<18x32xf32> to vector<9x32xf32>
    %350 = vector.extract_strided_slice %341 {offsets = [0, 0], sizes = [9, 32], strides = [1, 1]} : vector<18x32xf32> to vector<9x32xf32>
    %351 = vector.extract_strided_slice %344 {offsets = [0, 0], sizes = [9, 32], strides = [1, 1]} : vector<18x32xf32> to vector<9x32xf32>
    %cst_180 = arith.constant 0.000000e+00 : f32
    %352 = vector.broadcast %cst_180 : f32 to vector<9x32xf32>
    %353 = vector.extract_strided_slice %349 {offsets = [0, 0], sizes = [9, 8], strides = [1, 1]} : vector<9x32xf32> to vector<9x8xf32>
    %354 = vector.extract_strided_slice %350 {offsets = [0, 0], sizes = [9, 8], strides = [1, 1]} : vector<9x32xf32> to vector<9x8xf32>
    %cst_181 = arith.constant dense<0.000000e+00> : vector<9x9xf32>
    %355 = tpu.matmul %353, %354, %cst_181 {dimension_numbers = #tpu.dot_dimension_numbers<[1], [1], [0], [0], [0, 0, 1, 0], [], []>} : vector<9x8xf32>, vector<9x8xf32>, vector<9x9xf32> -> vector<9x9xf32>
    %cst_182 = arith.constant 0.353553385 : f32
    %356 = vector.broadcast %cst_182 : f32 to vector<9x9xf32>
    %357 = arith.mulf %355, %356 : vector<9x9xf32>
    %cst_183 = arith.constant dense<0xFF800000> : vector<9xf32>
    %358 = vector.multi_reduction <maximumf>, %357, %cst_183 [1] : vector<9x9xf32> to vector<9xf32>
    %359 = vector.shape_cast %358 : vector<9xf32> to vector<9x1xf32>
    %360 = vector.broadcast %359 : vector<9x1xf32> to vector<9x9xf32>
    %361 = arith.subf %357, %360 : vector<9x9xf32>
    %362 = math.exp %361 : vector<9x9xf32>
    %cst_184 = arith.constant dense<0.000000e+00> : vector<9xf32>
    %363 = vector.multi_reduction <add>, %362, %cst_184 [1] : vector<9x9xf32> to vector<9xf32>
    %364 = vector.shape_cast %363 : vector<9xf32> to vector<9x1xf32>
    %365 = vector.broadcast %364 : vector<9x1xf32> to vector<9x9xf32>
    %366 = arith.divf %362, %365 : vector<9x9xf32>
    %367 = vector.broadcast %273 : vector<1x9xf32> to vector<9x9xf32>
    %368 = arith.mulf %366, %367 : vector<9x9xf32>
    %369 = vector.extract_strided_slice %351 {offsets = [0, 0], sizes = [9, 8], strides = [1, 1]} : vector<9x32xf32> to vector<9x8xf32>
    %cst_185 = arith.constant dense<0.000000e+00> : vector<9x8xf32>
    %370 = tpu.matmul %368, %369, %cst_185 {dimension_numbers = #tpu.dot_dimension_numbers<[1], [0], [0], [1], [0, 0, 1, 1], [], []>} : vector<9x9xf32>, vector<9x8xf32>, vector<9x8xf32> -> vector<9x8xf32>
    %371 = vector.extract_strided_slice %346 {offsets = [0, 0], sizes = [8, 32], strides = [1, 1]} : vector<32x32xf32> to vector<8x32xf32>
    %cst_186 = arith.constant dense<0.000000e+00> : vector<9x32xf32>
    %372 = tpu.matmul %370, %371, %cst_186 {dimension_numbers = #tpu.dot_dimension_numbers<[1], [0], [0], [1], [0, 0, 1, 1], [], []>} : vector<9x8xf32>, vector<8x32xf32>, vector<9x32xf32> -> vector<9x32xf32>
    %373 = arith.addf %352, %372 : vector<9x32xf32>
    %374 = vector.extract_strided_slice %349 {offsets = [0, 8], sizes = [9, 8], strides = [1, 1]} : vector<9x32xf32> to vector<9x8xf32>
    %375 = vector.extract_strided_slice %350 {offsets = [0, 8], sizes = [9, 8], strides = [1, 1]} : vector<9x32xf32> to vector<9x8xf32>
    %cst_187 = arith.constant dense<0.000000e+00> : vector<9x9xf32>
    %376 = tpu.matmul %374, %375, %cst_187 {dimension_numbers = #tpu.dot_dimension_numbers<[1], [1], [0], [0], [0, 0, 1, 0], [], []>} : vector<9x8xf32>, vector<9x8xf32>, vector<9x9xf32> -> vector<9x9xf32>
    %cst_188 = arith.constant 0.353553385 : f32
    %377 = vector.broadcast %cst_188 : f32 to vector<9x9xf32>
    %378 = arith.mulf %376, %377 : vector<9x9xf32>
    %cst_189 = arith.constant dense<0xFF800000> : vector<9xf32>
    %379 = vector.multi_reduction <maximumf>, %378, %cst_189 [1] : vector<9x9xf32> to vector<9xf32>
    %380 = vector.shape_cast %379 : vector<9xf32> to vector<9x1xf32>
    %381 = vector.broadcast %380 : vector<9x1xf32> to vector<9x9xf32>
    %382 = arith.subf %378, %381 : vector<9x9xf32>
    %383 = math.exp %382 : vector<9x9xf32>
    %cst_190 = arith.constant dense<0.000000e+00> : vector<9xf32>
    %384 = vector.multi_reduction <add>, %383, %cst_190 [1] : vector<9x9xf32> to vector<9xf32>
    %385 = vector.shape_cast %384 : vector<9xf32> to vector<9x1xf32>
    %386 = vector.broadcast %385 : vector<9x1xf32> to vector<9x9xf32>
    %387 = arith.divf %383, %386 : vector<9x9xf32>
    %388 = vector.broadcast %273 : vector<1x9xf32> to vector<9x9xf32>
    %389 = arith.mulf %387, %388 : vector<9x9xf32>
    %390 = vector.extract_strided_slice %351 {offsets = [0, 8], sizes = [9, 8], strides = [1, 1]} : vector<9x32xf32> to vector<9x8xf32>
    %cst_191 = arith.constant dense<0.000000e+00> : vector<9x8xf32>
    %391 = tpu.matmul %389, %390, %cst_191 {dimension_numbers = #tpu.dot_dimension_numbers<[1], [0], [0], [1], [0, 0, 1, 1], [], []>} : vector<9x9xf32>, vector<9x8xf32>, vector<9x8xf32> -> vector<9x8xf32>
    %392 = vector.extract_strided_slice %346 {offsets = [8, 0], sizes = [8, 32], strides = [1, 1]} : vector<32x32xf32> to vector<8x32xf32>
    %cst_192 = arith.constant dense<0.000000e+00> : vector<9x32xf32>
    %393 = tpu.matmul %391, %392, %cst_192 {dimension_numbers = #tpu.dot_dimension_numbers<[1], [0], [0], [1], [0, 0, 1, 1], [], []>} : vector<9x8xf32>, vector<8x32xf32>, vector<9x32xf32> -> vector<9x32xf32>
    %394 = arith.addf %373, %393 : vector<9x32xf32>
    %395 = vector.extract_strided_slice %349 {offsets = [0, 16], sizes = [9, 8], strides = [1, 1]} : vector<9x32xf32> to vector<9x8xf32>
    %396 = vector.extract_strided_slice %350 {offsets = [0, 16], sizes = [9, 8], strides = [1, 1]} : vector<9x32xf32> to vector<9x8xf32>
    %cst_193 = arith.constant dense<0.000000e+00> : vector<9x9xf32>
    %397 = tpu.matmul %395, %396, %cst_193 {dimension_numbers = #tpu.dot_dimension_numbers<[1], [1], [0], [0], [0, 0, 1, 0], [], []>} : vector<9x8xf32>, vector<9x8xf32>, vector<9x9xf32> -> vector<9x9xf32>
    %cst_194 = arith.constant 0.353553385 : f32
    %398 = vector.broadcast %cst_194 : f32 to vector<9x9xf32>
    %399 = arith.mulf %397, %398 : vector<9x9xf32>
    %cst_195 = arith.constant dense<0xFF800000> : vector<9xf32>
    %400 = vector.multi_reduction <maximumf>, %399, %cst_195 [1] : vector<9x9xf32> to vector<9xf32>
    %401 = vector.shape_cast %400 : vector<9xf32> to vector<9x1xf32>
    %402 = vector.broadcast %401 : vector<9x1xf32> to vector<9x9xf32>
    %403 = arith.subf %399, %402 : vector<9x9xf32>
    %404 = math.exp %403 : vector<9x9xf32>
    %cst_196 = arith.constant dense<0.000000e+00> : vector<9xf32>
    %405 = vector.multi_reduction <add>, %404, %cst_196 [1] : vector<9x9xf32> to vector<9xf32>
    %406 = vector.shape_cast %405 : vector<9xf32> to vector<9x1xf32>
    %407 = vector.broadcast %406 : vector<9x1xf32> to vector<9x9xf32>
    %408 = arith.divf %404, %407 : vector<9x9xf32>
    %409 = vector.broadcast %273 : vector<1x9xf32> to vector<9x9xf32>
    %410 = arith.mulf %408, %409 : vector<9x9xf32>
    %411 = vector.extract_strided_slice %351 {offsets = [0, 16], sizes = [9, 8], strides = [1, 1]} : vector<9x32xf32> to vector<9x8xf32>
    %cst_197 = arith.constant dense<0.000000e+00> : vector<9x8xf32>
    %412 = tpu.matmul %410, %411, %cst_197 {dimension_numbers = #tpu.dot_dimension_numbers<[1], [0], [0], [1], [0, 0, 1, 1], [], []>} : vector<9x9xf32>, vector<9x8xf32>, vector<9x8xf32> -> vector<9x8xf32>
    %413 = vector.extract_strided_slice %346 {offsets = [16, 0], sizes = [8, 32], strides = [1, 1]} : vector<32x32xf32> to vector<8x32xf32>
    %cst_198 = arith.constant dense<0.000000e+00> : vector<9x32xf32>
    %414 = tpu.matmul %412, %413, %cst_198 {dimension_numbers = #tpu.dot_dimension_numbers<[1], [0], [0], [1], [0, 0, 1, 1], [], []>} : vector<9x8xf32>, vector<8x32xf32>, vector<9x32xf32> -> vector<9x32xf32>
    %415 = arith.addf %394, %414 : vector<9x32xf32>
    %416 = vector.extract_strided_slice %349 {offsets = [0, 24], sizes = [9, 8], strides = [1, 1]} : vector<9x32xf32> to vector<9x8xf32>
    %417 = vector.extract_strided_slice %350 {offsets = [0, 24], sizes = [9, 8], strides = [1, 1]} : vector<9x32xf32> to vector<9x8xf32>
    %cst_199 = arith.constant dense<0.000000e+00> : vector<9x9xf32>
    %418 = tpu.matmul %416, %417, %cst_199 {dimension_numbers = #tpu.dot_dimension_numbers<[1], [1], [0], [0], [0, 0, 1, 0], [], []>} : vector<9x8xf32>, vector<9x8xf32>, vector<9x9xf32> -> vector<9x9xf32>
    %cst_200 = arith.constant 0.353553385 : f32
    %419 = vector.broadcast %cst_200 : f32 to vector<9x9xf32>
    %420 = arith.mulf %418, %419 : vector<9x9xf32>
    %cst_201 = arith.constant dense<0xFF800000> : vector<9xf32>
    %421 = vector.multi_reduction <maximumf>, %420, %cst_201 [1] : vector<9x9xf32> to vector<9xf32>
    %422 = vector.shape_cast %421 : vector<9xf32> to vector<9x1xf32>
    %423 = vector.broadcast %422 : vector<9x1xf32> to vector<9x9xf32>
    %424 = arith.subf %420, %423 : vector<9x9xf32>
    %425 = math.exp %424 : vector<9x9xf32>
    %cst_202 = arith.constant dense<0.000000e+00> : vector<9xf32>
    %426 = vector.multi_reduction <add>, %425, %cst_202 [1] : vector<9x9xf32> to vector<9xf32>
    %427 = vector.shape_cast %426 : vector<9xf32> to vector<9x1xf32>
    %428 = vector.broadcast %427 : vector<9x1xf32> to vector<9x9xf32>
    %429 = arith.divf %425, %428 : vector<9x9xf32>
    %430 = vector.broadcast %273 : vector<1x9xf32> to vector<9x9xf32>
    %431 = arith.mulf %429, %430 : vector<9x9xf32>
    %432 = vector.extract_strided_slice %351 {offsets = [0, 24], sizes = [9, 8], strides = [1, 1]} : vector<9x32xf32> to vector<9x8xf32>
    %cst_203 = arith.constant dense<0.000000e+00> : vector<9x8xf32>
    %433 = tpu.matmul %431, %432, %cst_203 {dimension_numbers = #tpu.dot_dimension_numbers<[1], [0], [0], [1], [0, 0, 1, 1], [], []>} : vector<9x9xf32>, vector<9x8xf32>, vector<9x8xf32> -> vector<9x8xf32>
    %434 = vector.extract_strided_slice %346 {offsets = [24, 0], sizes = [8, 32], strides = [1, 1]} : vector<32x32xf32> to vector<8x32xf32>
    %cst_204 = arith.constant dense<0.000000e+00> : vector<9x32xf32>
    %435 = tpu.matmul %433, %434, %cst_204 {dimension_numbers = #tpu.dot_dimension_numbers<[1], [0], [0], [1], [0, 0, 1, 1], [], []>} : vector<9x8xf32>, vector<8x32xf32>, vector<9x32xf32> -> vector<9x32xf32>
    %436 = arith.addf %415, %435 : vector<9x32xf32>
    %437 = vector.broadcast %348 : vector<1x32xf32> to vector<9x32xf32>
    %438 = arith.addf %436, %437 : vector<9x32xf32>
    %439 = vector.extract_strided_slice %308 {offsets = [0, 0], sizes = [9, 32], strides = [1, 1]} : vector<18x32xf32> to vector<9x32xf32>
    %440 = arith.addf %439, %438 : vector<9x32xf32>
    %c0_205 = arith.constant 0 : index
    %c0_206 = arith.constant 0 : index
    %441 = vector.load %arg27[%c0_205, %c0_206] : memref<18x32xf32, #tpu.memory_space<vmem>>, vector<9x32xf32>
    tpu.vector_store %arg27[%c0_205, %c0_206], %440 {strides = array<i32>} : memref<18x32xf32, #tpu.memory_space<vmem>>, vector<9x32xf32>,
    %442 = vector.extract_strided_slice %340 {offsets = [9, 0], sizes = [9, 32], strides = [1, 1]} : vector<18x32xf32> to vector<9x32xf32>
    %443 = vector.extract_strided_slice %341 {offsets = [9, 0], sizes = [9, 32], strides = [1, 1]} : vector<18x32xf32> to vector<9x32xf32>
    %444 = vector.extract_strided_slice %344 {offsets = [9, 0], sizes = [9, 32], strides = [1, 1]} : vector<18x32xf32> to vector<9x32xf32>
    %cst_207 = arith.constant 0.000000e+00 : f32
    %445 = vector.broadcast %cst_207 : f32 to vector<9x32xf32>
    %446 = vector.extract_strided_slice %442 {offsets = [0, 0], sizes = [9, 8], strides = [1, 1]} : vector<9x32xf32> to vector<9x8xf32>
    %447 = vector.extract_strided_slice %443 {offsets = [0, 0], sizes = [9, 8], strides = [1, 1]} : vector<9x32xf32> to vector<9x8xf32>
    %cst_208 = arith.constant dense<0.000000e+00> : vector<9x9xf32>
    %448 = tpu.matmul %446, %447, %cst_208 {dimension_numbers = #tpu.dot_dimension_numbers<[1], [1], [0], [0], [0, 0, 1, 0], [], []>} : vector<9x8xf32>, vector<9x8xf32>, vector<9x9xf32> -> vector<9x9xf32>
    %cst_209 = arith.constant 0.353553385 : f32
    %449 = vector.broadcast %cst_209 : f32 to vector<9x9xf32>
    %450 = arith.mulf %448, %449 : vector<9x9xf32>
    %cst_210 = arith.constant dense<0xFF800000> : vector<9xf32>
    %451 = vector.multi_reduction <maximumf>, %450, %cst_210 [1] : vector<9x9xf32> to vector<9xf32>
    %452 = vector.shape_cast %451 : vector<9xf32> to vector<9x1xf32>
    %453 = vector.broadcast %452 : vector<9x1xf32> to vector<9x9xf32>
    %454 = arith.subf %450, %453 : vector<9x9xf32>
    %455 = math.exp %454 : vector<9x9xf32>
    %cst_211 = arith.constant dense<0.000000e+00> : vector<9xf32>
    %456 = vector.multi_reduction <add>, %455, %cst_211 [1] : vector<9x9xf32> to vector<9xf32>
    %457 = vector.shape_cast %456 : vector<9xf32> to vector<9x1xf32>
    %458 = vector.broadcast %457 : vector<9x1xf32> to vector<9x9xf32>
    %459 = arith.divf %455, %458 : vector<9x9xf32>
    %460 = vector.broadcast %298 : vector<1x9xf32> to vector<9x9xf32>
    %461 = arith.mulf %459, %460 : vector<9x9xf32>
    %462 = vector.extract_strided_slice %444 {offsets = [0, 0], sizes = [9, 8], strides = [1, 1]} : vector<9x32xf32> to vector<9x8xf32>
    %cst_212 = arith.constant dense<0.000000e+00> : vector<9x8xf32>
    %463 = tpu.matmul %461, %462, %cst_212 {dimension_numbers = #tpu.dot_dimension_numbers<[1], [0], [0], [1], [0, 0, 1, 1], [], []>} : vector<9x9xf32>, vector<9x8xf32>, vector<9x8xf32> -> vector<9x8xf32>
    %464 = vector.extract_strided_slice %346 {offsets = [0, 0], sizes = [8, 32], strides = [1, 1]} : vector<32x32xf32> to vector<8x32xf32>
    %cst_213 = arith.constant dense<0.000000e+00> : vector<9x32xf32>
    %465 = tpu.matmul %463, %464, %cst_213 {dimension_numbers = #tpu.dot_dimension_numbers<[1], [0], [0], [1], [0, 0, 1, 1], [], []>} : vector<9x8xf32>, vector<8x32xf32>, vector<9x32xf32> -> vector<9x32xf32>
    %466 = arith.addf %445, %465 : vector<9x32xf32>
    %467 = vector.extract_strided_slice %442 {offsets = [0, 8], sizes = [9, 8], strides = [1, 1]} : vector<9x32xf32> to vector<9x8xf32>
    %468 = vector.extract_strided_slice %443 {offsets = [0, 8], sizes = [9, 8], strides = [1, 1]} : vector<9x32xf32> to vector<9x8xf32>
    %cst_214 = arith.constant dense<0.000000e+00> : vector<9x9xf32>
    %469 = tpu.matmul %467, %468, %cst_214 {dimension_numbers = #tpu.dot_dimension_numbers<[1], [1], [0], [0], [0, 0, 1, 0], [], []>} : vector<9x8xf32>, vector<9x8xf32>, vector<9x9xf32> -> vector<9x9xf32>
    %cst_215 = arith.constant 0.353553385 : f32
    %470 = vector.broadcast %cst_215 : f32 to vector<9x9xf32>
    %471 = arith.mulf %469, %470 : vector<9x9xf32>
    %cst_216 = arith.constant dense<0xFF800000> : vector<9xf32>
    %472 = vector.multi_reduction <maximumf>, %471, %cst_216 [1] : vector<9x9xf32> to vector<9xf32>
    %473 = vector.shape_cast %472 : vector<9xf32> to vector<9x1xf32>
    %474 = vector.broadcast %473 : vector<9x1xf32> to vector<9x9xf32>
    %475 = arith.subf %471, %474 : vector<9x9xf32>
    %476 = math.exp %475 : vector<9x9xf32>
    %cst_217 = arith.constant dense<0.000000e+00> : vector<9xf32>
    %477 = vector.multi_reduction <add>, %476, %cst_217 [1] : vector<9x9xf32> to vector<9xf32>
    %478 = vector.shape_cast %477 : vector<9xf32> to vector<9x1xf32>
    %479 = vector.broadcast %478 : vector<9x1xf32> to vector<9x9xf32>
    %480 = arith.divf %476, %479 : vector<9x9xf32>
    %481 = vector.broadcast %298 : vector<1x9xf32> to vector<9x9xf32>
    %482 = arith.mulf %480, %481 : vector<9x9xf32>
    %483 = vector.extract_strided_slice %444 {offsets = [0, 8], sizes = [9, 8], strides = [1, 1]} : vector<9x32xf32> to vector<9x8xf32>
    %cst_218 = arith.constant dense<0.000000e+00> : vector<9x8xf32>
    %484 = tpu.matmul %482, %483, %cst_218 {dimension_numbers = #tpu.dot_dimension_numbers<[1], [0], [0], [1], [0, 0, 1, 1], [], []>} : vector<9x9xf32>, vector<9x8xf32>, vector<9x8xf32> -> vector<9x8xf32>
    %485 = vector.extract_strided_slice %346 {offsets = [8, 0], sizes = [8, 32], strides = [1, 1]} : vector<32x32xf32> to vector<8x32xf32>
    %cst_219 = arith.constant dense<0.000000e+00> : vector<9x32xf32>
    %486 = tpu.matmul %484, %485, %cst_219 {dimension_numbers = #tpu.dot_dimension_numbers<[1], [0], [0], [1], [0, 0, 1, 1], [], []>} : vector<9x8xf32>, vector<8x32xf32>, vector<9x32xf32> -> vector<9x32xf32>
    %487 = arith.addf %466, %486 : vector<9x32xf32>
    %488 = vector.extract_strided_slice %442 {offsets = [0, 16], sizes = [9, 8], strides = [1, 1]} : vector<9x32xf32> to vector<9x8xf32>
    %489 = vector.extract_strided_slice %443 {offsets = [0, 16], sizes = [9, 8], strides = [1, 1]} : vector<9x32xf32> to vector<9x8xf32>
    %cst_220 = arith.constant dense<0.000000e+00> : vector<9x9xf32>
    %490 = tpu.matmul %488, %489, %cst_220 {dimension_numbers = #tpu.dot_dimension_numbers<[1], [1], [0], [0], [0, 0, 1, 0], [], []>} : vector<9x8xf32>, vector<9x8xf32>, vector<9x9xf32> -> vector<9x9xf32>
    %cst_221 = arith.constant 0.353553385 : f32
    %491 = vector.broadcast %cst_221 : f32 to vector<9x9xf32>
    %492 = arith.mulf %490, %491 : vector<9x9xf32>
    %cst_222 = arith.constant dense<0xFF800000> : vector<9xf32>
    %493 = vector.multi_reduction <maximumf>, %492, %cst_222 [1] : vector<9x9xf32> to vector<9xf32>
    %494 = vector.shape_cast %493 : vector<9xf32> to vector<9x1xf32>
    %495 = vector.broadcast %494 : vector<9x1xf32> to vector<9x9xf32>
    %496 = arith.subf %492, %495 : vector<9x9xf32>
    %497 = math.exp %496 : vector<9x9xf32>
    %cst_223 = arith.constant dense<0.000000e+00> : vector<9xf32>
    %498 = vector.multi_reduction <add>, %497, %cst_223 [1] : vector<9x9xf32> to vector<9xf32>
    %499 = vector.shape_cast %498 : vector<9xf32> to vector<9x1xf32>
    %500 = vector.broadcast %499 : vector<9x1xf32> to vector<9x9xf32>
    %501 = arith.divf %497, %500 : vector<9x9xf32>
    %502 = vector.broadcast %298 : vector<1x9xf32> to vector<9x9xf32>
    %503 = arith.mulf %501, %502 : vector<9x9xf32>
    %504 = vector.extract_strided_slice %444 {offsets = [0, 16], sizes = [9, 8], strides = [1, 1]} : vector<9x32xf32> to vector<9x8xf32>
    %cst_224 = arith.constant dense<0.000000e+00> : vector<9x8xf32>
    %505 = tpu.matmul %503, %504, %cst_224 {dimension_numbers = #tpu.dot_dimension_numbers<[1], [0], [0], [1], [0, 0, 1, 1], [], []>} : vector<9x9xf32>, vector<9x8xf32>, vector<9x8xf32> -> vector<9x8xf32>
    %506 = vector.extract_strided_slice %346 {offsets = [16, 0], sizes = [8, 32], strides = [1, 1]} : vector<32x32xf32> to vector<8x32xf32>
    %cst_225 = arith.constant dense<0.000000e+00> : vector<9x32xf32>
    %507 = tpu.matmul %505, %506, %cst_225 {dimension_numbers = #tpu.dot_dimension_numbers<[1], [0], [0], [1], [0, 0, 1, 1], [], []>} : vector<9x8xf32>, vector<8x32xf32>, vector<9x32xf32> -> vector<9x32xf32>
    %508 = arith.addf %487, %507 : vector<9x32xf32>
    %509 = vector.extract_strided_slice %442 {offsets = [0, 24], sizes = [9, 8], strides = [1, 1]} : vector<9x32xf32> to vector<9x8xf32>
    %510 = vector.extract_strided_slice %443 {offsets = [0, 24], sizes = [9, 8], strides = [1, 1]} : vector<9x32xf32> to vector<9x8xf32>
    %cst_226 = arith.constant dense<0.000000e+00> : vector<9x9xf32>
    %511 = tpu.matmul %509, %510, %cst_226 {dimension_numbers = #tpu.dot_dimension_numbers<[1], [1], [0], [0], [0, 0, 1, 0], [], []>} : vector<9x8xf32>, vector<9x8xf32>, vector<9x9xf32> -> vector<9x9xf32>
    %cst_227 = arith.constant 0.353553385 : f32
    %512 = vector.broadcast %cst_227 : f32 to vector<9x9xf32>
    %513 = arith.mulf %511, %512 : vector<9x9xf32>
    %cst_228 = arith.constant dense<0xFF800000> : vector<9xf32>
    %514 = vector.multi_reduction <maximumf>, %513, %cst_228 [1] : vector<9x9xf32> to vector<9xf32>
    %515 = vector.shape_cast %514 : vector<9xf32> to vector<9x1xf32>
    %516 = vector.broadcast %515 : vector<9x1xf32> to vector<9x9xf32>
    %517 = arith.subf %513, %516 : vector<9x9xf32>
    %518 = math.exp %517 : vector<9x9xf32>
    %cst_229 = arith.constant dense<0.000000e+00> : vector<9xf32>
    %519 = vector.multi_reduction <add>, %518, %cst_229 [1] : vector<9x9xf32> to vector<9xf32>
    %520 = vector.shape_cast %519 : vector<9xf32> to vector<9x1xf32>
    %521 = vector.broadcast %520 : vector<9x1xf32> to vector<9x9xf32>
    %522 = arith.divf %518, %521 : vector<9x9xf32>
    %523 = vector.broadcast %298 : vector<1x9xf32> to vector<9x9xf32>
    %524 = arith.mulf %522, %523 : vector<9x9xf32>
    %525 = vector.extract_strided_slice %444 {offsets = [0, 24], sizes = [9, 8], strides = [1, 1]} : vector<9x32xf32> to vector<9x8xf32>
    %cst_230 = arith.constant dense<0.000000e+00> : vector<9x8xf32>
    %526 = tpu.matmul %524, %525, %cst_230 {dimension_numbers = #tpu.dot_dimension_numbers<[1], [0], [0], [1], [0, 0, 1, 1], [], []>} : vector<9x9xf32>, vector<9x8xf32>, vector<9x8xf32> -> vector<9x8xf32>
    %527 = vector.extract_strided_slice %346 {offsets = [24, 0], sizes = [8, 32], strides = [1, 1]} : vector<32x32xf32> to vector<8x32xf32>
    %cst_231 = arith.constant dense<0.000000e+00> : vector<9x32xf32>
    %528 = tpu.matmul %526, %527, %cst_231 {dimension_numbers = #tpu.dot_dimension_numbers<[1], [0], [0], [1], [0, 0, 1, 1], [], []>} : vector<9x8xf32>, vector<8x32xf32>, vector<9x32xf32> -> vector<9x32xf32>
    %529 = arith.addf %508, %528 : vector<9x32xf32>
    %530 = vector.broadcast %348 : vector<1x32xf32> to vector<9x32xf32>
    %531 = arith.addf %529, %530 : vector<9x32xf32>
    %532 = vector.extract_strided_slice %308 {offsets = [9, 0], sizes = [9, 32], strides = [1, 1]} : vector<18x32xf32> to vector<9x32xf32>
    %533 = arith.addf %532, %531 : vector<9x32xf32>
    %c9_232 = arith.constant 9 : index
    %c0_233 = arith.constant 0 : index
    %534 = vector.load %arg27[%c9_232, %c0_233] : memref<18x32xf32, #tpu.memory_space<vmem>>, vector<9x32xf32>
    tpu.vector_store %arg27[%c9_232, %c0_233], %533 {strides = array<i32>} : memref<18x32xf32, #tpu.memory_space<vmem>>, vector<9x32xf32>,
    %c0_234 = arith.constant 0 : index
    %c0_235 = arith.constant 0 : index
    %535 = vector.load %arg27[%c0_234, %c0_235] : memref<18x32xf32, #tpu.memory_space<vmem>>, vector<18x32xf32>
    %c0_236 = arith.constant 0 : index
    %c0_237 = arith.constant 0 : index
    %c0_238 = arith.constant 0 : index
    %536 = vector.load %arg11[%c0_236, %c0_237, %c0_238] : memref<2x1x32xf32, #tpu.memory_space<vmem>>, vector<1x1x32xf32>
    %537 = vector.shape_cast %536 : vector<1x1x32xf32> to vector<1x32xf32>
    %c0_239 = arith.constant 0 : index
    %c0_240 = arith.constant 0 : index
    %c0_241 = arith.constant 0 : index
    %538 = vector.load %arg12[%c0_239, %c0_240, %c0_241] : memref<2x1x32xf32, #tpu.memory_space<vmem>>, vector<1x1x32xf32>
    %539 = vector.shape_cast %538 : vector<1x1x32xf32> to vector<1x32xf32>
    %cst_242 = arith.constant dense<0.000000e+00> : vector<18xf32>
    %540 = vector.multi_reduction <add>, %535, %cst_242 [1] : vector<18x32xf32> to vector<18xf32>
    %541 = vector.shape_cast %540 : vector<18xf32> to vector<18x1xf32>
    %cst_243 = arith.constant 3.200000e+01 : f32
    %542 = vector.broadcast %cst_243 : f32 to vector<18x1xf32>
    %543 = arith.divf %541, %542 : vector<18x1xf32>
    %544 = vector.broadcast %543 : vector<18x1xf32> to vector<18x32xf32>
    %545 = arith.subf %535, %544 : vector<18x32xf32>
    %546 = arith.mulf %545, %545 : vector<18x32xf32>
    %cst_244 = arith.constant dense<0.000000e+00> : vector<18xf32>
    %547 = vector.multi_reduction <add>, %546, %cst_244 [1] : vector<18x32xf32> to vector<18xf32>
    %548 = vector.shape_cast %547 : vector<18xf32> to vector<18x1xf32>
    %cst_245 = arith.constant 3.200000e+01 : f32
    %549 = vector.broadcast %cst_245 : f32 to vector<18x1xf32>
    %550 = arith.divf %548, %549 : vector<18x1xf32>
    %cst_246 = arith.constant 9.99999997E-7 : f32
    %551 = vector.broadcast %cst_246 : f32 to vector<18x1xf32>
    %552 = arith.addf %550, %551 : vector<18x1xf32>
    %553 = math.rsqrt %552 : vector<18x1xf32>
    %554 = vector.broadcast %553 : vector<18x1xf32> to vector<18x32xf32>
    %555 = arith.mulf %545, %554 : vector<18x32xf32>
    %556 = vector.broadcast %537 : vector<1x32xf32> to vector<18x32xf32>
    %557 = arith.mulf %555, %556 : vector<18x32xf32>
    %558 = vector.broadcast %539 : vector<1x32xf32> to vector<18x32xf32>
    %559 = arith.addf %557, %558 : vector<18x32xf32>
    %c0_247 = arith.constant 0 : index
    %c0_248 = arith.constant 0 : index
    %c0_249 = arith.constant 0 : index
    %560 = vector.load %arg13[%c0_247, %c0_248, %c0_249] : memref<2x32x128xf32, #tpu.memory_space<vmem>>, vector<1x32x128xf32>
    %561 = vector.shape_cast %560 : vector<1x32x128xf32> to vector<32x128xf32>
    %cst_250 = arith.constant dense<0.000000e+00> : vector<18x128xf32>
    %562 = tpu.matmul %559, %561, %cst_250 {dimension_numbers = #tpu.dot_dimension_numbers<[1], [0], [0], [1], [0, 0, 1, 1], [], []>} : vector<18x32xf32>, vector<32x128xf32>, vector<18x128xf32> -> vector<18x128xf32>
    %c0_251 = arith.constant 0 : index
    %c0_252 = arith.constant 0 : index
    %c0_253 = arith.constant 0 : index
    %563 = vector.load %arg14[%c0_251, %c0_252, %c0_253] : memref<2x1x128xf32, #tpu.memory_space<vmem>>, vector<1x1x128xf32>
    %564 = vector.shape_cast %563 : vector<1x1x128xf32> to vector<1x128xf32>
    %565 = vector.broadcast %564 : vector<1x128xf32> to vector<18x128xf32>
    %566 = arith.addf %562, %565 : vector<18x128xf32>
    %cst_254 = arith.constant 5.000000e-01 : f32
    %567 = vector.broadcast %cst_254 : f32 to vector<18x128xf32>
    %568 = arith.mulf %567, %566 : vector<18x128xf32>
    %cst_255 = arith.constant 4.471500e-02 : f32
    %569 = vector.broadcast %cst_255 : f32 to vector<18x128xf32>
    %570 = arith.mulf %569, %566 : vector<18x128xf32>
    %571 = arith.mulf %570, %566 : vector<18x128xf32>
    %572 = arith.mulf %571, %566 : vector<18x128xf32>
    %573 = arith.addf %566, %572 : vector<18x128xf32>
    %cst_256 = arith.constant 0.797884583 : f32
    %574 = vector.broadcast %cst_256 : f32 to vector<18x128xf32>
    %575 = arith.mulf %574, %573 : vector<18x128xf32>
    %576 = math.tanh %575 : vector<18x128xf32>
    %cst_257 = arith.constant 1.000000e+00 : f32
    %577 = vector.broadcast %cst_257 : f32 to vector<18x128xf32>
    %578 = arith.addf %577, %576 : vector<18x128xf32>
    %579 = arith.mulf %568, %578 : vector<18x128xf32>
    %c0_258 = arith.constant 0 : index
    %c0_259 = arith.constant 0 : index
    %c0_260 = arith.constant 0 : index
    %580 = vector.load %arg15[%c0_258, %c0_259, %c0_260] : memref<2x128x32xf32, #tpu.memory_space<vmem>>, vector<1x128x32xf32>
    %581 = vector.shape_cast %580 : vector<1x128x32xf32> to vector<128x32xf32>
    %cst_261 = arith.constant dense<0.000000e+00> : vector<18x32xf32>
    %582 = tpu.matmul %579, %581, %cst_261 {dimension_numbers = #tpu.dot_dimension_numbers<[1], [0], [0], [1], [0, 0, 1, 1], [], []>} : vector<18x128xf32>, vector<128x32xf32>, vector<18x32xf32> -> vector<18x32xf32>
    %c0_262 = arith.constant 0 : index
    %c0_263 = arith.constant 0 : index
    %c0_264 = arith.constant 0 : index
    %583 = vector.load %arg16[%c0_262, %c0_263, %c0_264] : memref<2x1x32xf32, #tpu.memory_space<vmem>>, vector<1x1x32xf32>
    %584 = vector.shape_cast %583 : vector<1x1x32xf32> to vector<1x32xf32>
    %585 = vector.broadcast %584 : vector<1x32xf32> to vector<18x32xf32>
    %586 = arith.addf %582, %585 : vector<18x32xf32>
    %587 = arith.addf %535, %586 : vector<18x32xf32>
    %c0_265 = arith.constant 0 : index
    %c0_266 = arith.constant 0 : index
    %588 = vector.load %arg27[%c0_265, %c0_266] : memref<18x32xf32, #tpu.memory_space<vmem>>, vector<18x32xf32>
    tpu.vector_store %arg27[%c0_265, %c0_266], %587 {strides = array<i32>} : memref<18x32xf32, #tpu.memory_space<vmem>>, vector<18x32xf32>,
    %c1_267 = arith.constant 1 : index
    %c0_268 = arith.constant 0 : index
    %c0_269 = arith.constant 0 : index
    %589 = vector.load %arg18[%c1_267, %c0_268, %c0_269] : memref<2x4x32xf32, #tpu.memory_space<vmem>>, vector<1x4x32xf32>
    %590 = vector.shape_cast %589 : vector<1x4x32xf32> to vector<4x32xf32>
    %591 = arith.mulf %590, %590 : vector<4x32xf32>
    %cst_270 = arith.constant dense<0.000000e+00> : vector<4xf32>
    %592 = vector.multi_reduction <add>, %591, %cst_270 [1] : vector<4x32xf32> to vector<4xf32>
    %593 = vector.shape_cast %592 : vector<4xf32> to vector<4x1xf32>
    %594 = math.sqrt %593 : vector<4x1xf32>
    %cst_271 = arith.constant 9.99999997E-7 : f32
    %595 = vector.broadcast %cst_271 : f32 to vector<4x1xf32>
    %596 = arith.addf %594, %595 : vector<4x1xf32>
    %597 = vector.broadcast %596 : vector<4x1xf32> to vector<4x32xf32>
    %598 = arith.divf %590, %597 : vector<4x32xf32>
    %c0_272 = arith.constant 0 : index
    %c0_273 = arith.constant 0 : index
    %599 = vector.load %arg27[%c0_272, %c0_273] : memref<18x32xf32, #tpu.memory_space<vmem>>, vector<1x32xf32>
    %600 = arith.mulf %599, %599 : vector<1x32xf32>
    %cst_274 = arith.constant dense<0.000000e+00> : vector<1xf32>
    %601 = vector.multi_reduction <add>, %600, %cst_274 [1] : vector<1x32xf32> to vector<1xf32>
    %602 = vector.shape_cast %601 : vector<1xf32> to vector<1x1xf32>
    %603 = math.sqrt %602 : vector<1x1xf32>
    %cst_275 = arith.constant 9.99999997E-7 : f32
    %604 = vector.broadcast %cst_275 : f32 to vector<1x1xf32>
    %605 = arith.addf %603, %604 : vector<1x1xf32>
    %606 = vector.broadcast %605 : vector<1x1xf32> to vector<1x32xf32>
    %607 = arith.divf %599, %606 : vector<1x32xf32>
    %cst_276 = arith.constant dense<0.000000e+00> : vector<1x4xf32>
    %608 = tpu.matmul %607, %598, %cst_276 {dimension_numbers = #tpu.dot_dimension_numbers<[1], [1], [0], [0], [0, 0, 1, 0], [], []>} : vector<1x32xf32>, vector<4x32xf32>, vector<1x4xf32> -> vector<1x4xf32>
    %cst_277 = arith.constant 1.000000e+00 : f32
    %609 = vector.broadcast %cst_277 : f32 to vector<1x1xf32>
    %cst_278 = arith.constant 0.000000e+00 : f32
    %610 = vector.broadcast %cst_278 : f32 to vector<1x4xf32>
    %611 = arith.subf %610, %608 : vector<1x4xf32>
    %612 = math.exp %611 : vector<1x4xf32>
    %cst_279 = arith.constant 1.000000e+00 : f32
    %613 = vector.broadcast %cst_279 : f32 to vector<1x4xf32>
    %614 = arith.addf %613, %612 : vector<1x4xf32>
    %cst_280 = arith.constant 1.000000e+00 : f32
    %615 = vector.broadcast %cst_280 : f32 to vector<1x4xf32>
    %616 = arith.divf %615, %614 : vector<1x4xf32>
    %cst_281 = arith.constant 1.000000e+00 : f32
    %617 = vector.broadcast %cst_281 : f32 to vector<1x4xf32>
    %618 = tpu.concatenate %609, %616, %617 in 1 : vector<1x1xf32>, vector<1x4xf32>, vector<1x4xf32> -> vector<1x9xf32>
    %cst_282 = arith.constant 1.000000e+00 : f32
    %619 = vector.broadcast %cst_282 : f32 to vector<1x4xf32>
    %620 = arith.subf %619, %608 : vector<1x4xf32>
    %cst_283 = arith.constant dense<0.000000e+00> : vector<1xf32>
    %621 = vector.multi_reduction <add>, %620, %cst_283 [1] : vector<1x4xf32> to vector<1xf32>
    %622 = vector.shape_cast %621 : vector<1xf32> to vector<1x1xf32>
    %623 = arith.addf %303, %622 : vector<1x1xf32>
    %c9_284 = arith.constant 9 : index
    %c0_285 = arith.constant 0 : index
    %624 = vector.load %arg27[%c9_284, %c0_285] : memref<18x32xf32, #tpu.memory_space<vmem>>, vector<1x32xf32>
    %625 = arith.mulf %624, %624 : vector<1x32xf32>
    %cst_286 = arith.constant dense<0.000000e+00> : vector<1xf32>
    %626 = vector.multi_reduction <add>, %625, %cst_286 [1] : vector<1x32xf32> to vector<1xf32>
    %627 = vector.shape_cast %626 : vector<1xf32> to vector<1x1xf32>
    %628 = math.sqrt %627 : vector<1x1xf32>
    %cst_287 = arith.constant 9.99999997E-7 : f32
    %629 = vector.broadcast %cst_287 : f32 to vector<1x1xf32>
    %630 = arith.addf %628, %629 : vector<1x1xf32>
    %631 = vector.broadcast %630 : vector<1x1xf32> to vector<1x32xf32>
    %632 = arith.divf %624, %631 : vector<1x32xf32>
    %cst_288 = arith.constant dense<0.000000e+00> : vector<1x4xf32>
    %633 = tpu.matmul %632, %598, %cst_288 {dimension_numbers = #tpu.dot_dimension_numbers<[1], [1], [0], [0], [0, 0, 1, 0], [], []>} : vector<1x32xf32>, vector<4x32xf32>, vector<1x4xf32> -> vector<1x4xf32>
    %cst_289 = arith.constant 1.000000e+00 : f32
    %634 = vector.broadcast %cst_289 : f32 to vector<1x1xf32>
    %cst_290 = arith.constant 0.000000e+00 : f32
    %635 = vector.broadcast %cst_290 : f32 to vector<1x4xf32>
    %636 = arith.subf %635, %633 : vector<1x4xf32>
    %637 = math.exp %636 : vector<1x4xf32>
    %cst_291 = arith.constant 1.000000e+00 : f32
    %638 = vector.broadcast %cst_291 : f32 to vector<1x4xf32>
    %639 = arith.addf %638, %637 : vector<1x4xf32>
    %cst_292 = arith.constant 1.000000e+00 : f32
    %640 = vector.broadcast %cst_292 : f32 to vector<1x4xf32>
    %641 = arith.divf %640, %639 : vector<1x4xf32>
    %cst_293 = arith.constant 1.000000e+00 : f32
    %642 = vector.broadcast %cst_293 : f32 to vector<1x4xf32>
    %643 = tpu.concatenate %634, %641, %642 in 1 : vector<1x1xf32>, vector<1x4xf32>, vector<1x4xf32> -> vector<1x9xf32>
    %cst_294 = arith.constant 1.000000e+00 : f32
    %644 = vector.broadcast %cst_294 : f32 to vector<1x4xf32>
    %645 = arith.subf %644, %633 : vector<1x4xf32>
    %cst_295 = arith.constant dense<0.000000e+00> : vector<1xf32>
    %646 = vector.multi_reduction <add>, %645, %cst_295 [1] : vector<1x4xf32> to vector<1xf32>
    %647 = vector.shape_cast %646 : vector<1xf32> to vector<1x1xf32>
    %648 = arith.addf %623, %647 : vector<1x1xf32>
    %c1_296 = arith.constant 1 : index
    %c0_297 = arith.constant 0 : index
    %c0_298 = arith.constant 0 : index
    %649 = vector.load %arg17[%c1_296, %c0_297, %c0_298] : memref<2x4x32xf32, #tpu.memory_space<vmem>>, vector<1x4x32xf32>
    %650 = vector.shape_cast %649 : vector<1x4x32xf32> to vector<4x32xf32>
    %c1_299 = arith.constant 1 : index
    %c0_300 = arith.constant 0 : index
    %651 = vector.load %arg27[%c1_299, %c0_300] : memref<18x32xf32, #tpu.memory_space<vmem>>, vector<4x32xf32>
    tpu.vector_store %arg27[%c1_299, %c0_300], %650 {strides = array<i32>} : memref<18x32xf32, #tpu.memory_space<vmem>>, vector<4x32xf32>,
    %c10_301 = arith.constant 10 : index
    %c0_302 = arith.constant 0 : index
    %652 = vector.load %arg27[%c10_301, %c0_302] : memref<18x32xf32, #tpu.memory_space<vmem>>, vector<4x32xf32>
    tpu.vector_store %arg27[%c10_301, %c0_302], %650 {strides = array<i32>} : memref<18x32xf32, #tpu.memory_space<vmem>>, vector<4x32xf32>,
    %c0_303 = arith.constant 0 : index
    %c0_304 = arith.constant 0 : index
    %653 = vector.load %arg27[%c0_303, %c0_304] : memref<18x32xf32, #tpu.memory_space<vmem>>, vector<18x32xf32>
    %c1_305 = arith.constant 1 : index
    %c0_306 = arith.constant 0 : index
    %c0_307 = arith.constant 0 : index
    %654 = vector.load %arg5[%c1_305, %c0_306, %c0_307] : memref<2x1x32xf32, #tpu.memory_space<vmem>>, vector<1x1x32xf32>
    %655 = vector.shape_cast %654 : vector<1x1x32xf32> to vector<1x32xf32>
    %c1_308 = arith.constant 1 : index
    %c0_309 = arith.constant 0 : index
    %c0_310 = arith.constant 0 : index
    %656 = vector.load %arg6[%c1_308, %c0_309, %c0_310] : memref<2x1x32xf32, #tpu.memory_space<vmem>>, vector<1x1x32xf32>
    %657 = vector.shape_cast %656 : vector<1x1x32xf32> to vector<1x32xf32>
    %cst_311 = arith.constant dense<0.000000e+00> : vector<18xf32>
    %658 = vector.multi_reduction <add>, %653, %cst_311 [1] : vector<18x32xf32> to vector<18xf32>
    %659 = vector.shape_cast %658 : vector<18xf32> to vector<18x1xf32>
    %cst_312 = arith.constant 3.200000e+01 : f32
    %660 = vector.broadcast %cst_312 : f32 to vector<18x1xf32>
    %661 = arith.divf %659, %660 : vector<18x1xf32>
    %662 = vector.broadcast %661 : vector<18x1xf32> to vector<18x32xf32>
    %663 = arith.subf %653, %662 : vector<18x32xf32>
    %664 = arith.mulf %663, %663 : vector<18x32xf32>
    %cst_313 = arith.constant dense<0.000000e+00> : vector<18xf32>
    %665 = vector.multi_reduction <add>, %664, %cst_313 [1] : vector<18x32xf32> to vector<18xf32>
    %666 = vector.shape_cast %665 : vector<18xf32> to vector<18x1xf32>
    %cst_314 = arith.constant 3.200000e+01 : f32
    %667 = vector.broadcast %cst_314 : f32 to vector<18x1xf32>
    %668 = arith.divf %666, %667 : vector<18x1xf32>
    %cst_315 = arith.constant 9.99999997E-7 : f32
    %669 = vector.broadcast %cst_315 : f32 to vector<18x1xf32>
    %670 = arith.addf %668, %669 : vector<18x1xf32>
    %671 = math.rsqrt %670 : vector<18x1xf32>
    %672 = vector.broadcast %671 : vector<18x1xf32> to vector<18x32xf32>
    %673 = arith.mulf %663, %672 : vector<18x32xf32>
    %674 = vector.broadcast %655 : vector<1x32xf32> to vector<18x32xf32>
    %675 = arith.mulf %673, %674 : vector<18x32xf32>
    %676 = vector.broadcast %657 : vector<1x32xf32> to vector<18x32xf32>
    %677 = arith.addf %675, %676 : vector<18x32xf32>
    %c1_316 = arith.constant 1 : index
    %c0_317 = arith.constant 0 : index
    %c0_318 = arith.constant 0 : index
    %678 = vector.load %arg7[%c1_316, %c0_317, %c0_318] : memref<2x32x96xf32, #tpu.memory_space<vmem>>, vector<1x32x96xf32>
    %679 = vector.shape_cast %678 : vector<1x32x96xf32> to vector<32x96xf32>
    %cst_319 = arith.constant dense<0.000000e+00> : vector<18x96xf32>
    %680 = tpu.matmul %677, %679, %cst_319 {dimension_numbers = #tpu.dot_dimension_numbers<[1], [0], [0], [1], [0, 0, 1, 1], [], []>} : vector<18x32xf32>, vector<32x96xf32>, vector<18x96xf32> -> vector<18x96xf32>
    %c1_320 = arith.constant 1 : index
    %c0_321 = arith.constant 0 : index
    %c0_322 = arith.constant 0 : index
    %681 = vector.load %arg8[%c1_320, %c0_321, %c0_322] : memref<2x1x96xf32, #tpu.memory_space<vmem>>, vector<1x1x96xf32>
    %682 = vector.shape_cast %681 : vector<1x1x96xf32> to vector<1x96xf32>
    %683 = vector.broadcast %682 : vector<1x96xf32> to vector<18x96xf32>
    %684 = arith.addf %680, %683 : vector<18x96xf32>
    %685 = vector.extract_strided_slice %684 {offsets = [0, 0], sizes = [18, 32], strides = [1, 1]} : vector<18x96xf32> to vector<18x32xf32>
    %686 = vector.extract_strided_slice %684 {offsets = [0, 32], sizes = [18, 32], strides = [1, 1]} : vector<18x96xf32> to vector<18x32xf32>
    %687 = vector.extract_strided_slice %684 {offsets = [0, 64], sizes = [18, 32], strides = [1, 1]} : vector<18x96xf32> to vector<18x32xf32>
    %688 = arith.mulf %687, %241 : vector<18x32xf32>
    %689 = arith.addf %688, %242 : vector<18x32xf32>
    %c1_323 = arith.constant 1 : index
    %c0_324 = arith.constant 0 : index
    %c0_325 = arith.constant 0 : index
    %690 = vector.load %arg9[%c1_323, %c0_324, %c0_325] : memref<2x32x32xf32, #tpu.memory_space<vmem>>, vector<1x32x32xf32>
    %691 = vector.shape_cast %690 : vector<1x32x32xf32> to vector<32x32xf32>
    %c1_326 = arith.constant 1 : index
    %c0_327 = arith.constant 0 : index
    %c0_328 = arith.constant 0 : index
    %692 = vector.load %arg10[%c1_326, %c0_327, %c0_328] : memref<2x1x32xf32, #tpu.memory_space<vmem>>, vector<1x1x32xf32>
    %693 = vector.shape_cast %692 : vector<1x1x32xf32> to vector<1x32xf32>
    %694 = vector.extract_strided_slice %685 {offsets = [0, 0], sizes = [9, 32], strides = [1, 1]} : vector<18x32xf32> to vector<9x32xf32>
    %695 = vector.extract_strided_slice %686 {offsets = [0, 0], sizes = [9, 32], strides = [1, 1]} : vector<18x32xf32> to vector<9x32xf32>
    %696 = vector.extract_strided_slice %689 {offsets = [0, 0], sizes = [9, 32], strides = [1, 1]} : vector<18x32xf32> to vector<9x32xf32>
    %cst_329 = arith.constant 0.000000e+00 : f32
    %697 = vector.broadcast %cst_329 : f32 to vector<9x32xf32>
    %698 = vector.extract_strided_slice %694 {offsets = [0, 0], sizes = [9, 8], strides = [1, 1]} : vector<9x32xf32> to vector<9x8xf32>
    %699 = vector.extract_strided_slice %695 {offsets = [0, 0], sizes = [9, 8], strides = [1, 1]} : vector<9x32xf32> to vector<9x8xf32>
    %cst_330 = arith.constant dense<0.000000e+00> : vector<9x9xf32>
    %700 = tpu.matmul %698, %699, %cst_330 {dimension_numbers = #tpu.dot_dimension_numbers<[1], [1], [0], [0], [0, 0, 1, 0], [], []>} : vector<9x8xf32>, vector<9x8xf32>, vector<9x9xf32> -> vector<9x9xf32>
    %cst_331 = arith.constant 0.353553385 : f32
    %701 = vector.broadcast %cst_331 : f32 to vector<9x9xf32>
    %702 = arith.mulf %700, %701 : vector<9x9xf32>
    %cst_332 = arith.constant dense<0xFF800000> : vector<9xf32>
    %703 = vector.multi_reduction <maximumf>, %702, %cst_332 [1] : vector<9x9xf32> to vector<9xf32>
    %704 = vector.shape_cast %703 : vector<9xf32> to vector<9x1xf32>
    %705 = vector.broadcast %704 : vector<9x1xf32> to vector<9x9xf32>
    %706 = arith.subf %702, %705 : vector<9x9xf32>
    %707 = math.exp %706 : vector<9x9xf32>
    %cst_333 = arith.constant dense<0.000000e+00> : vector<9xf32>
    %708 = vector.multi_reduction <add>, %707, %cst_333 [1] : vector<9x9xf32> to vector<9xf32>
    %709 = vector.shape_cast %708 : vector<9xf32> to vector<9x1xf32>
    %710 = vector.broadcast %709 : vector<9x1xf32> to vector<9x9xf32>
    %711 = arith.divf %707, %710 : vector<9x9xf32>
    %712 = vector.broadcast %618 : vector<1x9xf32> to vector<9x9xf32>
    %713 = arith.mulf %711, %712 : vector<9x9xf32>
    %714 = vector.extract_strided_slice %696 {offsets = [0, 0], sizes = [9, 8], strides = [1, 1]} : vector<9x32xf32> to vector<9x8xf32>
    %cst_334 = arith.constant dense<0.000000e+00> : vector<9x8xf32>
    %715 = tpu.matmul %713, %714, %cst_334 {dimension_numbers = #tpu.dot_dimension_numbers<[1], [0], [0], [1], [0, 0, 1, 1], [], []>} : vector<9x9xf32>, vector<9x8xf32>, vector<9x8xf32> -> vector<9x8xf32>
    %716 = vector.extract_strided_slice %691 {offsets = [0, 0], sizes = [8, 32], strides = [1, 1]} : vector<32x32xf32> to vector<8x32xf32>
    %cst_335 = arith.constant dense<0.000000e+00> : vector<9x32xf32>
    %717 = tpu.matmul %715, %716, %cst_335 {dimension_numbers = #tpu.dot_dimension_numbers<[1], [0], [0], [1], [0, 0, 1, 1], [], []>} : vector<9x8xf32>, vector<8x32xf32>, vector<9x32xf32> -> vector<9x32xf32>
    %718 = arith.addf %697, %717 : vector<9x32xf32>
    %719 = vector.extract_strided_slice %694 {offsets = [0, 8], sizes = [9, 8], strides = [1, 1]} : vector<9x32xf32> to vector<9x8xf32>
    %720 = vector.extract_strided_slice %695 {offsets = [0, 8], sizes = [9, 8], strides = [1, 1]} : vector<9x32xf32> to vector<9x8xf32>
    %cst_336 = arith.constant dense<0.000000e+00> : vector<9x9xf32>
    %721 = tpu.matmul %719, %720, %cst_336 {dimension_numbers = #tpu.dot_dimension_numbers<[1], [1], [0], [0], [0, 0, 1, 0], [], []>} : vector<9x8xf32>, vector<9x8xf32>, vector<9x9xf32> -> vector<9x9xf32>
    %cst_337 = arith.constant 0.353553385 : f32
    %722 = vector.broadcast %cst_337 : f32 to vector<9x9xf32>
    %723 = arith.mulf %721, %722 : vector<9x9xf32>
    %cst_338 = arith.constant dense<0xFF800000> : vector<9xf32>
    %724 = vector.multi_reduction <maximumf>, %723, %cst_338 [1] : vector<9x9xf32> to vector<9xf32>
    %725 = vector.shape_cast %724 : vector<9xf32> to vector<9x1xf32>
    %726 = vector.broadcast %725 : vector<9x1xf32> to vector<9x9xf32>
    %727 = arith.subf %723, %726 : vector<9x9xf32>
    %728 = math.exp %727 : vector<9x9xf32>
    %cst_339 = arith.constant dense<0.000000e+00> : vector<9xf32>
    %729 = vector.multi_reduction <add>, %728, %cst_339 [1] : vector<9x9xf32> to vector<9xf32>
    %730 = vector.shape_cast %729 : vector<9xf32> to vector<9x1xf32>
    %731 = vector.broadcast %730 : vector<9x1xf32> to vector<9x9xf32>
    %732 = arith.divf %728, %731 : vector<9x9xf32>
    %733 = vector.broadcast %618 : vector<1x9xf32> to vector<9x9xf32>
    %734 = arith.mulf %732, %733 : vector<9x9xf32>
    %735 = vector.extract_strided_slice %696 {offsets = [0, 8], sizes = [9, 8], strides = [1, 1]} : vector<9x32xf32> to vector<9x8xf32>
    %cst_340 = arith.constant dense<0.000000e+00> : vector<9x8xf32>
    %736 = tpu.matmul %734, %735, %cst_340 {dimension_numbers = #tpu.dot_dimension_numbers<[1], [0], [0], [1], [0, 0, 1, 1], [], []>} : vector<9x9xf32>, vector<9x8xf32>, vector<9x8xf32> -> vector<9x8xf32>
    %737 = vector.extract_strided_slice %691 {offsets = [8, 0], sizes = [8, 32], strides = [1, 1]} : vector<32x32xf32> to vector<8x32xf32>
    %cst_341 = arith.constant dense<0.000000e+00> : vector<9x32xf32>
    %738 = tpu.matmul %736, %737, %cst_341 {dimension_numbers = #tpu.dot_dimension_numbers<[1], [0], [0], [1], [0, 0, 1, 1], [], []>} : vector<9x8xf32>, vector<8x32xf32>, vector<9x32xf32> -> vector<9x32xf32>
    %739 = arith.addf %718, %738 : vector<9x32xf32>
    %740 = vector.extract_strided_slice %694 {offsets = [0, 16], sizes = [9, 8], strides = [1, 1]} : vector<9x32xf32> to vector<9x8xf32>
    %741 = vector.extract_strided_slice %695 {offsets = [0, 16], sizes = [9, 8], strides = [1, 1]} : vector<9x32xf32> to vector<9x8xf32>
    %cst_342 = arith.constant dense<0.000000e+00> : vector<9x9xf32>
    %742 = tpu.matmul %740, %741, %cst_342 {dimension_numbers = #tpu.dot_dimension_numbers<[1], [1], [0], [0], [0, 0, 1, 0], [], []>} : vector<9x8xf32>, vector<9x8xf32>, vector<9x9xf32> -> vector<9x9xf32>
    %cst_343 = arith.constant 0.353553385 : f32
    %743 = vector.broadcast %cst_343 : f32 to vector<9x9xf32>
    %744 = arith.mulf %742, %743 : vector<9x9xf32>
    %cst_344 = arith.constant dense<0xFF800000> : vector<9xf32>
    %745 = vector.multi_reduction <maximumf>, %744, %cst_344 [1] : vector<9x9xf32> to vector<9xf32>
    %746 = vector.shape_cast %745 : vector<9xf32> to vector<9x1xf32>
    %747 = vector.broadcast %746 : vector<9x1xf32> to vector<9x9xf32>
    %748 = arith.subf %744, %747 : vector<9x9xf32>
    %749 = math.exp %748 : vector<9x9xf32>
    %cst_345 = arith.constant dense<0.000000e+00> : vector<9xf32>
    %750 = vector.multi_reduction <add>, %749, %cst_345 [1] : vector<9x9xf32> to vector<9xf32>
    %751 = vector.shape_cast %750 : vector<9xf32> to vector<9x1xf32>
    %752 = vector.broadcast %751 : vector<9x1xf32> to vector<9x9xf32>
    %753 = arith.divf %749, %752 : vector<9x9xf32>
    %754 = vector.broadcast %618 : vector<1x9xf32> to vector<9x9xf32>
    %755 = arith.mulf %753, %754 : vector<9x9xf32>
    %756 = vector.extract_strided_slice %696 {offsets = [0, 16], sizes = [9, 8], strides = [1, 1]} : vector<9x32xf32> to vector<9x8xf32>
    %cst_346 = arith.constant dense<0.000000e+00> : vector<9x8xf32>
    %757 = tpu.matmul %755, %756, %cst_346 {dimension_numbers = #tpu.dot_dimension_numbers<[1], [0], [0], [1], [0, 0, 1, 1], [], []>} : vector<9x9xf32>, vector<9x8xf32>, vector<9x8xf32> -> vector<9x8xf32>
    %758 = vector.extract_strided_slice %691 {offsets = [16, 0], sizes = [8, 32], strides = [1, 1]} : vector<32x32xf32> to vector<8x32xf32>
    %cst_347 = arith.constant dense<0.000000e+00> : vector<9x32xf32>
    %759 = tpu.matmul %757, %758, %cst_347 {dimension_numbers = #tpu.dot_dimension_numbers<[1], [0], [0], [1], [0, 0, 1, 1], [], []>} : vector<9x8xf32>, vector<8x32xf32>, vector<9x32xf32> -> vector<9x32xf32>
    %760 = arith.addf %739, %759 : vector<9x32xf32>
    %761 = vector.extract_strided_slice %694 {offsets = [0, 24], sizes = [9, 8], strides = [1, 1]} : vector<9x32xf32> to vector<9x8xf32>
    %762 = vector.extract_strided_slice %695 {offsets = [0, 24], sizes = [9, 8], strides = [1, 1]} : vector<9x32xf32> to vector<9x8xf32>
    %cst_348 = arith.constant dense<0.000000e+00> : vector<9x9xf32>
    %763 = tpu.matmul %761, %762, %cst_348 {dimension_numbers = #tpu.dot_dimension_numbers<[1], [1], [0], [0], [0, 0, 1, 0], [], []>} : vector<9x8xf32>, vector<9x8xf32>, vector<9x9xf32> -> vector<9x9xf32>
    %cst_349 = arith.constant 0.353553385 : f32
    %764 = vector.broadcast %cst_349 : f32 to vector<9x9xf32>
    %765 = arith.mulf %763, %764 : vector<9x9xf32>
    %cst_350 = arith.constant dense<0xFF800000> : vector<9xf32>
    %766 = vector.multi_reduction <maximumf>, %765, %cst_350 [1] : vector<9x9xf32> to vector<9xf32>
    %767 = vector.shape_cast %766 : vector<9xf32> to vector<9x1xf32>
    %768 = vector.broadcast %767 : vector<9x1xf32> to vector<9x9xf32>
    %769 = arith.subf %765, %768 : vector<9x9xf32>
    %770 = math.exp %769 : vector<9x9xf32>
    %cst_351 = arith.constant dense<0.000000e+00> : vector<9xf32>
    %771 = vector.multi_reduction <add>, %770, %cst_351 [1] : vector<9x9xf32> to vector<9xf32>
    %772 = vector.shape_cast %771 : vector<9xf32> to vector<9x1xf32>
    %773 = vector.broadcast %772 : vector<9x1xf32> to vector<9x9xf32>
    %774 = arith.divf %770, %773 : vector<9x9xf32>
    %775 = vector.broadcast %618 : vector<1x9xf32> to vector<9x9xf32>
    %776 = arith.mulf %774, %775 : vector<9x9xf32>
    %777 = vector.extract_strided_slice %696 {offsets = [0, 24], sizes = [9, 8], strides = [1, 1]} : vector<9x32xf32> to vector<9x8xf32>
    %cst_352 = arith.constant dense<0.000000e+00> : vector<9x8xf32>
    %778 = tpu.matmul %776, %777, %cst_352 {dimension_numbers = #tpu.dot_dimension_numbers<[1], [0], [0], [1], [0, 0, 1, 1], [], []>} : vector<9x9xf32>, vector<9x8xf32>, vector<9x8xf32> -> vector<9x8xf32>
    %779 = vector.extract_strided_slice %691 {offsets = [24, 0], sizes = [8, 32], strides = [1, 1]} : vector<32x32xf32> to vector<8x32xf32>
    %cst_353 = arith.constant dense<0.000000e+00> : vector<9x32xf32>
    %780 = tpu.matmul %778, %779, %cst_353 {dimension_numbers = #tpu.dot_dimension_numbers<[1], [0], [0], [1], [0, 0, 1, 1], [], []>} : vector<9x8xf32>, vector<8x32xf32>, vector<9x32xf32> -> vector<9x32xf32>
    %781 = arith.addf %760, %780 : vector<9x32xf32>
    %782 = vector.broadcast %693 : vector<1x32xf32> to vector<9x32xf32>
    %783 = arith.addf %781, %782 : vector<9x32xf32>
    %784 = vector.extract_strided_slice %653 {offsets = [0, 0], sizes = [9, 32], strides = [1, 1]} : vector<18x32xf32> to vector<9x32xf32>
    %785 = arith.addf %784, %783 : vector<9x32xf32>
    %c0_354 = arith.constant 0 : index
    %c0_355 = arith.constant 0 : index
    %786 = vector.load %arg27[%c0_354, %c0_355] : memref<18x32xf32, #tpu.memory_space<vmem>>, vector<9x32xf32>
    tpu.vector_store %arg27[%c0_354, %c0_355], %785 {strides = array<i32>} : memref<18x32xf32, #tpu.memory_space<vmem>>, vector<9x32xf32>,
    %787 = vector.extract_strided_slice %685 {offsets = [9, 0], sizes = [9, 32], strides = [1, 1]} : vector<18x32xf32> to vector<9x32xf32>
    %788 = vector.extract_strided_slice %686 {offsets = [9, 0], sizes = [9, 32], strides = [1, 1]} : vector<18x32xf32> to vector<9x32xf32>
    %789 = vector.extract_strided_slice %689 {offsets = [9, 0], sizes = [9, 32], strides = [1, 1]} : vector<18x32xf32> to vector<9x32xf32>
    %cst_356 = arith.constant 0.000000e+00 : f32
    %790 = vector.broadcast %cst_356 : f32 to vector<9x32xf32>
    %791 = vector.extract_strided_slice %787 {offsets = [0, 0], sizes = [9, 8], strides = [1, 1]} : vector<9x32xf32> to vector<9x8xf32>
    %792 = vector.extract_strided_slice %788 {offsets = [0, 0], sizes = [9, 8], strides = [1, 1]} : vector<9x32xf32> to vector<9x8xf32>
    %cst_357 = arith.constant dense<0.000000e+00> : vector<9x9xf32>
    %793 = tpu.matmul %791, %792, %cst_357 {dimension_numbers = #tpu.dot_dimension_numbers<[1], [1], [0], [0], [0, 0, 1, 0], [], []>} : vector<9x8xf32>, vector<9x8xf32>, vector<9x9xf32> -> vector<9x9xf32>
    %cst_358 = arith.constant 0.353553385 : f32
    %794 = vector.broadcast %cst_358 : f32 to vector<9x9xf32>
    %795 = arith.mulf %793, %794 : vector<9x9xf32>
    %cst_359 = arith.constant dense<0xFF800000> : vector<9xf32>
    %796 = vector.multi_reduction <maximumf>, %795, %cst_359 [1] : vector<9x9xf32> to vector<9xf32>
    %797 = vector.shape_cast %796 : vector<9xf32> to vector<9x1xf32>
    %798 = vector.broadcast %797 : vector<9x1xf32> to vector<9x9xf32>
    %799 = arith.subf %795, %798 : vector<9x9xf32>
    %800 = math.exp %799 : vector<9x9xf32>
    %cst_360 = arith.constant dense<0.000000e+00> : vector<9xf32>
    %801 = vector.multi_reduction <add>, %800, %cst_360 [1] : vector<9x9xf32> to vector<9xf32>
    %802 = vector.shape_cast %801 : vector<9xf32> to vector<9x1xf32>
    %803 = vector.broadcast %802 : vector<9x1xf32> to vector<9x9xf32>
    %804 = arith.divf %800, %803 : vector<9x9xf32>
    %805 = vector.broadcast %643 : vector<1x9xf32> to vector<9x9xf32>
    %806 = arith.mulf %804, %805 : vector<9x9xf32>
    %807 = vector.extract_strided_slice %789 {offsets = [0, 0], sizes = [9, 8], strides = [1, 1]} : vector<9x32xf32> to vector<9x8xf32>
    %cst_361 = arith.constant dense<0.000000e+00> : vector<9x8xf32>
    %808 = tpu.matmul %806, %807, %cst_361 {dimension_numbers = #tpu.dot_dimension_numbers<[1], [0], [0], [1], [0, 0, 1, 1], [], []>} : vector<9x9xf32>, vector<9x8xf32>, vector<9x8xf32> -> vector<9x8xf32>
    %809 = vector.extract_strided_slice %691 {offsets = [0, 0], sizes = [8, 32], strides = [1, 1]} : vector<32x32xf32> to vector<8x32xf32>
    %cst_362 = arith.constant dense<0.000000e+00> : vector<9x32xf32>
    %810 = tpu.matmul %808, %809, %cst_362 {dimension_numbers = #tpu.dot_dimension_numbers<[1], [0], [0], [1], [0, 0, 1, 1], [], []>} : vector<9x8xf32>, vector<8x32xf32>, vector<9x32xf32> -> vector<9x32xf32>
    %811 = arith.addf %790, %810 : vector<9x32xf32>
    %812 = vector.extract_strided_slice %787 {offsets = [0, 8], sizes = [9, 8], strides = [1, 1]} : vector<9x32xf32> to vector<9x8xf32>
    %813 = vector.extract_strided_slice %788 {offsets = [0, 8], sizes = [9, 8], strides = [1, 1]} : vector<9x32xf32> to vector<9x8xf32>
    %cst_363 = arith.constant dense<0.000000e+00> : vector<9x9xf32>
    %814 = tpu.matmul %812, %813, %cst_363 {dimension_numbers = #tpu.dot_dimension_numbers<[1], [1], [0], [0], [0, 0, 1, 0], [], []>} : vector<9x8xf32>, vector<9x8xf32>, vector<9x9xf32> -> vector<9x9xf32>
    %cst_364 = arith.constant 0.353553385 : f32
    %815 = vector.broadcast %cst_364 : f32 to vector<9x9xf32>
    %816 = arith.mulf %814, %815 : vector<9x9xf32>
    %cst_365 = arith.constant dense<0xFF800000> : vector<9xf32>
    %817 = vector.multi_reduction <maximumf>, %816, %cst_365 [1] : vector<9x9xf32> to vector<9xf32>
    %818 = vector.shape_cast %817 : vector<9xf32> to vector<9x1xf32>
    %819 = vector.broadcast %818 : vector<9x1xf32> to vector<9x9xf32>
    %820 = arith.subf %816, %819 : vector<9x9xf32>
    %821 = math.exp %820 : vector<9x9xf32>
    %cst_366 = arith.constant dense<0.000000e+00> : vector<9xf32>
    %822 = vector.multi_reduction <add>, %821, %cst_366 [1] : vector<9x9xf32> to vector<9xf32>
    %823 = vector.shape_cast %822 : vector<9xf32> to vector<9x1xf32>
    %824 = vector.broadcast %823 : vector<9x1xf32> to vector<9x9xf32>
    %825 = arith.divf %821, %824 : vector<9x9xf32>
    %826 = vector.broadcast %643 : vector<1x9xf32> to vector<9x9xf32>
    %827 = arith.mulf %825, %826 : vector<9x9xf32>
    %828 = vector.extract_strided_slice %789 {offsets = [0, 8], sizes = [9, 8], strides = [1, 1]} : vector<9x32xf32> to vector<9x8xf32>
    %cst_367 = arith.constant dense<0.000000e+00> : vector<9x8xf32>
    %829 = tpu.matmul %827, %828, %cst_367 {dimension_numbers = #tpu.dot_dimension_numbers<[1], [0], [0], [1], [0, 0, 1, 1], [], []>} : vector<9x9xf32>, vector<9x8xf32>, vector<9x8xf32> -> vector<9x8xf32>
    %830 = vector.extract_strided_slice %691 {offsets = [8, 0], sizes = [8, 32], strides = [1, 1]} : vector<32x32xf32> to vector<8x32xf32>
    %cst_368 = arith.constant dense<0.000000e+00> : vector<9x32xf32>
    %831 = tpu.matmul %829, %830, %cst_368 {dimension_numbers = #tpu.dot_dimension_numbers<[1], [0], [0], [1], [0, 0, 1, 1], [], []>} : vector<9x8xf32>, vector<8x32xf32>, vector<9x32xf32> -> vector<9x32xf32>
    %832 = arith.addf %811, %831 : vector<9x32xf32>
    %833 = vector.extract_strided_slice %787 {offsets = [0, 16], sizes = [9, 8], strides = [1, 1]} : vector<9x32xf32> to vector<9x8xf32>
    %834 = vector.extract_strided_slice %788 {offsets = [0, 16], sizes = [9, 8], strides = [1, 1]} : vector<9x32xf32> to vector<9x8xf32>
    %cst_369 = arith.constant dense<0.000000e+00> : vector<9x9xf32>
    %835 = tpu.matmul %833, %834, %cst_369 {dimension_numbers = #tpu.dot_dimension_numbers<[1], [1], [0], [0], [0, 0, 1, 0], [], []>} : vector<9x8xf32>, vector<9x8xf32>, vector<9x9xf32> -> vector<9x9xf32>
    %cst_370 = arith.constant 0.353553385 : f32
    %836 = vector.broadcast %cst_370 : f32 to vector<9x9xf32>
    %837 = arith.mulf %835, %836 : vector<9x9xf32>
    %cst_371 = arith.constant dense<0xFF800000> : vector<9xf32>
    %838 = vector.multi_reduction <maximumf>, %837, %cst_371 [1] : vector<9x9xf32> to vector<9xf32>
    %839 = vector.shape_cast %838 : vector<9xf32> to vector<9x1xf32>
    %840 = vector.broadcast %839 : vector<9x1xf32> to vector<9x9xf32>
    %841 = arith.subf %837, %840 : vector<9x9xf32>
    %842 = math.exp %841 : vector<9x9xf32>
    %cst_372 = arith.constant dense<0.000000e+00> : vector<9xf32>
    %843 = vector.multi_reduction <add>, %842, %cst_372 [1] : vector<9x9xf32> to vector<9xf32>
    %844 = vector.shape_cast %843 : vector<9xf32> to vector<9x1xf32>
    %845 = vector.broadcast %844 : vector<9x1xf32> to vector<9x9xf32>
    %846 = arith.divf %842, %845 : vector<9x9xf32>
    %847 = vector.broadcast %643 : vector<1x9xf32> to vector<9x9xf32>
    %848 = arith.mulf %846, %847 : vector<9x9xf32>
    %849 = vector.extract_strided_slice %789 {offsets = [0, 16], sizes = [9, 8], strides = [1, 1]} : vector<9x32xf32> to vector<9x8xf32>
    %cst_373 = arith.constant dense<0.000000e+00> : vector<9x8xf32>
    %850 = tpu.matmul %848, %849, %cst_373 {dimension_numbers = #tpu.dot_dimension_numbers<[1], [0], [0], [1], [0, 0, 1, 1], [], []>} : vector<9x9xf32>, vector<9x8xf32>, vector<9x8xf32> -> vector<9x8xf32>
    %851 = vector.extract_strided_slice %691 {offsets = [16, 0], sizes = [8, 32], strides = [1, 1]} : vector<32x32xf32> to vector<8x32xf32>
    %cst_374 = arith.constant dense<0.000000e+00> : vector<9x32xf32>
    %852 = tpu.matmul %850, %851, %cst_374 {dimension_numbers = #tpu.dot_dimension_numbers<[1], [0], [0], [1], [0, 0, 1, 1], [], []>} : vector<9x8xf32>, vector<8x32xf32>, vector<9x32xf32> -> vector<9x32xf32>
    %853 = arith.addf %832, %852 : vector<9x32xf32>
    %854 = vector.extract_strided_slice %787 {offsets = [0, 24], sizes = [9, 8], strides = [1, 1]} : vector<9x32xf32> to vector<9x8xf32>
    %855 = vector.extract_strided_slice %788 {offsets = [0, 24], sizes = [9, 8], strides = [1, 1]} : vector<9x32xf32> to vector<9x8xf32>
    %cst_375 = arith.constant dense<0.000000e+00> : vector<9x9xf32>
    %856 = tpu.matmul %854, %855, %cst_375 {dimension_numbers = #tpu.dot_dimension_numbers<[1], [1], [0], [0], [0, 0, 1, 0], [], []>} : vector<9x8xf32>, vector<9x8xf32>, vector<9x9xf32> -> vector<9x9xf32>
    %cst_376 = arith.constant 0.353553385 : f32
    %857 = vector.broadcast %cst_376 : f32 to vector<9x9xf32>
    %858 = arith.mulf %856, %857 : vector<9x9xf32>
    %cst_377 = arith.constant dense<0xFF800000> : vector<9xf32>
    %859 = vector.multi_reduction <maximumf>, %858, %cst_377 [1] : vector<9x9xf32> to vector<9xf32>
    %860 = vector.shape_cast %859 : vector<9xf32> to vector<9x1xf32>
    %861 = vector.broadcast %860 : vector<9x1xf32> to vector<9x9xf32>
    %862 = arith.subf %858, %861 : vector<9x9xf32>
    %863 = math.exp %862 : vector<9x9xf32>
    %cst_378 = arith.constant dense<0.000000e+00> : vector<9xf32>
    %864 = vector.multi_reduction <add>, %863, %cst_378 [1] : vector<9x9xf32> to vector<9xf32>
    %865 = vector.shape_cast %864 : vector<9xf32> to vector<9x1xf32>
    %866 = vector.broadcast %865 : vector<9x1xf32> to vector<9x9xf32>
    %867 = arith.divf %863, %866 : vector<9x9xf32>
    %868 = vector.broadcast %643 : vector<1x9xf32> to vector<9x9xf32>
    %869 = arith.mulf %867, %868 : vector<9x9xf32>
    %870 = vector.extract_strided_slice %789 {offsets = [0, 24], sizes = [9, 8], strides = [1, 1]} : vector<9x32xf32> to vector<9x8xf32>
    %cst_379 = arith.constant dense<0.000000e+00> : vector<9x8xf32>
    %871 = tpu.matmul %869, %870, %cst_379 {dimension_numbers = #tpu.dot_dimension_numbers<[1], [0], [0], [1], [0, 0, 1, 1], [], []>} : vector<9x9xf32>, vector<9x8xf32>, vector<9x8xf32> -> vector<9x8xf32>
    %872 = vector.extract_strided_slice %691 {offsets = [24, 0], sizes = [8, 32], strides = [1, 1]} : vector<32x32xf32> to vector<8x32xf32>
    %cst_380 = arith.constant dense<0.000000e+00> : vector<9x32xf32>
    %873 = tpu.matmul %871, %872, %cst_380 {dimension_numbers = #tpu.dot_dimension_numbers<[1], [0], [0], [1], [0, 0, 1, 1], [], []>} : vector<9x8xf32>, vector<8x32xf32>, vector<9x32xf32> -> vector<9x32xf32>
    %874 = arith.addf %853, %873 : vector<9x32xf32>
    %875 = vector.broadcast %693 : vector<1x32xf32> to vector<9x32xf32>
    %876 = arith.addf %874, %875 : vector<9x32xf32>
    %877 = vector.extract_strided_slice %653 {offsets = [9, 0], sizes = [9, 32], strides = [1, 1]} : vector<18x32xf32> to vector<9x32xf32>
    %878 = arith.addf %877, %876 : vector<9x32xf32>
    %c9_381 = arith.constant 9 : index
    %c0_382 = arith.constant 0 : index
    %879 = vector.load %arg27[%c9_381, %c0_382] : memref<18x32xf32, #tpu.memory_space<vmem>>, vector<9x32xf32>
    tpu.vector_store %arg27[%c9_381, %c0_382], %878 {strides = array<i32>} : memref<18x32xf32, #tpu.memory_space<vmem>>, vector<9x32xf32>,
    %c0_383 = arith.constant 0 : index
    %c0_384 = arith.constant 0 : index
    %880 = vector.load %arg27[%c0_383, %c0_384] : memref<18x32xf32, #tpu.memory_space<vmem>>, vector<18x32xf32>
    %c1_385 = arith.constant 1 : index
    %c0_386 = arith.constant 0 : index
    %c0_387 = arith.constant 0 : index
    %881 = vector.load %arg11[%c1_385, %c0_386, %c0_387] : memref<2x1x32xf32, #tpu.memory_space<vmem>>, vector<1x1x32xf32>
    %882 = vector.shape_cast %881 : vector<1x1x32xf32> to vector<1x32xf32>
    %c1_388 = arith.constant 1 : index
    %c0_389 = arith.constant 0 : index
    %c0_390 = arith.constant 0 : index
    %883 = vector.load %arg12[%c1_388, %c0_389, %c0_390] : memref<2x1x32xf32, #tpu.memory_space<vmem>>, vector<1x1x32xf32>
    %884 = vector.shape_cast %883 : vector<1x1x32xf32> to vector<1x32xf32>
    %cst_391 = arith.constant dense<0.000000e+00> : vector<18xf32>
    %885 = vector.multi_reduction <add>, %880, %cst_391 [1] : vector<18x32xf32> to vector<18xf32>
    %886 = vector.shape_cast %885 : vector<18xf32> to vector<18x1xf32>
    %cst_392 = arith.constant 3.200000e+01 : f32
    %887 = vector.broadcast %cst_392 : f32 to vector<18x1xf32>
    %888 = arith.divf %886, %887 : vector<18x1xf32>
    %889 = vector.broadcast %888 : vector<18x1xf32> to vector<18x32xf32>
    %890 = arith.subf %880, %889 : vector<18x32xf32>
    %891 = arith.mulf %890, %890 : vector<18x32xf32>
    %cst_393 = arith.constant dense<0.000000e+00> : vector<18xf32>
    %892 = vector.multi_reduction <add>, %891, %cst_393 [1] : vector<18x32xf32> to vector<18xf32>
    %893 = vector.shape_cast %892 : vector<18xf32> to vector<18x1xf32>
    %cst_394 = arith.constant 3.200000e+01 : f32
    %894 = vector.broadcast %cst_394 : f32 to vector<18x1xf32>
    %895 = arith.divf %893, %894 : vector<18x1xf32>
    %cst_395 = arith.constant 9.99999997E-7 : f32
    %896 = vector.broadcast %cst_395 : f32 to vector<18x1xf32>
    %897 = arith.addf %895, %896 : vector<18x1xf32>
    %898 = math.rsqrt %897 : vector<18x1xf32>
    %899 = vector.broadcast %898 : vector<18x1xf32> to vector<18x32xf32>
    %900 = arith.mulf %890, %899 : vector<18x32xf32>
    %901 = vector.broadcast %882 : vector<1x32xf32> to vector<18x32xf32>
    %902 = arith.mulf %900, %901 : vector<18x32xf32>
    %903 = vector.broadcast %884 : vector<1x32xf32> to vector<18x32xf32>
    %904 = arith.addf %902, %903 : vector<18x32xf32>
    %c1_396 = arith.constant 1 : index
    %c0_397 = arith.constant 0 : index
    %c0_398 = arith.constant 0 : index
    %905 = vector.load %arg13[%c1_396, %c0_397, %c0_398] : memref<2x32x128xf32, #tpu.memory_space<vmem>>, vector<1x32x128xf32>
    %906 = vector.shape_cast %905 : vector<1x32x128xf32> to vector<32x128xf32>
    %cst_399 = arith.constant dense<0.000000e+00> : vector<18x128xf32>
    %907 = tpu.matmul %904, %906, %cst_399 {dimension_numbers = #tpu.dot_dimension_numbers<[1], [0], [0], [1], [0, 0, 1, 1], [], []>} : vector<18x32xf32>, vector<32x128xf32>, vector<18x128xf32> -> vector<18x128xf32>
    %c1_400 = arith.constant 1 : index
    %c0_401 = arith.constant 0 : index
    %c0_402 = arith.constant 0 : index
    %908 = vector.load %arg14[%c1_400, %c0_401, %c0_402] : memref<2x1x128xf32, #tpu.memory_space<vmem>>, vector<1x1x128xf32>
    %909 = vector.shape_cast %908 : vector<1x1x128xf32> to vector<1x128xf32>
    %910 = vector.broadcast %909 : vector<1x128xf32> to vector<18x128xf32>
    %911 = arith.addf %907, %910 : vector<18x128xf32>
    %cst_403 = arith.constant 5.000000e-01 : f32
    %912 = vector.broadcast %cst_403 : f32 to vector<18x128xf32>
    %913 = arith.mulf %912, %911 : vector<18x128xf32>
    %cst_404 = arith.constant 4.471500e-02 : f32
    %914 = vector.broadcast %cst_404 : f32 to vector<18x128xf32>
    %915 = arith.mulf %914, %911 : vector<18x128xf32>
    %916 = arith.mulf %915, %911 : vector<18x128xf32>
    %917 = arith.mulf %916, %911 : vector<18x128xf32>
    %918 = arith.addf %911, %917 : vector<18x128xf32>
    %cst_405 = arith.constant 0.797884583 : f32
    %919 = vector.broadcast %cst_405 : f32 to vector<18x128xf32>
    %920 = arith.mulf %919, %918 : vector<18x128xf32>
    %921 = math.tanh %920 : vector<18x128xf32>
    %cst_406 = arith.constant 1.000000e+00 : f32
    %922 = vector.broadcast %cst_406 : f32 to vector<18x128xf32>
    %923 = arith.addf %922, %921 : vector<18x128xf32>
    %924 = arith.mulf %913, %923 : vector<18x128xf32>
    %c1_407 = arith.constant 1 : index
    %c0_408 = arith.constant 0 : index
    %c0_409 = arith.constant 0 : index
    %925 = vector.load %arg15[%c1_407, %c0_408, %c0_409] : memref<2x128x32xf32, #tpu.memory_space<vmem>>, vector<1x128x32xf32>
    %926 = vector.shape_cast %925 : vector<1x128x32xf32> to vector<128x32xf32>
    %cst_410 = arith.constant dense<0.000000e+00> : vector<18x32xf32>
    %927 = tpu.matmul %924, %926, %cst_410 {dimension_numbers = #tpu.dot_dimension_numbers<[1], [0], [0], [1], [0, 0, 1, 1], [], []>} : vector<18x128xf32>, vector<128x32xf32>, vector<18x32xf32> -> vector<18x32xf32>
    %c1_411 = arith.constant 1 : index
    %c0_412 = arith.constant 0 : index
    %c0_413 = arith.constant 0 : index
    %928 = vector.load %arg16[%c1_411, %c0_412, %c0_413] : memref<2x1x32xf32, #tpu.memory_space<vmem>>, vector<1x1x32xf32>
    %929 = vector.shape_cast %928 : vector<1x1x32xf32> to vector<1x32xf32>
    %930 = vector.broadcast %929 : vector<1x32xf32> to vector<18x32xf32>
    %931 = arith.addf %927, %930 : vector<18x32xf32>
    %932 = arith.addf %880, %931 : vector<18x32xf32>
    %c0_414 = arith.constant 0 : index
    %c0_415 = arith.constant 0 : index
    %933 = vector.load %arg27[%c0_414, %c0_415] : memref<18x32xf32, #tpu.memory_space<vmem>>, vector<18x32xf32>
    tpu.vector_store %arg27[%c0_414, %c0_415], %932 {strides = array<i32>} : memref<18x32xf32, #tpu.memory_space<vmem>>, vector<18x32xf32>,
    %c0_416 = arith.constant 0 : index
    %c0_417 = arith.constant 0 : index
    %934 = vector.load %arg23[%c0_416, %c0_417] : memref<32x128xf32, #tpu.memory_space<vmem>>, vector<32x128xf32>
    %c0_418 = arith.constant 0 : index
    %c0_419 = arith.constant 0 : index
    %935 = vector.load %arg24[%c0_418, %c0_419] : memref<1x128xf32, #tpu.memory_space<vmem>>, vector<1x128xf32>
    %c0_420 = arith.constant 0 : index
    %c0_421 = arith.constant 0 : index
    %936 = vector.load %arg27[%c0_420, %c0_421] : memref<18x32xf32, #tpu.memory_space<vmem>>, vector<1x32xf32>
    %c0_422 = arith.constant 0 : index
    %c0_423 = arith.constant 0 : index
    %937 = vector.load %arg21[%c0_422, %c0_423] : memref<1x32xf32, #tpu.memory_space<vmem>>, vector<1x32xf32>
    %c0_424 = arith.constant 0 : index
    %c0_425 = arith.constant 0 : index
    %938 = vector.load %arg22[%c0_424, %c0_425] : memref<1x32xf32, #tpu.memory_space<vmem>>, vector<1x32xf32>
    %cst_426 = arith.constant dense<0.000000e+00> : vector<1xf32>
    %939 = vector.multi_reduction <add>, %936, %cst_426 [1] : vector<1x32xf32> to vector<1xf32>
    %940 = vector.shape_cast %939 : vector<1xf32> to vector<1x1xf32>
    %cst_427 = arith.constant 3.200000e+01 : f32
    %941 = vector.broadcast %cst_427 : f32 to vector<1x1xf32>
    %942 = arith.divf %940, %941 : vector<1x1xf32>
    %943 = vector.broadcast %942 : vector<1x1xf32> to vector<1x32xf32>
    %944 = arith.subf %936, %943 : vector<1x32xf32>
    %945 = arith.mulf %944, %944 : vector<1x32xf32>
    %cst_428 = arith.constant dense<0.000000e+00> : vector<1xf32>
    %946 = vector.multi_reduction <add>, %945, %cst_428 [1] : vector<1x32xf32> to vector<1xf32>
    %947 = vector.shape_cast %946 : vector<1xf32> to vector<1x1xf32>
    %cst_429 = arith.constant 3.200000e+01 : f32
    %948 = vector.broadcast %cst_429 : f32 to vector<1x1xf32>
    %949 = arith.divf %947, %948 : vector<1x1xf32>
    %cst_430 = arith.constant 9.99999997E-7 : f32
    %950 = vector.broadcast %cst_430 : f32 to vector<1x1xf32>
    %951 = arith.addf %949, %950 : vector<1x1xf32>
    %952 = math.rsqrt %951 : vector<1x1xf32>
    %953 = vector.broadcast %952 : vector<1x1xf32> to vector<1x32xf32>
    %954 = arith.mulf %944, %953 : vector<1x32xf32>
    %955 = arith.mulf %954, %937 : vector<1x32xf32>
    %956 = arith.addf %955, %938 : vector<1x32xf32>
    %cst_431 = arith.constant dense<0.000000e+00> : vector<1x128xf32>
    %957 = tpu.matmul %956, %934, %cst_431 {dimension_numbers = #tpu.dot_dimension_numbers<[1], [0], [0], [1], [0, 0, 1, 1], [], []>} : vector<1x32xf32>, vector<32x128xf32>, vector<1x128xf32> -> vector<1x128xf32>
    %958 = arith.addf %957, %935 : vector<1x128xf32>
    %c0_432 = arith.constant 0 : index
    %c0_433 = arith.constant 0 : index
    %959 = vector.load %arg25[%c0_432, %c0_433] : memref<2x128xf32, #tpu.memory_space<vmem>>, vector<1x128xf32>
    tpu.vector_store %arg25[%c0_432, %c0_433], %958 {strides = array<i32>} : memref<2x128xf32, #tpu.memory_space<vmem>>, vector<1x128xf32>,
    %c9_434 = arith.constant 9 : index
    %c0_435 = arith.constant 0 : index
    %960 = vector.load %arg27[%c9_434, %c0_435] : memref<18x32xf32, #tpu.memory_space<vmem>>, vector<1x32xf32>
    %c0_436 = arith.constant 0 : index
    %c0_437 = arith.constant 0 : index
    %961 = vector.load %arg21[%c0_436, %c0_437] : memref<1x32xf32, #tpu.memory_space<vmem>>, vector<1x32xf32>
    %c0_438 = arith.constant 0 : index
    %c0_439 = arith.constant 0 : index
    %962 = vector.load %arg22[%c0_438, %c0_439] : memref<1x32xf32, #tpu.memory_space<vmem>>, vector<1x32xf32>
    %cst_440 = arith.constant dense<0.000000e+00> : vector<1xf32>
    %963 = vector.multi_reduction <add>, %960, %cst_440 [1] : vector<1x32xf32> to vector<1xf32>
    %964 = vector.shape_cast %963 : vector<1xf32> to vector<1x1xf32>
    %cst_441 = arith.constant 3.200000e+01 : f32
    %965 = vector.broadcast %cst_441 : f32 to vector<1x1xf32>
    %966 = arith.divf %964, %965 : vector<1x1xf32>
    %967 = vector.broadcast %966 : vector<1x1xf32> to vector<1x32xf32>
    %968 = arith.subf %960, %967 : vector<1x32xf32>
    %969 = arith.mulf %968, %968 : vector<1x32xf32>
    %cst_442 = arith.constant dense<0.000000e+00> : vector<1xf32>
    %970 = vector.multi_reduction <add>, %969, %cst_442 [1] : vector<1x32xf32> to vector<1xf32>
    %971 = vector.shape_cast %970 : vector<1xf32> to vector<1x1xf32>
    %cst_443 = arith.constant 3.200000e+01 : f32
    %972 = vector.broadcast %cst_443 : f32 to vector<1x1xf32>
    %973 = arith.divf %971, %972 : vector<1x1xf32>
    %cst_444 = arith.constant 9.99999997E-7 : f32
    %974 = vector.broadcast %cst_444 : f32 to vector<1x1xf32>
    %975 = arith.addf %973, %974 : vector<1x1xf32>
    %976 = math.rsqrt %975 : vector<1x1xf32>
    %977 = vector.broadcast %976 : vector<1x1xf32> to vector<1x32xf32>
    %978 = arith.mulf %968, %977 : vector<1x32xf32>
    %979 = arith.mulf %978, %961 : vector<1x32xf32>
    %980 = arith.addf %979, %962 : vector<1x32xf32>
    %cst_445 = arith.constant dense<0.000000e+00> : vector<1x128xf32>
    %981 = tpu.matmul %980, %934, %cst_445 {dimension_numbers = #tpu.dot_dimension_numbers<[1], [0], [0], [1], [0, 0, 1, 1], [], []>} : vector<1x32xf32>, vector<32x128xf32>, vector<1x128xf32> -> vector<1x128xf32>
    %982 = arith.addf %981, %935 : vector<1x128xf32>
    %c1_446 = arith.constant 1 : index
    %c0_447 = arith.constant 0 : index
    %983 = vector.load %arg25[%c1_446, %c0_447] : memref<2x128xf32, #tpu.memory_space<vmem>>, vector<1x128xf32>
    tpu.vector_store %arg25[%c1_446, %c0_447], %982 {strides = array<i32>} : memref<2x128xf32, #tpu.memory_space<vmem>>, vector<1x128xf32>,
    %cst_448 = arith.constant 1.250000e-01 : f32
    %984 = vector.broadcast %cst_448 : f32 to vector<1x1xf32>
    %985 = arith.mulf %648, %984 : vector<1x1xf32>
    %c0_449 = arith.constant 0 : index
    %c0_450 = arith.constant 0 : index
    %986 = vector.load %arg26[%c0_449, %c0_450] : memref<1x1xf32, #tpu.memory_space<vmem>>, vector<1x1xf32>
    tpu.vector_store %arg26[%c0_449, %c0_450], %985 {strides = array<i32>} : memref<1x1xf32, #tpu.memory_space<vmem>>, vector<1x1xf32>,
    return
  }
}

</mosaic_0001>

<llo_original>
// kernel: forward.1
$region0: #{forward.1}
  #allocation0 [shape = 'u32[]', space=smem, size = 0x4, offset = 0x4, fixed_abs, tag = 'smem constant byte address 0x4 - core index']
  #allocation1 [shape = 'u32[72,128]{1,0:T(1,128)}', space=vmem, size = 0x9000, scoped, tag = 'internal scratch']
  #allocation2 [shape = 'f32[18,32]{1,0:T(8,128)}', space=vmem, size = 0x3000, scoped, tag = 'scratch operand']
  %s0 = inlined_call_operand.vmem [shape: f32[8,192], index: 0, kind: input, shape index: {}]
  %s1 = inlined_call_operand.vmem [shape: f32[192,32], index: 1, kind: input, shape index: {}]
  %s2 = inlined_call_operand.vmem [shape: f32[1,32], index: 2, kind: input, shape index: {}]
  %s3 = inlined_call_operand.vmem [shape: f32[1,32], index: 3, kind: input, shape index: {}]
  %s4 = inlined_call_operand.vmem [shape: f32[5,32], index: 4, kind: input, shape index: {}]
  %s5 = inlined_call_operand.vmem [shape: f32[2,1,32], index: 5, kind: input, shape index: {}]
  %s6 = inlined_call_operand.vmem [shape: f32[2,1,32], index: 6, kind: input, shape index: {}]
  %s7 = inlined_call_operand.vmem [shape: f32[2,32,96], index: 7, kind: input, shape index: {}]
  %s8 = inlined_call_operand.vmem [shape: f32[2,1,96], index: 8, kind: input, shape index: {}]
  %s9 = inlined_call_operand.vmem [shape: f32[2,32,32], index: 9, kind: input, shape index: {}]
  %s10 = inlined_call_operand.vmem [shape: f32[2,1,32], index: 10, kind: input, shape index: {}]
  %s11 = inlined_call_operand.vmem [shape: f32[2,1,32], index: 11, kind: input, shape index: {}]
  %s12 = inlined_call_operand.vmem [shape: f32[2,1,32], index: 12, kind: input, shape index: {}]
  %s13 = inlined_call_operand.vmem [shape: f32[2,32,128], index: 13, kind: input, shape index: {}]
  %s14 = inlined_call_operand.vmem [shape: f32[2,1,128], index: 14, kind: input, shape index: {}]
  %s15 = inlined_call_operand.vmem [shape: f32[2,128,32], index: 15, kind: input, shape index: {}]
  %s16 = inlined_call_operand.vmem [shape: f32[2,1,32], index: 16, kind: input, shape index: {}]
  %s17 = inlined_call_operand.vmem [shape: f32[2,4,32], index: 17, kind: input, shape index: {}]
  %s18 = inlined_call_operand.vmem [shape: f32[2,4,32], index: 18, kind: input, shape index: {}]
  %s19 = inlined_call_operand.vmem [shape: f32[18,32], index: 19, kind: input, shape index: {}]
  %s20 = inlined_call_operand.vmem [shape: f32[18,32], index: 20, kind: input, shape index: {}]
  %s21 = inlined_call_operand.vmem [shape: f32[1,32], index: 21, kind: input, shape index: {}]
  %s22 = inlined_call_operand.vmem [shape: f32[1,32], index: 22, kind: input, shape index: {}]
  %s23 = inlined_call_operand.vmem [shape: f32[32,128], index: 23, kind: input, shape index: {}]
  %s24 = inlined_call_operand.vmem [shape: f32[1,128], index: 24, kind: input, shape index: {}]
  %s25 = inlined_call_operand.hbm [shape: f32[2,128], index: 25, kind: output, shape index: {0}]
  %s26 = inlined_call_operand.hbm [shape: f32[1,1], index: 26, kind: output, shape index: {1}]
  %27 = xla_tuple %s25, %s26
  %s28 = sld [smem:[#allocation0]]
  $region118: #{forward.1} parent=0
    _
  %s30 = ssub.s32 1, %s28
  %s31 = scalar_select 0, %s30, %s28
  $region1: #{forward.1} parent=0
    #allocation3 [shape = 'u8[1024]{0}', space=vmem, size = 0x400, scoped, tag = 'output window, operand 0, single buffered']
    #allocation4 [shape = 's32[1]{0}', space=sflag, size = 0x4, scoped, tag = 'scoped memory for forward.1']
    #allocation5 [shape = 'u8[512]{0}', space=vmem, size = 0x400, scoped, tag = 'output window, operand 1, single buffered']
    #allocation6 [shape = 's32[1]{0}', space=sflag, size = 0x4, scoped, tag = 'scoped memory for forward.1']
    %32 = vsyncpa [#allocation4], 0
    %33 = vsyncpa [#allocation6], 0
    // Predicated region
    $region2: #{forward.1} parent=1 // pred_check
      _
    $region3: #{forward.1} parent=1 // pred_check_branch
      %35 = sbr.rel (0) target = $region5
    $region4: #{forward.1} parent=1 // pred_region
      _
    $region5: #{forward.1} parent=1 // pred_fallthru
      _
    // Predicated region
    $region6: #{forward.1} parent=1 // pred_check
      _
    $region7: #{forward.1} parent=1 // pred_check_branch
      %37 = sbr.rel (0) target = $region9
    $region8: #{forward.1} parent=1 // pred_region
      _
    $region9: #{forward.1} parent=1 // pred_fallthru
      _
    // Predicated region
    $region10: #{forward.1} parent=1 // pred_check
      _
    $region11: #{forward.1} parent=1 // pred_check_branch
      %39 = sbr.rel (0) target = $region13
    $region12: #{forward.1} parent=1 // pred_region
      _
    $region13: #{forward.1} parent=1 // pred_fallthru
      _
    // Predicated region
    $region14: #{forward.1} parent=1 // pred_check
      _
    $region15: #{forward.1} parent=1 // pred_check_branch
      %41 = sbr.rel (0) target = $region17
    $region16: #{forward.1} parent=1 // pred_region
      _
    $region17: #{forward.1} parent=1 // pred_fallthru
      _
    // Predicated region
    $region18: #{forward.1} parent=1 // pred_check
      _
    $region19: #{forward.1} parent=1 // pred_check_branch
      %43 = sbr.rel (0) target = $region21
    $region20: #{forward.1} parent=1 // pred_region
      _
    $region21: #{forward.1} parent=1 // pred_fallthru
      _
    // Predicated region
    $region22: #{forward.1} parent=1 // pred_check
      _
    $region23: #{forward.1} parent=1 // pred_check_branch
      %45 = sbr.rel (0) target = $region25
    $region24: #{forward.1} parent=1 // pred_region
      _
    $region25: #{forward.1} parent=1 // pred_fallthru
      _
    // Predicated region
    $region26: #{forward.1} parent=1 // pred_check
      _
    $region27: #{forward.1} parent=1 // pred_check_branch
      %47 = sbr.rel (0) target = $region29
    $region28: #{forward.1} parent=1 // pred_region
      _
    $region29: #{forward.1} parent=1 // pred_fallthru
      _
    // Predicated region
    $region30: #{forward.1} parent=1 // pred_check
      _
    $region31: #{forward.1} parent=1 // pred_check_branch
      %49 = sbr.rel (0) target = $region33
    $region32: #{forward.1} parent=1 // pred_region
      _
    $region33: #{forward.1} parent=1 // pred_fallthru
      _
    // Predicated region
    $region34: #{forward.1} parent=1 // pred_check
      _
    $region35: #{forward.1} parent=1 // pred_check_branch
      %51 = sbr.rel (0) target = $region37
    $region36: #{forward.1} parent=1 // pred_region
      _
    $region37: #{forward.1} parent=1 // pred_fallthru
      _
    // Predicated region
    $region38: #{forward.1} parent=1 // pred_check
      _
    $region39: #{forward.1} parent=1 // pred_check_branch
      %53 = sbr.rel (0) target = $region41
    $region40: #{forward.1} parent=1 // pred_region
      _
    $region41: #{forward.1} parent=1 // pred_fallthru
      _
    // Predicated region
    $region42: #{forward.1} parent=1 // pred_check
      _
    $region43: #{forward.1} parent=1 // pred_check_branch
      %55 = sbr.rel (0) target = $region45
    $region44: #{forward.1} parent=1 // pred_region
      _
    $region45: #{forward.1} parent=1 // pred_fallthru
      _
    // Predicated region
    $region46: #{forward.1} parent=1 // pred_check
      _
    $region47: #{forward.1} parent=1 // pred_check_branch
      %57 = sbr.rel (0) target = $region49
    $region48: #{forward.1} parent=1 // pred_region
      _
    $region49: #{forward.1} parent=1 // pred_fallthru
      _
    // Predicated region
    $region50: #{forward.1} parent=1 // pred_check
      _
    $region51: #{forward.1} parent=1 // pred_check_branch
      %59 = sbr.rel (0) target = $region53
    $region52: #{forward.1} parent=1 // pred_region
      _
    $region53: #{forward.1} parent=1 // pred_fallthru
      _
    // Predicated region
    $region54: #{forward.1} parent=1 // pred_check
      _
    $region55: #{forward.1} parent=1 // pred_check_branch
      %61 = sbr.rel (0) target = $region57
    $region56: #{forward.1} parent=1 // pred_region
      _
    $region57: #{forward.1} parent=1 // pred_fallthru
      _
    // Predicated region
    $region58: #{forward.1} parent=1 // pred_check
      _
    $region59: #{forward.1} parent=1 // pred_check_branch
      %63 = sbr.rel (0) target = $region61
    $region60: #{forward.1} parent=1 // pred_region
      _
    $region61: #{forward.1} parent=1 // pred_fallthru
      _
    // Predicated region
    $region62: #{forward.1} parent=1 // pred_check
      _
    $region63: #{forward.1} parent=1 // pred_check_branch
      %65 = sbr.rel (0) target = $region65
    $region64: #{forward.1} parent=1 // pred_region
      _
    $region65: #{forward.1} parent=1 // pred_fallthru
      _
    // Predicated region
    $region66: #{forward.1} parent=1 // pred_check
      _
    $region67: #{forward.1} parent=1 // pred_check_branch
      %67 = sbr.rel (0) target = $region69
    $region68: #{forward.1} parent=1 // pred_region
      _
    $region69: #{forward.1} parent=1 // pred_fallthru
      _
    // Predicated region
    $region70: #{forward.1} parent=1 // pred_check
      _
    $region71: #{forward.1} parent=1 // pred_check_branch
      %69 = sbr.rel (0) target = $region73
    $region72: #{forward.1} parent=1 // pred_region
      _
    $region73: #{forward.1} parent=1 // pred_fallthru
      _
    // Predicated region
    $region74: #{forward.1} parent=1 // pred_check
      _
    $region75: #{forward.1} parent=1 // pred_check_branch
      %71 = sbr.rel (0) target = $region77
    $region76: #{forward.1} parent=1 // pred_region
      _
    $region77: #{forward.1} parent=1 // pred_fallthru
      _
    // Predicated region
    $region78: #{forward.1} parent=1 // pred_check
      _
    $region79: #{forward.1} parent=1 // pred_check_branch
      %73 = sbr.rel (0) target = $region81
    $region80: #{forward.1} parent=1 // pred_region
      _
    $region81: #{forward.1} parent=1 // pred_fallthru
      _
    // Predicated region
    $region82: #{forward.1} parent=1 // pred_check
      _
    $region83: #{forward.1} parent=1 // pred_check_branch
      %75 = sbr.rel (0) target = $region85
    $region84: #{forward.1} parent=1 // pred_region
      _
    $region85: #{forward.1} parent=1 // pred_fallthru
      _
    // Predicated region
    $region86: #{forward.1} parent=1 // pred_check
      _
    $region87: #{forward.1} parent=1 // pred_check_branch
      %77 = sbr.rel (0) target = $region89
    $region88: #{forward.1} parent=1 // pred_region
      _
    $region89: #{forward.1} parent=1 // pred_fallthru
      _
    // Predicated region
    $region90: #{forward.1} parent=1 // pred_check
      _
    $region91: #{forward.1} parent=1 // pred_check_branch
      %79 = sbr.rel (0) target = $region93
    $region92: #{forward.1} parent=1 // pred_region
      _
    $region93: #{forward.1} parent=1 // pred_fallthru
      _
    // Predicated region
    $region94: #{forward.1} parent=1 // pred_check
      _
    $region95: #{forward.1} parent=1 // pred_check_branch
      %81 = sbr.rel (0) target = $region97
    $region96: #{forward.1} parent=1 // pred_region
      _
    $region97: #{forward.1} parent=1 // pred_fallthru
      _
    // Predicated region
    $region98: #{forward.1} parent=1 // pred_check
      _
    $region99: #{forward.1} parent=1 // pred_check_branch
      %83 = sbr.rel (0) target = $region101
    $region100: #{forward.1} parent=1 // pred_region
      _
    $region101: #{forward.1} parent=1 // pred_fallthru
      _
    %vm84 = vcmask 261120
    %85 = vst.msk [vmem:[#allocation2] sm:$0xff] %vm84, 0.0
    %86 = vst.msk [vmem:[#allocation2 + $0x8] sm:$0xff] %vm84, 0.0
    %vm87 = vcmask 254976
    %88 = vst.msk [vmem:[#allocation2 + $0x10] sm:$0x3] %vm87, 0.0
    %v89 = vld [vmem:[%s3] sm:$0x1]
    %v90 = vld [vmem:[%s4] sm:$0x1]
    %v91 = vadd.f32 %v89, %v90
    %v92 = vld [vmem:[%s4 + $0x1] sm:$0xf]
    %v93 = vld [vmem:[%s2] sm:$0x1]
    %v94 = vld [vmem:[%s0] sm:$0xf]
    %vm95 = vcmask 519168
    %v96 = vsel %vm95, %v94, 0.0
    %97 = vadd.xlane.f32.xlu0 %v96
    %v98 = vpop.xlane.xlu0 %97
    %vm99 = vcmask 1043456
    %v100 = vsel %vm99, %v98, 0.0
    %v101 = vrot.slane %v100, 4
    %v102 = vadd.f32 %v100, %v101
    %v103 = vrot.slane %v102, 2
    %v104 = vadd.f32 %v102, %v103
    %v105 = vrot.slane %v104, 1
    %v106 = vadd.f32 %v104, %v105
    %v107 = vmul.f32 %v106, 0.00390625
    %v108 = vsub.f32 %v94, %v107
    %v109 = vmul.f32 %v108, %v108
    %v110 = vsel %vm95, %v109, 0.0
    %111 = vadd.xlane.f32.xlu0 %v110
    %v112 = vpop.xlane.xlu0 %111
    %v113 = vsel %vm99, %v112, 0.0
    %v114 = vrot.slane %v113, 4
    %v115 = vadd.f32 %v113, %v114
    %v116 = vrot.slane %v115, 2
    %v117 = vadd.f32 %v115, %v116
    %v118 = vrot.slane %v117, 1
    %v119 = vadd.f32 %v117, %v118
    %v120 = vmul.f32 %v119, 0.003921569
    %v121 = vadd.f32 %v120, 0.0001
    %v122 = vmul.f32 %v121, 4.0
    %v123 = vrcp.pop %v122
    %v124 = vmul.f32 %v122, %v123
    %v125 = vsub.f32 1.0, %v124
    %v126 = vmul.f32 %v123, %v125
    %v127 = vadd.f32 %v123, %v126
    %vm128 = vweird.f32 %v122
    %vm129 = vweird.f32 %v123
    %vm130 = vmor %vm128, %vm129
    %v131 = vsel %vm130, %v123, %v127
    %v132 = vand.u32 2147483647, %v122
    %vm133 = vcmp.eq.f32.partialorder %v132, 8.507059e+37
    %v134 = vand.u32 %v122, 2147483648
    %v135 = vor.u32 1.1754944e-38, %v134
    %v136 = vsel %vm133, %v135, %v131
    %v137 = vmul.f32 %v109, %v136
    %v138 = vadd.f32 %v137, 0.5
    %v139 = vsub.f32 0.0, %v138
    %v140 = vmul.f32 %v139, 1.442695
    %v141 = vpow.pop %v140
    %v142 = vadd.f32 %v141, 1.0
    %v143 = vrcp.pop %v142
    %v144 = vmul.f32 %v142, %v143
    %v145 = vsub.f32 1.0, %v144
    %v146 = vmul.f32 %v143, %v145
    %v147 = vadd.f32 %v143, %v146
    %vm148 = vweird.f32 %v142
    %vm149 = vweird.f32 %v143
    %vm150 = vmor %vm148, %vm149
    %v151 = vsel %vm150, %v143, %v147
    %v152 = vand.u32 2147483647, %v142
    %vm153 = vcmp.eq.f32.partialorder %v152, 8.507059e+37
    %v154 = vand.u32 %v142, 2147483648
    %v155 = vor.u32 1.1754944e-38, %v154
    %v156 = vsel %vm153, %v155, %v151
    %v157 = vmul.f32 1.0, %v156
    %v158 = vmul.f32 %v94, %v157
    %v159 = vld [vmem:[%s1] sm:$0xff]
    %v160 = vld [vmem:[%s1 + $0x8] sm:$0xff]
    %v161 = vld [vmem:[%s1 + $0x10] sm:$0xff]
    %v162 = vld [vmem:[%s1 + $0x18] sm:$0xff]
    %v163 = vld [vmem:[%s1 + $0x20] sm:$0xff]
    %v164 = vld [vmem:[%s1 + $0x28] sm:$0xff]
    %v165 = vld [vmem:[%s1 + $0x30] sm:$0xff]
    %v166 = vld [vmem:[%s1 + $0x38] sm:$0xff]
    %168 = vrot.lane.b32.xlu0 %v94, 64
    %v169 = vpop.permute.xlu0 %168
    %v171 = vsel %vm95, %v169, 0.0
    %172 = vadd.xlane.f32.xlu0 %v171
    %v173 = vpop.xlane.xlu0 %172
    %v174 = vsel %vm99, %v173, 0.0
    %v175 = vrot.slane %v174, 4
    %v176 = vadd.f32 %v174, %v175
    %v177 = vrot.slane %v176, 2
    %v178 = vadd.f32 %v176, %v177
    %v179 = vrot.slane %v178, 1
    %v180 = vadd.f32 %v178, %v179
    %v181 = vmul.f32 %v180, 0.00390625
    %v182 = vsub.f32 %v94, %v181
    %v183 = vmul.f32 %v182, %v182
    %185 = vrot.lane.b32.xlu0 %v183, 64
    %v186 = vpop.permute.xlu0 %185
    %v188 = vsel %vm95, %v186, 0.0
    %189 = vadd.xlane.f32.xlu0 %v188
    %v190 = vpop.xlane.xlu0 %189
    %v191 = vsel %vm99, %v190, 0.0
    %v192 = vrot.slane %v191, 4
    %v193 = vadd.f32 %v191, %v192
    %v194 = vrot.slane %v193, 2
    %v195 = vadd.f32 %v193, %v194
    %v196 = vrot.slane %v195, 1
    %v197 = vadd.f32 %v195, %v196
    %v198 = vmul.f32 %v197, 0.003921569
    %v199 = vadd.f32 %v198, 0.0001
    %v200 = vmul.f32 %v199, 4.0
    %v201 = vrcp.pop %v200
    %v202 = vmul.f32 %v200, %v201
    %v203 = vsub.f32 1.0, %v202
    %v204 = vmul.f32 %v201, %v203
    %v205 = vadd.f32 %v201, %v204
    %vm206 = vweird.f32 %v200
    %vm207 = vweird.f32 %v201
    %vm208 = vmor %vm206, %vm207
    %v209 = vsel %vm208, %v201, %v205
    %v210 = vand.u32 2147483647, %v200
    %vm211 = vcmp.eq.f32.partialorder %v210, 8.507059e+37
    %v212 = vand.u32 %v200, 2147483648
    %v213 = vor.u32 1.1754944e-38, %v212
    %v214 = vsel %vm211, %v213, %v209
    %v215 = vmul.f32 %v183, %v214
    %v216 = vadd.f32 %v215, 0.5
    %v217 = vsub.f32 0.0, %v216
    %v218 = vmul.f32 %v217, 1.442695
    %v219 = vpow.pop %v218
    %v220 = vadd.f32 %v219, 1.0
    %v221 = vrcp.pop %v220
    %v222 = vmul.f32 %v220, %v221
    %v223 = vsub.f32 1.0, %v222
    %v224 = vmul.f32 %v221, %v223
    %v225 = vadd.f32 %v221, %v224
    %vm226 = vweird.f32 %v220
    %vm227 = vweird.f32 %v221
    %vm228 = vmor %vm226, %vm227
    %v229 = vsel %vm228, %v221, %v225
    %v230 = vand.u32 2147483647, %v220
    %vm231 = vcmp.eq.f32.partialorder %v230, 8.507059e+37
    %v232 = vand.u32 %v220, 2147483648
    %v233 = vor.u32 1.1754944e-38, %v232
    %v234 = vsel %vm231, %v233, %v229
    %v235 = vmul.f32 1.0, %v234
    %v236 = vmul.f32 %v94, %v235
    %v237 = vld [vmem:[%s1 + $0x40] sm:$0xff]
    %v238 = vld [vmem:[%s1 + $0x48] sm:$0xff]
    %v239 = vld [vmem:[%s1 + $0x50] sm:$0xff]
    %v240 = vld [vmem:[%s1 + $0x58] sm:$0xff]
    %v241 = vld [vmem:[%s1 + $0x60] sm:$0xff]
    %v242 = vld [vmem:[%s1 + $0x68] sm:$0xff]
    %v243 = vld [vmem:[%s1 + $0x70] sm:$0xff]
    %v244 = vld [vmem:[%s1 + $0x78] sm:$0xff]
    %246 = vrot.lane.b32.xlu0 %v236, 64
    %v247 = vpop.permute.xlu0 %246
    %vm248 = vcmask 523264
    %v249 = vsel %vm248, %v247, 0
    %251 = vmatpush.msra.mxu0 0.0
    %252 = vmatpush.msra.mxu0 0.0
    %253 = vmatpush.msra.mxu0 0.0
    %254 = vmatpush.msra.mxu0 0.0
    %255 = vmatpush.msra.mxu0 0.0
    %256 = vmatpush.msra.mxu0 0.0
    %257 = vmatpush.msra.mxu0 0.0
    %258 = vmatpush.msra.mxu0 0.0
    %259 = vmatpush.msra.mxu0 %v244
    %260 = vmatpush.msra.mxu0 %v243
    %261 = vmatpush.msra.mxu0 %v242
    %262 = vmatpush.msra.mxu0 %v241
    %263 = vmatpush.msra.mxu0 %v240
    %264 = vmatpush.msra.mxu0 %v239
    %265 = vmatpush.msra.mxu0 %v238
    %266 = vmatpush.msra.mxu0 %v237
    %267 = vmatmul.f32.gmra.mxu0 %v249
    %v268 = vpop.f32.mrf.mxu0
    %v269 = vadd.f32 0.0, %v268
    %270 = vdwg.mxu0
    %v272 = vsel %vm248, %v158, 0
    %274 = vmatpush.msra.mxu0 0.0
    %275 = vmatpush.msra.mxu0 0.0
    %276 = vmatpush.msra.mxu0 0.0
    %277 = vmatpush.msra.mxu0 0.0
    %278 = vmatpush.msra.mxu0 0.0
    %279 = vmatpush.msra.mxu0 0.0
    %280 = vmatpush.msra.mxu0 0.0
    %281 = vmatpush.msra.mxu0 0.0
    %282 = vmatpush.msra.mxu0 %v166
    %283 = vmatpush.msra.mxu0 %v165
    %284 = vmatpush.msra.mxu0 %v164
    %285 = vmatpush.msra.mxu0 %v163
    %286 = vmatpush.msra.mxu0 %v162
    %287 = vmatpush.msra.mxu0 %v161
    %288 = vmatpush.msra.mxu0 %v160
    %289 = vmatpush.msra.mxu0 %v159
    %290 = vmatmul.f32.gmra.mxu0 %v272
    %v291 = vpop.f32.mrf.mxu0
    %v292 = vadd.f32 %v269, %v291
    %293 = vdwg.mxu0
    %v294 = vld [vmem:[%s0 + $0x8] sm:$0xf]
    %v295 = vsel %vm95, %v294, 0.0
    %296 = vadd.xlane.f32.xlu0 %v295
    %v297 = vpop.xlane.xlu0 %296
    %v298 = vsel %vm99, %v297, 0.0
    %v299 = vrot.slane %v298, 4
    %v300 = vadd.f32 %v298, %v299
    %v301 = vrot.slane %v300, 2
    %v302 = vadd.f32 %v300, %v301
    %v303 = vrot.slane %v302, 1
    %v304 = vadd.f32 %v302, %v303
    %v305 = vmul.f32 %v304, 0.00390625
    %v306 = vsub.f32 %v294, %v305
    %v307 = vmul.f32 %v306, %v306
    %v308 = vsel %vm95, %v307, 0.0
    %309 = vadd.xlane.f32.xlu0 %v308
    %v310 = vpop.xlane.xlu0 %309
    %v311 = vsel %vm99, %v310, 0.0
    %v312 = vrot.slane %v311, 4
    %v313 = vadd.f32 %v311, %v312
    %v314 = vrot.slane %v313, 2
    %v315 = vadd.f32 %v313, %v314
    %v316 = vrot.slane %v315, 1
    %v317 = vadd.f32 %v315, %v316
    %v318 = vmul.f32 %v317, 0.003921569
    %v319 = vadd.f32 %v318, 0.0001
    %v320 = vmul.f32 %v319, 4.0
    %v321 = vrcp.pop %v320
    %v322 = vmul.f32 %v320, %v321
    %v323 = vsub.f32 1.0, %v322
    %v324 = vmul.f32 %v321, %v323
    %v325 = vadd.f32 %v321, %v324
    %vm326 = vweird.f32 %v320
    %vm327 = vweird.f32 %v321
    %vm328 = vmor %vm326, %vm327
    %v329 = vsel %vm328, %v321, %v325
    %v330 = vand.u32 2147483647, %v320
    %vm331 = vcmp.eq.f32.partialorder %v330, 8.507059e+37
    %v332 = vand.u32 %v320, 2147483648
    %v333 = vor.u32 1.1754944e-38, %v332
    %v334 = vsel %vm331, %v333, %v329
    %v335 = vmul.f32 %v307, %v334
    %v336 = vadd.f32 %v335, 0.5
    %v337 = vsub.f32 0.0, %v336
    %v338 = vmul.f32 %v337, 1.442695
    %v339 = vpow.pop %v338
    %v340 = vadd.f32 %v339, 1.0
    %v341 = vrcp.pop %v340
    %v342 = vmul.f32 %v340, %v341
    %v343 = vsub.f32 1.0, %v342
    %v344 = vmul.f32 %v341, %v343
    %v345 = vadd.f32 %v341, %v344
    %vm346 = vweird.f32 %v340
    %vm347 = vweird.f32 %v341
    %vm348 = vmor %vm346, %vm347
    %v349 = vsel %vm348, %v341, %v345
    %v350 = vand.u32 2147483647, %v340
    %vm351 = vcmp.eq.f32.partialorder %v350, 8.507059e+37
    %v352 = vand.u32 %v340, 2147483648
    %v353 = vor.u32 1.1754944e-38, %v352
    %v354 = vsel %vm351, %v353, %v349
    %v355 = vmul.f32 1.0, %v354
    %v356 = vmul.f32 %v294, %v355
    %v357 = vld [vmem:[%s1 + $0x80] sm:$0xff]
    %v358 = vld [vmem:[%s1 + $0x88] sm:$0xff]
    %v359 = vld [vmem:[%s1 + $0x90] sm:$0xff]
    %v360 = vld [vmem:[%s1 + $0x98] sm:$0xff]
    %v361 = vld [vmem:[%s1 + $0xa0] sm:$0xff]
    %v362 = vld [vmem:[%s1 + $0xa8] sm:$0xff]
    %v363 = vld [vmem:[%s1 + $0xb0] sm:$0xff]
    %v364 = vld [vmem:[%s1 + $0xb8] sm:$0xff]
    %v366 = vsel %vm248, %v356, 0
    %368 = vmatpush.msra.mxu0 0.0
    %369 = vmatpush.msra.mxu0 0.0
    %370 = vmatpush.msra.mxu0 0.0
    %371 = vmatpush.msra.mxu0 0.0
    %372 = vmatpush.msra.mxu0 0.0
    %373 = vmatpush.msra.mxu0 0.0
    %374 = vmatpush.msra.mxu0 0.0
    %375 = vmatpush.msra.mxu0 0.0
    %376 = vmatpush.msra.mxu0 %v364
    %377 = vmatpush.msra.mxu0 %v363
    %378 = vmatpush.msra.mxu0 %v362
    %379 = vmatpush.msra.mxu0 %v361
    %380 = vmatpush.msra.mxu0 %v360
    %381 = vmatpush.msra.mxu0 %v359
    %382 = vmatpush.msra.mxu0 %v358
    %383 = vmatpush.msra.mxu0 %v357
    %384 = vmatmul.f32.gmra.mxu0 %v366
    %v385 = vpop.f32.mrf.mxu0
    %v386 = vadd.f32 0.0, %v385
    %387 = vdwg.mxu0
    %v388 = vadd.f32 %v292, %v386
    %vm389 = vcmask 253952
    %390 = vst.msk [vmem:[#allocation2] sm:$0x1] %vm389, %v91
    %v392 = vperm.slane %v93, 0
    %v394 = vadd.f32 %v388, %v392
    %v395 = vadd.f32 %v394, %v92
    %vm396 = vcmask 257024
    %397 = vst.msk [vmem:[#allocation2 + $0x5] sm:$0xf] %vm396, %v395
    %v398 = vld [vmem:[%s0] sm:$0xf0]
    %vm399 = vcmask 523268
    %v400 = vsel %vm399, %v398, 0.0
    %401 = vadd.xlane.f32.xlu0 %v400
    %v402 = vpop.xlane.xlu0 %401
    %v404 = vrot.slane %v402, 4
    %v406 = vsel %vm99, %v404, 0.0
    %v407 = vrot.slane %v406, 4
    %v408 = vadd.f32 %v406, %v407
    %v409 = vrot.slane %v408, 2
    %v410 = vadd.f32 %v408, %v409
    %v411 = vrot.slane %v410, 1
    %v412 = vadd.f32 %v410, %v411
    %v413 = vmul.f32 %v412, 0.00390625
    %v414 = vsub.f32 %v398, %v413
    %v415 = vmul.f32 %v414, %v414
    %v416 = vsel %vm399, %v415, 0.0
    %417 = vadd.xlane.f32.xlu0 %v416
    %v418 = vpop.xlane.xlu0 %417
    %v420 = vrot.slane %v418, 4
    %v422 = vsel %vm99, %v420, 0.0
    %v423 = vrot.slane %v422, 4
    %v424 = vadd.f32 %v422, %v423
    %v425 = vrot.slane %v424, 2
    %v426 = vadd.f32 %v424, %v425
    %v427 = vrot.slane %v426, 1
    %v428 = vadd.f32 %v426, %v427
    %v429 = vmul.f32 %v428, 0.003921569
    %v430 = vadd.f32 %v429, 0.0001
    %v431 = vmul.f32 %v430, 4.0
    %v432 = vrcp.pop %v431
    %v433 = vmul.f32 %v431, %v432
    %v434 = vsub.f32 1.0, %v433
    %v435 = vmul.f32 %v432, %v434
    %v436 = vadd.f32 %v432, %v435
    %vm437 = vweird.f32 %v431
    %vm438 = vweird.f32 %v432
    %vm439 = vmor %vm437, %vm438
    %v440 = vsel %vm439, %v432, %v436
    %v441 = vand.u32 2147483647, %v431
    %vm442 = vcmp.eq.f32.partialorder %v441, 8.507059e+37
    %v443 = vand.u32 %v431, 2147483648
    %v444 = vor.u32 1.1754944e-38, %v443
    %v445 = vsel %vm442, %v444, %v440
    %v446 = vmul.f32 %v415, %v445
    %v447 = vadd.f32 %v446, 0.5
    %v448 = vsub.f32 0.0, %v447
    %v449 = vmul.f32 %v448, 1.442695
    %v450 = vpow.pop %v449
    %v451 = vadd.f32 %v450, 1.0
    %v452 = vrcp.pop %v451
    %v453 = vmul.f32 %v451, %v452
    %v454 = vsub.f32 1.0, %v453
    %v455 = vmul.f32 %v452, %v454
    %v456 = vadd.f32 %v452, %v455
    %vm457 = vweird.f32 %v451
    %vm458 = vweird.f32 %v452
    %vm459 = vmor %vm457, %vm458
    %v460 = vsel %vm459, %v452, %v456
    %v461 = vand.u32 2147483647, %v451
    %vm462 = vcmp.eq.f32.partialorder %v461, 8.507059e+37
    %v463 = vand.u32 %v451, 2147483648
    %v464 = vor.u32 1.1754944e-38, %v463
    %v465 = vsel %vm462, %v464, %v460
    %v466 = vmul.f32 1.0, %v465
    %v467 = vmul.f32 %v398, %v466
    %v468 = vld [vmem:[%s1] sm:$0xff]
    %v469 = vld [vmem:[%s1 + $0x8] sm:$0xff]
    %v470 = vld [vmem:[%s1 + $0x10] sm:$0xff]
    %v471 = vld [vmem:[%s1 + $0x18] sm:$0xff]
    %v472 = vld [vmem:[%s1 + $0x20] sm:$0xff]
    %v473 = vld [vmem:[%s1 + $0x28] sm:$0xff]
    %v474 = vld [vmem:[%s1 + $0x30] sm:$0xff]
    %v475 = vld [vmem:[%s1 + $0x38] sm:$0xff]
    %477 = vrot.lane.b32.xlu0 %v398, 64
    %v478 = vpop.permute.xlu0 %477
    %v480 = vsel %vm399, %v478, 0.0
    %481 = vadd.xlane.f32.xlu0 %v480
    %v482 = vpop.xlane.xlu0 %481
    %v484 = vrot.slane %v482, 4
    %v486 = vsel %vm99, %v484, 0.0
    %v487 = vrot.slane %v486, 4
    %v488 = vadd.f32 %v486, %v487
    %v489 = vrot.slane %v488, 2
    %v490 = vadd.f32 %v488, %v489
    %v491 = vrot.slane %v490, 1
    %v492 = vadd.f32 %v490, %v491
    %v493 = vmul.f32 %v492, 0.00390625
    %v494 = vsub.f32 %v398, %v493
    %v495 = vmul.f32 %v494, %v494
    %497 = vrot.lane.b32.xlu0 %v495, 64
    %v498 = vpop.permute.xlu0 %497
    %v500 = vsel %vm399, %v498, 0.0
    %501 = vadd.xlane.f32.xlu0 %v500
    %v502 = vpop.xlane.xlu0 %501
    %v504 = vrot.slane %v502, 4
    %v506 = vsel %vm99, %v504, 0.0
    %v507 = vrot.slane %v506, 4
    %v508 = vadd.f32 %v506, %v507
    %v509 = vrot.slane %v508, 2
    %v510 = vadd.f32 %v508, %v509
    %v511 = vrot.slane %v510, 1
    %v512 = vadd.f32 %v510, %v511
    %v513 = vmul.f32 %v512, 0.003921569
    %v514 = vadd.f32 %v513, 0.0001
    %v515 = vmul.f32 %v514, 4.0
    %v516 = vrcp.pop %v515
    %v517 = vmul.f32 %v515, %v516
    %v518 = vsub.f32 1.0, %v517
    %v519 = vmul.f32 %v516, %v518
    %v520 = vadd.f32 %v516, %v519
    %vm521 = vweird.f32 %v515
    %vm522 = vweird.f32 %v516
    %vm523 = vmor %vm521, %vm522
    %v524 = vsel %vm523, %v516, %v520
    %v525 = vand.u32 2147483647, %v515
    %vm526 = vcmp.eq.f32.partialorder %v525, 8.507059e+37
    %v527 = vand.u32 %v515, 2147483648
    %v528 = vor.u32 1.1754944e-38, %v527
    %v529 = vsel %vm526, %v528, %v524
    %v530 = vmul.f32 %v495, %v529
    %v531 = vadd.f32 %v530, 0.5
    %v532 = vsub.f32 0.0, %v531
    %v533 = vmul.f32 %v532, 1.442695
    %v534 = vpow.pop %v533
    %v535 = vadd.f32 %v534, 1.0
    %v536 = vrcp.pop %v535
    %v537 = vmul.f32 %v535, %v536
    %v538 = vsub.f32 1.0, %v537
    %v539 = vmul.f32 %v536, %v538
    %v540 = vadd.f32 %v536, %v539
    %vm541 = vweird.f32 %v535
    %vm542 = vweird.f32 %v536
    %vm543 = vmor %vm541, %vm542
    %v544 = vsel %vm543, %v536, %v540
    %v545 = vand.u32 2147483647, %v535
    %vm546 = vcmp.eq.f32.partialorder %v545, 8.507059e+37
    %v547 = vand.u32 %v535, 2147483648
    %v548 = vor.u32 1.1754944e-38, %v547
    %v549 = vsel %vm546, %v548, %v544
    %v550 = vmul.f32 1.0, %v549
    %v551 = vmul.f32 %v398, %v550
    %v552 = vld [vmem:[%s1 + $0x40] sm:$0xff]
    %v553 = vld [vmem:[%s1 + $0x48] sm:$0xff]
    %v554 = vld [vmem:[%s1 + $0x50] sm:$0xff]
    %v555 = vld [vmem:[%s1 + $0x58] sm:$0xff]
    %v556 = vld [vmem:[%s1 + $0x60] sm:$0xff]
    %v557 = vld [vmem:[%s1 + $0x68] sm:$0xff]
    %v558 = vld [vmem:[%s1 + $0x70] sm:$0xff]
    %v559 = vld [vmem:[%s1 + $0x78] sm:$0xff]
    %v561 = vrot.slane %v551, 4
    %562 = vrot.lane.b32.xlu0 %v561, 64
    %v563 = vpop.permute.xlu0 %562
    %v564 = vsel %vm248, %v563, 0
    %566 = vmatpush.msra.mxu0 0.0
    %567 = vmatpush.msra.mxu0 0.0
    %568 = vmatpush.msra.mxu0 0.0
    %569 = vmatpush.msra.mxu0 0.0
    %570 = vmatpush.msra.mxu0 0.0
    %571 = vmatpush.msra.mxu0 0.0
    %572 = vmatpush.msra.mxu0 0.0
    %573 = vmatpush.msra.mxu0 0.0
    %574 = vmatpush.msra.mxu0 %v559
    %575 = vmatpush.msra.mxu0 %v558
    %576 = vmatpush.msra.mxu0 %v557
    %577 = vmatpush.msra.mxu0 %v556
    %578 = vmatpush.msra.mxu0 %v555
    %579 = vmatpush.msra.mxu0 %v554
    %580 = vmatpush.msra.mxu0 %v553
    %581 = vmatpush.msra.mxu0 %v552
    %582 = vmatmul.f32.gmra.mxu0 %v564
    %v583 = vpop.f32.mrf.mxu0
    %v584 = vadd.f32 0.0, %v583
    %585 = vdwg.mxu0
    %v587 = vrot.slane %v467, 4
    %v588 = vsel %vm248, %v587, 0
    %590 = vmatpush.msra.mxu0 0.0
    %591 = vmatpush.msra.mxu0 0.0
    %592 = vmatpush.msra.mxu0 0.0
    %593 = vmatpush.msra.mxu0 0.0
    %594 = vmatpush.msra.mxu0 0.0
    %595 = vmatpush.msra.mxu0 0.0
    %596 = vmatpush.msra.mxu0 0.0
    %597 = vmatpush.msra.mxu0 0.0
    %598 = vmatpush.msra.mxu0 %v475
    %599 = vmatpush.msra.mxu0 %v474
    %600 = vmatpush.msra.mxu0 %v473
    %601 = vmatpush.msra.mxu0 %v472
    %602 = vmatpush.msra.mxu0 %v471
    %603 = vmatpush.msra.mxu0 %v470
    %604 = vmatpush.msra.mxu0 %v469
    %605 = vmatpush.msra.mxu0 %v468
    %606 = vmatmul.f32.gmra.mxu0 %v588
    %v607 = vpop.f32.mrf.mxu0
    %v608 = vadd.f32 %v584, %v607
    %609 = vdwg.mxu0
    %v610 = vld [vmem:[%s0 + $0x8] sm:$0xf0]
    %v611 = vsel %vm399, %v610, 0.0
    %612 = vadd.xlane.f32.xlu0 %v611
    %v613 = vpop.xlane.xlu0 %612
    %v615 = vrot.slane %v613, 4
    %v617 = vsel %vm99, %v615, 0.0
    %v618 = vrot.slane %v617, 4
    %v619 = vadd.f32 %v617, %v618
    %v620 = vrot.slane %v619, 2
    %v621 = vadd.f32 %v619, %v620
    %v622 = vrot.slane %v621, 1
    %v623 = vadd.f32 %v621, %v622
    %v624 = vmul.f32 %v623, 0.00390625
    %v625 = vsub.f32 %v610, %v624
    %v626 = vmul.f32 %v625, %v625
    %v627 = vsel %vm399, %v626, 0.0
    %628 = vadd.xlane.f32.xlu0 %v627
    %v629 = vpop.xlane.xlu0 %628
    %v631 = vrot.slane %v629, 4
    %v633 = vsel %vm99, %v631, 0.0
    %v634 = vrot.slane %v633, 4
    %v635 = vadd.f32 %v633, %v634
    %v636 = vrot.slane %v635, 2
    %v637 = vadd.f32 %v635, %v636
    %v638 = vrot.slane %v637, 1
    %v639 = vadd.f32 %v637, %v638
    %v640 = vmul.f32 %v639, 0.003921569
    %v641 = vadd.f32 %v640, 0.0001
    %v642 = vmul.f32 %v641, 4.0
    %v643 = vrcp.pop %v642
    %v644 = vmul.f32 %v642, %v643
    %v645 = vsub.f32 1.0, %v644
    %v646 = vmul.f32 %v643, %v645
    %v647 = vadd.f32 %v643, %v646
    %vm648 = vweird.f32 %v642
    %vm649 = vweird.f32 %v643
    %vm650 = vmor %vm648, %vm649
    %v651 = vsel %vm650, %v643, %v647
    %v652 = vand.u32 2147483647, %v642
    %vm653 = vcmp.eq.f32.partialorder %v652, 8.507059e+37
    %v654 = vand.u32 %v642, 2147483648
    %v655 = vor.u32 1.1754944e-38, %v654
    %v656 = vsel %vm653, %v655, %v651
    %v657 = vmul.f32 %v626, %v656
    %v658 = vadd.f32 %v657, 0.5
    %v659 = vsub.f32 0.0, %v658
    %v660 = vmul.f32 %v659, 1.442695
    %v661 = vpow.pop %v660
    %v662 = vadd.f32 %v661, 1.0
    %v663 = vrcp.pop %v662
    %v664 = vmul.f32 %v662, %v663
    %v665 = vsub.f32 1.0, %v664
    %v666 = vmul.f32 %v663, %v665
    %v667 = vadd.f32 %v663, %v666
    %vm668 = vweird.f32 %v662
    %vm669 = vweird.f32 %v663
    %vm670 = vmor %vm668, %vm669
    %v671 = vsel %vm670, %v663, %v667
    %v672 = vand.u32 2147483647, %v662
    %vm673 = vcmp.eq.f32.partialorder %v672, 8.507059e+37
    %v674 = vand.u32 %v662, 2147483648
    %v675 = vor.u32 1.1754944e-38, %v674
    %v676 = vsel %vm673, %v675, %v671
    %v677 = vmul.f32 1.0, %v676
    %v678 = vmul.f32 %v610, %v677
    %v679 = vld [vmem:[%s1 + $0x80] sm:$0xff]
    %v680 = vld [vmem:[%s1 + $0x88] sm:$0xff]
    %v681 = vld [vmem:[%s1 + $0x90] sm:$0xff]
    %v682 = vld [vmem:[%s1 + $0x98] sm:$0xff]
    %v683 = vld [vmem:[%s1 + $0xa0] sm:$0xff]
    %v684 = vld [vmem:[%s1 + $0xa8] sm:$0xff]
    %v685 = vld [vmem:[%s1 + $0xb0] sm:$0xff]
    %v686 = vld [vmem:[%s1 + $0xb8] sm:$0xff]
    %v688 = vrot.slane %v678, 4
    %v689 = vsel %vm248, %v688, 0
    %691 = vmatpush.msra.mxu0 0.0
    %692 = vmatpush.msra.mxu0 0.0
    %693 = vmatpush.msra.mxu0 0.0
    %694 = vmatpush.msra.mxu0 0.0
    %695 = vmatpush.msra.mxu0 0.0
    %696 = vmatpush.msra.mxu0 0.0
    %697 = vmatpush.msra.mxu0 0.0
    %698 = vmatpush.msra.mxu0 0.0
    %699 = vmatpush.msra.mxu0 %v686
    %700 = vmatpush.msra.mxu0 %v685
    %701 = vmatpush.msra.mxu0 %v684
    %702 = vmatpush.msra.mxu0 %v683
    %703 = vmatpush.msra.mxu0 %v682
    %704 = vmatpush.msra.mxu0 %v681
    %705 = vmatpush.msra.mxu0 %v680
    %706 = vmatpush.msra.mxu0 %v679
    %707 = vmatmul.f32.gmra.mxu0 %v689
    %v708 = vpop.f32.mrf.mxu0
    %v709 = vadd.f32 0.0, %v708
    %710 = vdwg.mxu0
    %v711 = vadd.f32 %v608, %v709
    %712 = vst.msk [vmem:[#allocation2 + $0x9] sm:$0x1] %vm389, %v91
    %v713 = vadd.f32 %v711, %v392
    %v714 = vadd.f32 %v713, %v92
    %715 = vst.msk [vmem:[#allocation2 + $0xe] sm:$0xf] %vm396, %v714
    %v716 = vld [vmem:[%s19] sm:$0xff]
    %v717 = vld [vmem:[%s19 + $0x8] sm:$0xff]
    %v718 = vld [vmem:[%s19 + $0x10] sm:$0x3]
    %v719 = vld [vmem:[%s20] sm:$0xff]
    %v720 = vld [vmem:[%s20 + $0x8] sm:$0xff]
    %v721 = vld [vmem:[%s20 + $0x10] sm:$0x3]
    %v722 = vld [vmem:[%s18] sm:$0xf]
    %v723 = vmul.f32 %v722, %v722
    %v724 = vsel %vm396, %v723, 0.0
    %725 = vadd.xlane.f32.xlu0 %v724
    %v726 = vpop.xlane.xlu0 %725
    %v727 = vrsqrt.pop %v726
    %v728 = vmul.f32 %v727, %v726
    %v729 = vmul.f32 %v728, %v727
    %v730 = vmul.f32 0.5, %v729
    %v731 = vsub.f32 1.5, %v730
    %v732 = vmul.f32 %v727, %v731
    %v733 = vmul.f32 %v726, %v732
    %vm734 = vcmp.eq.f32.partialorder %v726, inf
    %v735 = vsel %vm734, %v726, %v733
    %vm736 = vcmp.eq.f32.partialorder %v726, 0.0
    %v737 = vand.u32 %v726, 2147483648
    %v738 = vsel %vm736, %v737, %v735
    %v739 = vadd.f32 %v738, 1e-06
    %v740 = vrcp.pop %v739
    %v741 = vmul.f32 %v739, %v740
    %v742 = vsub.f32 1.0, %v741
    %v743 = vmul.f32 %v740, %v742
    %v744 = vadd.f32 %v740, %v743
    %vm745 = vweird.f32 %v739
    %vm746 = vweird.f32 %v740
    %vm747 = vmor %vm745, %vm746
    %v748 = vsel %vm747, %v740, %v744
    %v749 = vand.u32 2147483647, %v739
    %vm750 = vcmp.eq.f32.partialorder %v749, 8.507059e+37
    %v751 = vand.u32 %v739, 2147483648
    %v752 = vor.u32 1.1754944e-38, %v751
    %v753 = vsel %vm750, %v752, %v748
    %v754 = vmul.f32 %v722, %v753
    %v755 = vld [vmem:[#allocation2] sm:$0x1]
    %v756 = vmul.f32 %v755, %v755
    %v757 = vsel %vm389, %v756, 0.0
    %758 = vadd.xlane.f32.xlu0 %v757
    %v759 = vpop.xlane.xlu0 %758
    %v760 = vrsqrt.pop %v759
    %v761 = vmul.f32 %v760, %v759
    %v762 = vmul.f32 %v761, %v760
    %v763 = vmul.f32 0.5, %v762
    %v764 = vsub.f32 1.5, %v763
    %v765 = vmul.f32 %v760, %v764
    %v766 = vmul.f32 %v759, %v765
    %vm767 = vcmp.eq.f32.partialorder %v759, inf
    %v768 = vsel %vm767, %v759, %v766
    %vm769 = vcmp.eq.f32.partialorder %v759, 0.0
    %v770 = vand.u32 %v759, 2147483648
    %v771 = vsel %vm769, %v770, %v768
    %v772 = vadd.f32 %v771, 1e-06
    %v773 = vrcp.pop %v772
    %v774 = vmul.f32 %v772, %v773
    %v775 = vsub.f32 1.0, %v774
    %v776 = vmul.f32 %v773, %v775
    %v777 = vadd.f32 %v773, %v776
    %vm778 = vweird.f32 %v772
    %vm779 = vweird.f32 %v773
    %vm780 = vmor %vm778, %vm779
    %v781 = vsel %vm780, %v773, %v777
    %v782 = vand.u32 2147483647, %v772
    %vm783 = vcmp.eq.f32.partialorder %v782, 8.507059e+37
    %v784 = vand.u32 %v772, 2147483648
    %v785 = vor.u32 1.1754944e-38, %v784
    %v786 = vsel %vm783, %v785, %v781
    %v787 = vmul.f32 %v755, %v786
    %v789 = vsel %vm84, %v787, 0
    %v792 = vsel %vm84, %v754, 0
    %794 = vmatpush.xpose.msra.mxu0 0.0
    %795 = vmatpush.xpose.msra.mxu0 0.0
    %796 = vmatpush.xpose.msra.mxu0 0.0
    %797 = vmatpush.xpose.msra.mxu0 0.0
    %798 = vmatpush.xpose.msra.mxu0 0.0
    %799 = vmatpush.xpose.msra.mxu0 0.0
    %800 = vmatpush.xpose.msra.mxu0 0.0
    %801 = vmatpush.xpose.msra.mxu0 0.0
    %802 = vmatpush.xpose.msra.mxu0 0.0
    %803 = vmatpush.xpose.msra.mxu0 0.0
    %804 = vmatpush.xpose.msra.mxu0 0.0
    %805 = vmatpush.xpose.msra.mxu0 0.0
    %806 = vmatpush.xpose.msra.mxu0 0.0
    %807 = vmatpush.xpose.msra.mxu0 0.0
    %808 = vmatpush.xpose.msra.mxu0 0.0
    %809 = vmatpush.xpose.msra.mxu0 %v792
    %810 = vmatmul.f32.gmra.mxu0 %v789
    %v811 = vpop.f32.mrf.mxu0
    %v812 = vadd.f32 0.0, %v811
    %813 = vdwg.mxu0
    %v814 = vsub.f32 0.0, %v812
    %v815 = vmul.f32 %v814, 1.442695
    %v816 = vpow.pop %v815
    %v817 = vadd.f32 %v816, 1.0
    %v818 = vrcp.pop %v817
    %v819 = vmul.f32 %v817, %v818
    %v820 = vsub.f32 1.0, %v819
    %v821 = vmul.f32 %v818, %v820
    %v822 = vadd.f32 %v818, %v821
    %vm823 = vweird.f32 %v817
    %vm824 = vweird.f32 %v818
    %vm825 = vmor %vm823, %vm824
    %v826 = vsel %vm825, %v818, %v822
    %v827 = vand.u32 2147483647, %v817
    %vm828 = vcmp.eq.f32.partialorder %v827, 8.507059e+37
    %v829 = vand.u32 %v817, 2147483648
    %v830 = vor.u32 1.1754944e-38, %v829
    %v831 = vsel %vm828, %v830, %v826
    %v832 = vmul.f32 1.0, %v831
    %834 = vrot.lane.b32.xlu0 %v832, 1
    %v835 = vpop.permute.xlu0 %834
    %vm837 = vcmask 7168
    %v838 = vsel %vm837, 1.0, %v835
    %vm839 = vcmask 39936
    %v840 = vsel %vm839, %v838, 1.0
    %v841 = vsub.f32 1.0, %v812
    %vm842 = vcmask 24576
    %v843 = vsel %vm842, %v841, 0.0
    %844 = vadd.xlane.f32.xlu0 %v843
    %v845 = vpop.xlane.xlu0 %844
    %v846 = vadd.f32 %v845, 0.0
    %v847 = vld [vmem:[#allocation2 + $0x9] sm:$0x1]
    %v848 = vmul.f32 %v847, %v847
    %v849 = vsel %vm389, %v848, 0.0
    %850 = vadd.xlane.f32.xlu0 %v849
    %v851 = vpop.xlane.xlu0 %850
    %v852 = vrsqrt.pop %v851
    %v853 = vmul.f32 %v852, %v851
    %v854 = vmul.f32 %v853, %v852
    %v855 = vmul.f32 0.5, %v854
    %v856 = vsub.f32 1.5, %v855
    %v857 = vmul.f32 %v852, %v856
    %v858 = vmul.f32 %v851, %v857
    %vm859 = vcmp.eq.f32.partialorder %v851, inf
    %v860 = vsel %vm859, %v851, %v858
    %vm861 = vcmp.eq.f32.partialorder %v851, 0.0
    %v862 = vand.u32 %v851, 2147483648
    %v863 = vsel %vm861, %v862, %v860
    %v864 = vadd.f32 %v863, 1e-06
    %v865 = vrcp.pop %v864
    %v866 = vmul.f32 %v864, %v865
    %v867 = vsub.f32 1.0, %v866
    %v868 = vmul.f32 %v865, %v867
    %v869 = vadd.f32 %v865, %v868
    %vm870 = vweird.f32 %v864
    %vm871 = vweird.f32 %v865
    %vm872 = vmor %vm870, %vm871
    %v873 = vsel %vm872, %v865, %v869
    %v874 = vand.u32 2147483647, %v864
    %vm875 = vcmp.eq.f32.partialorder %v874, 8.507059e+37
    %v876 = vand.u32 %v864, 2147483648
    %v877 = vor.u32 1.1754944e-38, %v876
    %v878 = vsel %vm875, %v877, %v873
    %v879 = vmul.f32 %v847, %v878
    %v881 = vsel %vm84, %v879, 0
    %883 = vmatpush.xpose.msra.mxu0 0.0
    %884 = vmatpush.xpose.msra.mxu0 0.0
    %885 = vmatpush.xpose.msra.mxu0 0.0
    %886 = vmatpush.xpose.msra.mxu0 0.0
    %887 = vmatpush.xpose.msra.mxu0 0.0
    %888 = vmatpush.xpose.msra.mxu0 0.0
    %889 = vmatpush.xpose.msra.mxu0 0.0
    %890 = vmatpush.xpose.msra.mxu0 0.0
    %891 = vmatpush.xpose.msra.mxu0 0.0
    %892 = vmatpush.xpose.msra.mxu0 0.0
    %893 = vmatpush.xpose.msra.mxu0 0.0
    %894 = vmatpush.xpose.msra.mxu0 0.0
    %895 = vmatpush.xpose.msra.mxu0 0.0
    %896 = vmatpush.xpose.msra.mxu0 0.0
    %897 = vmatpush.xpose.msra.mxu0 0.0
    %898 = vmatpush.xpose.msra.mxu0 %v792
    %899 = vmatmul.f32.gmra.mxu0 %v881
    %v900 = vpop.f32.mrf.mxu0
    %v901 = vadd.f32 0.0, %v900
    %902 = vdwg.mxu0
    %v903 = vsub.f32 0.0, %v901
    %v904 = vmul.f32 %v903, 1.442695
    %v905 = vpow.pop %v904
    %v906 = vadd.f32 %v905, 1.0
    %v907 = vrcp.pop %v906
    %v908 = vmul.f32 %v906, %v907
    %v909 = vsub.f32 1.0, %v908
    %v910 = vmul.f32 %v907, %v909
    %v911 = vadd.f32 %v907, %v910
    %vm912 = vweird.f32 %v906
    %vm913 = vweird.f32 %v907
    %vm914 = vmor %vm912, %vm913
    %v915 = vsel %vm914, %v907, %v911
    %v916 = vand.u32 2147483647, %v906
    %vm917 = vcmp.eq.f32.partialorder %v916, 8.507059e+37
    %v918 = vand.u32 %v906, 2147483648
    %v919 = vor.u32 1.1754944e-38, %v918
    %v920 = vsel %vm917, %v919, %v915
    %v921 = vmul.f32 1.0, %v920
    %923 = vrot.lane.b32.xlu0 %v921, 1
    %v924 = vpop.permute.xlu0 %923
    %v926 = vsel %vm837, 1.0, %v924
    %v927 = vsel %vm839, %v926, 1.0
    %v928 = vsub.f32 1.0, %v901
    %v929 = vsel %vm842, %v928, 0.0
    %930 = vadd.xlane.f32.xlu0 %v929
    %v931 = vpop.xlane.xlu0 %930
    %v932 = vadd.f32 %v846, %v931
    %v933 = vld [vmem:[%s17] sm:$0xf]
    %934 = vst.msk [vmem:[#allocation2 + $0x1] sm:$0xf] %vm396, %v933
    %935 = vst.msk [vmem:[#allocation2 + $0xa] sm:$0xf] %vm396, %v933
    %v936 = vld [vmem:[#allocation2] sm:$0xff]
    %v937 = vld [vmem:[#allocation2 + $0x8] sm:$0xff]
    %v938 = vld [vmem:[#allocation2 + $0x10] sm:$0x3]
    %v939 = vld [vmem:[%s5] sm:$0x1]
    %v940 = vld [vmem:[%s6] sm:$0x1]
    %v941 = vsel %vm84, %v936, 0.0
    %942 = vadd.xlane.f32.xlu0 %v941
    %v943 = vpop.xlane.xlu0 %942
    %v944 = vsel %vm84, %v937, 0.0
    %945 = vadd.xlane.f32.xlu0 %v944
    %v946 = vpop.xlane.xlu0 %945
    %v947 = vsel %vm87, %v938, 0.0
    %948 = vadd.xlane.f32.xlu0 %v947
    %v949 = vpop.xlane.xlu0 %948
    %v950 = vrcp.pop 32.0
    %v951 = vmul.f32 32.0, %v950
    %v952 = vsub.f32 1.0, %v951
    %v953 = vmul.f32 %v950, %v952
    %v954 = vadd.f32 %v950, %v953
    %vm955 = vweird.f32 %v950
    %v956 = vsel %vm955, %v950, %v954
    %v957 = vmul.f32 %v943, %v956
    %v958 = vmul.f32 %v946, %v956
    %v959 = vmul.f32 %v949, %v956
    %v960 = vsub.f32 %v936, %v957
    %v961 = vsub.f32 %v937, %v958
    %v962 = vsub.f32 %v938, %v959
    %v963 = vmul.f32 %v960, %v960
    %v964 = vmul.f32 %v961, %v961
    %v965 = vmul.f32 %v962, %v962
    %v966 = vsel %vm84, %v963, 0.0
    %967 = vadd.xlane.f32.xlu0 %v966
    %v968 = vpop.xlane.xlu0 %967
    %v969 = vsel %vm84, %v964, 0.0
    %970 = vadd.xlane.f32.xlu0 %v969
    %v971 = vpop.xlane.xlu0 %970
    %v972 = vsel %vm87, %v965, 0.0
    %973 = vadd.xlane.f32.xlu0 %v972
    %v974 = vpop.xlane.xlu0 %973
    %v975 = vmul.f32 %v968, %v956
    %v976 = vmul.f32 %v971, %v956
    %v977 = vmul.f32 %v974, %v956
    %v978 = vadd.f32 %v975, 1e-06
    %v979 = vadd.f32 %v976, 1e-06
    %v980 = vadd.f32 %v977, 1e-06
    %v981 = vrsqrt.pop %v978
    %v982 = vmul.f32 %v981, %v978
    %v983 = vmul.f32 %v982, %v981
    %v984 = vmul.f32 0.5, %v983
    %v985 = vsub.f32 1.5, %v984
    %v986 = vmul.f32 %v981, %v985
    %vm987 = vweird.f32 %v978
    %vm988 = vweird.f32 %v981
    %vm989 = vmor %vm987, %vm988
    %v990 = vsel %vm989, %v981, %v986
    %v991 = vrsqrt.pop %v979
    %v992 = vmul.f32 %v991, %v979
    %v993 = vmul.f32 %v992, %v991
    %v994 = vmul.f32 0.5, %v993
    %v995 = vsub.f32 1.5, %v994
    %v996 = vmul.f32 %v991, %v995
    %vm997 = vweird.f32 %v979
    %vm998 = vweird.f32 %v991
    %vm999 = vmor %vm997, %vm998
    %v1000 = vsel %vm999, %v991, %v996
    %v1001 = vrsqrt.pop %v980
    %v1002 = vmul.f32 %v1001, %v980
    %v1003 = vmul.f32 %v1002, %v1001
    %v1004 = vmul.f32 0.5, %v1003
    %v1005 = vsub.f32 1.5, %v1004
    %v1006 = vmul.f32 %v1001, %v1005
    %vm1007 = vweird.f32 %v980
    %vm1008 = vweird.f32 %v1001
    %vm1009 = vmor %vm1007, %vm1008
    %v1010 = vsel %vm1009, %v1001, %v1006
    %v1011 = vmul.f32 %v960, %v990
    %v1012 = vmul.f32 %v961, %v1000
    %v1013 = vmul.f32 %v962, %v1010
    %v1015 = vperm.slane %v939, 0
    %v1017 = vmul.f32 %v1011, %v1015
    %v1018 = vmul.f32 %v1012, %v1015
    %v1019 = vmul.f32 %v1013, %v1015
    %v1021 = vperm.slane %v940, 0
    %v1023 = vadd.f32 %v1017, %v1021
    %v1024 = vadd.f32 %v1018, %v1021
    %v1025 = vadd.f32 %v1019, %v1021
    %v1026 = vld [vmem:[%s7] sm:$0xff]
    %v1027 = vld [vmem:[%s7 + $0x8] sm:$0xff]
    %v1028 = vld [vmem:[%s7 + $0x10] sm:$0xff]
    %v1029 = vld [vmem:[%s7 + $0x18] sm:$0xff]
    %v1030 = vld [vmem:[%s8] sm:$0x1]
    %v1032 = vperm.slane %v1030, 0
    %v1035 = vsel %vm84, %v1023, 0
    %v1038 = vsel %vm84, %v1024, 0
    %v1041 = vsel %vm84, %v1025, 0
    %1043 = vmatpush.msra.mxu0 0.0
    %1044 = vmatpush.msra.mxu0 0.0
    %1045 = vmatpush.msra.mxu0 0.0
    %1046 = vmatpush.msra.mxu0 0.0
    %1047 = vmatpush.msra.mxu0 0.0
    %1048 = vmatpush.msra.mxu0 0.0
    %1049 = vmatpush.msra.mxu0 0.0
    %1050 = vmatpush.msra.mxu0 0.0
    %1051 = vmatpush.msra.mxu0 0.0
    %1052 = vmatpush.msra.mxu0 0.0
    %1053 = vmatpush.msra.mxu0 0.0
    %1054 = vmatpush.msra.mxu0 0.0
    %1055 = vmatpush.msra.mxu0 %v1029
    %1056 = vmatpush.msra.mxu0 %v1028
    %1057 = vmatpush.msra.mxu0 %v1027
    %1058 = vmatpush.msra.mxu0 %v1026
    %1059 = vmatmul.f32.gmra.mxu0 %v1035
    %v1060 = vpop.f32.mrf.mxu0
    %v1061 = vadd.f32 %v1032, %v1060
    %1062 = vmatmul.f32.gmra.mxu0 %v1038
    %v1063 = vpop.f32.mrf.mxu0
    %v1064 = vadd.f32 %v1032, %v1063
    %1065 = vmatmul.f32.gmra.mxu0 %v1041
    %v1066 = vpop.f32.mrf.mxu0
    %v1067 = vadd.f32 %v1032, %v1066
    %1068 = vdwg.mxu0
    %1072 = vrot.lane.b32.xlu0 %v716, 64
    %v1073 = vpop.permute.xlu0 %1072
    %1074 = vrot.lane.b32.xlu0 %v717, 64
    %v1075 = vpop.permute.xlu0 %1074
    %1076 = vrot.lane.b32.xlu0 %v718, 64
    %v1077 = vpop.permute.xlu0 %1076
    %v1081 = vmul.f32 %v1061, %v1073
    %v1082 = vmul.f32 %v1064, %v1075
    %v1083 = vmul.f32 %v1067, %v1077
    %1087 = vrot.lane.b32.xlu0 %v719, 64
    %v1088 = vpop.permute.xlu0 %1087
    %1089 = vrot.lane.b32.xlu0 %v720, 64
    %v1090 = vpop.permute.xlu0 %1089
    %1091 = vrot.lane.b32.xlu0 %v721, 64
    %v1092 = vpop.permute.xlu0 %1091
    %v1096 = vadd.f32 %v1081, %v1088
    %v1097 = vadd.f32 %v1082, %v1090
    %v1098 = vadd.f32 %v1083, %v1092
    %v1099 = vld [vmem:[%s9] sm:$0xff]
    %v1100 = vld [vmem:[%s9 + $0x8] sm:$0xff]
    %v1101 = vld [vmem:[%s9 + $0x10] sm:$0xff]
    %v1102 = vld [vmem:[%s9 + $0x18] sm:$0xff]
    %v1103 = vld [vmem:[%s10] sm:$0x1]
    %1106 = vrot.lane.b32.xlu0 %v1061, 96
    %v1107 = vpop.permute.xlu0 %1106
    %1108 = vrot.lane.b32.xlu0 %v1064, 96
    %v1109 = vpop.permute.xlu0 %1108
    %vm1110 = vcmask 64512
    %v1111 = vsel %vm1110, %v1061, 0
    %v1113 = vsel %vm1110, %v1064, 0
    %v1115 = vsel %vm1110, %v1107, 0
    %v1117 = vsel %vm1110, %v1109, 0
    %1119 = vmatpush.xpose.msra.mxu0 0.0
    %1120 = vmatpush.xpose.msra.mxu0 0.0
    %1121 = vmatpush.xpose.msra.mxu0 0.0
    %1122 = vmatpush.xpose.msra.mxu0 0.0
    %1123 = vmatpush.xpose.msra.mxu0 0.0
    %1124 = vmatpush.xpose.msra.mxu0 0.0
    %1125 = vmatpush.xpose.msra.mxu0 0.0
    %1126 = vmatpush.xpose.msra.mxu0 0.0
    %1127 = vmatpush.xpose.msra.mxu0 0.0
    %1128 = vmatpush.xpose.msra.mxu0 0.0
    %1129 = vmatpush.xpose.msra.mxu0 0.0
    %1130 = vmatpush.xpose.msra.mxu0 0.0
    %1131 = vmatpush.xpose.msra.mxu0 0.0
    %1132 = vmatpush.xpose.msra.mxu0 0.0
    %1133 = vmatpush.xpose.msra.mxu0 %v1117
    %1134 = vmatpush.xpose.msra.mxu0 %v1115
    %1135 = vmatmul.f32.gmra.mxu0 %v1111
    %v1136 = vpop.f32.mrf.mxu0
    %v1137 = vadd.f32 0.0, %v1136
    %1138 = vmatmul.f32.gmra.mxu0 %v1113
    %v1139 = vpop.f32.mrf.mxu0
    %v1140 = vadd.f32 0.0, %v1139
    %1141 = vdwg.mxu0
    %v1142 = vmul.f32 %v1137, 0.35355338
    %v1143 = vmul.f32 %v1140, 0.35355338
    %vm1144 = vcmask 72704
    %v1145 = vsel %vm1144, %v1142, -inf
    %1146 = vmax.xlane.f32.xlu0 %v1145
    %v1147 = vpop.xlane.xlu0 %1146
    %vm1148 = vcmask 65536
    %v1149 = vsel %vm1148, %v1143, -inf
    %1150 = vmax.xlane.f32.xlu0 %v1149
    %v1151 = vpop.xlane.xlu0 %1150
    %v1152 = vsub.f32 %v1142, %v1147
    %v1153 = vsub.f32 %v1143, %v1151
    %v1154 = vmul.f32 %v1152, 1.442695
    %v1155 = vpow.pop %v1154
    %v1156 = vmul.f32 %v1153, 1.442695
    %v1157 = vpow.pop %v1156
    %v1158 = vsel %vm1144, %v1155, 0.0
    %1159 = vadd.xlane.f32.xlu0 %v1158
    %v1160 = vpop.xlane.xlu0 %1159
    %v1161 = vsel %vm1148, %v1157, 0.0
    %1162 = vadd.xlane.f32.xlu0 %v1161
    %v1163 = vpop.xlane.xlu0 %1162
    %v1164 = vrcp.pop %v1160
    %v1165 = vmul.f32 %v1160, %v1164
    %v1166 = vsub.f32 1.0, %v1165
    %v1167 = vmul.f32 %v1164, %v1166
    %v1168 = vadd.f32 %v1164, %v1167
    %vm1169 = vweird.f32 %v1160
    %vm1170 = vweird.f32 %v1164
    %vm1171 = vmor %vm1169, %vm1170
    %v1172 = vsel %vm1171, %v1164, %v1168
    %v1173 = vand.u32 2147483647, %v1160
    %vm1174 = vcmp.eq.f32.partialorder %v1173, 8.507059e+37
    %v1175 = vand.u32 %v1160, 2147483648
    %v1176 = vor.u32 1.1754944e-38, %v1175
    %v1177 = vsel %vm1174, %v1176, %v1172
    %v1178 = vmul.f32 %v1155, %v1177
    %v1179 = vrcp.pop %v1163
    %v1180 = vmul.f32 %v1163, %v1179
    %v1181 = vsub.f32 1.0, %v1180
    %v1182 = vmul.f32 %v1179, %v1181
    %v1183 = vadd.f32 %v1179, %v1182
    %vm1184 = vweird.f32 %v1163
    %vm1185 = vweird.f32 %v1179
    %vm1186 = vmor %vm1184, %vm1185
    %v1187 = vsel %vm1186, %v1179, %v1183
    %v1188 = vand.u32 2147483647, %v1163
    %vm1189 = vcmp.eq.f32.partialorder %v1188, 8.507059e+37
    %v1190 = vand.u32 %v1163, 2147483648
    %v1191 = vor.u32 1.1754944e-38, %v1190
    %v1192 = vsel %vm1189, %v1191, %v1187
    %v1193 = vmul.f32 %v1157, %v1192
    %v1194 = vperm.slane %v840, 0
    %v1195 = vmul.f32 %v1178, %v1194
    %v1196 = vmul.f32 %v1193, %v1194
    %1199 = vrot.lane.b32.xlu0 %v1096, 64
    %v1200 = vpop.permute.xlu0 %1199
    %1201 = vrot.lane.b32.xlu0 %v1097, 64
    %v1202 = vpop.permute.xlu0 %1201
    %v1205 = vsel %vm1144, %v1195, 0
    %v1208 = vsel %vm1144, %v1196, 0
    %vm1210 = vcmask 1040384
    %v1211 = vsel %vm1210, %v1202, 0
    %1213 = vmatpush.msra.mxu0 0.0
    %1214 = vmatpush.msra.mxu0 0.0
    %1215 = vmatpush.msra.mxu0 0.0
    %1216 = vmatpush.msra.mxu0 0.0
    %1217 = vmatpush.msra.mxu0 0.0
    %1218 = vmatpush.msra.mxu0 0.0
    %1219 = vmatpush.msra.mxu0 0.0
    %1220 = vmatpush.msra.mxu0 0.0
    %1221 = vmatpush.msra.mxu0 0.0
    %1222 = vmatpush.msra.mxu0 0.0
    %1223 = vmatpush.msra.mxu0 0.0
    %1224 = vmatpush.msra.mxu0 0.0
    %1225 = vmatpush.msra.mxu0 0.0
    %1226 = vmatpush.msra.mxu0 0.0
    %1227 = vmatpush.msra.mxu0 %v1211
    %1228 = vmatpush.msra.mxu0 %v1200
    %1229 = vmatmul.f32.gmra.mxu0 %v1205
    %v1230 = vpop.f32.mrf.mxu0
    %v1231 = vadd.f32 0.0, %v1230
    %1232 = vmatmul.f32.gmra.mxu0 %v1208
    %v1233 = vpop.f32.mrf.mxu0
    %v1234 = vadd.f32 0.0, %v1233
    %1235 = vdwg.mxu0
    %1236 = vrot.lane.b32.xlu0 %v1061, 120
    %v1237 = vpop.permute.xlu0 %1236
    %1238 = vrot.lane.b32.xlu0 %v1064, 120
    %v1239 = vpop.permute.xlu0 %1238
    %1240 = vrot.lane.b32.xlu0 %v1061, 88
    %v1241 = vpop.permute.xlu0 %1240
    %1242 = vrot.lane.b32.xlu0 %v1064, 88
    %v1243 = vpop.permute.xlu0 %1242
    %v1244 = vsel %vm1110, %v1237, 0
    %v1246 = vsel %vm1110, %v1239, 0
    %v1248 = vsel %vm1110, %v1241, 0
    %v1250 = vsel %vm1110, %v1243, 0
    %1252 = vmatpush.xpose.msra.mxu0 0.0
    %1253 = vmatpush.xpose.msra.mxu0 0.0
    %1254 = vmatpush.xpose.msra.mxu0 0.0
    %1255 = vmatpush.xpose.msra.mxu0 0.0
    %1256 = vmatpush.xpose.msra.mxu0 0.0
    %1257 = vmatpush.xpose.msra.mxu0 0.0
    %1258 = vmatpush.xpose.msra.mxu0 0.0
    %1259 = vmatpush.xpose.msra.mxu0 0.0
    %1260 = vmatpush.xpose.msra.mxu0 0.0
    %1261 = vmatpush.xpose.msra.mxu0 0.0
    %1262 = vmatpush.xpose.msra.mxu0 0.0
    %1263 = vmatpush.xpose.msra.mxu0 0.0
    %1264 = vmatpush.xpose.msra.mxu0 0.0
    %1265 = vmatpush.xpose.msra.mxu0 0.0
    %1266 = vmatpush.xpose.msra.mxu0 %v1250
    %1267 = vmatpush.xpose.msra.mxu0 %v1248
    %1268 = vmatmul.f32.gmra.mxu0 %v1244
    %v1269 = vpop.f32.mrf.mxu0
    %v1270 = vadd.f32 0.0, %v1269
    %1271 = vmatmul.f32.gmra.mxu0 %v1246
    %v1272 = vpop.f32.mrf.mxu0
    %v1273 = vadd.f32 0.0, %v1272
    %1274 = vdwg.mxu0
    %v1275 = vmul.f32 %v1270, 0.35355338
    %v1276 = vmul.f32 %v1273, 0.35355338
    %v1277 = vsel %vm1144, %v1275, -inf
    %1278 = vmax.xlane.f32.xlu0 %v1277
    %v1279 = vpop.xlane.xlu0 %1278
    %v1280 = vsel %vm1148, %v1276, -inf
    %1281 = vmax.xlane.f32.xlu0 %v1280
    %v1282 = vpop.xlane.xlu0 %1281
    %v1283 = vsub.f32 %v1275, %v1279
    %v1284 = vsub.f32 %v1276, %v1282
    %v1285 = vmul.f32 %v1283, 1.442695
    %v1286 = vpow.pop %v1285
    %v1287 = vmul.f32 %v1284, 1.442695
    %v1288 = vpow.pop %v1287
    %v1289 = vsel %vm1144, %v1286, 0.0
    %1290 = vadd.xlane.f32.xlu0 %v1289
    %v1291 = vpop.xlane.xlu0 %1290
    %v1292 = vsel %vm1148, %v1288, 0.0
    %1293 = vadd.xlane.f32.xlu0 %v1292
    %v1294 = vpop.xlane.xlu0 %1293
    %v1295 = vrcp.pop %v1291
    %v1296 = vmul.f32 %v1291, %v1295
    %v1297 = vsub.f32 1.0, %v1296
    %v1298 = vmul.f32 %v1295, %v1297
    %v1299 = vadd.f32 %v1295, %v1298
    %vm1300 = vweird.f32 %v1291
    %vm1301 = vweird.f32 %v1295
    %vm1302 = vmor %vm1300, %vm1301
    %v1303 = vsel %vm1302, %v1295, %v1299
    %v1304 = vand.u32 2147483647, %v1291
    %vm1305 = vcmp.eq.f32.partialorder %v1304, 8.507059e+37
    %v1306 = vand.u32 %v1291, 2147483648
    %v1307 = vor.u32 1.1754944e-38, %v1306
    %v1308 = vsel %vm1305, %v1307, %v1303
    %v1309 = vmul.f32 %v1286, %v1308
    %v1310 = vrcp.pop %v1294
    %v1311 = vmul.f32 %v1294, %v1310
    %v1312 = vsub.f32 1.0, %v1311
    %v1313 = vmul.f32 %v1310, %v1312
    %v1314 = vadd.f32 %v1310, %v1313
    %vm1315 = vweird.f32 %v1294
    %vm1316 = vweird.f32 %v1310
    %vm1317 = vmor %vm1315, %vm1316
    %v1318 = vsel %vm1317, %v1310, %v1314
    %v1319 = vand.u32 2147483647, %v1294
    %vm1320 = vcmp.eq.f32.partialorder %v1319, 8.507059e+37
    %v1321 = vand.u32 %v1294, 2147483648
    %v1322 = vor.u32 1.1754944e-38, %v1321
    %v1323 = vsel %vm1320, %v1322, %v1318
    %v1324 = vmul.f32 %v1288, %v1323
    %v1325 = vmul.f32 %v1309, %v1194
    %v1326 = vmul.f32 %v1324, %v1194
    %1327 = vrot.lane.b32.xlu0 %v1096, 56
    %v1328 = vpop.permute.xlu0 %1327
    %1329 = vrot.lane.b32.xlu0 %v1097, 56
    %v1330 = vpop.permute.xlu0 %1329
    %v1333 = vsel %vm1144, %v1325, 0
    %v1336 = vsel %vm1144, %v1326, 0
    %v1338 = vsel %vm1210, %v1330, 0
    %1340 = vmatpush.msra.mxu0 0.0
    %1341 = vmatpush.msra.mxu0 0.0
    %1342 = vmatpush.msra.mxu0 0.0
    %1343 = vmatpush.msra.mxu0 0.0
    %1344 = vmatpush.msra.mxu0 0.0
    %1345 = vmatpush.msra.mxu0 0.0
    %1346 = vmatpush.msra.mxu0 0.0
    %1347 = vmatpush.msra.mxu0 0.0
    %1348 = vmatpush.msra.mxu0 0.0
    %1349 = vmatpush.msra.mxu0 0.0
    %1350 = vmatpush.msra.mxu0 0.0
    %1351 = vmatpush.msra.mxu0 0.0
    %1352 = vmatpush.msra.mxu0 0.0
    %1353 = vmatpush.msra.mxu0 0.0
    %1354 = vmatpush.msra.mxu0 %v1338
    %1355 = vmatpush.msra.mxu0 %v1328
    %1356 = vmatmul.f32.gmra.mxu0 %v1333
    %v1357 = vpop.f32.mrf.mxu0
    %v1358 = vadd.f32 0.0, %v1357
    %1359 = vmatmul.f32.gmra.mxu0 %v1336
    %v1360 = vpop.f32.mrf.mxu0
    %v1361 = vadd.f32 0.0, %v1360
    %1362 = vdwg.mxu0
    %v1364 = vsel %vm1110, %v1358, 0
    %v1367 = vsel %vm1110, %v1361, 0
    %1369 = vmatpush.msra.mxu0 0.0
    %1370 = vmatpush.msra.mxu0 0.0
    %1371 = vmatpush.msra.mxu0 0.0
    %1372 = vmatpush.msra.mxu0 0.0
    %1373 = vmatpush.msra.mxu0 0.0
    %1374 = vmatpush.msra.mxu0 0.0
    %1375 = vmatpush.msra.mxu0 0.0
    %1376 = vmatpush.msra.mxu0 0.0
    %1377 = vmatpush.msra.mxu0 0.0
    %1378 = vmatpush.msra.mxu0 0.0
    %1379 = vmatpush.msra.mxu0 0.0
    %1380 = vmatpush.msra.mxu0 0.0
    %1381 = vmatpush.msra.mxu0 0.0
    %1382 = vmatpush.msra.mxu0 0.0
    %1383 = vmatpush.msra.mxu0 0.0
    %1384 = vmatpush.msra.mxu0 %v1100
    %1385 = vmatmul.f32.gmra.mxu0 %v1364
    %v1386 = vpop.f32.mrf.mxu0
    %v1387 = vadd.f32 0.0, %v1386
    %1388 = vmatmul.f32.gmra.mxu0 %v1367
    %v1389 = vpop.f32.mrf.mxu0
    %v1390 = vadd.f32 0.0, %v1389
    %1391 = vdwg.mxu0
    %v1393 = vsel %vm1110, %v1231, 0
    %v1396 = vsel %vm1110, %v1234, 0
    %1398 = vmatpush.msra.mxu0 0.0
    %1399 = vmatpush.msra.mxu0 0.0
    %1400 = vmatpush.msra.mxu0 0.0
    %1401 = vmatpush.msra.mxu0 0.0
    %1402 = vmatpush.msra.mxu0 0.0
    %1403 = vmatpush.msra.mxu0 0.0
    %1404 = vmatpush.msra.mxu0 0.0
    %1405 = vmatpush.msra.mxu0 0.0
    %1406 = vmatpush.msra.mxu0 0.0
    %1407 = vmatpush.msra.mxu0 0.0
    %1408 = vmatpush.msra.mxu0 0.0
    %1409 = vmatpush.msra.mxu0 0.0
    %1410 = vmatpush.msra.mxu0 0.0
    %1411 = vmatpush.msra.mxu0 0.0
    %1412 = vmatpush.msra.mxu0 0.0
    %1413 = vmatpush.msra.mxu0 %v1099
    %1414 = vmatmul.f32.gmra.mxu0 %v1393
    %v1415 = vpop.f32.mrf.mxu0
    %v1416 = vadd.f32 %v1387, %v1415
    %1417 = vmatmul.f32.gmra.mxu0 %v1396
    %v1418 = vpop.f32.mrf.mxu0
    %v1419 = vadd.f32 %v1390, %v1418
    %1420 = vdwg.mxu0
    %1421 = vrot.lane.b32.xlu0 %v1061, 112
    %v1422 = vpop.permute.xlu0 %1421
    %1423 = vrot.lane.b32.xlu0 %v1064, 112
    %v1424 = vpop.permute.xlu0 %1423
    %1425 = vrot.lane.b32.xlu0 %v1061, 80
    %v1426 = vpop.permute.xlu0 %1425
    %1427 = vrot.lane.b32.xlu0 %v1064, 80
    %v1428 = vpop.permute.xlu0 %1427
    %v1429 = vsel %vm1110, %v1422, 0
    %v1431 = vsel %vm1110, %v1424, 0
    %v1433 = vsel %vm1110, %v1426, 0
    %v1435 = vsel %vm1110, %v1428, 0
    %1437 = vmatpush.xpose.msra.mxu0 0.0
    %1438 = vmatpush.xpose.msra.mxu0 0.0
    %1439 = vmatpush.xpose.msra.mxu0 0.0
    %1440 = vmatpush.xpose.msra.mxu0 0.0
    %1441 = vmatpush.xpose.msra.mxu0 0.0
    %1442 = vmatpush.xpose.msra.mxu0 0.0
    %1443 = vmatpush.xpose.msra.mxu0 0.0
    %1444 = vmatpush.xpose.msra.mxu0 0.0
    %1445 = vmatpush.xpose.msra.mxu0 0.0
    %1446 = vmatpush.xpose.msra.mxu0 0.0
    %1447 = vmatpush.xpose.msra.mxu0 0.0
    %1448 = vmatpush.xpose.msra.mxu0 0.0
    %1449 = vmatpush.xpose.msra.mxu0 0.0
    %1450 = vmatpush.xpose.msra.mxu0 0.0
    %1451 = vmatpush.xpose.msra.mxu0 %v1435
    %1452 = vmatpush.xpose.msra.mxu0 %v1433
    %1453 = vmatmul.f32.gmra.mxu0 %v1429
    %v1454 = vpop.f32.mrf.mxu0
    %v1455 = vadd.f32 0.0, %v1454
    %1456 = vmatmul.f32.gmra.mxu0 %v1431
    %v1457 = vpop.f32.mrf.mxu0
    %v1458 = vadd.f32 0.0, %v1457
    %1459 = vdwg.mxu0
    %v1460 = vmul.f32 %v1455, 0.35355338
    %v1461 = vmul.f32 %v1458, 0.35355338
    %v1462 = vsel %vm1144, %v1460, -inf
    %1463 = vmax.xlane.f32.xlu0 %v1462
    %v1464 = vpop.xlane.xlu0 %1463
    %v1465 = vsel %vm1148, %v1461, -inf
    %1466 = vmax.xlane.f32.xlu0 %v1465
    %v1467 = vpop.xlane.xlu0 %1466
    %v1468 = vsub.f32 %v1460, %v1464
    %v1469 = vsub.f32 %v1461, %v1467
    %v1470 = vmul.f32 %v1468, 1.442695
    %v1471 = vpow.pop %v1470
    %v1472 = vmul.f32 %v1469, 1.442695
    %v1473 = vpow.pop %v1472
    %v1474 = vsel %vm1144, %v1471, 0.0
    %1475 = vadd.xlane.f32.xlu0 %v1474
    %v1476 = vpop.xlane.xlu0 %1475
    %v1477 = vsel %vm1148, %v1473, 0.0
    %1478 = vadd.xlane.f32.xlu0 %v1477
    %v1479 = vpop.xlane.xlu0 %1478
    %v1480 = vrcp.pop %v1476
    %v1481 = vmul.f32 %v1476, %v1480
    %v1482 = vsub.f32 1.0, %v1481
    %v1483 = vmul.f32 %v1480, %v1482
    %v1484 = vadd.f32 %v1480, %v1483
    %vm1485 = vweird.f32 %v1476
    %vm1486 = vweird.f32 %v1480
    %vm1487 = vmor %vm1485, %vm1486
    %v1488 = vsel %vm1487, %v1480, %v1484
    %v1489 = vand.u32 2147483647, %v1476
    %vm1490 = vcmp.eq.f32.partialorder %v1489, 8.507059e+37
    %v1491 = vand.u32 %v1476, 2147483648
    %v1492 = vor.u32 1.1754944e-38, %v1491
    %v1493 = vsel %vm1490, %v1492, %v1488
    %v1494 = vmul.f32 %v1471, %v1493
    %v1495 = vrcp.pop %v1479
    %v1496 = vmul.f32 %v1479, %v1495
    %v1497 = vsub.f32 1.0, %v1496
    %v1498 = vmul.f32 %v1495, %v1497
    %v1499 = vadd.f32 %v1495, %v1498
    %vm1500 = vweird.f32 %v1479
    %vm1501 = vweird.f32 %v1495
    %vm1502 = vmor %vm1500, %vm1501
    %v1503 = vsel %vm1502, %v1495, %v1499
    %v1504 = vand.u32 2147483647, %v1479
    %vm1505 = vcmp.eq.f32.partialorder %v1504, 8.507059e+37
    %v1506 = vand.u32 %v1479, 2147483648
    %v1507 = vor.u32 1.1754944e-38, %v1506
    %v1508 = vsel %vm1505, %v1507, %v1503
    %v1509 = vmul.f32 %v1473, %v1508
    %v1510 = vmul.f32 %v1494, %v1194
    %v1511 = vmul.f32 %v1509, %v1194
    %1512 = vrot.lane.b32.xlu0 %v1096, 48
    %v1513 = vpop.permute.xlu0 %1512
    %1514 = vrot.lane.b32.xlu0 %v1097, 48
    %v1515 = vpop.permute.xlu0 %1514
    %v1518 = vsel %vm1144, %v1510, 0
    %v1521 = vsel %vm1144, %v1511, 0
    %v1523 = vsel %vm1210, %v1515, 0
    %1525 = vmatpush.msra.mxu0 0.0
    %1526 = vmatpush.msra.mxu0 0.0
    %1527 = vmatpush.msra.mxu0 0.0
    %1528 = vmatpush.msra.mxu0 0.0
    %1529 = vmatpush.msra.mxu0 0.0
    %1530 = vmatpush.msra.mxu0 0.0
    %1531 = vmatpush.msra.mxu0 0.0
    %1532 = vmatpush.msra.mxu0 0.0
    %1533 = vmatpush.msra.mxu0 0.0
    %1534 = vmatpush.msra.mxu0 0.0
    %1535 = vmatpush.msra.mxu0 0.0
    %1536 = vmatpush.msra.mxu0 0.0
    %1537 = vmatpush.msra.mxu0 0.0
    %1538 = vmatpush.msra.mxu0 0.0
    %1539 = vmatpush.msra.mxu0 %v1523
    %1540 = vmatpush.msra.mxu0 %v1513
    %1541 = vmatmul.f32.gmra.mxu0 %v1518
    %v1542 = vpop.f32.mrf.mxu0
    %v1543 = vadd.f32 0.0, %v1542
    %1544 = vmatmul.f32.gmra.mxu0 %v1521
    %v1545 = vpop.f32.mrf.mxu0
    %v1546 = vadd.f32 0.0, %v1545
    %1547 = vdwg.mxu0
    %v1549 = vsel %vm1110, %v1543, 0
    %v1552 = vsel %vm1110, %v1546, 0
    %1554 = vmatpush.msra.mxu0 0.0
    %1555 = vmatpush.msra.mxu0 0.0
    %1556 = vmatpush.msra.mxu0 0.0
    %1557 = vmatpush.msra.mxu0 0.0
    %1558 = vmatpush.msra.mxu0 0.0
    %1559 = vmatpush.msra.mxu0 0.0
    %1560 = vmatpush.msra.mxu0 0.0
    %1561 = vmatpush.msra.mxu0 0.0
    %1562 = vmatpush.msra.mxu0 0.0
    %1563 = vmatpush.msra.mxu0 0.0
    %1564 = vmatpush.msra.mxu0 0.0
    %1565 = vmatpush.msra.mxu0 0.0
    %1566 = vmatpush.msra.mxu0 0.0
    %1567 = vmatpush.msra.mxu0 0.0
    %1568 = vmatpush.msra.mxu0 0.0
    %1569 = vmatpush.msra.mxu0 %v1101
    %1570 = vmatmul.f32.gmra.mxu0 %v1549
    %v1571 = vpop.f32.mrf.mxu0
    %v1572 = vadd.f32 0.0, %v1571
    %1573 = vmatmul.f32.gmra.mxu0 %v1552
    %v1574 = vpop.f32.mrf.mxu0
    %v1575 = vadd.f32 0.0, %v1574
    %1576 = vdwg.mxu0
    %v1577 = vadd.f32 %v1416, %v1572
    %v1578 = vadd.f32 %v1419, %v1575
    %1579 = vrot.lane.b32.xlu0 %v1061, 104
    %v1580 = vpop.permute.xlu0 %1579
    %1581 = vrot.lane.b32.xlu0 %v1064, 104
    %v1582 = vpop.permute.xlu0 %1581
    %1583 = vrot.lane.b32.xlu0 %v1061, 72
    %v1584 = vpop.permute.xlu0 %1583
    %1585 = vrot.lane.b32.xlu0 %v1064, 72
    %v1586 = vpop.permute.xlu0 %1585
    %v1587 = vsel %vm1110, %v1580, 0
    %v1589 = vsel %vm1110, %v1582, 0
    %v1591 = vsel %vm1110, %v1584, 0
    %v1593 = vsel %vm1110, %v1586, 0
    %1595 = vmatpush.xpose.msra.mxu0 0.0
    %1596 = vmatpush.xpose.msra.mxu0 0.0
    %1597 = vmatpush.xpose.msra.mxu0 0.0
    %1598 = vmatpush.xpose.msra.mxu0 0.0
    %1599 = vmatpush.xpose.msra.mxu0 0.0
    %1600 = vmatpush.xpose.msra.mxu0 0.0
    %1601 = vmatpush.xpose.msra.mxu0 0.0
    %1602 = vmatpush.xpose.msra.mxu0 0.0
    %1603 = vmatpush.xpose.msra.mxu0 0.0
    %1604 = vmatpush.xpose.msra.mxu0 0.0
    %1605 = vmatpush.xpose.msra.mxu0 0.0
    %1606 = vmatpush.xpose.msra.mxu0 0.0
    %1607 = vmatpush.xpose.msra.mxu0 0.0
    %1608 = vmatpush.xpose.msra.mxu0 0.0
    %1609 = vmatpush.xpose.msra.mxu0 %v1593
    %1610 = vmatpush.xpose.msra.mxu0 %v1591
    %1611 = vmatmul.f32.gmra.mxu0 %v1587
    %v1612 = vpop.f32.mrf.mxu0
    %v1613 = vadd.f32 0.0, %v1612
    %1614 = vmatmul.f32.gmra.mxu0 %v1589
    %v1615 = vpop.f32.mrf.mxu0
    %v1616 = vadd.f32 0.0, %v1615
    %1617 = vdwg.mxu0
    %v1618 = vmul.f32 %v1613, 0.35355338
    %v1619 = vmul.f32 %v1616, 0.35355338
    %v1620 = vsel %vm1144, %v1618, -inf
    %1621 = vmax.xlane.f32.xlu0 %v1620
    %v1622 = vpop.xlane.xlu0 %1621
    %v1623 = vsel %vm1148, %v1619, -inf
    %1624 = vmax.xlane.f32.xlu0 %v1623
    %v1625 = vpop.xlane.xlu0 %1624
    %v1626 = vsub.f32 %v1618, %v1622
    %v1627 = vsub.f32 %v1619, %v1625
    %v1628 = vmul.f32 %v1626, 1.442695
    %v1629 = vpow.pop %v1628
    %v1630 = vmul.f32 %v1627, 1.442695
    %v1631 = vpow.pop %v1630
    %v1632 = vsel %vm1144, %v1629, 0.0
    %1633 = vadd.xlane.f32.xlu0 %v1632
    %v1634 = vpop.xlane.xlu0 %1633
    %v1635 = vsel %vm1148, %v1631, 0.0
    %1636 = vadd.xlane.f32.xlu0 %v1635
    %v1637 = vpop.xlane.xlu0 %1636
    %v1638 = vrcp.pop %v1634
    %v1639 = vmul.f32 %v1634, %v1638
    %v1640 = vsub.f32 1.0, %v1639
    %v1641 = vmul.f32 %v1638, %v1640
    %v1642 = vadd.f32 %v1638, %v1641
    %vm1643 = vweird.f32 %v1634
    %vm1644 = vweird.f32 %v1638
    %vm1645 = vmor %vm1643, %vm1644
    %v1646 = vsel %vm1645, %v1638, %v1642
    %v1647 = vand.u32 2147483647, %v1634
    %vm1648 = vcmp.eq.f32.partialorder %v1647, 8.507059e+37
    %v1649 = vand.u32 %v1634, 2147483648
    %v1650 = vor.u32 1.1754944e-38, %v1649
    %v1651 = vsel %vm1648, %v1650, %v1646
    %v1652 = vmul.f32 %v1629, %v1651
    %v1653 = vrcp.pop %v1637
    %v1654 = vmul.f32 %v1637, %v1653
    %v1655 = vsub.f32 1.0, %v1654
    %v1656 = vmul.f32 %v1653, %v1655
    %v1657 = vadd.f32 %v1653, %v1656
    %vm1658 = vweird.f32 %v1637
    %vm1659 = vweird.f32 %v1653
    %vm1660 = vmor %vm1658, %vm1659
    %v1661 = vsel %vm1660, %v1653, %v1657
    %v1662 = vand.u32 2147483647, %v1637
    %vm1663 = vcmp.eq.f32.partialorder %v1662, 8.507059e+37
    %v1664 = vand.u32 %v1637, 2147483648
    %v1665 = vor.u32 1.1754944e-38, %v1664
    %v1666 = vsel %vm1663, %v1665, %v1661
    %v1667 = vmul.f32 %v1631, %v1666
    %v1668 = vmul.f32 %v1652, %v1194
    %v1669 = vmul.f32 %v1667, %v1194
    %1670 = vrot.lane.b32.xlu0 %v1096, 40
    %v1671 = vpop.permute.xlu0 %1670
    %1672 = vrot.lane.b32.xlu0 %v1097, 40
    %v1673 = vpop.permute.xlu0 %1672
    %v1676 = vsel %vm1144, %v1668, 0
    %v1679 = vsel %vm1144, %v1669, 0
    %v1681 = vsel %vm1210, %v1673, 0
    %1683 = vmatpush.msra.mxu0 0.0
    %1684 = vmatpush.msra.mxu0 0.0
    %1685 = vmatpush.msra.mxu0 0.0
    %1686 = vmatpush.msra.mxu0 0.0
    %1687 = vmatpush.msra.mxu0 0.0
    %1688 = vmatpush.msra.mxu0 0.0
    %1689 = vmatpush.msra.mxu0 0.0
    %1690 = vmatpush.msra.mxu0 0.0
    %1691 = vmatpush.msra.mxu0 0.0
    %1692 = vmatpush.msra.mxu0 0.0
    %1693 = vmatpush.msra.mxu0 0.0
    %1694 = vmatpush.msra.mxu0 0.0
    %1695 = vmatpush.msra.mxu0 0.0
    %1696 = vmatpush.msra.mxu0 0.0
    %1697 = vmatpush.msra.mxu0 %v1681
    %1698 = vmatpush.msra.mxu0 %v1671
    %1699 = vmatmul.f32.gmra.mxu0 %v1676
    %v1700 = vpop.f32.mrf.mxu0
    %v1701 = vadd.f32 0.0, %v1700
    %1702 = vmatmul.f32.gmra.mxu0 %v1679
    %v1703 = vpop.f32.mrf.mxu0
    %v1704 = vadd.f32 0.0, %v1703
    %1705 = vdwg.mxu0
    %v1707 = vsel %vm1110, %v1701, 0
    %v1710 = vsel %vm1110, %v1704, 0
    %1712 = vmatpush.msra.mxu0 0.0
    %1713 = vmatpush.msra.mxu0 0.0
    %1714 = vmatpush.msra.mxu0 0.0
    %1715 = vmatpush.msra.mxu0 0.0
    %1716 = vmatpush.msra.mxu0 0.0
    %1717 = vmatpush.msra.mxu0 0.0
    %1718 = vmatpush.msra.mxu0 0.0
    %1719 = vmatpush.msra.mxu0 0.0
    %1720 = vmatpush.msra.mxu0 0.0
    %1721 = vmatpush.msra.mxu0 0.0
    %1722 = vmatpush.msra.mxu0 0.0
    %1723 = vmatpush.msra.mxu0 0.0
    %1724 = vmatpush.msra.mxu0 0.0
    %1725 = vmatpush.msra.mxu0 0.0
    %1726 = vmatpush.msra.mxu0 0.0
    %1727 = vmatpush.msra.mxu0 %v1102
    %1728 = vmatmul.f32.gmra.mxu0 %v1707
    %v1729 = vpop.f32.mrf.mxu0
    %v1730 = vadd.f32 0.0, %v1729
    %1731 = vmatmul.f32.gmra.mxu0 %v1710
    %v1732 = vpop.f32.mrf.mxu0
    %v1733 = vadd.f32 0.0, %v1732
    %1734 = vdwg.mxu0
    %v1735 = vadd.f32 %v1577, %v1730
    %v1736 = vadd.f32 %v1578, %v1733
    %v1738 = vperm.slane %v1103, 0
    %v1740 = vadd.f32 %v1735, %v1738
    %v1741 = vadd.f32 %v1736, %v1738
    %v1742 = vadd.f32 %v936, %v1740
    %v1743 = vadd.f32 %v937, %v1741
    %1744 = vst.msk [vmem:[#allocation2] sm:$0xff] %vm84, %v1742
    %1745 = vst.msk [vmem:[#allocation2 + $0x8] sm:$0x1] %vm389, %v1743
    %vm1747 = vcmask 1046528
    %v1748 = vrot.slane %v1064, 1
    %v1749 = vrot.slane %v1067, 1
    %v1750 = vsel %vm1747, %v1748, %v1749
    %1751 = vrot.lane.b32.xlu0 %v1750, 96
    %v1752 = vpop.permute.xlu0 %1751
    %1753 = vrot.lane.b32.xlu0 %v1749, 96
    %v1754 = vpop.permute.xlu0 %1753
    %v1755 = vsel %vm1110, %v1750, 0
    %v1757 = vsel %vm1110, %v1749, 0
    %v1759 = vsel %vm1110, %v1752, 0
    %v1761 = vsel %vm1110, %v1754, 0
    %1763 = vmatpush.xpose.msra.mxu0 0.0
    %1764 = vmatpush.xpose.msra.mxu0 0.0
    %1765 = vmatpush.xpose.msra.mxu0 0.0
    %1766 = vmatpush.xpose.msra.mxu0 0.0
    %1767 = vmatpush.xpose.msra.mxu0 0.0
    %1768 = vmatpush.xpose.msra.mxu0 0.0
    %1769 = vmatpush.xpose.msra.mxu0 0.0
    %1770 = vmatpush.xpose.msra.mxu0 0.0
    %1771 = vmatpush.xpose.msra.mxu0 0.0
    %1772 = vmatpush.xpose.msra.mxu0 0.0
    %1773 = vmatpush.xpose.msra.mxu0 0.0
    %1774 = vmatpush.xpose.msra.mxu0 0.0
    %1775 = vmatpush.xpose.msra.mxu0 0.0
    %1776 = vmatpush.xpose.msra.mxu0 0.0
    %1777 = vmatpush.xpose.msra.mxu0 %v1761
    %1778 = vmatpush.xpose.msra.mxu0 %v1759
    %1779 = vmatmul.f32.gmra.mxu0 %v1755
    %v1780 = vpop.f32.mrf.mxu0
    %v1781 = vadd.f32 0.0, %v1780
    %1782 = vmatmul.f32.gmra.mxu0 %v1757
    %v1783 = vpop.f32.mrf.mxu0
    %v1784 = vadd.f32 0.0, %v1783
    %1785 = vdwg.mxu0
    %v1786 = vmul.f32 %v1781, 0.35355338
    %v1787 = vmul.f32 %v1784, 0.35355338
    %v1788 = vsel %vm1144, %v1786, -inf
    %1789 = vmax.xlane.f32.xlu0 %v1788
    %v1790 = vpop.xlane.xlu0 %1789
    %v1791 = vsel %vm1148, %v1787, -inf
    %1792 = vmax.xlane.f32.xlu0 %v1791
    %v1793 = vpop.xlane.xlu0 %1792
    %v1794 = vsub.f32 %v1786, %v1790
    %v1795 = vsub.f32 %v1787, %v1793
    %v1796 = vmul.f32 %v1794, 1.442695
    %v1797 = vpow.pop %v1796
    %v1798 = vmul.f32 %v1795, 1.442695
    %v1799 = vpow.pop %v1798
    %v1800 = vsel %vm1144, %v1797, 0.0
    %1801 = vadd.xlane.f32.xlu0 %v1800
    %v1802 = vpop.xlane.xlu0 %1801
    %v1803 = vsel %vm1148, %v1799, 0.0
    %1804 = vadd.xlane.f32.xlu0 %v1803
    %v1805 = vpop.xlane.xlu0 %1804
    %v1806 = vrcp.pop %v1802
    %v1807 = vmul.f32 %v1802, %v1806
    %v1808 = vsub.f32 1.0, %v1807
    %v1809 = vmul.f32 %v1806, %v1808
    %v1810 = vadd.f32 %v1806, %v1809
    %vm1811 = vweird.f32 %v1802
    %vm1812 = vweird.f32 %v1806
    %vm1813 = vmor %vm1811, %vm1812
    %v1814 = vsel %vm1813, %v1806, %v1810
    %v1815 = vand.u32 2147483647, %v1802
    %vm1816 = vcmp.eq.f32.partialorder %v1815, 8.507059e+37
    %v1817 = vand.u32 %v1802, 2147483648
    %v1818 = vor.u32 1.1754944e-38, %v1817
    %v1819 = vsel %vm1816, %v1818, %v1814
    %v1820 = vmul.f32 %v1797, %v1819
    %v1821 = vrcp.pop %v1805
    %v1822 = vmul.f32 %v1805, %v1821
    %v1823 = vsub.f32 1.0, %v1822
    %v1824 = vmul.f32 %v1821, %v1823
    %v1825 = vadd.f32 %v1821, %v1824
    %vm1826 = vweird.f32 %v1805
    %vm1827 = vweird.f32 %v1821
    %vm1828 = vmor %vm1826, %vm1827
    %v1829 = vsel %vm1828, %v1821, %v1825
    %v1830 = vand.u32 2147483647, %v1805
    %vm1831 = vcmp.eq.f32.partialorder %v1830, 8.507059e+37
    %v1832 = vand.u32 %v1805, 2147483648
    %v1833 = vor.u32 1.1754944e-38, %v1832
    %v1834 = vsel %vm1831, %v1833, %v1829
    %v1835 = vmul.f32 %v1799, %v1834
    %v1836 = vperm.slane %v927, 0
    %v1837 = vmul.f32 %v1820, %v1836
    %v1838 = vmul.f32 %v1835, %v1836
    %v1840 = vrot.slane %v1097, 1
    %v1841 = vrot.slane %v1098, 1
    %v1842 = vsel %vm1747, %v1840, %v1841
    %1843 = vrot.lane.b32.xlu0 %v1842, 64
    %v1844 = vpop.permute.xlu0 %1843
    %1845 = vrot.lane.b32.xlu0 %v1841, 64
    %v1846 = vpop.permute.xlu0 %1845
    %v1849 = vsel %vm1144, %v1837, 0
    %v1852 = vsel %vm1144, %v1838, 0
    %v1854 = vsel %vm1210, %v1846, 0
    %1856 = vmatpush.msra.mxu0 0.0
    %1857 = vmatpush.msra.mxu0 0.0
    %1858 = vmatpush.msra.mxu0 0.0
    %1859 = vmatpush.msra.mxu0 0.0
    %1860 = vmatpush.msra.mxu0 0.0
    %1861 = vmatpush.msra.mxu0 0.0
    %1862 = vmatpush.msra.mxu0 0.0
    %1863 = vmatpush.msra.mxu0 0.0
    %1864 = vmatpush.msra.mxu0 0.0
    %1865 = vmatpush.msra.mxu0 0.0
    %1866 = vmatpush.msra.mxu0 0.0
    %1867 = vmatpush.msra.mxu0 0.0
    %1868 = vmatpush.msra.mxu0 0.0
    %1869 = vmatpush.msra.mxu0 0.0
    %1870 = vmatpush.msra.mxu0 %v1854
    %1871 = vmatpush.msra.mxu0 %v1844
    %1872 = vmatmul.f32.gmra.mxu0 %v1849
    %v1873 = vpop.f32.mrf.mxu0
    %v1874 = vadd.f32 0.0, %v1873
    %1875 = vmatmul.f32.gmra.mxu0 %v1852
    %v1876 = vpop.f32.mrf.mxu0
    %v1877 = vadd.f32 0.0, %v1876
    %1878 = vdwg.mxu0
    %1879 = vrot.lane.b32.xlu0 %v1750, 120
    %v1880 = vpop.permute.xlu0 %1879
    %1881 = vrot.lane.b32.xlu0 %v1749, 120
    %v1882 = vpop.permute.xlu0 %1881
    %1883 = vrot.lane.b32.xlu0 %v1750, 88
    %v1884 = vpop.permute.xlu0 %1883
    %1885 = vrot.lane.b32.xlu0 %v1749, 88
    %v1886 = vpop.permute.xlu0 %1885
    %v1887 = vsel %vm1110, %v1880, 0
    %v1889 = vsel %vm1110, %v1882, 0
    %v1891 = vsel %vm1110, %v1884, 0
    %v1893 = vsel %vm1110, %v1886, 0
    %1895 = vmatpush.xpose.msra.mxu0 0.0
    %1896 = vmatpush.xpose.msra.mxu0 0.0
    %1897 = vmatpush.xpose.msra.mxu0 0.0
    %1898 = vmatpush.xpose.msra.mxu0 0.0
    %1899 = vmatpush.xpose.msra.mxu0 0.0
    %1900 = vmatpush.xpose.msra.mxu0 0.0
    %1901 = vmatpush.xpose.msra.mxu0 0.0
    %1902 = vmatpush.xpose.msra.mxu0 0.0
    %1903 = vmatpush.xpose.msra.mxu0 0.0
    %1904 = vmatpush.xpose.msra.mxu0 0.0
    %1905 = vmatpush.xpose.msra.mxu0 0.0
    %1906 = vmatpush.xpose.msra.mxu0 0.0
    %1907 = vmatpush.xpose.msra.mxu0 0.0
    %1908 = vmatpush.xpose.msra.mxu0 0.0
    %1909 = vmatpush.xpose.msra.mxu0 %v1893
    %1910 = vmatpush.xpose.msra.mxu0 %v1891
    %1911 = vmatmul.f32.gmra.mxu0 %v1887
    %v1912 = vpop.f32.mrf.mxu0
    %v1913 = vadd.f32 0.0, %v1912
    %1914 = vmatmul.f32.gmra.mxu0 %v1889
    %v1915 = vpop.f32.mrf.mxu0
    %v1916 = vadd.f32 0.0, %v1915
    %1917 = vdwg.mxu0
    %v1918 = vmul.f32 %v1913, 0.35355338
    %v1919 = vmul.f32 %v1916, 0.35355338
    %v1920 = vsel %vm1144, %v1918, -inf
    %1921 = vmax.xlane.f32.xlu0 %v1920
    %v1922 = vpop.xlane.xlu0 %1921
    %v1923 = vsel %vm1148, %v1919, -inf
    %1924 = vmax.xlane.f32.xlu0 %v1923
    %v1925 = vpop.xlane.xlu0 %1924
    %v1926 = vsub.f32 %v1918, %v1922
    %v1927 = vsub.f32 %v1919, %v1925
    %v1928 = vmul.f32 %v1926, 1.442695
    %v1929 = vpow.pop %v1928
    %v1930 = vmul.f32 %v1927, 1.442695
    %v1931 = vpow.pop %v1930
    %v1932 = vsel %vm1144, %v1929, 0.0
    %1933 = vadd.xlane.f32.xlu0 %v1932
    %v1934 = vpop.xlane.xlu0 %1933
    %v1935 = vsel %vm1148, %v1931, 0.0
    %1936 = vadd.xlane.f32.xlu0 %v1935
    %v1937 = vpop.xlane.xlu0 %1936
    %v1938 = vrcp.pop %v1934
    %v1939 = vmul.f32 %v1934, %v1938
    %v1940 = vsub.f32 1.0, %v1939
    %v1941 = vmul.f32 %v1938, %v1940
    %v1942 = vadd.f32 %v1938, %v1941
    %vm1943 = vweird.f32 %v1934
    %vm1944 = vweird.f32 %v1938
    %vm1945 = vmor %vm1943, %vm1944
    %v1946 = vsel %vm1945, %v1938, %v1942
    %v1947 = vand.u32 2147483647, %v1934
    %vm1948 = vcmp.eq.f32.partialorder %v1947, 8.507059e+37
    %v1949 = vand.u32 %v1934, 2147483648
    %v1950 = vor.u32 1.1754944e-38, %v1949
    %v1951 = vsel %vm1948, %v1950, %v1946
    %v1952 = vmul.f32 %v1929, %v1951
    %v1953 = vrcp.pop %v1937
    %v1954 = vmul.f32 %v1937, %v1953
    %v1955 = vsub.f32 1.0, %v1954
    %v1956 = vmul.f32 %v1953, %v1955
    %v1957 = vadd.f32 %v1953, %v1956
    %vm1958 = vweird.f32 %v1937
    %vm1959 = vweird.f32 %v1953
    %vm1960 = vmor %vm1958, %vm1959
    %v1961 = vsel %vm1960, %v1953, %v1957
    %v1962 = vand.u32 2147483647, %v1937
    %vm1963 = vcmp.eq.f32.partialorder %v1962, 8.507059e+37
    %v1964 = vand.u32 %v1937, 2147483648
    %v1965 = vor.u32 1.1754944e-38, %v1964
    %v1966 = vsel %vm1963, %v1965, %v1961
    %v1967 = vmul.f32 %v1931, %v1966
    %v1968 = vmul.f32 %v1952, %v1836
    %v1969 = vmul.f32 %v1967, %v1836
    %1970 = vrot.lane.b32.xlu0 %v1842, 56
    %v1971 = vpop.permute.xlu0 %1970
    %1972 = vrot.lane.b32.xlu0 %v1841, 56
    %v1973 = vpop.permute.xlu0 %1972
    %v1976 = vsel %vm1144, %v1968, 0
    %v1979 = vsel %vm1144, %v1969, 0
    %v1981 = vsel %vm1210, %v1973, 0
    %1983 = vmatpush.msra.mxu0 0.0
    %1984 = vmatpush.msra.mxu0 0.0
    %1985 = vmatpush.msra.mxu0 0.0
    %1986 = vmatpush.msra.mxu0 0.0
    %1987 = vmatpush.msra.mxu0 0.0
    %1988 = vmatpush.msra.mxu0 0.0
    %1989 = vmatpush.msra.mxu0 0.0
    %1990 = vmatpush.msra.mxu0 0.0
    %1991 = vmatpush.msra.mxu0 0.0
    %1992 = vmatpush.msra.mxu0 0.0
    %1993 = vmatpush.msra.mxu0 0.0
    %1994 = vmatpush.msra.mxu0 0.0
    %1995 = vmatpush.msra.mxu0 0.0
    %1996 = vmatpush.msra.mxu0 0.0
    %1997 = vmatpush.msra.mxu0 %v1981
    %1998 = vmatpush.msra.mxu0 %v1971
    %1999 = vmatmul.f32.gmra.mxu0 %v1976
    %v2000 = vpop.f32.mrf.mxu0
    %v2001 = vadd.f32 0.0, %v2000
    %2002 = vmatmul.f32.gmra.mxu0 %v1979
    %v2003 = vpop.f32.mrf.mxu0
    %v2004 = vadd.f32 0.0, %v2003
    %2005 = vdwg.mxu0
    %v2007 = vsel %vm1110, %v2001, 0
    %v2010 = vsel %vm1110, %v2004, 0
    %2012 = vmatpush.msra.mxu0 0.0
    %2013 = vmatpush.msra.mxu0 0.0
    %2014 = vmatpush.msra.mxu0 0.0
    %2015 = vmatpush.msra.mxu0 0.0
    %2016 = vmatpush.msra.mxu0 0.0
    %2017 = vmatpush.msra.mxu0 0.0
    %2018 = vmatpush.msra.mxu0 0.0
    %2019 = vmatpush.msra.mxu0 0.0
    %2020 = vmatpush.msra.mxu0 0.0
    %2021 = vmatpush.msra.mxu0 0.0
    %2022 = vmatpush.msra.mxu0 0.0
    %2023 = vmatpush.msra.mxu0 0.0
    %2024 = vmatpush.msra.mxu0 0.0
    %2025 = vmatpush.msra.mxu0 0.0
    %2026 = vmatpush.msra.mxu0 0.0
    %2027 = vmatpush.msra.mxu0 %v1100
    %2028 = vmatmul.f32.gmra.mxu0 %v2007
    %v2029 = vpop.f32.mrf.mxu0
    %v2030 = vadd.f32 0.0, %v2029
    %2031 = vmatmul.f32.gmra.mxu0 %v2010
    %v2032 = vpop.f32.mrf.mxu0
    %v2033 = vadd.f32 0.0, %v2032
    %2034 = vdwg.mxu0
    %v2036 = vsel %vm1110, %v1874, 0
    %v2039 = vsel %vm1110, %v1877, 0
    %2041 = vmatpush.msra.mxu0 0.0
    %2042 = vmatpush.msra.mxu0 0.0
    %2043 = vmatpush.msra.mxu0 0.0
    %2044 = vmatpush.msra.mxu0 0.0
    %2045 = vmatpush.msra.mxu0 0.0
    %2046 = vmatpush.msra.mxu0 0.0
    %2047 = vmatpush.msra.mxu0 0.0
    %2048 = vmatpush.msra.mxu0 0.0
    %2049 = vmatpush.msra.mxu0 0.0
    %2050 = vmatpush.msra.mxu0 0.0
    %2051 = vmatpush.msra.mxu0 0.0
    %2052 = vmatpush.msra.mxu0 0.0
    %2053 = vmatpush.msra.mxu0 0.0
    %2054 = vmatpush.msra.mxu0 0.0
    %2055 = vmatpush.msra.mxu0 0.0
    %2056 = vmatpush.msra.mxu0 %v1099
    %2057 = vmatmul.f32.gmra.mxu0 %v2036
    %v2058 = vpop.f32.mrf.mxu0
    %v2059 = vadd.f32 %v2030, %v2058
    %2060 = vmatmul.f32.gmra.mxu0 %v2039
    %v2061 = vpop.f32.mrf.mxu0
    %v2062 = vadd.f32 %v2033, %v2061
    %2063 = vdwg.mxu0
    %2064 = vrot.lane.b32.xlu0 %v1750, 112
    %v2065 = vpop.permute.xlu0 %2064
    %2066 = vrot.lane.b32.xlu0 %v1749, 112
    %v2067 = vpop.permute.xlu0 %2066
    %2068 = vrot.lane.b32.xlu0 %v1750, 80
    %v2069 = vpop.permute.xlu0 %2068
    %2070 = vrot.lane.b32.xlu0 %v1749, 80
    %v2071 = vpop.permute.xlu0 %2070
    %v2072 = vsel %vm1110, %v2065, 0
    %v2074 = vsel %vm1110, %v2067, 0
    %v2076 = vsel %vm1110, %v2069, 0
    %v2078 = vsel %vm1110, %v2071, 0
    %2080 = vmatpush.xpose.msra.mxu0 0.0
    %2081 = vmatpush.xpose.msra.mxu0 0.0
    %2082 = vmatpush.xpose.msra.mxu0 0.0
    %2083 = vmatpush.xpose.msra.mxu0 0.0
    %2084 = vmatpush.xpose.msra.mxu0 0.0
    %2085 = vmatpush.xpose.msra.mxu0 0.0
    %2086 = vmatpush.xpose.msra.mxu0 0.0
    %2087 = vmatpush.xpose.msra.mxu0 0.0
    %2088 = vmatpush.xpose.msra.mxu0 0.0
    %2089 = vmatpush.xpose.msra.mxu0 0.0
    %2090 = vmatpush.xpose.msra.mxu0 0.0
    %2091 = vmatpush.xpose.msra.mxu0 0.0
    %2092 = vmatpush.xpose.msra.mxu0 0.0
    %2093 = vmatpush.xpose.msra.mxu0 0.0
    %2094 = vmatpush.xpose.msra.mxu0 %v2078
    %2095 = vmatpush.xpose.msra.mxu0 %v2076
    %2096 = vmatmul.f32.gmra.mxu0 %v2072
    %v2097 = vpop.f32.mrf.mxu0
    %v2098 = vadd.f32 0.0, %v2097
    %2099 = vmatmul.f32.gmra.mxu0 %v2074
    %v2100 = vpop.f32.mrf.mxu0
    %v2101 = vadd.f32 0.0, %v2100
    %2102 = vdwg.mxu0
    %v2103 = vmul.f32 %v2098, 0.35355338
    %v2104 = vmul.f32 %v2101, 0.35355338
    %v2105 = vsel %vm1144, %v2103, -inf
    %2106 = vmax.xlane.f32.xlu0 %v2105
    %v2107 = vpop.xlane.xlu0 %2106
    %v2108 = vsel %vm1148, %v2104, -inf
    %2109 = vmax.xlane.f32.xlu0 %v2108
    %v2110 = vpop.xlane.xlu0 %2109
    %v2111 = vsub.f32 %v2103, %v2107
    %v2112 = vsub.f32 %v2104, %v2110
    %v2113 = vmul.f32 %v2111, 1.442695
    %v2114 = vpow.pop %v2113
    %v2115 = vmul.f32 %v2112, 1.442695
    %v2116 = vpow.pop %v2115
    %v2117 = vsel %vm1144, %v2114, 0.0
    %2118 = vadd.xlane.f32.xlu0 %v2117
    %v2119 = vpop.xlane.xlu0 %2118
    %v2120 = vsel %vm1148, %v2116, 0.0
    %2121 = vadd.xlane.f32.xlu0 %v2120
    %v2122 = vpop.xlane.xlu0 %2121
    %v2123 = vrcp.pop %v2119
    %v2124 = vmul.f32 %v2119, %v2123
    %v2125 = vsub.f32 1.0, %v2124
    %v2126 = vmul.f32 %v2123, %v2125
    %v2127 = vadd.f32 %v2123, %v2126
    %vm2128 = vweird.f32 %v2119
    %vm2129 = vweird.f32 %v2123
    %vm2130 = vmor %vm2128, %vm2129
    %v2131 = vsel %vm2130, %v2123, %v2127
    %v2132 = vand.u32 2147483647, %v2119
    %vm2133 = vcmp.eq.f32.partialorder %v2132, 8.507059e+37
    %v2134 = vand.u32 %v2119, 2147483648
    %v2135 = vor.u32 1.1754944e-38, %v2134
    %v2136 = vsel %vm2133, %v2135, %v2131
    %v2137 = vmul.f32 %v2114, %v2136
    %v2138 = vrcp.pop %v2122
    %v2139 = vmul.f32 %v2122, %v2138
    %v2140 = vsub.f32 1.0, %v2139
    %v2141 = vmul.f32 %v2138, %v2140
    %v2142 = vadd.f32 %v2138, %v2141
    %vm2143 = vweird.f32 %v2122
    %vm2144 = vweird.f32 %v2138
    %vm2145 = vmor %vm2143, %vm2144
    %v2146 = vsel %vm2145, %v2138, %v2142
    %v2147 = vand.u32 2147483647, %v2122
    %vm2148 = vcmp.eq.f32.partialorder %v2147, 8.507059e+37
    %v2149 = vand.u32 %v2122, 2147483648
    %v2150 = vor.u32 1.1754944e-38, %v2149
    %v2151 = vsel %vm2148, %v2150, %v2146
    %v2152 = vmul.f32 %v2116, %v2151
    %v2153 = vmul.f32 %v2137, %v1836
    %v2154 = vmul.f32 %v2152, %v1836
    %2155 = vrot.lane.b32.xlu0 %v1842, 48
    %v2156 = vpop.permute.xlu0 %2155
    %2157 = vrot.lane.b32.xlu0 %v1841, 48
    %v2158 = vpop.permute.xlu0 %2157
    %v2161 = vsel %vm1144, %v2153, 0
    %v2164 = vsel %vm1144, %v2154, 0
    %v2166 = vsel %vm1210, %v2158, 0
    %2168 = vmatpush.msra.mxu0 0.0
    %2169 = vmatpush.msra.mxu0 0.0
    %2170 = vmatpush.msra.mxu0 0.0
    %2171 = vmatpush.msra.mxu0 0.0
    %2172 = vmatpush.msra.mxu0 0.0
    %2173 = vmatpush.msra.mxu0 0.0
    %2174 = vmatpush.msra.mxu0 0.0
    %2175 = vmatpush.msra.mxu0 0.0
    %2176 = vmatpush.msra.mxu0 0.0
    %2177 = vmatpush.msra.mxu0 0.0
    %2178 = vmatpush.msra.mxu0 0.0
    %2179 = vmatpush.msra.mxu0 0.0
    %2180 = vmatpush.msra.mxu0 0.0
    %2181 = vmatpush.msra.mxu0 0.0
    %2182 = vmatpush.msra.mxu0 %v2166
    %2183 = vmatpush.msra.mxu0 %v2156
    %2184 = vmatmul.f32.gmra.mxu0 %v2161
    %v2185 = vpop.f32.mrf.mxu0
    %v2186 = vadd.f32 0.0, %v2185
    %2187 = vmatmul.f32.gmra.mxu0 %v2164
    %v2188 = vpop.f32.mrf.mxu0
    %v2189 = vadd.f32 0.0, %v2188
    %2190 = vdwg.mxu0
    %v2192 = vsel %vm1110, %v2186, 0
    %v2195 = vsel %vm1110, %v2189, 0
    %2197 = vmatpush.msra.mxu0 0.0
    %2198 = vmatpush.msra.mxu0 0.0
    %2199 = vmatpush.msra.mxu0 0.0
    %2200 = vmatpush.msra.mxu0 0.0
    %2201 = vmatpush.msra.mxu0 0.0
    %2202 = vmatpush.msra.mxu0 0.0
    %2203 = vmatpush.msra.mxu0 0.0
    %2204 = vmatpush.msra.mxu0 0.0
    %2205 = vmatpush.msra.mxu0 0.0
    %2206 = vmatpush.msra.mxu0 0.0
    %2207 = vmatpush.msra.mxu0 0.0
    %2208 = vmatpush.msra.mxu0 0.0
    %2209 = vmatpush.msra.mxu0 0.0
    %2210 = vmatpush.msra.mxu0 0.0
    %2211 = vmatpush.msra.mxu0 0.0
    %2212 = vmatpush.msra.mxu0 %v1101
    %2213 = vmatmul.f32.gmra.mxu0 %v2192
    %v2214 = vpop.f32.mrf.mxu0
    %v2215 = vadd.f32 0.0, %v2214
    %2216 = vmatmul.f32.gmra.mxu0 %v2195
    %v2217 = vpop.f32.mrf.mxu0
    %v2218 = vadd.f32 0.0, %v2217
    %2219 = vdwg.mxu0
    %v2220 = vadd.f32 %v2059, %v2215
    %v2221 = vadd.f32 %v2062, %v2218
    %2222 = vrot.lane.b32.xlu0 %v1750, 104
    %v2223 = vpop.permute.xlu0 %2222
    %2224 = vrot.lane.b32.xlu0 %v1749, 104
    %v2225 = vpop.permute.xlu0 %2224
    %2226 = vrot.lane.b32.xlu0 %v1750, 72
    %v2227 = vpop.permute.xlu0 %2226
    %2228 = vrot.lane.b32.xlu0 %v1749, 72
    %v2229 = vpop.permute.xlu0 %2228
    %v2230 = vsel %vm1110, %v2223, 0
    %v2232 = vsel %vm1110, %v2225, 0
    %v2234 = vsel %vm1110, %v2227, 0
    %v2236 = vsel %vm1110, %v2229, 0
    %2238 = vmatpush.xpose.msra.mxu0 0.0
    %2239 = vmatpush.xpose.msra.mxu0 0.0
    %2240 = vmatpush.xpose.msra.mxu0 0.0
    %2241 = vmatpush.xpose.msra.mxu0 0.0
    %2242 = vmatpush.xpose.msra.mxu0 0.0
    %2243 = vmatpush.xpose.msra.mxu0 0.0
    %2244 = vmatpush.xpose.msra.mxu0 0.0
    %2245 = vmatpush.xpose.msra.mxu0 0.0
    %2246 = vmatpush.xpose.msra.mxu0 0.0
    %2247 = vmatpush.xpose.msra.mxu0 0.0
    %2248 = vmatpush.xpose.msra.mxu0 0.0
    %2249 = vmatpush.xpose.msra.mxu0 0.0
    %2250 = vmatpush.xpose.msra.mxu0 0.0
    %2251 = vmatpush.xpose.msra.mxu0 0.0
    %2252 = vmatpush.xpose.msra.mxu0 %v2236
    %2253 = vmatpush.xpose.msra.mxu0 %v2234
    %2254 = vmatmul.f32.gmra.mxu0 %v2230
    %v2255 = vpop.f32.mrf.mxu0
    %v2256 = vadd.f32 0.0, %v2255
    %2257 = vmatmul.f32.gmra.mxu0 %v2232
    %v2258 = vpop.f32.mrf.mxu0
    %v2259 = vadd.f32 0.0, %v2258
    %2260 = vdwg.mxu0
    %v2261 = vmul.f32 %v2256, 0.35355338
    %v2262 = vmul.f32 %v2259, 0.35355338
    %v2263 = vsel %vm1144, %v2261, -inf
    %2264 = vmax.xlane.f32.xlu0 %v2263
    %v2265 = vpop.xlane.xlu0 %2264
    %v2266 = vsel %vm1148, %v2262, -inf
    %2267 = vmax.xlane.f32.xlu0 %v2266
    %v2268 = vpop.xlane.xlu0 %2267
    %v2269 = vsub.f32 %v2261, %v2265
    %v2270 = vsub.f32 %v2262, %v2268
    %v2271 = vmul.f32 %v2269, 1.442695
    %v2272 = vpow.pop %v2271
    %v2273 = vmul.f32 %v2270, 1.442695
    %v2274 = vpow.pop %v2273
    %v2275 = vsel %vm1144, %v2272, 0.0
    %2276 = vadd.xlane.f32.xlu0 %v2275
    %v2277 = vpop.xlane.xlu0 %2276
    %v2278 = vsel %vm1148, %v2274, 0.0
    %2279 = vadd.xlane.f32.xlu0 %v2278
    %v2280 = vpop.xlane.xlu0 %2279
    %v2281 = vrcp.pop %v2277
    %v2282 = vmul.f32 %v2277, %v2281
    %v2283 = vsub.f32 1.0, %v2282
    %v2284 = vmul.f32 %v2281, %v2283
    %v2285 = vadd.f32 %v2281, %v2284
    %vm2286 = vweird.f32 %v2277
    %vm2287 = vweird.f32 %v2281
    %vm2288 = vmor %vm2286, %vm2287
    %v2289 = vsel %vm2288, %v2281, %v2285
    %v2290 = vand.u32 2147483647, %v2277
    %vm2291 = vcmp.eq.f32.partialorder %v2290, 8.507059e+37
    %v2292 = vand.u32 %v2277, 2147483648
    %v2293 = vor.u32 1.1754944e-38, %v2292
    %v2294 = vsel %vm2291, %v2293, %v2289
    %v2295 = vmul.f32 %v2272, %v2294
    %v2296 = vrcp.pop %v2280
    %v2297 = vmul.f32 %v2280, %v2296
    %v2298 = vsub.f32 1.0, %v2297
    %v2299 = vmul.f32 %v2296, %v2298
    %v2300 = vadd.f32 %v2296, %v2299
    %vm2301 = vweird.f32 %v2280
    %vm2302 = vweird.f32 %v2296
    %vm2303 = vmor %vm2301, %vm2302
    %v2304 = vsel %vm2303, %v2296, %v2300
    %v2305 = vand.u32 2147483647, %v2280
    %vm2306 = vcmp.eq.f32.partialorder %v2305, 8.507059e+37
    %v2307 = vand.u32 %v2280, 2147483648
    %v2308 = vor.u32 1.1754944e-38, %v2307
    %v2309 = vsel %vm2306, %v2308, %v2304
    %v2310 = vmul.f32 %v2274, %v2309
    %v2311 = vmul.f32 %v2295, %v1836
    %v2312 = vmul.f32 %v2310, %v1836
    %2313 = vrot.lane.b32.xlu0 %v1842, 40
    %v2314 = vpop.permute.xlu0 %2313
    %2315 = vrot.lane.b32.xlu0 %v1841, 40
    %v2316 = vpop.permute.xlu0 %2315
    %v2319 = vsel %vm1144, %v2311, 0
    %v2322 = vsel %vm1144, %v2312, 0
    %v2324 = vsel %vm1210, %v2316, 0
    %2326 = vmatpush.msra.mxu0 0.0
    %2327 = vmatpush.msra.mxu0 0.0
    %2328 = vmatpush.msra.mxu0 0.0
    %2329 = vmatpush.msra.mxu0 0.0
    %2330 = vmatpush.msra.mxu0 0.0
    %2331 = vmatpush.msra.mxu0 0.0
    %2332 = vmatpush.msra.mxu0 0.0
    %2333 = vmatpush.msra.mxu0 0.0
    %2334 = vmatpush.msra.mxu0 0.0
    %2335 = vmatpush.msra.mxu0 0.0
    %2336 = vmatpush.msra.mxu0 0.0
    %2337 = vmatpush.msra.mxu0 0.0
    %2338 = vmatpush.msra.mxu0 0.0
    %2339 = vmatpush.msra.mxu0 0.0
    %2340 = vmatpush.msra.mxu0 %v2324
    %2341 = vmatpush.msra.mxu0 %v2314
    %2342 = vmatmul.f32.gmra.mxu0 %v2319
    %v2343 = vpop.f32.mrf.mxu0
    %v2344 = vadd.f32 0.0, %v2343
    %2345 = vmatmul.f32.gmra.mxu0 %v2322
    %v2346 = vpop.f32.mrf.mxu0
    %v2347 = vadd.f32 0.0, %v2346
    %2348 = vdwg.mxu0
    %v2350 = vsel %vm1110, %v2344, 0
    %v2353 = vsel %vm1110, %v2347, 0
    %2355 = vmatpush.msra.mxu0 0.0
    %2356 = vmatpush.msra.mxu0 0.0
    %2357 = vmatpush.msra.mxu0 0.0
    %2358 = vmatpush.msra.mxu0 0.0
    %2359 = vmatpush.msra.mxu0 0.0
    %2360 = vmatpush.msra.mxu0 0.0
    %2361 = vmatpush.msra.mxu0 0.0
    %2362 = vmatpush.msra.mxu0 0.0
    %2363 = vmatpush.msra.mxu0 0.0
    %2364 = vmatpush.msra.mxu0 0.0
    %2365 = vmatpush.msra.mxu0 0.0
    %2366 = vmatpush.msra.mxu0 0.0
    %2367 = vmatpush.msra.mxu0 0.0
    %2368 = vmatpush.msra.mxu0 0.0
    %2369 = vmatpush.msra.mxu0 0.0
    %2370 = vmatpush.msra.mxu0 %v1102
    %2371 = vmatmul.f32.gmra.mxu0 %v2350
    %v2372 = vpop.f32.mrf.mxu0
    %v2373 = vadd.f32 0.0, %v2372
    %2374 = vmatmul.f32.gmra.mxu0 %v2353
    %v2375 = vpop.f32.mrf.mxu0
    %v2376 = vadd.f32 0.0, %v2375
    %2377 = vdwg.mxu0
    %v2378 = vadd.f32 %v2220, %v2373
    %v2379 = vadd.f32 %v2221, %v2376
    %v2380 = vadd.f32 %v2378, %v1738
    %v2381 = vadd.f32 %v2379, %v1738
    %v2384 = vrot.slane %v2380, 7
    %v2385 = vrot.slane %v2381, 7
    %v2386 = vsel %vm1210, %v2384, %v2385
    %v2389 = vadd.f32 %v937, %v2384
    %v2390 = vadd.f32 %v938, %v2386
    %vm2391 = vcmask 261121
    %2392 = vst.msk [vmem:[#allocation2 + $0x8] sm:$0xfe] %vm2391, %v2389
    %2393 = vst.msk [vmem:[#allocation2 + $0x10] sm:$0x3] %vm87, %v2390
    %v2394 = vld [vmem:[#allocation2] sm:$0xff]
    %v2395 = vld [vmem:[#allocation2 + $0x8] sm:$0xff]
    %v2396 = vld [vmem:[#allocation2 + $0x10] sm:$0x3]
    %v2397 = vld [vmem:[%s11] sm:$0x1]
    %v2398 = vld [vmem:[%s12] sm:$0x1]
    %v2399 = vsel %vm84, %v2394, 0.0
    %2400 = vadd.xlane.f32.xlu0 %v2399
    %v2401 = vpop.xlane.xlu0 %2400
    %v2402 = vsel %vm84, %v2395, 0.0
    %2403 = vadd.xlane.f32.xlu0 %v2402
    %v2404 = vpop.xlane.xlu0 %2403
    %v2405 = vsel %vm87, %v2396, 0.0
    %2406 = vadd.xlane.f32.xlu0 %v2405
    %v2407 = vpop.xlane.xlu0 %2406
    %v2408 = vmul.f32 %v2401, %v956
    %v2409 = vmul.f32 %v2404, %v956
    %v2410 = vmul.f32 %v2407, %v956
    %v2411 = vsub.f32 %v2394, %v2408
    %v2412 = vsub.f32 %v2395, %v2409
    %v2413 = vsub.f32 %v2396, %v2410
    %v2414 = vmul.f32 %v2411, %v2411
    %v2415 = vmul.f32 %v2412, %v2412
    %v2416 = vmul.f32 %v2413, %v2413
    %v2417 = vsel %vm84, %v2414, 0.0
    %2418 = vadd.xlane.f32.xlu0 %v2417
    %v2419 = vpop.xlane.xlu0 %2418
    %v2420 = vsel %vm84, %v2415, 0.0
    %2421 = vadd.xlane.f32.xlu0 %v2420
    %v2422 = vpop.xlane.xlu0 %2421
    %v2423 = vsel %vm87, %v2416, 0.0
    %2424 = vadd.xlane.f32.xlu0 %v2423
    %v2425 = vpop.xlane.xlu0 %2424
    %v2426 = vmul.f32 %v2419, %v956
    %v2427 = vmul.f32 %v2422, %v956
    %v2428 = vmul.f32 %v2425, %v956
    %v2429 = vadd.f32 %v2426, 1e-06
    %v2430 = vadd.f32 %v2427, 1e-06
    %v2431 = vadd.f32 %v2428, 1e-06
    %v2432 = vrsqrt.pop %v2429
    %v2433 = vmul.f32 %v2432, %v2429
    %v2434 = vmul.f32 %v2433, %v2432
    %v2435 = vmul.f32 0.5, %v2434
    %v2436 = vsub.f32 1.5, %v2435
    %v2437 = vmul.f32 %v2432, %v2436
    %vm2438 = vweird.f32 %v2429
    %vm2439 = vweird.f32 %v2432
    %vm2440 = vmor %vm2438, %vm2439
    %v2441 = vsel %vm2440, %v2432, %v2437
    %v2442 = vrsqrt.pop %v2430
    %v2443 = vmul.f32 %v2442, %v2430
    %v2444 = vmul.f32 %v2443, %v2442
    %v2445 = vmul.f32 0.5, %v2444
    %v2446 = vsub.f32 1.5, %v2445
    %v2447 = vmul.f32 %v2442, %v2446
    %vm2448 = vweird.f32 %v2430
    %vm2449 = vweird.f32 %v2442
    %vm2450 = vmor %vm2448, %vm2449
    %v2451 = vsel %vm2450, %v2442, %v2447
    %v2452 = vrsqrt.pop %v2431
    %v2453 = vmul.f32 %v2452, %v2431
    %v2454 = vmul.f32 %v2453, %v2452
    %v2455 = vmul.f32 0.5, %v2454
    %v2456 = vsub.f32 1.5, %v2455
    %v2457 = vmul.f32 %v2452, %v2456
    %vm2458 = vweird.f32 %v2431
    %vm2459 = vweird.f32 %v2452
    %vm2460 = vmor %vm2458, %vm2459
    %v2461 = vsel %vm2460, %v2452, %v2457
    %v2462 = vmul.f32 %v2411, %v2441
    %v2463 = vmul.f32 %v2412, %v2451
    %v2464 = vmul.f32 %v2413, %v2461
    %v2466 = vperm.slane %v2397, 0
    %v2468 = vmul.f32 %v2462, %v2466
    %v2469 = vmul.f32 %v2463, %v2466
    %v2470 = vmul.f32 %v2464, %v2466
    %v2472 = vperm.slane %v2398, 0
    %v2474 = vadd.f32 %v2468, %v2472
    %v2475 = vadd.f32 %v2469, %v2472
    %v2476 = vadd.f32 %v2470, %v2472
    %v2477 = vld [vmem:[%s13] sm:$0xff]
    %v2478 = vld [vmem:[%s13 + $0x8] sm:$0xff]
    %v2479 = vld [vmem:[%s13 + $0x10] sm:$0xff]
    %v2480 = vld [vmem:[%s13 + $0x18] sm:$0xff]
    %v2481 = vld [vmem:[%s14] sm:$0x1]
    %v2483 = vperm.slane %v2481, 0
    %v2486 = vsel %vm84, %v2474, 0
    %v2489 = vsel %vm84, %v2475, 0
    %v2492 = vsel %vm84, %v2476, 0
    %2494 = vmatpush.msra.mxu0 0.0
    %2495 = vmatpush.msra.mxu0 0.0
    %2496 = vmatpush.msra.mxu0 0.0
    %2497 = vmatpush.msra.mxu0 0.0
    %2498 = vmatpush.msra.mxu0 0.0
    %2499 = vmatpush.msra.mxu0 0.0
    %2500 = vmatpush.msra.mxu0 0.0
    %2501 = vmatpush.msra.mxu0 0.0
    %2502 = vmatpush.msra.mxu0 0.0
    %2503 = vmatpush.msra.mxu0 0.0
    %2504 = vmatpush.msra.mxu0 0.0
    %2505 = vmatpush.msra.mxu0 0.0
    %2506 = vmatpush.msra.mxu0 %v2480
    %2507 = vmatpush.msra.mxu0 %v2479
    %2508 = vmatpush.msra.mxu0 %v2478
    %2509 = vmatpush.msra.mxu0 %v2477
    %2510 = vmatmul.f32.gmra.mxu0 %v2486
    %v2511 = vpop.f32.mrf.mxu0
    %v2512 = vadd.f32 %v2483, %v2511
    %2513 = vmatmul.f32.gmra.mxu0 %v2489
    %v2514 = vpop.f32.mrf.mxu0
    %v2515 = vadd.f32 %v2483, %v2514
    %2516 = vmatmul.f32.gmra.mxu0 %v2492
    %v2517 = vpop.f32.mrf.mxu0
    %v2518 = vadd.f32 %v2483, %v2517
    %2519 = vdwg.mxu0
    %v2520 = vmul.f32 %v2512, 0.5
    %v2521 = vmul.f32 %v2515, 0.5
    %v2522 = vmul.f32 %v2518, 0.5
    %v2523 = vmul.f32 %v2512, 0.044715
    %v2524 = vmul.f32 %v2515, 0.044715
    %v2525 = vmul.f32 %v2518, 0.044715
    %v2526 = vmul.f32 %v2523, %v2512
    %v2527 = vmul.f32 %v2524, %v2515
    %v2528 = vmul.f32 %v2525, %v2518
    %v2529 = vmul.f32 %v2526, %v2512
    %v2530 = vmul.f32 %v2527, %v2515
    %v2531 = vmul.f32 %v2528, %v2518
    %v2532 = vadd.f32 %v2512, %v2529
    %v2533 = vadd.f32 %v2515, %v2530
    %v2534 = vadd.f32 %v2518, %v2531
    %v2535 = vmul.f32 %v2532, 0.7978846
    %v2536 = vmul.f32 %v2533, 0.7978846
    %v2537 = vmul.f32 %v2534, 0.7978846
    %v2538 = vtanh.pop %v2535
    %v2539 = vtanh.pop %v2536
    %v2540 = vtanh.pop %v2537
    %v2541 = vadd.f32 %v2538, 1.0
    %v2542 = vadd.f32 %v2539, 1.0
    %v2543 = vadd.f32 %v2540, 1.0
    %v2544 = vmul.f32 %v2520, %v2541
    %v2545 = vmul.f32 %v2521, %v2542
    %v2546 = vmul.f32 %v2522, %v2543
    %v2547 = vld [vmem:[%s15] sm:$0xff]
    %v2548 = vld [vmem:[%s15 + $0x8] sm:$0xff]
    %v2549 = vld [vmem:[%s15 + $0x10] sm:$0xff]
    %v2550 = vld [vmem:[%s15 + $0x18] sm:$0xff]
    %v2551 = vld [vmem:[%s15 + $0x20] sm:$0xff]
    %v2552 = vld [vmem:[%s15 + $0x28] sm:$0xff]
    %v2553 = vld [vmem:[%s15 + $0x30] sm:$0xff]
    %v2554 = vld [vmem:[%s15 + $0x38] sm:$0xff]
    %v2555 = vld [vmem:[%s15 + $0x40] sm:$0xff]
    %v2556 = vld [vmem:[%s15 + $0x48] sm:$0xff]
    %v2557 = vld [vmem:[%s15 + $0x50] sm:$0xff]
    %v2558 = vld [vmem:[%s15 + $0x58] sm:$0xff]
    %v2559 = vld [vmem:[%s15 + $0x60] sm:$0xff]
    %v2560 = vld [vmem:[%s15 + $0x68] sm:$0xff]
    %v2561 = vld [vmem:[%s15 + $0x70] sm:$0xff]
    %v2562 = vld [vmem:[%s15 + $0x78] sm:$0xff]
    %v2563 = vld [vmem:[%s16] sm:$0x1]
    %v2565 = vperm.slane %v2563, 0
    %2567 = vmatpush.msra.mxu0 %v2562
    %2568 = vmatpush.msra.mxu0 %v2561
    %2569 = vmatpush.msra.mxu0 %v2560
    %2570 = vmatpush.msra.mxu0 %v2559
    %2571 = vmatpush.msra.mxu0 %v2558
    %2572 = vmatpush.msra.mxu0 %v2557
    %2573 = vmatpush.msra.mxu0 %v2556
    %2574 = vmatpush.msra.mxu0 %v2555
    %2575 = vmatpush.msra.mxu0 %v2554
    %2576 = vmatpush.msra.mxu0 %v2553
    %2577 = vmatpush.msra.mxu0 %v2552
    %2578 = vmatpush.msra.mxu0 %v2551
    %2579 = vmatpush.msra.mxu0 %v2550
    %2580 = vmatpush.msra.mxu0 %v2549
    %2581 = vmatpush.msra.mxu0 %v2548
    %2582 = vmatpush.msra.mxu0 %v2547
    %2583 = vmatmul.f32.gmra.mxu0 %v2544
    %v2584 = vpop.f32.mrf.mxu0
    %v2585 = vadd.f32 %v2565, %v2584
    %2586 = vmatmul.f32.gmra.mxu0 %v2545
    %v2587 = vpop.f32.mrf.mxu0
    %v2588 = vadd.f32 %v2565, %v2587
    %2589 = vmatmul.f32.gmra.mxu0 %v2546
    %v2590 = vpop.f32.mrf.mxu0
    %v2591 = vadd.f32 %v2565, %v2590
    %2592 = vdwg.mxu0
    %v2593 = vadd.f32 %v2394, %v2585
    %v2594 = vadd.f32 %v2395, %v2588
    %v2595 = vadd.f32 %v2396, %v2591
    %2596 = vst.msk [vmem:[#allocation2] sm:$0xff] %vm84, %v2593
    %2597 = vst.msk [vmem:[#allocation2 + $0x8] sm:$0xff] %vm84, %v2594
    %2598 = vst.msk [vmem:[#allocation2 + $0x10] sm:$0x3] %vm87, %v2595
    %s2599 = scalar_lea.vmem %s18, 4
    %v2600 = vld [vmem:[%s2599] sm:$0xf]
    %v2601 = vmul.f32 %v2600, %v2600
    %v2602 = vsel %vm396, %v2601, 0.0
    %2603 = vadd.xlane.f32.xlu0 %v2602
    %v2604 = vpop.xlane.xlu0 %2603
    %v2605 = vrsqrt.pop %v2604
    %v2606 = vmul.f32 %v2605, %v2604
    %v2607 = vmul.f32 %v2606, %v2605
    %v2608 = vmul.f32 0.5, %v2607
    %v2609 = vsub.f32 1.5, %v2608
    %v2610 = vmul.f32 %v2605, %v2609
    %v2611 = vmul.f32 %v2604, %v2610
    %vm2612 = vcmp.eq.f32.partialorder %v2604, inf
    %v2613 = vsel %vm2612, %v2604, %v2611
    %vm2614 = vcmp.eq.f32.partialorder %v2604, 0.0
    %v2615 = vand.u32 %v2604, 2147483648
    %v2616 = vsel %vm2614, %v2615, %v2613
    %v2617 = vadd.f32 %v2616, 1e-06
    %v2618 = vrcp.pop %v2617
    %v2619 = vmul.f32 %v2617, %v2618
    %v2620 = vsub.f32 1.0, %v2619
    %v2621 = vmul.f32 %v2618, %v2620
    %v2622 = vadd.f32 %v2618, %v2621
    %vm2623 = vweird.f32 %v2617
    %vm2624 = vweird.f32 %v2618
    %vm2625 = vmor %vm2623, %vm2624
    %v2626 = vsel %vm2625, %v2618, %v2622
    %v2627 = vand.u32 2147483647, %v2617
    %vm2628 = vcmp.eq.f32.partialorder %v2627, 8.507059e+37
    %v2629 = vand.u32 %v2617, 2147483648
    %v2630 = vor.u32 1.1754944e-38, %v2629
    %v2631 = vsel %vm2628, %v2630, %v2626
    %v2632 = vmul.f32 %v2600, %v2631
    %v2633 = vld [vmem:[#allocation2] sm:$0x1]
    %v2634 = vmul.f32 %v2633, %v2633
    %v2635 = vsel %vm389, %v2634, 0.0
    %2636 = vadd.xlane.f32.xlu0 %v2635
    %v2637 = vpop.xlane.xlu0 %2636
    %v2638 = vrsqrt.pop %v2637
    %v2639 = vmul.f32 %v2638, %v2637
    %v2640 = vmul.f32 %v2639, %v2638
    %v2641 = vmul.f32 0.5, %v2640
    %v2642 = vsub.f32 1.5, %v2641
    %v2643 = vmul.f32 %v2638, %v2642
    %v2644 = vmul.f32 %v2637, %v2643
    %vm2645 = vcmp.eq.f32.partialorder %v2637, inf
    %v2646 = vsel %vm2645, %v2637, %v2644
    %vm2647 = vcmp.eq.f32.partialorder %v2637, 0.0
    %v2648 = vand.u32 %v2637, 2147483648
    %v2649 = vsel %vm2647, %v2648, %v2646
    %v2650 = vadd.f32 %v2649, 1e-06
    %v2651 = vrcp.pop %v2650
    %v2652 = vmul.f32 %v2650, %v2651
    %v2653 = vsub.f32 1.0, %v2652
    %v2654 = vmul.f32 %v2651, %v2653
    %v2655 = vadd.f32 %v2651, %v2654
    %vm2656 = vweird.f32 %v2650
    %vm2657 = vweird.f32 %v2651
    %vm2658 = vmor %vm2656, %vm2657
    %v2659 = vsel %vm2658, %v2651, %v2655
    %v2660 = vand.u32 2147483647, %v2650
    %vm2661 = vcmp.eq.f32.partialorder %v2660, 8.507059e+37
    %v2662 = vand.u32 %v2650, 2147483648
    %v2663 = vor.u32 1.1754944e-38, %v2662
    %v2664 = vsel %vm2661, %v2663, %v2659
    %v2665 = vmul.f32 %v2633, %v2664
    %v2667 = vsel %vm84, %v2665, 0
    %v2670 = vsel %vm84, %v2632, 0
    %2672 = vmatpush.xpose.msra.mxu0 0.0
    %2673 = vmatpush.xpose.msra.mxu0 0.0
    %2674 = vmatpush.xpose.msra.mxu0 0.0
    %2675 = vmatpush.xpose.msra.mxu0 0.0
    %2676 = vmatpush.xpose.msra.mxu0 0.0
    %2677 = vmatpush.xpose.msra.mxu0 0.0
    %2678 = vmatpush.xpose.msra.mxu0 0.0
    %2679 = vmatpush.xpose.msra.mxu0 0.0
    %2680 = vmatpush.xpose.msra.mxu0 0.0
    %2681 = vmatpush.xpose.msra.mxu0 0.0
    %2682 = vmatpush.xpose.msra.mxu0 0.0
    %2683 = vmatpush.xpose.msra.mxu0 0.0
    %2684 = vmatpush.xpose.msra.mxu0 0.0
    %2685 = vmatpush.xpose.msra.mxu0 0.0
    %2686 = vmatpush.xpose.msra.mxu0 0.0
    %2687 = vmatpush.xpose.msra.mxu0 %v2670
    %2688 = vmatmul.f32.gmra.mxu0 %v2667
    %v2689 = vpop.f32.mrf.mxu0
    %v2690 = vadd.f32 0.0, %v2689
    %2691 = vdwg.mxu0
    %v2692 = vsub.f32 0.0, %v2690
    %v2693 = vmul.f32 %v2692, 1.442695
    %v2694 = vpow.pop %v2693
    %v2695 = vadd.f32 %v2694, 1.0
    %v2696 = vrcp.pop %v2695
    %v2697 = vmul.f32 %v2695, %v2696
    %v2698 = vsub.f32 1.0, %v2697
    %v2699 = vmul.f32 %v2696, %v2698
    %v2700 = vadd.f32 %v2696, %v2699
    %vm2701 = vweird.f32 %v2695
    %vm2702 = vweird.f32 %v2696
    %vm2703 = vmor %vm2701, %vm2702
    %v2704 = vsel %vm2703, %v2696, %v2700
    %v2705 = vand.u32 2147483647, %v2695
    %vm2706 = vcmp.eq.f32.partialorder %v2705, 8.507059e+37
    %v2707 = vand.u32 %v2695, 2147483648
    %v2708 = vor.u32 1.1754944e-38, %v2707
    %v2709 = vsel %vm2706, %v2708, %v2704
    %v2710 = vmul.f32 1.0, %v2709
    %2712 = vrot.lane.b32.xlu0 %v2710, 1
    %v2713 = vpop.permute.xlu0 %2712
    %v2715 = vsel %vm837, 1.0, %v2713
    %v2716 = vsel %vm839, %v2715, 1.0
    %v2717 = vsub.f32 1.0, %v2690
    %v2718 = vsel %vm842, %v2717, 0.0
    %2719 = vadd.xlane.f32.xlu0 %v2718
    %v2720 = vpop.xlane.xlu0 %2719
    %v2721 = vadd.f32 %v932, %v2720
    %v2722 = vld [vmem:[#allocation2 + $0x9] sm:$0x1]
    %v2723 = vmul.f32 %v2722, %v2722
    %v2724 = vsel %vm389, %v2723, 0.0
    %2725 = vadd.xlane.f32.xlu0 %v2724
    %v2726 = vpop.xlane.xlu0 %2725
    %v2727 = vrsqrt.pop %v2726
    %v2728 = vmul.f32 %v2727, %v2726
    %v2729 = vmul.f32 %v2728, %v2727
    %v2730 = vmul.f32 0.5, %v2729
    %v2731 = vsub.f32 1.5, %v2730
    %v2732 = vmul.f32 %v2727, %v2731
    %v2733 = vmul.f32 %v2726, %v2732
    %vm2734 = vcmp.eq.f32.partialorder %v2726, inf
    %v2735 = vsel %vm2734, %v2726, %v2733
    %vm2736 = vcmp.eq.f32.partialorder %v2726, 0.0
    %v2737 = vand.u32 %v2726, 2147483648
    %v2738 = vsel %vm2736, %v2737, %v2735
    %v2739 = vadd.f32 %v2738, 1e-06
    %v2740 = vrcp.pop %v2739
    %v2741 = vmul.f32 %v2739, %v2740
    %v2742 = vsub.f32 1.0, %v2741
    %v2743 = vmul.f32 %v2740, %v2742
    %v2744 = vadd.f32 %v2740, %v2743
    %vm2745 = vweird.f32 %v2739
    %vm2746 = vweird.f32 %v2740
    %vm2747 = vmor %vm2745, %vm2746
    %v2748 = vsel %vm2747, %v2740, %v2744
    %v2749 = vand.u32 2147483647, %v2739
    %vm2750 = vcmp.eq.f32.partialorder %v2749, 8.507059e+37
    %v2751 = vand.u32 %v2739, 2147483648
    %v2752 = vor.u32 1.1754944e-38, %v2751
    %v2753 = vsel %vm2750, %v2752, %v2748
    %v2754 = vmul.f32 %v2722, %v2753
    %v2756 = vsel %vm84, %v2754, 0
    %2758 = vmatpush.xpose.msra.mxu0 0.0
    %2759 = vmatpush.xpose.msra.mxu0 0.0
    %2760 = vmatpush.xpose.msra.mxu0 0.0
    %2761 = vmatpush.xpose.msra.mxu0 0.0
    %2762 = vmatpush.xpose.msra.mxu0 0.0
    %2763 = vmatpush.xpose.msra.mxu0 0.0
    %2764 = vmatpush.xpose.msra.mxu0 0.0
    %2765 = vmatpush.xpose.msra.mxu0 0.0
    %2766 = vmatpush.xpose.msra.mxu0 0.0
    %2767 = vmatpush.xpose.msra.mxu0 0.0
    %2768 = vmatpush.xpose.msra.mxu0 0.0
    %2769 = vmatpush.xpose.msra.mxu0 0.0
    %2770 = vmatpush.xpose.msra.mxu0 0.0
    %2771 = vmatpush.xpose.msra.mxu0 0.0
    %2772 = vmatpush.xpose.msra.mxu0 0.0
    %2773 = vmatpush.xpose.msra.mxu0 %v2670
    %2774 = vmatmul.f32.gmra.mxu0 %v2756
    %v2775 = vpop.f32.mrf.mxu0
    %v2776 = vadd.f32 0.0, %v2775
    %2777 = vdwg.mxu0
    %v2778 = vsub.f32 0.0, %v2776
    %v2779 = vmul.f32 %v2778, 1.442695
    %v2780 = vpow.pop %v2779
    %v2781 = vadd.f32 %v2780, 1.0
    %v2782 = vrcp.pop %v2781
    %v2783 = vmul.f32 %v2781, %v2782
    %v2784 = vsub.f32 1.0, %v2783
    %v2785 = vmul.f32 %v2782, %v2784
    %v2786 = vadd.f32 %v2782, %v2785
    %vm2787 = vweird.f32 %v2781
    %vm2788 = vweird.f32 %v2782
    %vm2789 = vmor %vm2787, %vm2788
    %v2790 = vsel %vm2789, %v2782, %v2786
    %v2791 = vand.u32 2147483647, %v2781
    %vm2792 = vcmp.eq.f32.partialorder %v2791, 8.507059e+37
    %v2793 = vand.u32 %v2781, 2147483648
    %v2794 = vor.u32 1.1754944e-38, %v2793
    %v2795 = vsel %vm2792, %v2794, %v2790
    %v2796 = vmul.f32 1.0, %v2795
    %2798 = vrot.lane.b32.xlu0 %v2796, 1
    %v2799 = vpop.permute.xlu0 %2798
    %v2801 = vsel %vm837, 1.0, %v2799
    %v2802 = vsel %vm839, %v2801, 1.0
    %v2803 = vsub.f32 1.0, %v2776
    %v2804 = vsel %vm842, %v2803, 0.0
    %2805 = vadd.xlane.f32.xlu0 %v2804
    %v2806 = vpop.xlane.xlu0 %2805
    %v2807 = vadd.f32 %v2721, %v2806
    %s2808 = scalar_lea.vmem %s17, 4
    %v2809 = vld [vmem:[%s2808] sm:$0xf]
    %2810 = vst.msk [vmem:[#allocation2 + $0x1] sm:$0xf] %vm396, %v2809
    %2811 = vst.msk [vmem:[#allocation2 + $0xa] sm:$0xf] %vm396, %v2809
    %v2812 = vld [vmem:[#allocation2] sm:$0xff]
    %v2813 = vld [vmem:[#allocation2 + $0x8] sm:$0xff]
    %v2814 = vld [vmem:[#allocation2 + $0x10] sm:$0x3]
    %s2815 = scalar_lea.vmem %s5, 1
    %v2816 = vld [vmem:[%s2815] sm:$0x1]
    %s2817 = scalar_lea.vmem %s6, 1
    %v2818 = vld [vmem:[%s2817] sm:$0x1]
    %v2819 = vsel %vm84, %v2812, 0.0
    %2820 = vadd.xlane.f32.xlu0 %v2819
    %v2821 = vpop.xlane.xlu0 %2820
    %v2822 = vsel %vm84, %v2813, 0.0
    %2823 = vadd.xlane.f32.xlu0 %v2822
    %v2824 = vpop.xlane.xlu0 %2823
    %v2825 = vsel %vm87, %v2814, 0.0
    %2826 = vadd.xlane.f32.xlu0 %v2825
    %v2827 = vpop.xlane.xlu0 %2826
    %v2828 = vmul.f32 %v2821, %v956
    %v2829 = vmul.f32 %v2824, %v956
    %v2830 = vmul.f32 %v2827, %v956
    %v2831 = vsub.f32 %v2812, %v2828
    %v2832 = vsub.f32 %v2813, %v2829
    %v2833 = vsub.f32 %v2814, %v2830
    %v2834 = vmul.f32 %v2831, %v2831
    %v2835 = vmul.f32 %v2832, %v2832
    %v2836 = vmul.f32 %v2833, %v2833
    %v2837 = vsel %vm84, %v2834, 0.0
    %2838 = vadd.xlane.f32.xlu0 %v2837
    %v2839 = vpop.xlane.xlu0 %2838
    %v2840 = vsel %vm84, %v2835, 0.0
    %2841 = vadd.xlane.f32.xlu0 %v2840
    %v2842 = vpop.xlane.xlu0 %2841
    %v2843 = vsel %vm87, %v2836, 0.0
    %2844 = vadd.xlane.f32.xlu0 %v2843
    %v2845 = vpop.xlane.xlu0 %2844
    %v2846 = vmul.f32 %v2839, %v956
    %v2847 = vmul.f32 %v2842, %v956
    %v2848 = vmul.f32 %v2845, %v956
    %v2849 = vadd.f32 %v2846, 1e-06
    %v2850 = vadd.f32 %v2847, 1e-06
    %v2851 = vadd.f32 %v2848, 1e-06
    %v2852 = vrsqrt.pop %v2849
    %v2853 = vmul.f32 %v2852, %v2849
    %v2854 = vmul.f32 %v2853, %v2852
    %v2855 = vmul.f32 0.5, %v2854
    %v2856 = vsub.f32 1.5, %v2855
    %v2857 = vmul.f32 %v2852, %v2856
    %vm2858 = vweird.f32 %v2849
    %vm2859 = vweird.f32 %v2852
    %vm2860 = vmor %vm2858, %vm2859
    %v2861 = vsel %vm2860, %v2852, %v2857
    %v2862 = vrsqrt.pop %v2850
    %v2863 = vmul.f32 %v2862, %v2850
    %v2864 = vmul.f32 %v2863, %v2862
    %v2865 = vmul.f32 0.5, %v2864
    %v2866 = vsub.f32 1.5, %v2865
    %v2867 = vmul.f32 %v2862, %v2866
    %vm2868 = vweird.f32 %v2850
    %vm2869 = vweird.f32 %v2862
    %vm2870 = vmor %vm2868, %vm2869
    %v2871 = vsel %vm2870, %v2862, %v2867
    %v2872 = vrsqrt.pop %v2851
    %v2873 = vmul.f32 %v2872, %v2851
    %v2874 = vmul.f32 %v2873, %v2872
    %v2875 = vmul.f32 0.5, %v2874
    %v2876 = vsub.f32 1.5, %v2875
    %v2877 = vmul.f32 %v2872, %v2876
    %vm2878 = vweird.f32 %v2851
    %vm2879 = vweird.f32 %v2872
    %vm2880 = vmor %vm2878, %vm2879
    %v2881 = vsel %vm2880, %v2872, %v2877
    %v2882 = vmul.f32 %v2831, %v2861
    %v2883 = vmul.f32 %v2832, %v2871
    %v2884 = vmul.f32 %v2833, %v2881
    %v2886 = vperm.slane %v2816, 0
    %v2888 = vmul.f32 %v2882, %v2886
    %v2889 = vmul.f32 %v2883, %v2886
    %v2890 = vmul.f32 %v2884, %v2886
    %v2892 = vperm.slane %v2818, 0
    %v2894 = vadd.f32 %v2888, %v2892
    %v2895 = vadd.f32 %v2889, %v2892
    %v2896 = vadd.f32 %v2890, %v2892
    %s2897 = scalar_lea.vmem %s7, 32
    %v2898 = vld [vmem:[%s2897] sm:$0xff]
    %v2899 = vld [vmem:[%s2897 + $0x8] sm:$0xff]
    %v2900 = vld [vmem:[%s2897 + $0x10] sm:$0xff]
    %v2901 = vld [vmem:[%s2897 + $0x18] sm:$0xff]
    %s2902 = scalar_lea.vmem %s8, 1
    %v2903 = vld [vmem:[%s2902] sm:$0x1]
    %v2905 = vperm.slane %v2903, 0
    %v2908 = vsel %vm84, %v2894, 0
    %v2911 = vsel %vm84, %v2895, 0
    %v2914 = vsel %vm84, %v2896, 0
    %2916 = vmatpush.msra.mxu0 0.0
    %2917 = vmatpush.msra.mxu0 0.0
    %2918 = vmatpush.msra.mxu0 0.0
    %2919 = vmatpush.msra.mxu0 0.0
    %2920 = vmatpush.msra.mxu0 0.0
    %2921 = vmatpush.msra.mxu0 0.0
    %2922 = vmatpush.msra.mxu0 0.0
    %2923 = vmatpush.msra.mxu0 0.0
    %2924 = vmatpush.msra.mxu0 0.0
    %2925 = vmatpush.msra.mxu0 0.0
    %2926 = vmatpush.msra.mxu0 0.0
    %2927 = vmatpush.msra.mxu0 0.0
    %2928 = vmatpush.msra.mxu0 %v2901
    %2929 = vmatpush.msra.mxu0 %v2900
    %2930 = vmatpush.msra.mxu0 %v2899
    %2931 = vmatpush.msra.mxu0 %v2898
    %2932 = vmatmul.f32.gmra.mxu0 %v2908
    %v2933 = vpop.f32.mrf.mxu0
    %v2934 = vadd.f32 %v2905, %v2933
    %2935 = vmatmul.f32.gmra.mxu0 %v2911
    %v2936 = vpop.f32.mrf.mxu0
    %v2937 = vadd.f32 %v2905, %v2936
    %2938 = vmatmul.f32.gmra.mxu0 %v2914
    %v2939 = vpop.f32.mrf.mxu0
    %v2940 = vadd.f32 %v2905, %v2939
    %2941 = vdwg.mxu0
    %v2942 = vmul.f32 %v2934, %v1073
    %v2943 = vmul.f32 %v2937, %v1075
    %v2944 = vmul.f32 %v2940, %v1077
    %v2945 = vadd.f32 %v2942, %v1088
    %v2946 = vadd.f32 %v2943, %v1090
    %v2947 = vadd.f32 %v2944, %v1092
    %s2948 = scalar_lea.vmem %s9, 32
    %v2949 = vld [vmem:[%s2948] sm:$0xff]
    %v2950 = vld [vmem:[%s2948 + $0x8] sm:$0xff]
    %v2951 = vld [vmem:[%s2948 + $0x10] sm:$0xff]
    %v2952 = vld [vmem:[%s2948 + $0x18] sm:$0xff]
    %s2953 = scalar_lea.vmem %s10, 1
    %v2954 = vld [vmem:[%s2953] sm:$0x1]
    %2957 = vrot.lane.b32.xlu0 %v2934, 96
    %v2958 = vpop.permute.xlu0 %2957
    %2959 = vrot.lane.b32.xlu0 %v2937, 96
    %v2960 = vpop.permute.xlu0 %2959
    %v2961 = vsel %vm1110, %v2934, 0
    %v2963 = vsel %vm1110, %v2937, 0
    %v2965 = vsel %vm1110, %v2958, 0
    %v2967 = vsel %vm1110, %v2960, 0
    %2969 = vmatpush.xpose.msra.mxu0 0.0
    %2970 = vmatpush.xpose.msra.mxu0 0.0
    %2971 = vmatpush.xpose.msra.mxu0 0.0
    %2972 = vmatpush.xpose.msra.mxu0 0.0
    %2973 = vmatpush.xpose.msra.mxu0 0.0
    %2974 = vmatpush.xpose.msra.mxu0 0.0
    %2975 = vmatpush.xpose.msra.mxu0 0.0
    %2976 = vmatpush.xpose.msra.mxu0 0.0
    %2977 = vmatpush.xpose.msra.mxu0 0.0
    %2978 = vmatpush.xpose.msra.mxu0 0.0
    %2979 = vmatpush.xpose.msra.mxu0 0.0
    %2980 = vmatpush.xpose.msra.mxu0 0.0
    %2981 = vmatpush.xpose.msra.mxu0 0.0
    %2982 = vmatpush.xpose.msra.mxu0 0.0
    %2983 = vmatpush.xpose.msra.mxu0 %v2967
    %2984 = vmatpush.xpose.msra.mxu0 %v2965
    %2985 = vmatmul.f32.gmra.mxu0 %v2961
    %v2986 = vpop.f32.mrf.mxu0
    %v2987 = vadd.f32 0.0, %v2986
    %2988 = vmatmul.f32.gmra.mxu0 %v2963
    %v2989 = vpop.f32.mrf.mxu0
    %v2990 = vadd.f32 0.0, %v2989
    %2991 = vdwg.mxu0
    %v2992 = vmul.f32 %v2987, 0.35355338
    %v2993 = vmul.f32 %v2990, 0.35355338
    %v2994 = vsel %vm1144, %v2992, -inf
    %2995 = vmax.xlane.f32.xlu0 %v2994
    %v2996 = vpop.xlane.xlu0 %2995
    %v2997 = vsel %vm1148, %v2993, -inf
    %2998 = vmax.xlane.f32.xlu0 %v2997
    %v2999 = vpop.xlane.xlu0 %2998
    %v3000 = vsub.f32 %v2992, %v2996
    %v3001 = vsub.f32 %v2993, %v2999
    %v3002 = vmul.f32 %v3000, 1.442695
    %v3003 = vpow.pop %v3002
    %v3004 = vmul.f32 %v3001, 1.442695
    %v3005 = vpow.pop %v3004
    %v3006 = vsel %vm1144, %v3003, 0.0
    %3007 = vadd.xlane.f32.xlu0 %v3006
    %v3008 = vpop.xlane.xlu0 %3007
    %v3009 = vsel %vm1148, %v3005, 0.0
    %3010 = vadd.xlane.f32.xlu0 %v3009
    %v3011 = vpop.xlane.xlu0 %3010
    %v3012 = vrcp.pop %v3008
    %v3013 = vmul.f32 %v3008, %v3012
    %v3014 = vsub.f32 1.0, %v3013
    %v3015 = vmul.f32 %v3012, %v3014
    %v3016 = vadd.f32 %v3012, %v3015
    %vm3017 = vweird.f32 %v3008
    %vm3018 = vweird.f32 %v3012
    %vm3019 = vmor %vm3017, %vm3018
    %v3020 = vsel %vm3019, %v3012, %v3016
    %v3021 = vand.u32 2147483647, %v3008
    %vm3022 = vcmp.eq.f32.partialorder %v3021, 8.507059e+37
    %v3023 = vand.u32 %v3008, 2147483648
    %v3024 = vor.u32 1.1754944e-38, %v3023
    %v3025 = vsel %vm3022, %v3024, %v3020
    %v3026 = vmul.f32 %v3003, %v3025
    %v3027 = vrcp.pop %v3011
    %v3028 = vmul.f32 %v3011, %v3027
    %v3029 = vsub.f32 1.0, %v3028
    %v3030 = vmul.f32 %v3027, %v3029
    %v3031 = vadd.f32 %v3027, %v3030
    %vm3032 = vweird.f32 %v3011
    %vm3033 = vweird.f32 %v3027
    %vm3034 = vmor %vm3032, %vm3033
    %v3035 = vsel %vm3034, %v3027, %v3031
    %v3036 = vand.u32 2147483647, %v3011
    %vm3037 = vcmp.eq.f32.partialorder %v3036, 8.507059e+37
    %v3038 = vand.u32 %v3011, 2147483648
    %v3039 = vor.u32 1.1754944e-38, %v3038
    %v3040 = vsel %vm3037, %v3039, %v3035
    %v3041 = vmul.f32 %v3005, %v3040
    %v3042 = vperm.slane %v2716, 0
    %v3043 = vmul.f32 %v3026, %v3042
    %v3044 = vmul.f32 %v3041, %v3042
    %3047 = vrot.lane.b32.xlu0 %v2945, 64
    %v3048 = vpop.permute.xlu0 %3047
    %3049 = vrot.lane.b32.xlu0 %v2946, 64
    %v3050 = vpop.permute.xlu0 %3049
    %v3053 = vsel %vm1144, %v3043, 0
    %v3056 = vsel %vm1144, %v3044, 0
    %v3058 = vsel %vm1210, %v3050, 0
    %3060 = vmatpush.msra.mxu0 0.0
    %3061 = vmatpush.msra.mxu0 0.0
    %3062 = vmatpush.msra.mxu0 0.0
    %3063 = vmatpush.msra.mxu0 0.0
    %3064 = vmatpush.msra.mxu0 0.0
    %3065 = vmatpush.msra.mxu0 0.0
    %3066 = vmatpush.msra.mxu0 0.0
    %3067 = vmatpush.msra.mxu0 0.0
    %3068 = vmatpush.msra.mxu0 0.0
    %3069 = vmatpush.msra.mxu0 0.0
    %3070 = vmatpush.msra.mxu0 0.0
    %3071 = vmatpush.msra.mxu0 0.0
    %3072 = vmatpush.msra.mxu0 0.0
    %3073 = vmatpush.msra.mxu0 0.0
    %3074 = vmatpush.msra.mxu0 %v3058
    %3075 = vmatpush.msra.mxu0 %v3048
    %3076 = vmatmul.f32.gmra.mxu0 %v3053
    %v3077 = vpop.f32.mrf.mxu0
    %v3078 = vadd.f32 0.0, %v3077
    %3079 = vmatmul.f32.gmra.mxu0 %v3056
    %v3080 = vpop.f32.mrf.mxu0
    %v3081 = vadd.f32 0.0, %v3080
    %3082 = vdwg.mxu0
    %3083 = vrot.lane.b32.xlu0 %v2934, 120
    %v3084 = vpop.permute.xlu0 %3083
    %3085 = vrot.lane.b32.xlu0 %v2937, 120
    %v3086 = vpop.permute.xlu0 %3085
    %3087 = vrot.lane.b32.xlu0 %v2934, 88
    %v3088 = vpop.permute.xlu0 %3087
    %3089 = vrot.lane.b32.xlu0 %v2937, 88
    %v3090 = vpop.permute.xlu0 %3089
    %v3091 = vsel %vm1110, %v3084, 0
    %v3093 = vsel %vm1110, %v3086, 0
    %v3095 = vsel %vm1110, %v3088, 0
    %v3097 = vsel %vm1110, %v3090, 0
    %3099 = vmatpush.xpose.msra.mxu0 0.0
    %3100 = vmatpush.xpose.msra.mxu0 0.0
    %3101 = vmatpush.xpose.msra.mxu0 0.0
    %3102 = vmatpush.xpose.msra.mxu0 0.0
    %3103 = vmatpush.xpose.msra.mxu0 0.0
    %3104 = vmatpush.xpose.msra.mxu0 0.0
    %3105 = vmatpush.xpose.msra.mxu0 0.0
    %3106 = vmatpush.xpose.msra.mxu0 0.0
    %3107 = vmatpush.xpose.msra.mxu0 0.0
    %3108 = vmatpush.xpose.msra.mxu0 0.0
    %3109 = vmatpush.xpose.msra.mxu0 0.0
    %3110 = vmatpush.xpose.msra.mxu0 0.0
    %3111 = vmatpush.xpose.msra.mxu0 0.0
    %3112 = vmatpush.xpose.msra.mxu0 0.0
    %3113 = vmatpush.xpose.msra.mxu0 %v3097
    %3114 = vmatpush.xpose.msra.mxu0 %v3095
    %3115 = vmatmul.f32.gmra.mxu0 %v3091
    %v3116 = vpop.f32.mrf.mxu0
    %v3117 = vadd.f32 0.0, %v3116
    %3118 = vmatmul.f32.gmra.mxu0 %v3093
    %v3119 = vpop.f32.mrf.mxu0
    %v3120 = vadd.f32 0.0, %v3119
    %3121 = vdwg.mxu0
    %v3122 = vmul.f32 %v3117, 0.35355338
    %v3123 = vmul.f32 %v3120, 0.35355338
    %v3124 = vsel %vm1144, %v3122, -inf
    %3125 = vmax.xlane.f32.xlu0 %v3124
    %v3126 = vpop.xlane.xlu0 %3125
    %v3127 = vsel %vm1148, %v3123, -inf
    %3128 = vmax.xlane.f32.xlu0 %v3127
    %v3129 = vpop.xlane.xlu0 %3128
    %v3130 = vsub.f32 %v3122, %v3126
    %v3131 = vsub.f32 %v3123, %v3129
    %v3132 = vmul.f32 %v3130, 1.442695
    %v3133 = vpow.pop %v3132
    %v3134 = vmul.f32 %v3131, 1.442695
    %v3135 = vpow.pop %v3134
    %v3136 = vsel %vm1144, %v3133, 0.0
    %3137 = vadd.xlane.f32.xlu0 %v3136
    %v3138 = vpop.xlane.xlu0 %3137
    %v3139 = vsel %vm1148, %v3135, 0.0
    %3140 = vadd.xlane.f32.xlu0 %v3139
    %v3141 = vpop.xlane.xlu0 %3140
    %v3142 = vrcp.pop %v3138
    %v3143 = vmul.f32 %v3138, %v3142
    %v3144 = vsub.f32 1.0, %v3143
    %v3145 = vmul.f32 %v3142, %v3144
    %v3146 = vadd.f32 %v3142, %v3145
    %vm3147 = vweird.f32 %v3138
    %vm3148 = vweird.f32 %v3142
    %vm3149 = vmor %vm3147, %vm3148
    %v3150 = vsel %vm3149, %v3142, %v3146
    %v3151 = vand.u32 2147483647, %v3138
    %vm3152 = vcmp.eq.f32.partialorder %v3151, 8.507059e+37
    %v3153 = vand.u32 %v3138, 2147483648
    %v3154 = vor.u32 1.1754944e-38, %v3153
    %v3155 = vsel %vm3152, %v3154, %v3150
    %v3156 = vmul.f32 %v3133, %v3155
    %v3157 = vrcp.pop %v3141
    %v3158 = vmul.f32 %v3141, %v3157
    %v3159 = vsub.f32 1.0, %v3158
    %v3160 = vmul.f32 %v3157, %v3159
    %v3161 = vadd.f32 %v3157, %v3160
    %vm3162 = vweird.f32 %v3141
    %vm3163 = vweird.f32 %v3157
    %vm3164 = vmor %vm3162, %vm3163
    %v3165 = vsel %vm3164, %v3157, %v3161
    %v3166 = vand.u32 2147483647, %v3141
    %vm3167 = vcmp.eq.f32.partialorder %v3166, 8.507059e+37
    %v3168 = vand.u32 %v3141, 2147483648
    %v3169 = vor.u32 1.1754944e-38, %v3168
    %v3170 = vsel %vm3167, %v3169, %v3165
    %v3171 = vmul.f32 %v3135, %v3170
    %v3172 = vmul.f32 %v3156, %v3042
    %v3173 = vmul.f32 %v3171, %v3042
    %3174 = vrot.lane.b32.xlu0 %v2945, 56
    %v3175 = vpop.permute.xlu0 %3174
    %3176 = vrot.lane.b32.xlu0 %v2946, 56
    %v3177 = vpop.permute.xlu0 %3176
    %v3180 = vsel %vm1144, %v3172, 0
    %v3183 = vsel %vm1144, %v3173, 0
    %v3185 = vsel %vm1210, %v3177, 0
    %3187 = vmatpush.msra.mxu0 0.0
    %3188 = vmatpush.msra.mxu0 0.0
    %3189 = vmatpush.msra.mxu0 0.0
    %3190 = vmatpush.msra.mxu0 0.0
    %3191 = vmatpush.msra.mxu0 0.0
    %3192 = vmatpush.msra.mxu0 0.0
    %3193 = vmatpush.msra.mxu0 0.0
    %3194 = vmatpush.msra.mxu0 0.0
    %3195 = vmatpush.msra.mxu0 0.0
    %3196 = vmatpush.msra.mxu0 0.0
    %3197 = vmatpush.msra.mxu0 0.0
    %3198 = vmatpush.msra.mxu0 0.0
    %3199 = vmatpush.msra.mxu0 0.0
    %3200 = vmatpush.msra.mxu0 0.0
    %3201 = vmatpush.msra.mxu0 %v3185
    %3202 = vmatpush.msra.mxu0 %v3175
    %3203 = vmatmul.f32.gmra.mxu0 %v3180
    %v3204 = vpop.f32.mrf.mxu0
    %v3205 = vadd.f32 0.0, %v3204
    %3206 = vmatmul.f32.gmra.mxu0 %v3183
    %v3207 = vpop.f32.mrf.mxu0
    %v3208 = vadd.f32 0.0, %v3207
    %3209 = vdwg.mxu0
    %v3211 = vsel %vm1110, %v3205, 0
    %v3214 = vsel %vm1110, %v3208, 0
    %3216 = vmatpush.msra.mxu0 0.0
    %3217 = vmatpush.msra.mxu0 0.0
    %3218 = vmatpush.msra.mxu0 0.0
    %3219 = vmatpush.msra.mxu0 0.0
    %3220 = vmatpush.msra.mxu0 0.0
    %3221 = vmatpush.msra.mxu0 0.0
    %3222 = vmatpush.msra.mxu0 0.0
    %3223 = vmatpush.msra.mxu0 0.0
    %3224 = vmatpush.msra.mxu0 0.0
    %3225 = vmatpush.msra.mxu0 0.0
    %3226 = vmatpush.msra.mxu0 0.0
    %3227 = vmatpush.msra.mxu0 0.0
    %3228 = vmatpush.msra.mxu0 0.0
    %3229 = vmatpush.msra.mxu0 0.0
    %3230 = vmatpush.msra.mxu0 0.0
    %3231 = vmatpush.msra.mxu0 %v2950
    %3232 = vmatmul.f32.gmra.mxu0 %v3211
    %v3233 = vpop.f32.mrf.mxu0
    %v3234 = vadd.f32 0.0, %v3233
    %3235 = vmatmul.f32.gmra.mxu0 %v3214
    %v3236 = vpop.f32.mrf.mxu0
    %v3237 = vadd.f32 0.0, %v3236
    %3238 = vdwg.mxu0
    %v3240 = vsel %vm1110, %v3078, 0
    %v3243 = vsel %vm1110, %v3081, 0
    %3245 = vmatpush.msra.mxu0 0.0
    %3246 = vmatpush.msra.mxu0 0.0
    %3247 = vmatpush.msra.mxu0 0.0
    %3248 = vmatpush.msra.mxu0 0.0
    %3249 = vmatpush.msra.mxu0 0.0
    %3250 = vmatpush.msra.mxu0 0.0
    %3251 = vmatpush.msra.mxu0 0.0
    %3252 = vmatpush.msra.mxu0 0.0
    %3253 = vmatpush.msra.mxu0 0.0
    %3254 = vmatpush.msra.mxu0 0.0
    %3255 = vmatpush.msra.mxu0 0.0
    %3256 = vmatpush.msra.mxu0 0.0
    %3257 = vmatpush.msra.mxu0 0.0
    %3258 = vmatpush.msra.mxu0 0.0
    %3259 = vmatpush.msra.mxu0 0.0
    %3260 = vmatpush.msra.mxu0 %v2949
    %3261 = vmatmul.f32.gmra.mxu0 %v3240
    %v3262 = vpop.f32.mrf.mxu0
    %v3263 = vadd.f32 %v3234, %v3262
    %3264 = vmatmul.f32.gmra.mxu0 %v3243
    %v3265 = vpop.f32.mrf.mxu0
    %v3266 = vadd.f32 %v3237, %v3265
    %3267 = vdwg.mxu0
    %3268 = vrot.lane.b32.xlu0 %v2934, 112
    %v3269 = vpop.permute.xlu0 %3268
    %3270 = vrot.lane.b32.xlu0 %v2937, 112
    %v3271 = vpop.permute.xlu0 %3270
    %3272 = vrot.lane.b32.xlu0 %v2934, 80
    %v3273 = vpop.permute.xlu0 %3272
    %3274 = vrot.lane.b32.xlu0 %v2937, 80
    %v3275 = vpop.permute.xlu0 %3274
    %v3276 = vsel %vm1110, %v3269, 0
    %v3278 = vsel %vm1110, %v3271, 0
    %v3280 = vsel %vm1110, %v3273, 0
    %v3282 = vsel %vm1110, %v3275, 0
    %3284 = vmatpush.xpose.msra.mxu0 0.0
    %3285 = vmatpush.xpose.msra.mxu0 0.0
    %3286 = vmatpush.xpose.msra.mxu0 0.0
    %3287 = vmatpush.xpose.msra.mxu0 0.0
    %3288 = vmatpush.xpose.msra.mxu0 0.0
    %3289 = vmatpush.xpose.msra.mxu0 0.0
    %3290 = vmatpush.xpose.msra.mxu0 0.0
    %3291 = vmatpush.xpose.msra.mxu0 0.0
    %3292 = vmatpush.xpose.msra.mxu0 0.0
    %3293 = vmatpush.xpose.msra.mxu0 0.0
    %3294 = vmatpush.xpose.msra.mxu0 0.0
    %3295 = vmatpush.xpose.msra.mxu0 0.0
    %3296 = vmatpush.xpose.msra.mxu0 0.0
    %3297 = vmatpush.xpose.msra.mxu0 0.0
    %3298 = vmatpush.xpose.msra.mxu0 %v3282
    %3299 = vmatpush.xpose.msra.mxu0 %v3280
    %3300 = vmatmul.f32.gmra.mxu0 %v3276
    %v3301 = vpop.f32.mrf.mxu0
    %v3302 = vadd.f32 0.0, %v3301
    %3303 = vmatmul.f32.gmra.mxu0 %v3278
    %v3304 = vpop.f32.mrf.mxu0
    %v3305 = vadd.f32 0.0, %v3304
    %3306 = vdwg.mxu0
    %v3307 = vmul.f32 %v3302, 0.35355338
    %v3308 = vmul.f32 %v3305, 0.35355338
    %v3309 = vsel %vm1144, %v3307, -inf
    %3310 = vmax.xlane.f32.xlu0 %v3309
    %v3311 = vpop.xlane.xlu0 %3310
    %v3312 = vsel %vm1148, %v3308, -inf
    %3313 = vmax.xlane.f32.xlu0 %v3312
    %v3314 = vpop.xlane.xlu0 %3313
    %v3315 = vsub.f32 %v3307, %v3311
    %v3316 = vsub.f32 %v3308, %v3314
    %v3317 = vmul.f32 %v3315, 1.442695
    %v3318 = vpow.pop %v3317
    %v3319 = vmul.f32 %v3316, 1.442695
    %v3320 = vpow.pop %v3319
    %v3321 = vsel %vm1144, %v3318, 0.0
    %3322 = vadd.xlane.f32.xlu0 %v3321
    %v3323 = vpop.xlane.xlu0 %3322
    %v3324 = vsel %vm1148, %v3320, 0.0
    %3325 = vadd.xlane.f32.xlu0 %v3324
    %v3326 = vpop.xlane.xlu0 %3325
    %v3327 = vrcp.pop %v3323
    %v3328 = vmul.f32 %v3323, %v3327
    %v3329 = vsub.f32 1.0, %v3328
    %v3330 = vmul.f32 %v3327, %v3329
    %v3331 = vadd.f32 %v3327, %v3330
    %vm3332 = vweird.f32 %v3323
    %vm3333 = vweird.f32 %v3327
    %vm3334 = vmor %vm3332, %vm3333
    %v3335 = vsel %vm3334, %v3327, %v3331
    %v3336 = vand.u32 2147483647, %v3323
    %vm3337 = vcmp.eq.f32.partialorder %v3336, 8.507059e+37
    %v3338 = vand.u32 %v3323, 2147483648
    %v3339 = vor.u32 1.1754944e-38, %v3338
    %v3340 = vsel %vm3337, %v3339, %v3335
    %v3341 = vmul.f32 %v3318, %v3340
    %v3342 = vrcp.pop %v3326
    %v3343 = vmul.f32 %v3326, %v3342
    %v3344 = vsub.f32 1.0, %v3343
    %v3345 = vmul.f32 %v3342, %v3344
    %v3346 = vadd.f32 %v3342, %v3345
    %vm3347 = vweird.f32 %v3326
    %vm3348 = vweird.f32 %v3342
    %vm3349 = vmor %vm3347, %vm3348
    %v3350 = vsel %vm3349, %v3342, %v3346
    %v3351 = vand.u32 2147483647, %v3326
    %vm3352 = vcmp.eq.f32.partialorder %v3351, 8.507059e+37
    %v3353 = vand.u32 %v3326, 2147483648
    %v3354 = vor.u32 1.1754944e-38, %v3353
    %v3355 = vsel %vm3352, %v3354, %v3350
    %v3356 = vmul.f32 %v3320, %v3355
    %v3357 = vmul.f32 %v3341, %v3042
    %v3358 = vmul.f32 %v3356, %v3042
    %3359 = vrot.lane.b32.xlu0 %v2945, 48
    %v3360 = vpop.permute.xlu0 %3359
    %3361 = vrot.lane.b32.xlu0 %v2946, 48
    %v3362 = vpop.permute.xlu0 %3361
    %v3365 = vsel %vm1144, %v3357, 0
    %v3368 = vsel %vm1144, %v3358, 0
    %v3370 = vsel %vm1210, %v3362, 0
    %3372 = vmatpush.msra.mxu0 0.0
    %3373 = vmatpush.msra.mxu0 0.0
    %3374 = vmatpush.msra.mxu0 0.0
    %3375 = vmatpush.msra.mxu0 0.0
    %3376 = vmatpush.msra.mxu0 0.0
    %3377 = vmatpush.msra.mxu0 0.0
    %3378 = vmatpush.msra.mxu0 0.0
    %3379 = vmatpush.msra.mxu0 0.0
    %3380 = vmatpush.msra.mxu0 0.0
    %3381 = vmatpush.msra.mxu0 0.0
    %3382 = vmatpush.msra.mxu0 0.0
    %3383 = vmatpush.msra.mxu0 0.0
    %3384 = vmatpush.msra.mxu0 0.0
    %3385 = vmatpush.msra.mxu0 0.0
    %3386 = vmatpush.msra.mxu0 %v3370
    %3387 = vmatpush.msra.mxu0 %v3360
    %3388 = vmatmul.f32.gmra.mxu0 %v3365
    %v3389 = vpop.f32.mrf.mxu0
    %v3390 = vadd.f32 0.0, %v3389
    %3391 = vmatmul.f32.gmra.mxu0 %v3368
    %v3392 = vpop.f32.mrf.mxu0
    %v3393 = vadd.f32 0.0, %v3392
    %3394 = vdwg.mxu0
    %v3396 = vsel %vm1110, %v3390, 0
    %v3399 = vsel %vm1110, %v3393, 0
    %3401 = vmatpush.msra.mxu0 0.0
    %3402 = vmatpush.msra.mxu0 0.0
    %3403 = vmatpush.msra.mxu0 0.0
    %3404 = vmatpush.msra.mxu0 0.0
    %3405 = vmatpush.msra.mxu0 0.0
    %3406 = vmatpush.msra.mxu0 0.0
    %3407 = vmatpush.msra.mxu0 0.0
    %3408 = vmatpush.msra.mxu0 0.0
    %3409 = vmatpush.msra.mxu0 0.0
    %3410 = vmatpush.msra.mxu0 0.0
    %3411 = vmatpush.msra.mxu0 0.0
    %3412 = vmatpush.msra.mxu0 0.0
    %3413 = vmatpush.msra.mxu0 0.0
    %3414 = vmatpush.msra.mxu0 0.0
    %3415 = vmatpush.msra.mxu0 0.0
    %3416 = vmatpush.msra.mxu0 %v2951
    %3417 = vmatmul.f32.gmra.mxu0 %v3396
    %v3418 = vpop.f32.mrf.mxu0
    %v3419 = vadd.f32 0.0, %v3418
    %3420 = vmatmul.f32.gmra.mxu0 %v3399
    %v3421 = vpop.f32.mrf.mxu0
    %v3422 = vadd.f32 0.0, %v3421
    %3423 = vdwg.mxu0
    %v3424 = vadd.f32 %v3263, %v3419
    %v3425 = vadd.f32 %v3266, %v3422
    %3426 = vrot.lane.b32.xlu0 %v2934, 104
    %v3427 = vpop.permute.xlu0 %3426
    %3428 = vrot.lane.b32.xlu0 %v2937, 104
    %v3429 = vpop.permute.xlu0 %3428
    %3430 = vrot.lane.b32.xlu0 %v2934, 72
    %v3431 = vpop.permute.xlu0 %3430
    %3432 = vrot.lane.b32.xlu0 %v2937, 72
    %v3433 = vpop.permute.xlu0 %3432
    %v3434 = vsel %vm1110, %v3427, 0
    %v3436 = vsel %vm1110, %v3429, 0
    %v3438 = vsel %vm1110, %v3431, 0
    %v3440 = vsel %vm1110, %v3433, 0
    %3442 = vmatpush.xpose.msra.mxu0 0.0
    %3443 = vmatpush.xpose.msra.mxu0 0.0
    %3444 = vmatpush.xpose.msra.mxu0 0.0
    %3445 = vmatpush.xpose.msra.mxu0 0.0
    %3446 = vmatpush.xpose.msra.mxu0 0.0
    %3447 = vmatpush.xpose.msra.mxu0 0.0
    %3448 = vmatpush.xpose.msra.mxu0 0.0
    %3449 = vmatpush.xpose.msra.mxu0 0.0
    %3450 = vmatpush.xpose.msra.mxu0 0.0
    %3451 = vmatpush.xpose.msra.mxu0 0.0
    %3452 = vmatpush.xpose.msra.mxu0 0.0
    %3453 = vmatpush.xpose.msra.mxu0 0.0
    %3454 = vmatpush.xpose.msra.mxu0 0.0
    %3455 = vmatpush.xpose.msra.mxu0 0.0
    %3456 = vmatpush.xpose.msra.mxu0 %v3440
    %3457 = vmatpush.xpose.msra.mxu0 %v3438
    %3458 = vmatmul.f32.gmra.mxu0 %v3434
    %v3459 = vpop.f32.mrf.mxu0
    %v3460 = vadd.f32 0.0, %v3459
    %3461 = vmatmul.f32.gmra.mxu0 %v3436
    %v3462 = vpop.f32.mrf.mxu0
    %v3463 = vadd.f32 0.0, %v3462
    %3464 = vdwg.mxu0
    %v3465 = vmul.f32 %v3460, 0.35355338
    %v3466 = vmul.f32 %v3463, 0.35355338
    %v3467 = vsel %vm1144, %v3465, -inf
    %3468 = vmax.xlane.f32.xlu0 %v3467
    %v3469 = vpop.xlane.xlu0 %3468
    %v3470 = vsel %vm1148, %v3466, -inf
    %3471 = vmax.xlane.f32.xlu0 %v3470
    %v3472 = vpop.xlane.xlu0 %3471
    %v3473 = vsub.f32 %v3465, %v3469
    %v3474 = vsub.f32 %v3466, %v3472
    %v3475 = vmul.f32 %v3473, 1.442695
    %v3476 = vpow.pop %v3475
    %v3477 = vmul.f32 %v3474, 1.442695
    %v3478 = vpow.pop %v3477
    %v3479 = vsel %vm1144, %v3476, 0.0
    %3480 = vadd.xlane.f32.xlu0 %v3479
    %v3481 = vpop.xlane.xlu0 %3480
    %v3482 = vsel %vm1148, %v3478, 0.0
    %3483 = vadd.xlane.f32.xlu0 %v3482
    %v3484 = vpop.xlane.xlu0 %3483
    %v3485 = vrcp.pop %v3481
    %v3486 = vmul.f32 %v3481, %v3485
    %v3487 = vsub.f32 1.0, %v3486
    %v3488 = vmul.f32 %v3485, %v3487
    %v3489 = vadd.f32 %v3485, %v3488
    %vm3490 = vweird.f32 %v3481
    %vm3491 = vweird.f32 %v3485
    %vm3492 = vmor %vm3490, %vm3491
    %v3493 = vsel %vm3492, %v3485, %v3489
    %v3494 = vand.u32 2147483647, %v3481
    %vm3495 = vcmp.eq.f32.partialorder %v3494, 8.507059e+37
    %v3496 = vand.u32 %v3481, 2147483648
    %v3497 = vor.u32 1.1754944e-38, %v3496
    %v3498 = vsel %vm3495, %v3497, %v3493
    %v3499 = vmul.f32 %v3476, %v3498
    %v3500 = vrcp.pop %v3484
    %v3501 = vmul.f32 %v3484, %v3500
    %v3502 = vsub.f32 1.0, %v3501
    %v3503 = vmul.f32 %v3500, %v3502
    %v3504 = vadd.f32 %v3500, %v3503
    %vm3505 = vweird.f32 %v3484
    %vm3506 = vweird.f32 %v3500
    %vm3507 = vmor %vm3505, %vm3506
    %v3508 = vsel %vm3507, %v3500, %v3504
    %v3509 = vand.u32 2147483647, %v3484
    %vm3510 = vcmp.eq.f32.partialorder %v3509, 8.507059e+37
    %v3511 = vand.u32 %v3484, 2147483648
    %v3512 = vor.u32 1.1754944e-38, %v3511
    %v3513 = vsel %vm3510, %v3512, %v3508
    %v3514 = vmul.f32 %v3478, %v3513
    %v3515 = vmul.f32 %v3499, %v3042
    %v3516 = vmul.f32 %v3514, %v3042
    %3517 = vrot.lane.b32.xlu0 %v2945, 40
    %v3518 = vpop.permute.xlu0 %3517
    %3519 = vrot.lane.b32.xlu0 %v2946, 40
    %v3520 = vpop.permute.xlu0 %3519
    %v3523 = vsel %vm1144, %v3515, 0
    %v3526 = vsel %vm1144, %v3516, 0
    %v3528 = vsel %vm1210, %v3520, 0
    %3530 = vmatpush.msra.mxu0 0.0
    %3531 = vmatpush.msra.mxu0 0.0
    %3532 = vmatpush.msra.mxu0 0.0
    %3533 = vmatpush.msra.mxu0 0.0
    %3534 = vmatpush.msra.mxu0 0.0
    %3535 = vmatpush.msra.mxu0 0.0
    %3536 = vmatpush.msra.mxu0 0.0
    %3537 = vmatpush.msra.mxu0 0.0
    %3538 = vmatpush.msra.mxu0 0.0
    %3539 = vmatpush.msra.mxu0 0.0
    %3540 = vmatpush.msra.mxu0 0.0
    %3541 = vmatpush.msra.mxu0 0.0
    %3542 = vmatpush.msra.mxu0 0.0
    %3543 = vmatpush.msra.mxu0 0.0
    %3544 = vmatpush.msra.mxu0 %v3528
    %3545 = vmatpush.msra.mxu0 %v3518
    %3546 = vmatmul.f32.gmra.mxu0 %v3523
    %v3547 = vpop.f32.mrf.mxu0
    %v3548 = vadd.f32 0.0, %v3547
    %3549 = vmatmul.f32.gmra.mxu0 %v3526
    %v3550 = vpop.f32.mrf.mxu0
    %v3551 = vadd.f32 0.0, %v3550
    %3552 = vdwg.mxu0
    %v3554 = vsel %vm1110, %v3548, 0
    %v3557 = vsel %vm1110, %v3551, 0
    %3559 = vmatpush.msra.mxu0 0.0
    %3560 = vmatpush.msra.mxu0 0.0
    %3561 = vmatpush.msra.mxu0 0.0
    %3562 = vmatpush.msra.mxu0 0.0
    %3563 = vmatpush.msra.mxu0 0.0
    %3564 = vmatpush.msra.mxu0 0.0
    %3565 = vmatpush.msra.mxu0 0.0
    %3566 = vmatpush.msra.mxu0 0.0
    %3567 = vmatpush.msra.mxu0 0.0
    %3568 = vmatpush.msra.mxu0 0.0
    %3569 = vmatpush.msra.mxu0 0.0
    %3570 = vmatpush.msra.mxu0 0.0
    %3571 = vmatpush.msra.mxu0 0.0
    %3572 = vmatpush.msra.mxu0 0.0
    %3573 = vmatpush.msra.mxu0 0.0
    %3574 = vmatpush.msra.mxu0 %v2952
    %3575 = vmatmul.f32.gmra.mxu0 %v3554
    %v3576 = vpop.f32.mrf.mxu0
    %v3577 = vadd.f32 0.0, %v3576
    %3578 = vmatmul.f32.gmra.mxu0 %v3557
    %v3579 = vpop.f32.mrf.mxu0
    %v3580 = vadd.f32 0.0, %v3579
    %3581 = vdwg.mxu0
    %v3582 = vadd.f32 %v3424, %v3577
    %v3583 = vadd.f32 %v3425, %v3580
    %v3585 = vperm.slane %v2954, 0
    %v3587 = vadd.f32 %v3582, %v3585
    %v3588 = vadd.f32 %v3583, %v3585
    %v3589 = vadd.f32 %v2812, %v3587
    %v3590 = vadd.f32 %v2813, %v3588
    %3591 = vst.msk [vmem:[#allocation2] sm:$0xff] %vm84, %v3589
    %3592 = vst.msk [vmem:[#allocation2 + $0x8] sm:$0x1] %vm389, %v3590
    %v3594 = vrot.slane %v2937, 1
    %v3595 = vrot.slane %v2940, 1
    %v3596 = vsel %vm1747, %v3594, %v3595
    %3597 = vrot.lane.b32.xlu0 %v3596, 96
    %v3598 = vpop.permute.xlu0 %3597
    %3599 = vrot.lane.b32.xlu0 %v3595, 96
    %v3600 = vpop.permute.xlu0 %3599
    %v3601 = vsel %vm1110, %v3596, 0
    %v3603 = vsel %vm1110, %v3595, 0
    %v3605 = vsel %vm1110, %v3598, 0
    %v3607 = vsel %vm1110, %v3600, 0
    %3609 = vmatpush.xpose.msra.mxu0 0.0
    %3610 = vmatpush.xpose.msra.mxu0 0.0
    %3611 = vmatpush.xpose.msra.mxu0 0.0
    %3612 = vmatpush.xpose.msra.mxu0 0.0
    %3613 = vmatpush.xpose.msra.mxu0 0.0
    %3614 = vmatpush.xpose.msra.mxu0 0.0
    %3615 = vmatpush.xpose.msra.mxu0 0.0
    %3616 = vmatpush.xpose.msra.mxu0 0.0
    %3617 = vmatpush.xpose.msra.mxu0 0.0
    %3618 = vmatpush.xpose.msra.mxu0 0.0
    %3619 = vmatpush.xpose.msra.mxu0 0.0
    %3620 = vmatpush.xpose.msra.mxu0 0.0
    %3621 = vmatpush.xpose.msra.mxu0 0.0
    %3622 = vmatpush.xpose.msra.mxu0 0.0
    %3623 = vmatpush.xpose.msra.mxu0 %v3607
    %3624 = vmatpush.xpose.msra.mxu0 %v3605
    %3625 = vmatmul.f32.gmra.mxu0 %v3601
    %v3626 = vpop.f32.mrf.mxu0
    %v3627 = vadd.f32 0.0, %v3626
    %3628 = vmatmul.f32.gmra.mxu0 %v3603
    %v3629 = vpop.f32.mrf.mxu0
    %v3630 = vadd.f32 0.0, %v3629
    %3631 = vdwg.mxu0
    %v3632 = vmul.f32 %v3627, 0.35355338
    %v3633 = vmul.f32 %v3630, 0.35355338
    %v3634 = vsel %vm1144, %v3632, -inf
    %3635 = vmax.xlane.f32.xlu0 %v3634
    %v3636 = vpop.xlane.xlu0 %3635
    %v3637 = vsel %vm1148, %v3633, -inf
    %3638 = vmax.xlane.f32.xlu0 %v3637
    %v3639 = vpop.xlane.xlu0 %3638
    %v3640 = vsub.f32 %v3632, %v3636
    %v3641 = vsub.f32 %v3633, %v3639
    %v3642 = vmul.f32 %v3640, 1.442695
    %v3643 = vpow.pop %v3642
    %v3644 = vmul.f32 %v3641, 1.442695
    %v3645 = vpow.pop %v3644
    %v3646 = vsel %vm1144, %v3643, 0.0
    %3647 = vadd.xlane.f32.xlu0 %v3646
    %v3648 = vpop.xlane.xlu0 %3647
    %v3649 = vsel %vm1148, %v3645, 0.0
    %3650 = vadd.xlane.f32.xlu0 %v3649
    %v3651 = vpop.xlane.xlu0 %3650
    %v3652 = vrcp.pop %v3648
    %v3653 = vmul.f32 %v3648, %v3652
    %v3654 = vsub.f32 1.0, %v3653
    %v3655 = vmul.f32 %v3652, %v3654
    %v3656 = vadd.f32 %v3652, %v3655
    %vm3657 = vweird.f32 %v3648
    %vm3658 = vweird.f32 %v3652
    %vm3659 = vmor %vm3657, %vm3658
    %v3660 = vsel %vm3659, %v3652, %v3656
    %v3661 = vand.u32 2147483647, %v3648
    %vm3662 = vcmp.eq.f32.partialorder %v3661, 8.507059e+37
    %v3663 = vand.u32 %v3648, 2147483648
    %v3664 = vor.u32 1.1754944e-38, %v3663
    %v3665 = vsel %vm3662, %v3664, %v3660
    %v3666 = vmul.f32 %v3643, %v3665
    %v3667 = vrcp.pop %v3651
    %v3668 = vmul.f32 %v3651, %v3667
    %v3669 = vsub.f32 1.0, %v3668
    %v3670 = vmul.f32 %v3667, %v3669
    %v3671 = vadd.f32 %v3667, %v3670
    %vm3672 = vweird.f32 %v3651
    %vm3673 = vweird.f32 %v3667
    %vm3674 = vmor %vm3672, %vm3673
    %v3675 = vsel %vm3674, %v3667, %v3671
    %v3676 = vand.u32 2147483647, %v3651
    %vm3677 = vcmp.eq.f32.partialorder %v3676, 8.507059e+37
    %v3678 = vand.u32 %v3651, 2147483648
    %v3679 = vor.u32 1.1754944e-38, %v3678
    %v3680 = vsel %vm3677, %v3679, %v3675
    %v3681 = vmul.f32 %v3645, %v3680
    %v3682 = vperm.slane %v2802, 0
    %v3683 = vmul.f32 %v3666, %v3682
    %v3684 = vmul.f32 %v3681, %v3682
    %v3686 = vrot.slane %v2946, 1
    %v3687 = vrot.slane %v2947, 1
    %v3688 = vsel %vm1747, %v3686, %v3687
    %3689 = vrot.lane.b32.xlu0 %v3688, 64
    %v3690 = vpop.permute.xlu0 %3689
    %3691 = vrot.lane.b32.xlu0 %v3687, 64
    %v3692 = vpop.permute.xlu0 %3691
    %v3695 = vsel %vm1144, %v3683, 0
    %v3698 = vsel %vm1144, %v3684, 0
    %v3700 = vsel %vm1210, %v3692, 0
    %3702 = vmatpush.msra.mxu0 0.0
    %3703 = vmatpush.msra.mxu0 0.0
    %3704 = vmatpush.msra.mxu0 0.0
    %3705 = vmatpush.msra.mxu0 0.0
    %3706 = vmatpush.msra.mxu0 0.0
    %3707 = vmatpush.msra.mxu0 0.0
    %3708 = vmatpush.msra.mxu0 0.0
    %3709 = vmatpush.msra.mxu0 0.0
    %3710 = vmatpush.msra.mxu0 0.0
    %3711 = vmatpush.msra.mxu0 0.0
    %3712 = vmatpush.msra.mxu0 0.0
    %3713 = vmatpush.msra.mxu0 0.0
    %3714 = vmatpush.msra.mxu0 0.0
    %3715 = vmatpush.msra.mxu0 0.0
    %3716 = vmatpush.msra.mxu0 %v3700
    %3717 = vmatpush.msra.mxu0 %v3690
    %3718 = vmatmul.f32.gmra.mxu0 %v3695
    %v3719 = vpop.f32.mrf.mxu0
    %v3720 = vadd.f32 0.0, %v3719
    %3721 = vmatmul.f32.gmra.mxu0 %v3698
    %v3722 = vpop.f32.mrf.mxu0
    %v3723 = vadd.f32 0.0, %v3722
    %3724 = vdwg.mxu0
    %3725 = vrot.lane.b32.xlu0 %v3596, 120
    %v3726 = vpop.permute.xlu0 %3725
    %3727 = vrot.lane.b32.xlu0 %v3595, 120
    %v3728 = vpop.permute.xlu0 %3727
    %3729 = vrot.lane.b32.xlu0 %v3596, 88
    %v3730 = vpop.permute.xlu0 %3729
    %3731 = vrot.lane.b32.xlu0 %v3595, 88
    %v3732 = vpop.permute.xlu0 %3731
    %v3733 = vsel %vm1110, %v3726, 0
    %v3735 = vsel %vm1110, %v3728, 0
    %v3737 = vsel %vm1110, %v3730, 0
    %v3739 = vsel %vm1110, %v3732, 0
    %3741 = vmatpush.xpose.msra.mxu0 0.0
    %3742 = vmatpush.xpose.msra.mxu0 0.0
    %3743 = vmatpush.xpose.msra.mxu0 0.0
    %3744 = vmatpush.xpose.msra.mxu0 0.0
    %3745 = vmatpush.xpose.msra.mxu0 0.0
    %3746 = vmatpush.xpose.msra.mxu0 0.0
    %3747 = vmatpush.xpose.msra.mxu0 0.0
    %3748 = vmatpush.xpose.msra.mxu0 0.0
    %3749 = vmatpush.xpose.msra.mxu0 0.0
    %3750 = vmatpush.xpose.msra.mxu0 0.0
    %3751 = vmatpush.xpose.msra.mxu0 0.0
    %3752 = vmatpush.xpose.msra.mxu0 0.0
    %3753 = vmatpush.xpose.msra.mxu0 0.0
    %3754 = vmatpush.xpose.msra.mxu0 0.0
    %3755 = vmatpush.xpose.msra.mxu0 %v3739
    %3756 = vmatpush.xpose.msra.mxu0 %v3737
    %3757 = vmatmul.f32.gmra.mxu0 %v3733
    %v3758 = vpop.f32.mrf.mxu0
    %v3759 = vadd.f32 0.0, %v3758
    %3760 = vmatmul.f32.gmra.mxu0 %v3735
    %v3761 = vpop.f32.mrf.mxu0
    %v3762 = vadd.f32 0.0, %v3761
    %3763 = vdwg.mxu0
    %v3764 = vmul.f32 %v3759, 0.35355338
    %v3765 = vmul.f32 %v3762, 0.35355338
    %v3766 = vsel %vm1144, %v3764, -inf
    %3767 = vmax.xlane.f32.xlu0 %v3766
    %v3768 = vpop.xlane.xlu0 %3767
    %v3769 = vsel %vm1148, %v3765, -inf
    %3770 = vmax.xlane.f32.xlu0 %v3769
    %v3771 = vpop.xlane.xlu0 %3770
    %v3772 = vsub.f32 %v3764, %v3768
    %v3773 = vsub.f32 %v3765, %v3771
    %v3774 = vmul.f32 %v3772, 1.442695
    %v3775 = vpow.pop %v3774
    %v3776 = vmul.f32 %v3773, 1.442695
    %v3777 = vpow.pop %v3776
    %v3778 = vsel %vm1144, %v3775, 0.0
    %3779 = vadd.xlane.f32.xlu0 %v3778
    %v3780 = vpop.xlane.xlu0 %3779
    %v3781 = vsel %vm1148, %v3777, 0.0
    %3782 = vadd.xlane.f32.xlu0 %v3781
    %v3783 = vpop.xlane.xlu0 %3782
    %v3784 = vrcp.pop %v3780
    %v3785 = vmul.f32 %v3780, %v3784
    %v3786 = vsub.f32 1.0, %v3785
    %v3787 = vmul.f32 %v3784, %v3786
    %v3788 = vadd.f32 %v3784, %v3787
    %vm3789 = vweird.f32 %v3780
    %vm3790 = vweird.f32 %v3784
    %vm3791 = vmor %vm3789, %vm3790
    %v3792 = vsel %vm3791, %v3784, %v3788
    %v3793 = vand.u32 2147483647, %v3780
    %vm3794 = vcmp.eq.f32.partialorder %v3793, 8.507059e+37
    %v3795 = vand.u32 %v3780, 2147483648
    %v3796 = vor.u32 1.1754944e-38, %v3795
    %v3797 = vsel %vm3794, %v3796, %v3792
    %v3798 = vmul.f32 %v3775, %v3797
    %v3799 = vrcp.pop %v3783
    %v3800 = vmul.f32 %v3783, %v3799
    %v3801 = vsub.f32 1.0, %v3800
    %v3802 = vmul.f32 %v3799, %v3801
    %v3803 = vadd.f32 %v3799, %v3802
    %vm3804 = vweird.f32 %v3783
    %vm3805 = vweird.f32 %v3799
    %vm3806 = vmor %vm3804, %vm3805
    %v3807 = vsel %vm3806, %v3799, %v3803
    %v3808 = vand.u32 2147483647, %v3783
    %vm3809 = vcmp.eq.f32.partialorder %v3808, 8.507059e+37
    %v3810 = vand.u32 %v3783, 2147483648
    %v3811 = vor.u32 1.1754944e-38, %v3810
    %v3812 = vsel %vm3809, %v3811, %v3807
    %v3813 = vmul.f32 %v3777, %v3812
    %v3814 = vmul.f32 %v3798, %v3682
    %v3815 = vmul.f32 %v3813, %v3682
    %3816 = vrot.lane.b32.xlu0 %v3688, 56
    %v3817 = vpop.permute.xlu0 %3816
    %3818 = vrot.lane.b32.xlu0 %v3687, 56
    %v3819 = vpop.permute.xlu0 %3818
    %v3822 = vsel %vm1144, %v3814, 0
    %v3825 = vsel %vm1144, %v3815, 0
    %v3827 = vsel %vm1210, %v3819, 0
    %3829 = vmatpush.msra.mxu0 0.0
    %3830 = vmatpush.msra.mxu0 0.0
    %3831 = vmatpush.msra.mxu0 0.0
    %3832 = vmatpush.msra.mxu0 0.0
    %3833 = vmatpush.msra.mxu0 0.0
    %3834 = vmatpush.msra.mxu0 0.0
    %3835 = vmatpush.msra.mxu0 0.0
    %3836 = vmatpush.msra.mxu0 0.0
    %3837 = vmatpush.msra.mxu0 0.0
    %3838 = vmatpush.msra.mxu0 0.0
    %3839 = vmatpush.msra.mxu0 0.0
    %3840 = vmatpush.msra.mxu0 0.0
    %3841 = vmatpush.msra.mxu0 0.0
    %3842 = vmatpush.msra.mxu0 0.0
    %3843 = vmatpush.msra.mxu0 %v3827
    %3844 = vmatpush.msra.mxu0 %v3817
    %3845 = vmatmul.f32.gmra.mxu0 %v3822
    %v3846 = vpop.f32.mrf.mxu0
    %v3847 = vadd.f32 0.0, %v3846
    %3848 = vmatmul.f32.gmra.mxu0 %v3825
    %v3849 = vpop.f32.mrf.mxu0
    %v3850 = vadd.f32 0.0, %v3849
    %3851 = vdwg.mxu0
    %v3853 = vsel %vm1110, %v3847, 0
    %v3856 = vsel %vm1110, %v3850, 0
    %3858 = vmatpush.msra.mxu0 0.0
    %3859 = vmatpush.msra.mxu0 0.0
    %3860 = vmatpush.msra.mxu0 0.0
    %3861 = vmatpush.msra.mxu0 0.0
    %3862 = vmatpush.msra.mxu0 0.0
    %3863 = vmatpush.msra.mxu0 0.0
    %3864 = vmatpush.msra.mxu0 0.0
    %3865 = vmatpush.msra.mxu0 0.0
    %3866 = vmatpush.msra.mxu0 0.0
    %3867 = vmatpush.msra.mxu0 0.0
    %3868 = vmatpush.msra.mxu0 0.0
    %3869 = vmatpush.msra.mxu0 0.0
    %3870 = vmatpush.msra.mxu0 0.0
    %3871 = vmatpush.msra.mxu0 0.0
    %3872 = vmatpush.msra.mxu0 0.0
    %3873 = vmatpush.msra.mxu0 %v2950
    %3874 = vmatmul.f32.gmra.mxu0 %v3853
    %v3875 = vpop.f32.mrf.mxu0
    %v3876 = vadd.f32 0.0, %v3875
    %3877 = vmatmul.f32.gmra.mxu0 %v3856
    %v3878 = vpop.f32.mrf.mxu0
    %v3879 = vadd.f32 0.0, %v3878
    %3880 = vdwg.mxu0
    %v3882 = vsel %vm1110, %v3720, 0
    %v3885 = vsel %vm1110, %v3723, 0
    %3887 = vmatpush.msra.mxu0 0.0
    %3888 = vmatpush.msra.mxu0 0.0
    %3889 = vmatpush.msra.mxu0 0.0
    %3890 = vmatpush.msra.mxu0 0.0
    %3891 = vmatpush.msra.mxu0 0.0
    %3892 = vmatpush.msra.mxu0 0.0
    %3893 = vmatpush.msra.mxu0 0.0
    %3894 = vmatpush.msra.mxu0 0.0
    %3895 = vmatpush.msra.mxu0 0.0
    %3896 = vmatpush.msra.mxu0 0.0
    %3897 = vmatpush.msra.mxu0 0.0
    %3898 = vmatpush.msra.mxu0 0.0
    %3899 = vmatpush.msra.mxu0 0.0
    %3900 = vmatpush.msra.mxu0 0.0
    %3901 = vmatpush.msra.mxu0 0.0
    %3902 = vmatpush.msra.mxu0 %v2949
    %3903 = vmatmul.f32.gmra.mxu0 %v3882
    %v3904 = vpop.f32.mrf.mxu0
    %v3905 = vadd.f32 %v3876, %v3904
    %3906 = vmatmul.f32.gmra.mxu0 %v3885
    %v3907 = vpop.f32.mrf.mxu0
    %v3908 = vadd.f32 %v3879, %v3907
    %3909 = vdwg.mxu0
    %3910 = vrot.lane.b32.xlu0 %v3596, 112
    %v3911 = vpop.permute.xlu0 %3910
    %3912 = vrot.lane.b32.xlu0 %v3595, 112
    %v3913 = vpop.permute.xlu0 %3912
    %3914 = vrot.lane.b32.xlu0 %v3596, 80
    %v3915 = vpop.permute.xlu0 %3914
    %3916 = vrot.lane.b32.xlu0 %v3595, 80
    %v3917 = vpop.permute.xlu0 %3916
    %v3918 = vsel %vm1110, %v3911, 0
    %v3920 = vsel %vm1110, %v3913, 0
    %v3922 = vsel %vm1110, %v3915, 0
    %v3924 = vsel %vm1110, %v3917, 0
    %3926 = vmatpush.xpose.msra.mxu0 0.0
    %3927 = vmatpush.xpose.msra.mxu0 0.0
    %3928 = vmatpush.xpose.msra.mxu0 0.0
    %3929 = vmatpush.xpose.msra.mxu0 0.0
    %3930 = vmatpush.xpose.msra.mxu0 0.0
    %3931 = vmatpush.xpose.msra.mxu0 0.0
    %3932 = vmatpush.xpose.msra.mxu0 0.0
    %3933 = vmatpush.xpose.msra.mxu0 0.0
    %3934 = vmatpush.xpose.msra.mxu0 0.0
    %3935 = vmatpush.xpose.msra.mxu0 0.0
    %3936 = vmatpush.xpose.msra.mxu0 0.0
    %3937 = vmatpush.xpose.msra.mxu0 0.0
    %3938 = vmatpush.xpose.msra.mxu0 0.0
    %3939 = vmatpush.xpose.msra.mxu0 0.0
    %3940 = vmatpush.xpose.msra.mxu0 %v3924
    %3941 = vmatpush.xpose.msra.mxu0 %v3922
    %3942 = vmatmul.f32.gmra.mxu0 %v3918
    %v3943 = vpop.f32.mrf.mxu0
    %v3944 = vadd.f32 0.0, %v3943
    %3945 = vmatmul.f32.gmra.mxu0 %v3920
    %v3946 = vpop.f32.mrf.mxu0
    %v3947 = vadd.f32 0.0, %v3946
    %3948 = vdwg.mxu0
    %v3949 = vmul.f32 %v3944, 0.35355338
    %v3950 = vmul.f32 %v3947, 0.35355338
    %v3951 = vsel %vm1144, %v3949, -inf
    %3952 = vmax.xlane.f32.xlu0 %v3951
    %v3953 = vpop.xlane.xlu0 %3952
    %v3954 = vsel %vm1148, %v3950, -inf
    %3955 = vmax.xlane.f32.xlu0 %v3954
    %v3956 = vpop.xlane.xlu0 %3955
    %v3957 = vsub.f32 %v3949, %v3953
    %v3958 = vsub.f32 %v3950, %v3956
    %v3959 = vmul.f32 %v3957, 1.442695
    %v3960 = vpow.pop %v3959
    %v3961 = vmul.f32 %v3958, 1.442695
    %v3962 = vpow.pop %v3961
    %v3963 = vsel %vm1144, %v3960, 0.0
    %3964 = vadd.xlane.f32.xlu0 %v3963
    %v3965 = vpop.xlane.xlu0 %3964
    %v3966 = vsel %vm1148, %v3962, 0.0
    %3967 = vadd.xlane.f32.xlu0 %v3966
    %v3968 = vpop.xlane.xlu0 %3967
    %v3969 = vrcp.pop %v3965
    %v3970 = vmul.f32 %v3965, %v3969
    %v3971 = vsub.f32 1.0, %v3970
    %v3972 = vmul.f32 %v3969, %v3971
    %v3973 = vadd.f32 %v3969, %v3972
    %vm3974 = vweird.f32 %v3965
    %vm3975 = vweird.f32 %v3969
    %vm3976 = vmor %vm3974, %vm3975
    %v3977 = vsel %vm3976, %v3969, %v3973
    %v3978 = vand.u32 2147483647, %v3965
    %vm3979 = vcmp.eq.f32.partialorder %v3978, 8.507059e+37
    %v3980 = vand.u32 %v3965, 2147483648
    %v3981 = vor.u32 1.1754944e-38, %v3980
    %v3982 = vsel %vm3979, %v3981, %v3977
    %v3983 = vmul.f32 %v3960, %v3982
    %v3984 = vrcp.pop %v3968
    %v3985 = vmul.f32 %v3968, %v3984
    %v3986 = vsub.f32 1.0, %v3985
    %v3987 = vmul.f32 %v3984, %v3986
    %v3988 = vadd.f32 %v3984, %v3987
    %vm3989 = vweird.f32 %v3968
    %vm3990 = vweird.f32 %v3984
    %vm3991 = vmor %vm3989, %vm3990
    %v3992 = vsel %vm3991, %v3984, %v3988
    %v3993 = vand.u32 2147483647, %v3968
    %vm3994 = vcmp.eq.f32.partialorder %v3993, 8.507059e+37
    %v3995 = vand.u32 %v3968, 2147483648
    %v3996 = vor.u32 1.1754944e-38, %v3995
    %v3997 = vsel %vm3994, %v3996, %v3992
    %v3998 = vmul.f32 %v3962, %v3997
    %v3999 = vmul.f32 %v3983, %v3682
    %v4000 = vmul.f32 %v3998, %v3682
    %4001 = vrot.lane.b32.xlu0 %v3688, 48
    %v4002 = vpop.permute.xlu0 %4001
    %4003 = vrot.lane.b32.xlu0 %v3687, 48
    %v4004 = vpop.permute.xlu0 %4003
    %v4007 = vsel %vm1144, %v3999, 0
    %v4010 = vsel %vm1144, %v4000, 0
    %v4012 = vsel %vm1210, %v4004, 0
    %4014 = vmatpush.msra.mxu0 0.0
    %4015 = vmatpush.msra.mxu0 0.0
    %4016 = vmatpush.msra.mxu0 0.0
    %4017 = vmatpush.msra.mxu0 0.0
    %4018 = vmatpush.msra.mxu0 0.0
    %4019 = vmatpush.msra.mxu0 0.0
    %4020 = vmatpush.msra.mxu0 0.0
    %4021 = vmatpush.msra.mxu0 0.0
    %4022 = vmatpush.msra.mxu0 0.0
    %4023 = vmatpush.msra.mxu0 0.0
    %4024 = vmatpush.msra.mxu0 0.0
    %4025 = vmatpush.msra.mxu0 0.0
    %4026 = vmatpush.msra.mxu0 0.0
    %4027 = vmatpush.msra.mxu0 0.0
    %4028 = vmatpush.msra.mxu0 %v4012
    %4029 = vmatpush.msra.mxu0 %v4002
    %4030 = vmatmul.f32.gmra.mxu0 %v4007
    %v4031 = vpop.f32.mrf.mxu0
    %v4032 = vadd.f32 0.0, %v4031
    %4033 = vmatmul.f32.gmra.mxu0 %v4010
    %v4034 = vpop.f32.mrf.mxu0
    %v4035 = vadd.f32 0.0, %v4034
    %4036 = vdwg.mxu0
    %v4038 = vsel %vm1110, %v4032, 0
    %v4041 = vsel %vm1110, %v4035, 0
    %4043 = vmatpush.msra.mxu0 0.0
    %4044 = vmatpush.msra.mxu0 0.0
    %4045 = vmatpush.msra.mxu0 0.0
    %4046 = vmatpush.msra.mxu0 0.0
    %4047 = vmatpush.msra.mxu0 0.0
    %4048 = vmatpush.msra.mxu0 0.0
    %4049 = vmatpush.msra.mxu0 0.0
    %4050 = vmatpush.msra.mxu0 0.0
    %4051 = vmatpush.msra.mxu0 0.0
    %4052 = vmatpush.msra.mxu0 0.0
    %4053 = vmatpush.msra.mxu0 0.0
    %4054 = vmatpush.msra.mxu0 0.0
    %4055 = vmatpush.msra.mxu0 0.0
    %4056 = vmatpush.msra.mxu0 0.0
    %4057 = vmatpush.msra.mxu0 0.0
    %4058 = vmatpush.msra.mxu0 %v2951
    %4059 = vmatmul.f32.gmra.mxu0 %v4038
    %v4060 = vpop.f32.mrf.mxu0
    %v4061 = vadd.f32 0.0, %v4060
    %4062 = vmatmul.f32.gmra.mxu0 %v4041
    %v4063 = vpop.f32.mrf.mxu0
    %v4064 = vadd.f32 0.0, %v4063
    %4065 = vdwg.mxu0
    %v4066 = vadd.f32 %v3905, %v4061
    %v4067 = vadd.f32 %v3908, %v4064
    %4068 = vrot.lane.b32.xlu0 %v3596, 104
    %v4069 = vpop.permute.xlu0 %4068
    %4070 = vrot.lane.b32.xlu0 %v3595, 104
    %v4071 = vpop.permute.xlu0 %4070
    %4072 = vrot.lane.b32.xlu0 %v3596, 72
    %v4073 = vpop.permute.xlu0 %4072
    %4074 = vrot.lane.b32.xlu0 %v3595, 72
    %v4075 = vpop.permute.xlu0 %4074
    %v4076 = vsel %vm1110, %v4069, 0
    %v4078 = vsel %vm1110, %v4071, 0
    %v4080 = vsel %vm1110, %v4073, 0
    %v4082 = vsel %vm1110, %v4075, 0
    %4084 = vmatpush.xpose.msra.mxu0 0.0
    %4085 = vmatpush.xpose.msra.mxu0 0.0
    %4086 = vmatpush.xpose.msra.mxu0 0.0
    %4087 = vmatpush.xpose.msra.mxu0 0.0
    %4088 = vmatpush.xpose.msra.mxu0 0.0
    %4089 = vmatpush.xpose.msra.mxu0 0.0
    %4090 = vmatpush.xpose.msra.mxu0 0.0
    %4091 = vmatpush.xpose.msra.mxu0 0.0
    %4092 = vmatpush.xpose.msra.mxu0 0.0
    %4093 = vmatpush.xpose.msra.mxu0 0.0
    %4094 = vmatpush.xpose.msra.mxu0 0.0
    %4095 = vmatpush.xpose.msra.mxu0 0.0
    %4096 = vmatpush.xpose.msra.mxu0 0.0
    %4097 = vmatpush.xpose.msra.mxu0 0.0
    %4098 = vmatpush.xpose.msra.mxu0 %v4082
    %4099 = vmatpush.xpose.msra.mxu0 %v4080
    %4100 = vmatmul.f32.gmra.mxu0 %v4076
    %v4101 = vpop.f32.mrf.mxu0
    %v4102 = vadd.f32 0.0, %v4101
    %4103 = vmatmul.f32.gmra.mxu0 %v4078
    %v4104 = vpop.f32.mrf.mxu0
    %v4105 = vadd.f32 0.0, %v4104
    %4106 = vdwg.mxu0
    %v4107 = vmul.f32 %v4102, 0.35355338
    %v4108 = vmul.f32 %v4105, 0.35355338
    %v4109 = vsel %vm1144, %v4107, -inf
    %4110 = vmax.xlane.f32.xlu0 %v4109
    %v4111 = vpop.xlane.xlu0 %4110
    %v4112 = vsel %vm1148, %v4108, -inf
    %4113 = vmax.xlane.f32.xlu0 %v4112
    %v4114 = vpop.xlane.xlu0 %4113
    %v4115 = vsub.f32 %v4107, %v4111
    %v4116 = vsub.f32 %v4108, %v4114
    %v4117 = vmul.f32 %v4115, 1.442695
    %v4118 = vpow.pop %v4117
    %v4119 = vmul.f32 %v4116, 1.442695
    %v4120 = vpow.pop %v4119
    %v4121 = vsel %vm1144, %v4118, 0.0
    %4122 = vadd.xlane.f32.xlu0 %v4121
    %v4123 = vpop.xlane.xlu0 %4122
    %v4124 = vsel %vm1148, %v4120, 0.0
    %4125 = vadd.xlane.f32.xlu0 %v4124
    %v4126 = vpop.xlane.xlu0 %4125
    %v4127 = vrcp.pop %v4123
    %v4128 = vmul.f32 %v4123, %v4127
    %v4129 = vsub.f32 1.0, %v4128
    %v4130 = vmul.f32 %v4127, %v4129
    %v4131 = vadd.f32 %v4127, %v4130
    %vm4132 = vweird.f32 %v4123
    %vm4133 = vweird.f32 %v4127
    %vm4134 = vmor %vm4132, %vm4133
    %v4135 = vsel %vm4134, %v4127, %v4131
    %v4136 = vand.u32 2147483647, %v4123
    %vm4137 = vcmp.eq.f32.partialorder %v4136, 8.507059e+37
    %v4138 = vand.u32 %v4123, 2147483648
    %v4139 = vor.u32 1.1754944e-38, %v4138
    %v4140 = vsel %vm4137, %v4139, %v4135
    %v4141 = vmul.f32 %v4118, %v4140
    %v4142 = vrcp.pop %v4126
    %v4143 = vmul.f32 %v4126, %v4142
    %v4144 = vsub.f32 1.0, %v4143
    %v4145 = vmul.f32 %v4142, %v4144
    %v4146 = vadd.f32 %v4142, %v4145
    %vm4147 = vweird.f32 %v4126
    %vm4148 = vweird.f32 %v4142
    %vm4149 = vmor %vm4147, %vm4148
    %v4150 = vsel %vm4149, %v4142, %v4146
    %v4151 = vand.u32 2147483647, %v4126
    %vm4152 = vcmp.eq.f32.partialorder %v4151, 8.507059e+37
    %v4153 = vand.u32 %v4126, 2147483648
    %v4154 = vor.u32 1.1754944e-38, %v4153
    %v4155 = vsel %vm4152, %v4154, %v4150
    %v4156 = vmul.f32 %v4120, %v4155
    %v4157 = vmul.f32 %v4141, %v3682
    %v4158 = vmul.f32 %v4156, %v3682
    %4159 = vrot.lane.b32.xlu0 %v3688, 40
    %v4160 = vpop.permute.xlu0 %4159
    %4161 = vrot.lane.b32.xlu0 %v3687, 40
    %v4162 = vpop.permute.xlu0 %4161
    %v4165 = vsel %vm1144, %v4157, 0
    %v4168 = vsel %vm1144, %v4158, 0
    %v4170 = vsel %vm1210, %v4162, 0
    %4172 = vmatpush.msra.mxu0 0.0
    %4173 = vmatpush.msra.mxu0 0.0
    %4174 = vmatpush.msra.mxu0 0.0
    %4175 = vmatpush.msra.mxu0 0.0
    %4176 = vmatpush.msra.mxu0 0.0
    %4177 = vmatpush.msra.mxu0 0.0
    %4178 = vmatpush.msra.mxu0 0.0
    %4179 = vmatpush.msra.mxu0 0.0
    %4180 = vmatpush.msra.mxu0 0.0
    %4181 = vmatpush.msra.mxu0 0.0
    %4182 = vmatpush.msra.mxu0 0.0
    %4183 = vmatpush.msra.mxu0 0.0
    %4184 = vmatpush.msra.mxu0 0.0
    %4185 = vmatpush.msra.mxu0 0.0
    %4186 = vmatpush.msra.mxu0 %v4170
    %4187 = vmatpush.msra.mxu0 %v4160
    %4188 = vmatmul.f32.gmra.mxu0 %v4165
    %v4189 = vpop.f32.mrf.mxu0
    %v4190 = vadd.f32 0.0, %v4189
    %4191 = vmatmul.f32.gmra.mxu0 %v4168
    %v4192 = vpop.f32.mrf.mxu0
    %v4193 = vadd.f32 0.0, %v4192
    %4194 = vdwg.mxu0
    %v4196 = vsel %vm1110, %v4190, 0
    %v4199 = vsel %vm1110, %v4193, 0
    %4201 = vmatpush.msra.mxu0 0.0
    %4202 = vmatpush.msra.mxu0 0.0
    %4203 = vmatpush.msra.mxu0 0.0
    %4204 = vmatpush.msra.mxu0 0.0
    %4205 = vmatpush.msra.mxu0 0.0
    %4206 = vmatpush.msra.mxu0 0.0
    %4207 = vmatpush.msra.mxu0 0.0
    %4208 = vmatpush.msra.mxu0 0.0
    %4209 = vmatpush.msra.mxu0 0.0
    %4210 = vmatpush.msra.mxu0 0.0
    %4211 = vmatpush.msra.mxu0 0.0
    %4212 = vmatpush.msra.mxu0 0.0
    %4213 = vmatpush.msra.mxu0 0.0
    %4214 = vmatpush.msra.mxu0 0.0
    %4215 = vmatpush.msra.mxu0 0.0
    %4216 = vmatpush.msra.mxu0 %v2952
    %4217 = vmatmul.f32.gmra.mxu0 %v4196
    %v4218 = vpop.f32.mrf.mxu0
    %v4219 = vadd.f32 0.0, %v4218
    %4220 = vmatmul.f32.gmra.mxu0 %v4199
    %v4221 = vpop.f32.mrf.mxu0
    %v4222 = vadd.f32 0.0, %v4221
    %4223 = vdwg.mxu0
    %v4224 = vadd.f32 %v4066, %v4219
    %v4225 = vadd.f32 %v4067, %v4222
    %v4226 = vadd.f32 %v4224, %v3585
    %v4227 = vadd.f32 %v4225, %v3585
    %v4230 = vrot.slane %v4226, 7
    %v4231 = vrot.slane %v4227, 7
    %v4232 = vsel %vm1210, %v4230, %v4231
    %v4235 = vadd.f32 %v2813, %v4230
    %v4236 = vadd.f32 %v2814, %v4232
    %4237 = vst.msk [vmem:[#allocation2 + $0x8] sm:$0xfe] %vm2391, %v4235
    %4238 = vst.msk [vmem:[#allocation2 + $0x10] sm:$0x3] %vm87, %v4236
    %v4239 = vld [vmem:[#allocation2] sm:$0xff]
    %v4240 = vld [vmem:[#allocation2 + $0x8] sm:$0xff]
    %v4241 = vld [vmem:[#allocation2 + $0x10] sm:$0x3]
    %s4242 = scalar_lea.vmem %s11, 1
    %v4243 = vld [vmem:[%s4242] sm:$0x1]
    %s4244 = scalar_lea.vmem %s12, 1
    %v4245 = vld [vmem:[%s4244] sm:$0x1]
    %v4246 = vsel %vm84, %v4239, 0.0
    %4247 = vadd.xlane.f32.xlu0 %v4246
    %v4248 = vpop.xlane.xlu0 %4247
    %v4249 = vsel %vm84, %v4240, 0.0
    %4250 = vadd.xlane.f32.xlu0 %v4249
    %v4251 = vpop.xlane.xlu0 %4250
    %v4252 = vsel %vm87, %v4241, 0.0
    %4253 = vadd.xlane.f32.xlu0 %v4252
    %v4254 = vpop.xlane.xlu0 %4253
    %v4255 = vmul.f32 %v4248, %v956
    %v4256 = vmul.f32 %v4251, %v956
    %v4257 = vmul.f32 %v4254, %v956
    %v4258 = vsub.f32 %v4239, %v4255
    %v4259 = vsub.f32 %v4240, %v4256
    %v4260 = vsub.f32 %v4241, %v4257
    %v4261 = vmul.f32 %v4258, %v4258
    %v4262 = vmul.f32 %v4259, %v4259
    %v4263 = vmul.f32 %v4260, %v4260
    %v4264 = vsel %vm84, %v4261, 0.0
    %4265 = vadd.xlane.f32.xlu0 %v4264
    %v4266 = vpop.xlane.xlu0 %4265
    %v4267 = vsel %vm84, %v4262, 0.0
    %4268 = vadd.xlane.f32.xlu0 %v4267
    %v4269 = vpop.xlane.xlu0 %4268
    %v4270 = vsel %vm87, %v4263, 0.0
    %4271 = vadd.xlane.f32.xlu0 %v4270
    %v4272 = vpop.xlane.xlu0 %4271
    %v4273 = vmul.f32 %v4266, %v956
    %v4274 = vmul.f32 %v4269, %v956
    %v4275 = vmul.f32 %v4272, %v956
    %v4276 = vadd.f32 %v4273, 1e-06
    %v4277 = vadd.f32 %v4274, 1e-06
    %v4278 = vadd.f32 %v4275, 1e-06
    %v4279 = vrsqrt.pop %v4276
    %v4280 = vmul.f32 %v4279, %v4276
    %v4281 = vmul.f32 %v4280, %v4279
    %v4282 = vmul.f32 0.5, %v4281
    %v4283 = vsub.f32 1.5, %v4282
    %v4284 = vmul.f32 %v4279, %v4283
    %vm4285 = vweird.f32 %v4276
    %vm4286 = vweird.f32 %v4279
    %vm4287 = vmor %vm4285, %vm4286
    %v4288 = vsel %vm4287, %v4279, %v4284
    %v4289 = vrsqrt.pop %v4277
    %v4290 = vmul.f32 %v4289, %v4277
    %v4291 = vmul.f32 %v4290, %v4289
    %v4292 = vmul.f32 0.5, %v4291
    %v4293 = vsub.f32 1.5, %v4292
    %v4294 = vmul.f32 %v4289, %v4293
    %vm4295 = vweird.f32 %v4277
    %vm4296 = vweird.f32 %v4289
    %vm4297 = vmor %vm4295, %vm4296
    %v4298 = vsel %vm4297, %v4289, %v4294
    %v4299 = vrsqrt.pop %v4278
    %v4300 = vmul.f32 %v4299, %v4278
    %v4301 = vmul.f32 %v4300, %v4299
    %v4302 = vmul.f32 0.5, %v4301
    %v4303 = vsub.f32 1.5, %v4302
    %v4304 = vmul.f32 %v4299, %v4303
    %vm4305 = vweird.f32 %v4278
    %vm4306 = vweird.f32 %v4299
    %vm4307 = vmor %vm4305, %vm4306
    %v4308 = vsel %vm4307, %v4299, %v4304
    %v4309 = vmul.f32 %v4258, %v4288
    %v4310 = vmul.f32 %v4259, %v4298
    %v4311 = vmul.f32 %v4260, %v4308
    %v4313 = vperm.slane %v4243, 0
    %v4315 = vmul.f32 %v4309, %v4313
    %v4316 = vmul.f32 %v4310, %v4313
    %v4317 = vmul.f32 %v4311, %v4313
    %v4319 = vperm.slane %v4245, 0
    %v4321 = vadd.f32 %v4315, %v4319
    %v4322 = vadd.f32 %v4316, %v4319
    %v4323 = vadd.f32 %v4317, %v4319
    %s4324 = scalar_lea.vmem %s13, 32
    %v4325 = vld [vmem:[%s4324] sm:$0xff]
    %v4326 = vld [vmem:[%s4324 + $0x8] sm:$0xff]
    %v4327 = vld [vmem:[%s4324 + $0x10] sm:$0xff]
    %v4328 = vld [vmem:[%s4324 + $0x18] sm:$0xff]
    %s4329 = scalar_lea.vmem %s14, 1
    %v4330 = vld [vmem:[%s4329] sm:$0x1]
    %v4332 = vperm.slane %v4330, 0
    %v4335 = vsel %vm84, %v4321, 0
    %v4338 = vsel %vm84, %v4322, 0
    %v4341 = vsel %vm84, %v4323, 0
    %4343 = vmatpush.msra.mxu0 0.0
    %4344 = vmatpush.msra.mxu0 0.0
    %4345 = vmatpush.msra.mxu0 0.0
    %4346 = vmatpush.msra.mxu0 0.0
    %4347 = vmatpush.msra.mxu0 0.0
    %4348 = vmatpush.msra.mxu0 0.0
    %4349 = vmatpush.msra.mxu0 0.0
    %4350 = vmatpush.msra.mxu0 0.0
    %4351 = vmatpush.msra.mxu0 0.0
    %4352 = vmatpush.msra.mxu0 0.0
    %4353 = vmatpush.msra.mxu0 0.0
    %4354 = vmatpush.msra.mxu0 0.0
    %4355 = vmatpush.msra.mxu0 %v4328
    %4356 = vmatpush.msra.mxu0 %v4327
    %4357 = vmatpush.msra.mxu0 %v4326
    %4358 = vmatpush.msra.mxu0 %v4325
    %4359 = vmatmul.f32.gmra.mxu0 %v4335
    %v4360 = vpop.f32.mrf.mxu0
    %v4361 = vadd.f32 %v4332, %v4360
    %4362 = vmatmul.f32.gmra.mxu0 %v4338
    %v4363 = vpop.f32.mrf.mxu0
    %v4364 = vadd.f32 %v4332, %v4363
    %4365 = vmatmul.f32.gmra.mxu0 %v4341
    %v4366 = vpop.f32.mrf.mxu0
    %v4367 = vadd.f32 %v4332, %v4366
    %4368 = vdwg.mxu0
    %v4369 = vmul.f32 %v4361, 0.5
    %v4370 = vmul.f32 %v4364, 0.5
    %v4371 = vmul.f32 %v4367, 0.5
    %v4372 = vmul.f32 %v4361, 0.044715
    %v4373 = vmul.f32 %v4364, 0.044715
    %v4374 = vmul.f32 %v4367, 0.044715
    %v4375 = vmul.f32 %v4372, %v4361
    %v4376 = vmul.f32 %v4373, %v4364
    %v4377 = vmul.f32 %v4374, %v4367
    %v4378 = vmul.f32 %v4375, %v4361
    %v4379 = vmul.f32 %v4376, %v4364
    %v4380 = vmul.f32 %v4377, %v4367
    %v4381 = vadd.f32 %v4361, %v4378
    %v4382 = vadd.f32 %v4364, %v4379
    %v4383 = vadd.f32 %v4367, %v4380
    %v4384 = vmul.f32 %v4381, 0.7978846
    %v4385 = vmul.f32 %v4382, 0.7978846
    %v4386 = vmul.f32 %v4383, 0.7978846
    %v4387 = vtanh.pop %v4384
    %v4388 = vtanh.pop %v4385
    %v4389 = vtanh.pop %v4386
    %v4390 = vadd.f32 %v4387, 1.0
    %v4391 = vadd.f32 %v4388, 1.0
    %v4392 = vadd.f32 %v4389, 1.0
    %v4393 = vmul.f32 %v4369, %v4390
    %v4394 = vmul.f32 %v4370, %v4391
    %v4395 = vmul.f32 %v4371, %v4392
    %s4396 = scalar_lea.vmem %s15, 128
    %v4397 = vld [vmem:[%s4396] sm:$0xff]
    %v4398 = vld [vmem:[%s4396 + $0x8] sm:$0xff]
    %v4399 = vld [vmem:[%s4396 + $0x10] sm:$0xff]
    %v4400 = vld [vmem:[%s4396 + $0x18] sm:$0xff]
    %v4401 = vld [vmem:[%s4396 + $0x20] sm:$0xff]
    %v4402 = vld [vmem:[%s4396 + $0x28] sm:$0xff]
    %v4403 = vld [vmem:[%s4396 + $0x30] sm:$0xff]
    %v4404 = vld [vmem:[%s4396 + $0x38] sm:$0xff]
    %v4405 = vld [vmem:[%s4396 + $0x40] sm:$0xff]
    %v4406 = vld [vmem:[%s4396 + $0x48] sm:$0xff]
    %v4407 = vld [vmem:[%s4396 + $0x50] sm:$0xff]
    %v4408 = vld [vmem:[%s4396 + $0x58] sm:$0xff]
    %v4409 = vld [vmem:[%s4396 + $0x60] sm:$0xff]
    %v4410 = vld [vmem:[%s4396 + $0x68] sm:$0xff]
    %v4411 = vld [vmem:[%s4396 + $0x70] sm:$0xff]
    %v4412 = vld [vmem:[%s4396 + $0x78] sm:$0xff]
    %s4413 = scalar_lea.vmem %s16, 1
    %v4414 = vld [vmem:[%s4413] sm:$0x1]
    %v4416 = vperm.slane %v4414, 0
    %4418 = vmatpush.msra.mxu0 %v4412
    %4419 = vmatpush.msra.mxu0 %v4411
    %4420 = vmatpush.msra.mxu0 %v4410
    %4421 = vmatpush.msra.mxu0 %v4409
    %4422 = vmatpush.msra.mxu0 %v4408
    %4423 = vmatpush.msra.mxu0 %v4407
    %4424 = vmatpush.msra.mxu0 %v4406
    %4425 = vmatpush.msra.mxu0 %v4405
    %4426 = vmatpush.msra.mxu0 %v4404
    %4427 = vmatpush.msra.mxu0 %v4403
    %4428 = vmatpush.msra.mxu0 %v4402
    %4429 = vmatpush.msra.mxu0 %v4401
    %4430 = vmatpush.msra.mxu0 %v4400
    %4431 = vmatpush.msra.mxu0 %v4399
    %4432 = vmatpush.msra.mxu0 %v4398
    %4433 = vmatpush.msra.mxu0 %v4397
    %4434 = vmatmul.f32.gmra.mxu0 %v4393
    %v4435 = vpop.f32.mrf.mxu0
    %v4436 = vadd.f32 %v4416, %v4435
    %4437 = vmatmul.f32.gmra.mxu0 %v4394
    %v4438 = vpop.f32.mrf.mxu0
    %v4439 = vadd.f32 %v4416, %v4438
    %4440 = vmatmul.f32.gmra.mxu0 %v4395
    %v4441 = vpop.f32.mrf.mxu0
    %v4442 = vadd.f32 %v4416, %v4441
    %4443 = vdwg.mxu0
    %v4444 = vadd.f32 %v4239, %v4436
    %v4445 = vadd.f32 %v4240, %v4439
    %v4446 = vadd.f32 %v4241, %v4442
    %4447 = vst.msk [vmem:[#allocation2] sm:$0xff] %vm84, %v4444
    %4448 = vst.msk [vmem:[#allocation2 + $0x8] sm:$0xff] %vm84, %v4445
    %4449 = vst.msk [vmem:[#allocation2 + $0x10] sm:$0x3] %vm87, %v4446
    %v4450 = vld [vmem:[%s23] sm:$0xff]
    %v4451 = vld [vmem:[%s23 + $0x8] sm:$0xff]
    %v4452 = vld [vmem:[%s23 + $0x10] sm:$0xff]
    %v4453 = vld [vmem:[%s23 + $0x18] sm:$0xff]
    %v4454 = vld [vmem:[%s24] sm:$0x1]
    %v4455 = vld [vmem:[#allocation2] sm:$0x1]
    %v4456 = vld [vmem:[%s21] sm:$0x1]
    %v4457 = vld [vmem:[%s22] sm:$0x1]
    %v4458 = vsel %vm389, %v4455, 0.0
    %4459 = vadd.xlane.f32.xlu0 %v4458
    %v4460 = vpop.xlane.xlu0 %4459
    %v4461 = vmul.f32 %v4460, %v956
    %v4462 = vsub.f32 %v4455, %v4461
    %v4463 = vmul.f32 %v4462, %v4462
    %v4464 = vsel %vm389, %v4463, 0.0
    %4465 = vadd.xlane.f32.xlu0 %v4464
    %v4466 = vpop.xlane.xlu0 %4465
    %v4467 = vmul.f32 %v4466, %v956
    %v4468 = vadd.f32 %v4467, 1e-06
    %v4469 = vrsqrt.pop %v4468
    %v4470 = vmul.f32 %v4469, %v4468
    %v4471 = vmul.f32 %v4470, %v4469
    %v4472 = vmul.f32 0.5, %v4471
    %v4473 = vsub.f32 1.5, %v4472
    %v4474 = vmul.f32 %v4469, %v4473
    %vm4475 = vweird.f32 %v4468
    %vm4476 = vweird.f32 %v4469
    %vm4477 = vmor %vm4475, %vm4476
    %v4478 = vsel %vm4477, %v4469, %v4474
    %v4479 = vmul.f32 %v4462, %v4478
    %v4480 = vmul.f32 %v4479, %v4456
    %v4481 = vadd.f32 %v4480, %v4457
    %v4483 = vsel %vm84, %v4481, 0
    %4485 = vmatpush.msra.mxu0 0.0
    %4486 = vmatpush.msra.mxu0 0.0
    %4487 = vmatpush.msra.mxu0 0.0
    %4488 = vmatpush.msra.mxu0 0.0
    %4489 = vmatpush.msra.mxu0 0.0
    %4490 = vmatpush.msra.mxu0 0.0
    %4491 = vmatpush.msra.mxu0 0.0
    %4492 = vmatpush.msra.mxu0 0.0
    %4493 = vmatpush.msra.mxu0 0.0
    %4494 = vmatpush.msra.mxu0 0.0
    %4495 = vmatpush.msra.mxu0 0.0
    %4496 = vmatpush.msra.mxu0 0.0
    %4497 = vmatpush.msra.mxu0 %v4453
    %4498 = vmatpush.msra.mxu0 %v4452
    %4499 = vmatpush.msra.mxu0 %v4451
    %4500 = vmatpush.msra.mxu0 %v4450
    %4501 = vmatmul.f32.gmra.mxu0 %v4483
    %v4502 = vpop.f32.mrf.mxu0
    %v4503 = vadd.f32 %v4454, %v4502
    %4504 = vdwg.mxu0
    %4505 = vst [vmem:[#allocation3] sm:$0x1] %v4503
    %v4506 = vld [vmem:[#allocation2 + $0x9] sm:$0x1]
    %v4507 = vld [vmem:[%s21] sm:$0x1]
    %v4508 = vld [vmem:[%s22] sm:$0x1]
    %v4509 = vsel %vm389, %v4506, 0.0
    %4510 = vadd.xlane.f32.xlu0 %v4509
    %v4511 = vpop.xlane.xlu0 %4510
    %v4512 = vmul.f32 %v4511, %v956
    %v4513 = vsub.f32 %v4506, %v4512
    %v4514 = vmul.f32 %v4513, %v4513
    %v4515 = vsel %vm389, %v4514, 0.0
    %4516 = vadd.xlane.f32.xlu0 %v4515
    %v4517 = vpop.xlane.xlu0 %4516
    %v4518 = vmul.f32 %v4517, %v956
    %v4519 = vadd.f32 %v4518, 1e-06
    %v4520 = vrsqrt.pop %v4519
    %v4521 = vmul.f32 %v4520, %v4519
    %v4522 = vmul.f32 %v4521, %v4520
    %v4523 = vmul.f32 0.5, %v4522
    %v4524 = vsub.f32 1.5, %v4523
    %v4525 = vmul.f32 %v4520, %v4524
    %vm4526 = vweird.f32 %v4519
    %vm4527 = vweird.f32 %v4520
    %vm4528 = vmor %vm4526, %vm4527
    %v4529 = vsel %vm4528, %v4520, %v4525
    %v4530 = vmul.f32 %v4513, %v4529
    %v4531 = vmul.f32 %v4530, %v4507
    %v4532 = vadd.f32 %v4531, %v4508
    %v4534 = vsel %vm84, %v4532, 0
    %4536 = vmatpush.msra.mxu0 0.0
    %4537 = vmatpush.msra.mxu0 0.0
    %4538 = vmatpush.msra.mxu0 0.0
    %4539 = vmatpush.msra.mxu0 0.0
    %4540 = vmatpush.msra.mxu0 0.0
    %4541 = vmatpush.msra.mxu0 0.0
    %4542 = vmatpush.msra.mxu0 0.0
    %4543 = vmatpush.msra.mxu0 0.0
    %4544 = vmatpush.msra.mxu0 0.0
    %4545 = vmatpush.msra.mxu0 0.0
    %4546 = vmatpush.msra.mxu0 0.0
    %4547 = vmatpush.msra.mxu0 0.0
    %4548 = vmatpush.msra.mxu0 %v4453
    %4549 = vmatpush.msra.mxu0 %v4452
    %4550 = vmatpush.msra.mxu0 %v4451
    %4551 = vmatpush.msra.mxu0 %v4450
    %4552 = vmatmul.f32.gmra.mxu0 %v4534
    %v4553 = vpop.f32.mrf.mxu0
    %v4554 = vadd.f32 %v4454, %v4553
    %4555 = vdwg.mxu0
    %4556 = vst [vmem:[#allocation3 + $0x1] sm:$0x1] %v4554
    %v4557 = vmul.f32 %v2807, 0.125
    %vm4558 = vcmask 0
    %4559 = vst.msk [vmem:[#allocation5] sm:$0x1] %vm4558, %v4557
    // Predicated region
    $region102: #{forward.1} parent=1 // pred_check
      _
    $region103: #{forward.1} parent=1 // pred_check_branch
      %4561 = sbr.rel (0) target = $region105
    $region104: #{forward.1} parent=1 // pred_region
      %4563 = vsyncadd [#allocation4], 0
      %s4565 = sshll.u32 [#allocation3], 4
      %s4566 = int_to_ptr.vmem [resolvable:$true] %s4565
      %s4567 = sshll.u32 %s25, 4
      %s4568 = int_to_ptr.hbm [resolvable:$true] %s4567
      %4570 = dma.vmem_to_hbm [thread:$0]  %s4566, 32, %s4568, [#allocation4]
    $region105: #{forward.1} parent=1 // pred_fallthru
      _
    // Predicated region
    $region106: #{forward.1} parent=1 // pred_check
      _
    $region107: #{forward.1} parent=1 // pred_check_branch
      %4572 = sbr.rel (0) target = $region109
    $region108: #{forward.1} parent=1 // pred_region
      %4574 = vsyncadd [#allocation6], 0
      %s4576 = sshll.u32 [#allocation5], 4
      %s4577 = int_to_ptr.vmem [resolvable:$true] %s4576
      %s4578 = sshll.u32 %s26, 4
      %s4579 = int_to_ptr.hbm [resolvable:$true] %s4578
      %4581 = dma.vmem_to_hbm [thread:$0]  %s4577, 16, %s4579, [#allocation6]
    $region109: #{forward.1} parent=1 // pred_fallthru
      _
    // Predicated region
    $region110: #{forward.1} parent=1 // pred_check
      _
    $region111: #{forward.1} parent=1 // pred_check_branch
      %4583 = sbr.rel (0) target = $region113
    $region112: #{forward.1} parent=1 // pred_region
      %4585 = dma.done [#allocation4], 32
    $region113: #{forward.1} parent=1 // pred_fallthru
      _
    // Predicated region
    $region114: #{forward.1} parent=1 // pred_check
      _
    $region115: #{forward.1} parent=1 // pred_check_branch
      %4587 = sbr.rel (0) target = $region117
    $region116: #{forward.1} parent=1 // pred_region
      %4589 = dma.done [#allocation6], 16
    $region117: #{forward.1} parent=1 // pred_fallthru
      _
    %4590 = vsyncpa [#allocation4], 1
    %4591 = vsyncpa [#allocation6], 1

</llo_original>
